<compile_context>
chip_gen: v6e
topology: v6e:2x2x1
jax: 0.10.0
libtpu: 0.0.40
codegen_flags: <defaults>
</compile_context>

<pallas_src>
import math
from functools import partial

import jax
import jax.numpy as jnp
from jax.experimental import pallas as pl
from jax.experimental.pallas import tpu as pltpu


_LN_EPS = 1e-5


# ----------------------------------------------------------------------------
# Small helpers
# ----------------------------------------------------------------------------
def _compiler_params():
    # 32 MiB scoped VMEM: >= default on all of v5e/v6e/v7x, well below v7x's
    # 64 MiB physical.  Single 1-D grid axis, fully parallel (megacore-shardable).
    return pltpu.CompilerParams(
        dimension_semantics=("parallel",),
        vmem_limit_bytes=32 * 1024 * 1024,
    )


def _rep_spec(shape):
    """Operand replicated across the grid (same block index every step -> resident)."""
    shape = tuple(int(s) for s in shape)
    return pl.BlockSpec(shape, lambda *_: (0,) * len(shape))


def _batch_spec(L, D):
    """One batch element per grid step; the kernel sees an (L, D) ref."""
    return pl.BlockSpec((None, L, D), lambda b: (b, 0, 0))


def _bytes(*arrays):
    return int(sum(a.size * a.dtype.itemsize for a in arrays))


# ----------------------------------------------------------------------------
# In-kernel building blocks
# ----------------------------------------------------------------------------
def _add_layernorm(y, res, gamma, beta, eps):
    """Residual add + LayerNorm over the last dim (f32 math)."""
    y = y + res
    mu = jnp.mean(y, axis=-1, keepdims=True)
    var = jnp.mean((y - mu) ** 2, axis=-1, keepdims=True)
    return (y - mu) * jax.lax.rsqrt(var + eps) * gamma + beta


def _mha_core(q_in, k_in, v_in, wq, bq, wk, bk, wv, bv, wo, *, nhead, scale):
    """Multi-head scaled-dot attention with head-stacked weights.

    q_in: (Lq, D); k_in/v_in: (Lk, D).  wq/wk/wv: (H, D, Dh) refs,
    bq/bk/bv: (H, 1, Dh) refs, wo: (H, Dh, D) ref.
    Returns the out-projected context (Lq, D) in f32 (out-proj bias NOT added).
    Head split/merge is free layout plumbing: static leading-dim indexing of the
    stacked projection weights; contexts fold back through per-head rows of wo.
    """
    Lq, D = q_in.shape
    y = jnp.zeros((Lq, D), jnp.float32)
    for h in range(nhead):  # static unroll; nhead is small
        q_h = (jnp.dot(q_in, wq[h], preferred_element_type=jnp.float32) + bq[h]) * scale
        k_h = jnp.dot(k_in, wk[h], preferred_element_type=jnp.float32) + bk[h]
        v_h = jnp.dot(v_in, wv[h], preferred_element_type=jnp.float32) + bv[h]
        # (Lq, Dh) x (Lk, Dh) -> (Lq, Lk), contracting the head dim.
        s = jax.lax.dot_general(q_h, k_h, (((1,), (1,)), ((), ())),
                                preferred_element_type=jnp.float32)
        s = s - jnp.max(s, axis=-1, keepdims=True)
        p = jnp.exp(s)
        p = p * pl.reciprocal(jnp.sum(p, axis=-1, keepdims=True), approx=True)
        ctx = jnp.dot(p, v_h, preferred_element_type=jnp.float32)         # (Lq, Dh)
        y = y + jnp.dot(ctx, wo[h], preferred_element_type=jnp.float32)   # (Lq, D)
    return y


# ----------------------------------------------------------------------------
# Kernel A: self-attention sublayer (MHA + residual + LayerNorm1), one batch/step
# ----------------------------------------------------------------------------
def _self_attn_ln_kernel(tgt_ref, qp_ref,
                         wq, bq, wk, bk, wv, bv, wo, bo, g, beta,
                         o_ref, *, nhead, scale, eps):
    x = tgt_ref[...]                 # (Lt, D): residual and value source
    qk_in = x + qp_ref[...]          # q = k = tgt + query_pos
    y = _mha_core(qk_in, qk_in, x, wq, bq, wk, bk, wv, bv, wo,
                  nhead=nhead, scale=scale)
    y = y + bo[...]
    o_ref[...] = _add_layernorm(y, x, g[...], beta[...], eps).astype(o_ref.dtype)


# ----------------------------------------------------------------------------
# Kernel B: MoChA (scaled_dot, chunk_size=-1) cross-attention sublayer + LN2
# ----------------------------------------------------------------------------
def _cross_attn_ln_kernel(tgt_ref, qp_ref, mem_ref, pos_ref,
                          wq, bq, wk, bk, wv, bv, wo, bo, g, beta,
                          o_ref, *, nhead, scale, eps):
    x = tgt_ref[...]                 # (Lt, D): residual, query source (+query_pos)
    q_in = x + qp_ref[...]
    mem = mem_ref[...]               # (Lm, D): value source
    k_in = mem + pos_ref[...]        # key source = memory + pos
    y = _mha_core(q_in, k_in, mem, wq, bq, wk, bk, wv, bv, wo,
                  nhead=nhead, scale=scale)
    y = y + bo[...]
    o_ref[...] = _add_layernorm(y, x, g[...], beta[...], eps).astype(o_ref.dtype)


# ----------------------------------------------------------------------------
# Kernel C: FFN (linear1 -> relu -> linear2) + residual + LayerNorm3, row-tiled
# ----------------------------------------------------------------------------
def _ffn_ln_kernel(x_ref, w1, b1, w2, b2, g, beta, o_ref, *, eps):
    x = x_ref[...]                                                   # (bm, D)
    h = jnp.dot(x, w1[...], preferred_element_type=jnp.float32) + b1[...]
    h = jnp.maximum(h, 0.0)
    y = jnp.dot(h.astype(x.dtype), w2[...], preferred_element_type=jnp.float32) + b2[...]
    o_ref[...] = _add_layernorm(y, x, g[...], beta[...], eps).astype(o_ref.dtype)


# ----------------------------------------------------------------------------
# pallas_call wrappers
# ----------------------------------------------------------------------------
def self_attn_block(tgt_bf, qp_bf, p, nhead, eps=_LN_EPS):
    B, Lq, D = tgt_bf.shape
    Dh = D // nhead
    args = (tgt_bf, qp_bf,
            p['sa_wq3'], p['sa_bq3'], p['sa_wk3'], p['sa_bk3'],
            p['sa_wv3'], p['sa_bv3'], p['sa_wo3'], p['sa_bo2'],
            p['ln1_g2'], p['ln1_b2'])
    cost = pl.CostEstimate(
        flops=int(B * (8 * Lq * D * D + 4 * Lq * Lq * D)),
        transcendentals=int(B * nhead * Lq * Lq),
        bytes_accessed=_bytes(*args) + _bytes(tgt_bf))
    in_specs = [_batch_spec(Lq, D), _batch_spec(Lq, D)] + \
               [_rep_spec(a.shape) for a in args[2:]]
    return pl.pallas_call(
        partial(_self_attn_ln_kernel, nhead=nhead, scale=1.0 / math.sqrt(Dh), eps=eps),
        out_shape=jax.ShapeDtypeStruct((B, Lq, D), tgt_bf.dtype),
        grid=(B,),
        in_specs=in_specs,
        out_specs=_batch_spec(Lq, D),
        input_output_aliases={0: 0},     # residual activation updated in place
        compiler_params=_compiler_params(),
        cost_estimate=cost,
    )(*args)


def cross_attn_block(tgt_bf, qp_bf, mem_bf, pos_bf, p, nhead, eps=_LN_EPS):
    B, Lq, D = tgt_bf.shape
    Lm = mem_bf.shape[1]
    Dh = D // nhead
    args = (tgt_bf, qp_bf, mem_bf, pos_bf,
            p['ca_wq3'], p['ca_bq3'], p['ca_wk3'], p['ca_bk3'],
            p['ca_wv3'], p['ca_bv3'], p['ca_wo3'], p['ca_bo2'],
            p['ln2_g2'], p['ln2_b2'])
    cost = pl.CostEstimate(
        flops=int(B * (4 * Lq * D * D + 4 * Lm * D * D + 4 * Lq * Lm * D)),
        transcendentals=int(B * nhead * Lq * Lm),
        bytes_accessed=_bytes(*args) + _bytes(tgt_bf))
    in_specs = [_batch_spec(Lq, D), _batch_spec(Lq, D),
                _batch_spec(Lm, D), _batch_spec(Lm, D)] + \
               [_rep_spec(a.shape) for a in args[4:]]
    return pl.pallas_call(
        partial(_cross_attn_ln_kernel, nhead=nhead, scale=1.0 / math.sqrt(Dh), eps=eps),
        out_shape=jax.ShapeDtypeStruct((B, Lq, D), tgt_bf.dtype),
        grid=(B,),
        in_specs=in_specs,
        out_specs=_batch_spec(Lq, D),
        input_output_aliases={0: 0},
        compiler_params=_compiler_params(),
        cost_estimate=cost,
    )(*args)


def ffn_block(x2d, p, eps=_LN_EPS):
    M, D = x2d.shape
    F = p['ff_w1'].shape[1]
    bm = M if M <= 256 else 256       # row tile (multiple of 8 or full extent)
    grid_m = pl.cdiv(M, bm)
    args = (x2d, p['ff_w1'], p['ff_b1'], p['ff_w2'], p['ff_b2'],
            p['ln3_g2'], p['ln3_b2'])
    cost = pl.CostEstimate(
        flops=int(4 * M * D * F),
        transcendentals=0,
        bytes_accessed=_bytes(*args) + _bytes(x2d))
    in_specs = [pl.BlockSpec((bm, D), lambda i: (i, 0))] + \
               [_rep_spec(a.shape) for a in args[1:]]
    return pl.pallas_call(
        partial(_ffn_ln_kernel, eps=eps),
        out_shape=jax.ShapeDtypeStruct((M, D), x2d.dtype),
        grid=(grid_m,),
        in_specs=in_specs,
        out_specs=pl.BlockSpec((bm, D), lambda i: (i, 0)),
        input_output_aliases={0: 0},
        compiler_params=_compiler_params(),
        cost_estimate=cost,
    )(*args)


# ----------------------------------------------------------------------------
# Full decoder layer (forward_post semantics, eval mode)
# ----------------------------------------------------------------------------
def transformer_decoder_layer_mma(tgt, memory, pos, query_pos, params, nhead):
    Lt, B, D = tgt.shape
    # One-time layout plumbing: seq-first (L,B,D) -> batch-first (B,L,D) so each
    # grid step gets a contiguous (L,D) slab (lane dim = D, sublane dim = L).
    tgt_bf = jnp.transpose(tgt, (1, 0, 2))
    qp_bf = jnp.transpose(query_pos, (1, 0, 2))
    mem_bf = jnp.transpose(memory, (1, 0, 2))
    pos_bf = jnp.transpose(pos, (1, 0, 2))

    t1 = self_attn_block(tgt_bf, qp_bf, params, nhead)                 # SA + LN1
    t2 = cross_attn_block(t1, qp_bf, mem_bf, pos_bf, params, nhead)    # MoChA + LN2
    t3 = ffn_block(t2.reshape(B * Lt, D), params)                      # FFN + LN3
    return jnp.transpose(t3.reshape(B, Lt, D), (1, 0, 2))              # back to (L,B,D)


# ----------------------------------------------------------------------------
# Parameters: logical (PyTorch-equivalent, weights stored (in, out)) + packing
# into the head-stacked / lane-friendly layout consumed by the kernels.
# ----------------------------------------------------------------------------
def init_params(key, d_model, dim_feedforward):
    names_shapes = [
        # self_attn in_proj (split q/k/v) and out_proj; weights stored (in, out)
        ('sa_wq', (d_model, d_model)), ('sa_bq', (d_model,)),
        ('sa_wk', (d_model, d_model)), ('sa_bk', (d_model,)),
        ('sa_wv', (d_model, d_model)), ('sa_bv', (d_model,)),
        ('sa_wo', (d_model, d_model)), ('sa_bo', (d_model,)),
        # MoChA projections: w_key, w_query, w_value, w_out
        ('ca_wk', (d_model, d_model)), ('ca_bk', (d_model,)),
        ('ca_wq', (d_model, d_model)), ('ca_bq', (d_model,)),
        ('ca_wv', (d_model, d_model)), ('ca_bv', (d_model,)),
        ('ca_wo', (d_model, d_model)), ('ca_bo', (d_model,)),
        # FFN
        ('ff_w1', (d_model, dim_feedforward)), ('ff_b1', (dim_feedforward,)),
        ('ff_w2', (dim_feedforward, d_model)), ('ff_b2', (d_model,)),
    ]
    keys = jax.random.split(key, len(names_shapes))
    params = {}
    for (name, shape), k in zip(names_shapes, keys):
        scale = 1.0 / math.sqrt(shape[0])
        params[name] = jax.random.uniform(k, shape, jnp.float32, -scale, scale)
    for i in (1, 2, 3):
        params[f'ln{i}_g'] = jnp.ones((d_model,), jnp.float32)
        params[f'ln{i}_b'] = jnp.zeros((d_model,), jnp.float32)
    return params


def pack_params(p, nhead):
    """Convert full (D,D) projection weights into head-stacked kernel operands."""
    D = p['sa_wq'].shape[0]
    Dh = D // nhead

    def cols(w):   # (D_in, D_out) -> (H, D_in, Dh): group output columns by head
        return jnp.transpose(w.reshape(w.shape[0], nhead, Dh), (1, 0, 2))

    def colb(b):   # (D_out,) -> (H, 1, Dh)
        return b.reshape(nhead, 1, Dh)

    def rows(w):   # out-proj (D_in, D_out) -> (H, Dh, D_out): group input rows by head
        return w.reshape(nhead, Dh, w.shape[1])

    def r2(b):     # (N,) -> (1, N)
        return b.reshape(1, -1)

    q = {}
    for pre in ('sa', 'ca'):
        for nm in ('q', 'k', 'v'):
            q[f'{pre}_w{nm}3'] = cols(p[f'{pre}_w{nm}'])
            q[f'{pre}_b{nm}3'] = colb(p[f'{pre}_b{nm}'])
        q[f'{pre}_wo3'] = rows(p[f'{pre}_wo'])
        q[f'{pre}_bo2'] = r2(p[f'{pre}_bo'])
    for i in (1, 2, 3):
        q[f'ln{i}_g2'] = r2(p[f'ln{i}_g'])
        q[f'ln{i}_b2'] = r2(p[f'ln{i}_b'])
    q['ff_w1'] = p['ff_w1']
    q['ff_b1'] = r2(p['ff_b1'])
    q['ff_w2'] = p['ff_w2']
    q['ff_b2'] = r2(p['ff_b2'])
    return q


# ----------------------------------------------------------------------------
if __name__ == "__main__":
    d_model, nhead, dim_feedforward = 32, 4, 64
    L_tgt, L_mem, B = 8, 16, 2

    root = jax.random.PRNGKey(0)
    k_tgt, k_mem, k_qp, k_pos, k_par = jax.random.split(root, 5)

    tgt = jax.random.normal(k_tgt, (L_tgt, B, d_model), jnp.float32)
    memory = jax.random.normal(k_mem, (L_mem, B, d_model), jnp.float32)
    query_pos = jax.random.normal(k_qp, (L_tgt, B, d_model), jnp.float32)
    pos = jax.random.normal(k_pos, (L_mem, B, d_model), jnp.float32)

    params = pack_params(init_params(k_par, d_model, dim_feedforward), nhead)

    fwd = jax.jit(partial(transformer_decoder_layer_mma, nhead=nhead))
    out = fwd(tgt, memory, pos, query_pos, params)
    out = jax.block_until_ready(out)

    assert out.shape == (L_tgt, B, d_model)
    assert bool(jnp.all(jnp.isfinite(out)))
    print("KERNEL_OK")
</pallas_src>

<mosaic_0001>
module attributes {stable_mosaic.version = 11 : i64} {
  func.func @_self_attn_ln_kernel(%arg0: i32, %arg1: memref<1x8x32xf32, #tpu.memory_space<vmem>>, %arg2: memref<1x8x32xf32, #tpu.memory_space<vmem>>, %arg3: memref<4x32x8xf32, #tpu.memory_space<vmem>>, %arg4: memref<4x1x8xf32, #tpu.memory_space<vmem>>, %arg5: memref<4x32x8xf32, #tpu.memory_space<vmem>>, %arg6: memref<4x1x8xf32, #tpu.memory_space<vmem>>, %arg7: memref<4x32x8xf32, #tpu.memory_space<vmem>>, %arg8: memref<4x1x8xf32, #tpu.memory_space<vmem>>, %arg9: memref<4x8x32xf32, #tpu.memory_space<vmem>>, %arg10: memref<1x32xf32, #tpu.memory_space<vmem>>, %arg11: memref<1x32xf32, #tpu.memory_space<vmem>>, %arg12: memref<1x32xf32, #tpu.memory_space<vmem>>, %arg13: memref<1x8x32xf32, #tpu.memory_space<vmem>>) attributes {dimension_semantics = [#tpu.dimension_semantics<parallel>], iteration_bounds = array<i64: 2>, scalar_prefetch = 0 : i64, scratch_operands = 0 : i64, tpu.core_type = #tpu.core_type<tc>, window_params = [{transform_indices = @transform_0, window_bounds = array<i64: 1, 8, 32>}, {transform_indices = @transform_1, window_bounds = array<i64: 1, 8, 32>}, {pipeline_mode = #tpu.pipeline_mode<synchronous>, transform_indices = @transform_2, window_bounds = array<i64: 4, 32, 8>}, {pipeline_mode = #tpu.pipeline_mode<synchronous>, transform_indices = @transform_3, window_bounds = array<i64: 4, 1, 8>}, {pipeline_mode = #tpu.pipeline_mode<synchronous>, transform_indices = @transform_4, window_bounds = array<i64: 4, 32, 8>}, {pipeline_mode = #tpu.pipeline_mode<synchronous>, transform_indices = @transform_5, window_bounds = array<i64: 4, 1, 8>}, {pipeline_mode = #tpu.pipeline_mode<synchronous>, transform_indices = @transform_6, window_bounds = array<i64: 4, 32, 8>}, {pipeline_mode = #tpu.pipeline_mode<synchronous>, transform_indices = @transform_7, window_bounds = array<i64: 4, 1, 8>}, {pipeline_mode = #tpu.pipeline_mode<synchronous>, transform_indices = @transform_8, window_bounds = array<i64: 4, 8, 32>}, {pipeline_mode = #tpu.pipeline_mode<synchronous>, transform_indices = @transform_9, window_bounds = array<i64: 1, 32>}, {pipeline_mode = #tpu.pipeline_mode<synchronous>, transform_indices = @transform_10, window_bounds = array<i64: 1, 32>}, {pipeline_mode = #tpu.pipeline_mode<synchronous>, transform_indices = @transform_11, window_bounds = array<i64: 1, 32>}, {transform_indices = @transform_12, window_bounds = array<i64: 1, 8, 32>}]} {
    %c0 = arith.constant 0 : index
    %c0_0 = arith.constant 0 : index
    %c0_1 = arith.constant 0 : index
    %0 = vector.load %arg1[%c0, %c0_0, %c0_1] : memref<1x8x32xf32, #tpu.memory_space<vmem>>, vector<1x8x32xf32>
    %1 = vector.shape_cast %0 : vector<1x8x32xf32> to vector<8x32xf32>
    %c0_2 = arith.constant 0 : index
    %c0_3 = arith.constant 0 : index
    %c0_4 = arith.constant 0 : index
    %2 = vector.load %arg2[%c0_2, %c0_3, %c0_4] : memref<1x8x32xf32, #tpu.memory_space<vmem>>, vector<1x8x32xf32>
    %3 = vector.shape_cast %2 : vector<1x8x32xf32> to vector<8x32xf32>
    %4 = arith.addf %1, %3 : vector<8x32xf32>
    %cst = arith.constant 0.000000e+00 : f32
    %5 = vector.broadcast %cst : f32 to vector<8x32xf32>
    %c0_5 = arith.constant 0 : index
    %c0_6 = arith.constant 0 : index
    %c0_7 = arith.constant 0 : index
    %6 = vector.load %arg3[%c0_5, %c0_6, %c0_7] : memref<4x32x8xf32, #tpu.memory_space<vmem>>, vector<1x32x8xf32>
    %7 = vector.shape_cast %6 : vector<1x32x8xf32> to vector<32x8xf32>
    %cst_8 = arith.constant dense<0.000000e+00> : vector<8x8xf32>
    %8 = tpu.matmul %4, %7, %cst_8 {dimension_numbers = #tpu.dot_dimension_numbers<[1], [0], [0], [1], [0, 0, 1, 1], [], []>} : vector<8x32xf32>, vector<32x8xf32>, vector<8x8xf32> -> vector<8x8xf32>
    %c0_9 = arith.constant 0 : index
    %c0_10 = arith.constant 0 : index
    %c0_11 = arith.constant 0 : index
    %9 = vector.load %arg4[%c0_9, %c0_10, %c0_11] : memref<4x1x8xf32, #tpu.memory_space<vmem>>, vector<1x1x8xf32>
    %10 = vector.shape_cast %9 : vector<1x1x8xf32> to vector<1x8xf32>
    %11 = vector.broadcast %10 : vector<1x8xf32> to vector<8x8xf32>
    %12 = arith.addf %8, %11 : vector<8x8xf32>
    %cst_12 = arith.constant 0.353553385 : f32
    %13 = vector.broadcast %cst_12 : f32 to vector<8x8xf32>
    %14 = arith.mulf %12, %13 : vector<8x8xf32>
    %c0_13 = arith.constant 0 : index
    %c0_14 = arith.constant 0 : index
    %c0_15 = arith.constant 0 : index
    %15 = vector.load %arg5[%c0_13, %c0_14, %c0_15] : memref<4x32x8xf32, #tpu.memory_space<vmem>>, vector<1x32x8xf32>
    %16 = vector.shape_cast %15 : vector<1x32x8xf32> to vector<32x8xf32>
    %cst_16 = arith.constant dense<0.000000e+00> : vector<8x8xf32>
    %17 = tpu.matmul %4, %16, %cst_16 {dimension_numbers = #tpu.dot_dimension_numbers<[1], [0], [0], [1], [0, 0, 1, 1], [], []>} : vector<8x32xf32>, vector<32x8xf32>, vector<8x8xf32> -> vector<8x8xf32>
    %c0_17 = arith.constant 0 : index
    %c0_18 = arith.constant 0 : index
    %c0_19 = arith.constant 0 : index
    %18 = vector.load %arg6[%c0_17, %c0_18, %c0_19] : memref<4x1x8xf32, #tpu.memory_space<vmem>>, vector<1x1x8xf32>
    %19 = vector.shape_cast %18 : vector<1x1x8xf32> to vector<1x8xf32>
    %20 = vector.broadcast %19 : vector<1x8xf32> to vector<8x8xf32>
    %21 = arith.addf %17, %20 : vector<8x8xf32>
    %c0_20 = arith.constant 0 : index
    %c0_21 = arith.constant 0 : index
    %c0_22 = arith.constant 0 : index
    %22 = vector.load %arg7[%c0_20, %c0_21, %c0_22] : memref<4x32x8xf32, #tpu.memory_space<vmem>>, vector<1x32x8xf32>
    %23 = vector.shape_cast %22 : vector<1x32x8xf32> to vector<32x8xf32>
    %cst_23 = arith.constant dense<0.000000e+00> : vector<8x8xf32>
    %24 = tpu.matmul %1, %23, %cst_23 {dimension_numbers = #tpu.dot_dimension_numbers<[1], [0], [0], [1], [0, 0, 1, 1], [], []>} : vector<8x32xf32>, vector<32x8xf32>, vector<8x8xf32> -> vector<8x8xf32>
    %c0_24 = arith.constant 0 : index
    %c0_25 = arith.constant 0 : index
    %c0_26 = arith.constant 0 : index
    %25 = vector.load %arg8[%c0_24, %c0_25, %c0_26] : memref<4x1x8xf32, #tpu.memory_space<vmem>>, vector<1x1x8xf32>
    %26 = vector.shape_cast %25 : vector<1x1x8xf32> to vector<1x8xf32>
    %27 = vector.broadcast %26 : vector<1x8xf32> to vector<8x8xf32>
    %28 = arith.addf %24, %27 : vector<8x8xf32>
    %cst_27 = arith.constant dense<0.000000e+00> : vector<8x8xf32>
    %29 = tpu.matmul %14, %21, %cst_27 {dimension_numbers = #tpu.dot_dimension_numbers<[1], [1], [0], [0], [0, 0, 1, 0], [], []>} : vector<8x8xf32>, vector<8x8xf32>, vector<8x8xf32> -> vector<8x8xf32>
    %cst_28 = arith.constant dense<0xFF800000> : vector<8xf32>
    %30 = vector.multi_reduction <maximumf>, %29, %cst_28 [1] : vector<8x8xf32> to vector<8xf32>
    %31 = vector.shape_cast %30 : vector<8xf32> to vector<8x1xf32>
    %32 = vector.broadcast %31 : vector<8x1xf32> to vector<8x8xf32>
    %33 = arith.subf %29, %32 : vector<8x8xf32>
    %34 = math.exp %33 : vector<8x8xf32>
    %cst_29 = arith.constant dense<0.000000e+00> : vector<8xf32>
    %35 = vector.multi_reduction <add>, %34, %cst_29 [1] : vector<8x8xf32> to vector<8xf32>
    %36 = vector.shape_cast %35 : vector<8xf32> to vector<8x1xf32>
    %37 = tpu.reciprocal %36 {approx = true} : vector<8x1xf32> -> vector<8x1xf32>
    %38 = vector.broadcast %37 : vector<8x1xf32> to vector<8x8xf32>
    %39 = arith.mulf %34, %38 : vector<8x8xf32>
    %cst_30 = arith.constant dense<0.000000e+00> : vector<8x8xf32>
    %40 = tpu.matmul %39, %28, %cst_30 {dimension_numbers = #tpu.dot_dimension_numbers<[1], [0], [0], [1], [0, 0, 1, 1], [], []>} : vector<8x8xf32>, vector<8x8xf32>, vector<8x8xf32> -> vector<8x8xf32>
    %c0_31 = arith.constant 0 : index
    %c0_32 = arith.constant 0 : index
    %c0_33 = arith.constant 0 : index
    %41 = vector.load %arg9[%c0_31, %c0_32, %c0_33] : memref<4x8x32xf32, #tpu.memory_space<vmem>>, vector<1x8x32xf32>
    %42 = vector.shape_cast %41 : vector<1x8x32xf32> to vector<8x32xf32>
    %cst_34 = arith.constant dense<0.000000e+00> : vector<8x32xf32>
    %43 = tpu.matmul %40, %42, %cst_34 {dimension_numbers = #tpu.dot_dimension_numbers<[1], [0], [0], [1], [0, 0, 1, 1], [], []>} : vector<8x8xf32>, vector<8x32xf32>, vector<8x32xf32> -> vector<8x32xf32>
    %44 = arith.addf %5, %43 : vector<8x32xf32>
    %c1 = arith.constant 1 : index
    %c0_35 = arith.constant 0 : index
    %c0_36 = arith.constant 0 : index
    %45 = vector.load %arg3[%c1, %c0_35, %c0_36] : memref<4x32x8xf32, #tpu.memory_space<vmem>>, vector<1x32x8xf32>
    %46 = vector.shape_cast %45 : vector<1x32x8xf32> to vector<32x8xf32>
    %cst_37 = arith.constant dense<0.000000e+00> : vector<8x8xf32>
    %47 = tpu.matmul %4, %46, %cst_37 {dimension_numbers = #tpu.dot_dimension_numbers<[1], [0], [0], [1], [0, 0, 1, 1], [], []>} : vector<8x32xf32>, vector<32x8xf32>, vector<8x8xf32> -> vector<8x8xf32>
    %c1_38 = arith.constant 1 : index
    %c0_39 = arith.constant 0 : index
    %c0_40 = arith.constant 0 : index
    %48 = vector.load %arg4[%c1_38, %c0_39, %c0_40] : memref<4x1x8xf32, #tpu.memory_space<vmem>>, vector<1x1x8xf32>
    %49 = vector.shape_cast %48 : vector<1x1x8xf32> to vector<1x8xf32>
    %50 = vector.broadcast %49 : vector<1x8xf32> to vector<8x8xf32>
    %51 = arith.addf %47, %50 : vector<8x8xf32>
    %cst_41 = arith.constant 0.353553385 : f32
    %52 = vector.broadcast %cst_41 : f32 to vector<8x8xf32>
    %53 = arith.mulf %51, %52 : vector<8x8xf32>
    %c1_42 = arith.constant 1 : index
    %c0_43 = arith.constant 0 : index
    %c0_44 = arith.constant 0 : index
    %54 = vector.load %arg5[%c1_42, %c0_43, %c0_44] : memref<4x32x8xf32, #tpu.memory_space<vmem>>, vector<1x32x8xf32>
    %55 = vector.shape_cast %54 : vector<1x32x8xf32> to vector<32x8xf32>
    %cst_45 = arith.constant dense<0.000000e+00> : vector<8x8xf32>
    %56 = tpu.matmul %4, %55, %cst_45 {dimension_numbers = #tpu.dot_dimension_numbers<[1], [0], [0], [1], [0, 0, 1, 1], [], []>} : vector<8x32xf32>, vector<32x8xf32>, vector<8x8xf32> -> vector<8x8xf32>
    %c1_46 = arith.constant 1 : index
    %c0_47 = arith.constant 0 : index
    %c0_48 = arith.constant 0 : index
    %57 = vector.load %arg6[%c1_46, %c0_47, %c0_48] : memref<4x1x8xf32, #tpu.memory_space<vmem>>, vector<1x1x8xf32>
    %58 = vector.shape_cast %57 : vector<1x1x8xf32> to vector<1x8xf32>
    %59 = vector.broadcast %58 : vector<1x8xf32> to vector<8x8xf32>
    %60 = arith.addf %56, %59 : vector<8x8xf32>
    %c1_49 = arith.constant 1 : index
    %c0_50 = arith.constant 0 : index
    %c0_51 = arith.constant 0 : index
    %61 = vector.load %arg7[%c1_49, %c0_50, %c0_51] : memref<4x32x8xf32, #tpu.memory_space<vmem>>, vector<1x32x8xf32>
    %62 = vector.shape_cast %61 : vector<1x32x8xf32> to vector<32x8xf32>
    %cst_52 = arith.constant dense<0.000000e+00> : vector<8x8xf32>
    %63 = tpu.matmul %1, %62, %cst_52 {dimension_numbers = #tpu.dot_dimension_numbers<[1], [0], [0], [1], [0, 0, 1, 1], [], []>} : vector<8x32xf32>, vector<32x8xf32>, vector<8x8xf32> -> vector<8x8xf32>
    %c1_53 = arith.constant 1 : index
    %c0_54 = arith.constant 0 : index
    %c0_55 = arith.constant 0 : index
    %64 = vector.load %arg8[%c1_53, %c0_54, %c0_55] : memref<4x1x8xf32, #tpu.memory_space<vmem>>, vector<1x1x8xf32>
    %65 = vector.shape_cast %64 : vector<1x1x8xf32> to vector<1x8xf32>
    %66 = vector.broadcast %65 : vector<1x8xf32> to vector<8x8xf32>
    %67 = arith.addf %63, %66 : vector<8x8xf32>
    %cst_56 = arith.constant dense<0.000000e+00> : vector<8x8xf32>
    %68 = tpu.matmul %53, %60, %cst_56 {dimension_numbers = #tpu.dot_dimension_numbers<[1], [1], [0], [0], [0, 0, 1, 0], [], []>} : vector<8x8xf32>, vector<8x8xf32>, vector<8x8xf32> -> vector<8x8xf32>
    %cst_57 = arith.constant dense<0xFF800000> : vector<8xf32>
    %69 = vector.multi_reduction <maximumf>, %68, %cst_57 [1] : vector<8x8xf32> to vector<8xf32>
    %70 = vector.shape_cast %69 : vector<8xf32> to vector<8x1xf32>
    %71 = vector.broadcast %70 : vector<8x1xf32> to vector<8x8xf32>
    %72 = arith.subf %68, %71 : vector<8x8xf32>
    %73 = math.exp %72 : vector<8x8xf32>
    %cst_58 = arith.constant dense<0.000000e+00> : vector<8xf32>
    %74 = vector.multi_reduction <add>, %73, %cst_58 [1] : vector<8x8xf32> to vector<8xf32>
    %75 = vector.shape_cast %74 : vector<8xf32> to vector<8x1xf32>
    %76 = tpu.reciprocal %75 {approx = true} : vector<8x1xf32> -> vector<8x1xf32>
    %77 = vector.broadcast %76 : vector<8x1xf32> to vector<8x8xf32>
    %78 = arith.mulf %73, %77 : vector<8x8xf32>
    %cst_59 = arith.constant dense<0.000000e+00> : vector<8x8xf32>
    %79 = tpu.matmul %78, %67, %cst_59 {dimension_numbers = #tpu.dot_dimension_numbers<[1], [0], [0], [1], [0, 0, 1, 1], [], []>} : vector<8x8xf32>, vector<8x8xf32>, vector<8x8xf32> -> vector<8x8xf32>
    %c1_60 = arith.constant 1 : index
    %c0_61 = arith.constant 0 : index
    %c0_62 = arith.constant 0 : index
    %80 = vector.load %arg9[%c1_60, %c0_61, %c0_62] : memref<4x8x32xf32, #tpu.memory_space<vmem>>, vector<1x8x32xf32>
    %81 = vector.shape_cast %80 : vector<1x8x32xf32> to vector<8x32xf32>
    %cst_63 = arith.constant dense<0.000000e+00> : vector<8x32xf32>
    %82 = tpu.matmul %79, %81, %cst_63 {dimension_numbers = #tpu.dot_dimension_numbers<[1], [0], [0], [1], [0, 0, 1, 1], [], []>} : vector<8x8xf32>, vector<8x32xf32>, vector<8x32xf32> -> vector<8x32xf32>
    %83 = arith.addf %44, %82 : vector<8x32xf32>
    %c2 = arith.constant 2 : index
    %c0_64 = arith.constant 0 : index
    %c0_65 = arith.constant 0 : index
    %84 = vector.load %arg3[%c2, %c0_64, %c0_65] : memref<4x32x8xf32, #tpu.memory_space<vmem>>, vector<1x32x8xf32>
    %85 = vector.shape_cast %84 : vector<1x32x8xf32> to vector<32x8xf32>
    %cst_66 = arith.constant dense<0.000000e+00> : vector<8x8xf32>
    %86 = tpu.matmul %4, %85, %cst_66 {dimension_numbers = #tpu.dot_dimension_numbers<[1], [0], [0], [1], [0, 0, 1, 1], [], []>} : vector<8x32xf32>, vector<32x8xf32>, vector<8x8xf32> -> vector<8x8xf32>
    %c2_67 = arith.constant 2 : index
    %c0_68 = arith.constant 0 : index
    %c0_69 = arith.constant 0 : index
    %87 = vector.load %arg4[%c2_67, %c0_68, %c0_69] : memref<4x1x8xf32, #tpu.memory_space<vmem>>, vector<1x1x8xf32>
    %88 = vector.shape_cast %87 : vector<1x1x8xf32> to vector<1x8xf32>
    %89 = vector.broadcast %88 : vector<1x8xf32> to vector<8x8xf32>
    %90 = arith.addf %86, %89 : vector<8x8xf32>
    %cst_70 = arith.constant 0.353553385 : f32
    %91 = vector.broadcast %cst_70 : f32 to vector<8x8xf32>
    %92 = arith.mulf %90, %91 : vector<8x8xf32>
    %c2_71 = arith.constant 2 : index
    %c0_72 = arith.constant 0 : index
    %c0_73 = arith.constant 0 : index
    %93 = vector.load %arg5[%c2_71, %c0_72, %c0_73] : memref<4x32x8xf32, #tpu.memory_space<vmem>>, vector<1x32x8xf32>
    %94 = vector.shape_cast %93 : vector<1x32x8xf32> to vector<32x8xf32>
    %cst_74 = arith.constant dense<0.000000e+00> : vector<8x8xf32>
    %95 = tpu.matmul %4, %94, %cst_74 {dimension_numbers = #tpu.dot_dimension_numbers<[1], [0], [0], [1], [0, 0, 1, 1], [], []>} : vector<8x32xf32>, vector<32x8xf32>, vector<8x8xf32> -> vector<8x8xf32>
    %c2_75 = arith.constant 2 : index
    %c0_76 = arith.constant 0 : index
    %c0_77 = arith.constant 0 : index
    %96 = vector.load %arg6[%c2_75, %c0_76, %c0_77] : memref<4x1x8xf32, #tpu.memory_space<vmem>>, vector<1x1x8xf32>
    %97 = vector.shape_cast %96 : vector<1x1x8xf32> to vector<1x8xf32>
    %98 = vector.broadcast %97 : vector<1x8xf32> to vector<8x8xf32>
    %99 = arith.addf %95, %98 : vector<8x8xf32>
    %c2_78 = arith.constant 2 : index
    %c0_79 = arith.constant 0 : index
    %c0_80 = arith.constant 0 : index
    %100 = vector.load %arg7[%c2_78, %c0_79, %c0_80] : memref<4x32x8xf32, #tpu.memory_space<vmem>>, vector<1x32x8xf32>
    %101 = vector.shape_cast %100 : vector<1x32x8xf32> to vector<32x8xf32>
    %cst_81 = arith.constant dense<0.000000e+00> : vector<8x8xf32>
    %102 = tpu.matmul %1, %101, %cst_81 {dimension_numbers = #tpu.dot_dimension_numbers<[1], [0], [0], [1], [0, 0, 1, 1], [], []>} : vector<8x32xf32>, vector<32x8xf32>, vector<8x8xf32> -> vector<8x8xf32>
    %c2_82 = arith.constant 2 : index
    %c0_83 = arith.constant 0 : index
    %c0_84 = arith.constant 0 : index
    %103 = vector.load %arg8[%c2_82, %c0_83, %c0_84] : memref<4x1x8xf32, #tpu.memory_space<vmem>>, vector<1x1x8xf32>
    %104 = vector.shape_cast %103 : vector<1x1x8xf32> to vector<1x8xf32>
    %105 = vector.broadcast %104 : vector<1x8xf32> to vector<8x8xf32>
    %106 = arith.addf %102, %105 : vector<8x8xf32>
    %cst_85 = arith.constant dense<0.000000e+00> : vector<8x8xf32>
    %107 = tpu.matmul %92, %99, %cst_85 {dimension_numbers = #tpu.dot_dimension_numbers<[1], [1], [0], [0], [0, 0, 1, 0], [], []>} : vector<8x8xf32>, vector<8x8xf32>, vector<8x8xf32> -> vector<8x8xf32>
    %cst_86 = arith.constant dense<0xFF800000> : vector<8xf32>
    %108 = vector.multi_reduction <maximumf>, %107, %cst_86 [1] : vector<8x8xf32> to vector<8xf32>
    %109 = vector.shape_cast %108 : vector<8xf32> to vector<8x1xf32>
    %110 = vector.broadcast %109 : vector<8x1xf32> to vector<8x8xf32>
    %111 = arith.subf %107, %110 : vector<8x8xf32>
    %112 = math.exp %111 : vector<8x8xf32>
    %cst_87 = arith.constant dense<0.000000e+00> : vector<8xf32>
    %113 = vector.multi_reduction <add>, %112, %cst_87 [1] : vector<8x8xf32> to vector<8xf32>
    %114 = vector.shape_cast %113 : vector<8xf32> to vector<8x1xf32>
    %115 = tpu.reciprocal %114 {approx = true} : vector<8x1xf32> -> vector<8x1xf32>
    %116 = vector.broadcast %115 : vector<8x1xf32> to vector<8x8xf32>
    %117 = arith.mulf %112, %116 : vector<8x8xf32>
    %cst_88 = arith.constant dense<0.000000e+00> : vector<8x8xf32>
    %118 = tpu.matmul %117, %106, %cst_88 {dimension_numbers = #tpu.dot_dimension_numbers<[1], [0], [0], [1], [0, 0, 1, 1], [], []>} : vector<8x8xf32>, vector<8x8xf32>, vector<8x8xf32> -> vector<8x8xf32>
    %c2_89 = arith.constant 2 : index
    %c0_90 = arith.constant 0 : index
    %c0_91 = arith.constant 0 : index
    %119 = vector.load %arg9[%c2_89, %c0_90, %c0_91] : memref<4x8x32xf32, #tpu.memory_space<vmem>>, vector<1x8x32xf32>
    %120 = vector.shape_cast %119 : vector<1x8x32xf32> to vector<8x32xf32>
    %cst_92 = arith.constant dense<0.000000e+00> : vector<8x32xf32>
    %121 = tpu.matmul %118, %120, %cst_92 {dimension_numbers = #tpu.dot_dimension_numbers<[1], [0], [0], [1], [0, 0, 1, 1], [], []>} : vector<8x8xf32>, vector<8x32xf32>, vector<8x32xf32> -> vector<8x32xf32>
    %122 = arith.addf %83, %121 : vector<8x32xf32>
    %c3 = arith.constant 3 : index
    %c0_93 = arith.constant 0 : index
    %c0_94 = arith.constant 0 : index
    %123 = vector.load %arg3[%c3, %c0_93, %c0_94] : memref<4x32x8xf32, #tpu.memory_space<vmem>>, vector<1x32x8xf32>
    %124 = vector.shape_cast %123 : vector<1x32x8xf32> to vector<32x8xf32>
    %cst_95 = arith.constant dense<0.000000e+00> : vector<8x8xf32>
    %125 = tpu.matmul %4, %124, %cst_95 {dimension_numbers = #tpu.dot_dimension_numbers<[1], [0], [0], [1], [0, 0, 1, 1], [], []>} : vector<8x32xf32>, vector<32x8xf32>, vector<8x8xf32> -> vector<8x8xf32>
    %c3_96 = arith.constant 3 : index
    %c0_97 = arith.constant 0 : index
    %c0_98 = arith.constant 0 : index
    %126 = vector.load %arg4[%c3_96, %c0_97, %c0_98] : memref<4x1x8xf32, #tpu.memory_space<vmem>>, vector<1x1x8xf32>
    %127 = vector.shape_cast %126 : vector<1x1x8xf32> to vector<1x8xf32>
    %128 = vector.broadcast %127 : vector<1x8xf32> to vector<8x8xf32>
    %129 = arith.addf %125, %128 : vector<8x8xf32>
    %cst_99 = arith.constant 0.353553385 : f32
    %130 = vector.broadcast %cst_99 : f32 to vector<8x8xf32>
    %131 = arith.mulf %129, %130 : vector<8x8xf32>
    %c3_100 = arith.constant 3 : index
    %c0_101 = arith.constant 0 : index
    %c0_102 = arith.constant 0 : index
    %132 = vector.load %arg5[%c3_100, %c0_101, %c0_102] : memref<4x32x8xf32, #tpu.memory_space<vmem>>, vector<1x32x8xf32>
    %133 = vector.shape_cast %132 : vector<1x32x8xf32> to vector<32x8xf32>
    %cst_103 = arith.constant dense<0.000000e+00> : vector<8x8xf32>
    %134 = tpu.matmul %4, %133, %cst_103 {dimension_numbers = #tpu.dot_dimension_numbers<[1], [0], [0], [1], [0, 0, 1, 1], [], []>} : vector<8x32xf32>, vector<32x8xf32>, vector<8x8xf32> -> vector<8x8xf32>
    %c3_104 = arith.constant 3 : index
    %c0_105 = arith.constant 0 : index
    %c0_106 = arith.constant 0 : index
    %135 = vector.load %arg6[%c3_104, %c0_105, %c0_106] : memref<4x1x8xf32, #tpu.memory_space<vmem>>, vector<1x1x8xf32>
    %136 = vector.shape_cast %135 : vector<1x1x8xf32> to vector<1x8xf32>
    %137 = vector.broadcast %136 : vector<1x8xf32> to vector<8x8xf32>
    %138 = arith.addf %134, %137 : vector<8x8xf32>
    %c3_107 = arith.constant 3 : index
    %c0_108 = arith.constant 0 : index
    %c0_109 = arith.constant 0 : index
    %139 = vector.load %arg7[%c3_107, %c0_108, %c0_109] : memref<4x32x8xf32, #tpu.memory_space<vmem>>, vector<1x32x8xf32>
    %140 = vector.shape_cast %139 : vector<1x32x8xf32> to vector<32x8xf32>
    %cst_110 = arith.constant dense<0.000000e+00> : vector<8x8xf32>
    %141 = tpu.matmul %1, %140, %cst_110 {dimension_numbers = #tpu.dot_dimension_numbers<[1], [0], [0], [1], [0, 0, 1, 1], [], []>} : vector<8x32xf32>, vector<32x8xf32>, vector<8x8xf32> -> vector<8x8xf32>
    %c3_111 = arith.constant 3 : index
    %c0_112 = arith.constant 0 : index
    %c0_113 = arith.constant 0 : index
    %142 = vector.load %arg8[%c3_111, %c0_112, %c0_113] : memref<4x1x8xf32, #tpu.memory_space<vmem>>, vector<1x1x8xf32>
    %143 = vector.shape_cast %142 : vector<1x1x8xf32> to vector<1x8xf32>
    %144 = vector.broadcast %143 : vector<1x8xf32> to vector<8x8xf32>
    %145 = arith.addf %141, %144 : vector<8x8xf32>
    %cst_114 = arith.constant dense<0.000000e+00> : vector<8x8xf32>
    %146 = tpu.matmul %131, %138, %cst_114 {dimension_numbers = #tpu.dot_dimension_numbers<[1], [1], [0], [0], [0, 0, 1, 0], [], []>} : vector<8x8xf32>, vector<8x8xf32>, vector<8x8xf32> -> vector<8x8xf32>
    %cst_115 = arith.constant dense<0xFF800000> : vector<8xf32>
    %147 = vector.multi_reduction <maximumf>, %146, %cst_115 [1] : vector<8x8xf32> to vector<8xf32>
    %148 = vector.shape_cast %147 : vector<8xf32> to vector<8x1xf32>
    %149 = vector.broadcast %148 : vector<8x1xf32> to vector<8x8xf32>
    %150 = arith.subf %146, %149 : vector<8x8xf32>
    %151 = math.exp %150 : vector<8x8xf32>
    %cst_116 = arith.constant dense<0.000000e+00> : vector<8xf32>
    %152 = vector.multi_reduction <add>, %151, %cst_116 [1] : vector<8x8xf32> to vector<8xf32>
    %153 = vector.shape_cast %152 : vector<8xf32> to vector<8x1xf32>
    %154 = tpu.reciprocal %153 {approx = true} : vector<8x1xf32> -> vector<8x1xf32>
    %155 = vector.broadcast %154 : vector<8x1xf32> to vector<8x8xf32>
    %156 = arith.mulf %151, %155 : vector<8x8xf32>
    %cst_117 = arith.constant dense<0.000000e+00> : vector<8x8xf32>
    %157 = tpu.matmul %156, %145, %cst_117 {dimension_numbers = #tpu.dot_dimension_numbers<[1], [0], [0], [1], [0, 0, 1, 1], [], []>} : vector<8x8xf32>, vector<8x8xf32>, vector<8x8xf32> -> vector<8x8xf32>
    %c3_118 = arith.constant 3 : index
    %c0_119 = arith.constant 0 : index
    %c0_120 = arith.constant 0 : index
    %158 = vector.load %arg9[%c3_118, %c0_119, %c0_120] : memref<4x8x32xf32, #tpu.memory_space<vmem>>, vector<1x8x32xf32>
    %159 = vector.shape_cast %158 : vector<1x8x32xf32> to vector<8x32xf32>
    %cst_121 = arith.constant dense<0.000000e+00> : vector<8x32xf32>
    %160 = tpu.matmul %157, %159, %cst_121 {dimension_numbers = #tpu.dot_dimension_numbers<[1], [0], [0], [1], [0, 0, 1, 1], [], []>} : vector<8x8xf32>, vector<8x32xf32>, vector<8x32xf32> -> vector<8x32xf32>
    %161 = arith.addf %122, %160 : vector<8x32xf32>
    %c0_122 = arith.constant 0 : index
    %c0_123 = arith.constant 0 : index
    %162 = vector.load %arg10[%c0_122, %c0_123] : memref<1x32xf32, #tpu.memory_space<vmem>>, vector<1x32xf32>
    %163 = vector.broadcast %162 : vector<1x32xf32> to vector<8x32xf32>
    %164 = arith.addf %161, %163 : vector<8x32xf32>
    %c0_124 = arith.constant 0 : index
    %c0_125 = arith.constant 0 : index
    %165 = vector.load %arg11[%c0_124, %c0_125] : memref<1x32xf32, #tpu.memory_space<vmem>>, vector<1x32xf32>
    %c0_126 = arith.constant 0 : index
    %c0_127 = arith.constant 0 : index
    %166 = vector.load %arg12[%c0_126, %c0_127] : memref<1x32xf32, #tpu.memory_space<vmem>>, vector<1x32xf32>
    %167 = arith.addf %164, %1 : vector<8x32xf32>
    %cst_128 = arith.constant dense<0.000000e+00> : vector<8xf32>
    %168 = vector.multi_reduction <add>, %167, %cst_128 [1] : vector<8x32xf32> to vector<8xf32>
    %169 = vector.shape_cast %168 : vector<8xf32> to vector<8x1xf32>
    %cst_129 = arith.constant 3.200000e+01 : f32
    %170 = vector.broadcast %cst_129 : f32 to vector<8x1xf32>
    %171 = arith.divf %169, %170 : vector<8x1xf32>
    %172 = vector.broadcast %171 : vector<8x1xf32> to vector<8x32xf32>
    %173 = arith.subf %167, %172 : vector<8x32xf32>
    %174 = arith.mulf %173, %173 : vector<8x32xf32>
    %cst_130 = arith.constant dense<0.000000e+00> : vector<8xf32>
    %175 = vector.multi_reduction <add>, %174, %cst_130 [1] : vector<8x32xf32> to vector<8xf32>
    %176 = vector.shape_cast %175 : vector<8xf32> to vector<8x1xf32>
    %cst_131 = arith.constant 3.200000e+01 : f32
    %177 = vector.broadcast %cst_131 : f32 to vector<8x1xf32>
    %178 = arith.divf %176, %177 : vector<8x1xf32>
    %179 = vector.broadcast %171 : vector<8x1xf32> to vector<8x32xf32>
    %180 = arith.subf %167, %179 : vector<8x32xf32>
    %cst_132 = arith.constant 9.99999974E-6 : f32
    %181 = vector.broadcast %cst_132 : f32 to vector<8x1xf32>
    %182 = arith.addf %178, %181 : vector<8x1xf32>
    %183 = math.rsqrt %182 : vector<8x1xf32>
    %184 = vector.broadcast %183 : vector<8x1xf32> to vector<8x32xf32>
    %185 = arith.mulf %180, %184 : vector<8x32xf32>
    %186 = vector.broadcast %165 : vector<1x32xf32> to vector<8x32xf32>
    %187 = arith.mulf %185, %186 : vector<8x32xf32>
    %188 = vector.broadcast %166 : vector<1x32xf32> to vector<8x32xf32>
    %189 = arith.addf %187, %188 : vector<8x32xf32>
    %c0_133 = arith.constant 0 : index
    %c0_134 = arith.constant 0 : index
    %c0_135 = arith.constant 0 : index
    %190 = vector.load %arg13[%c0_133, %c0_134, %c0_135] : memref<1x8x32xf32, #tpu.memory_space<vmem>>, vector<1x8x32xf32>
    %191 = vector.shape_cast %190 : vector<1x8x32xf32> to vector<8x32xf32>
    %192 = vector.shape_cast %189 : vector<8x32xf32> to vector<1x8x32xf32>
    tpu.vector_store %arg13[%c0_133, %c0_134, %c0_135], %192 {strides = array<i32>} : memref<1x8x32xf32, #tpu.memory_space<vmem>>, vector<1x8x32xf32>,
    return
  }
  func.func @transform_0(%arg0: i32) -> (i32, i32, i32) {
    %c0_i32 = arith.constant 0 : i32
    %c0_i32_0 = arith.constant 0 : i32
    %c0_i32_1 = arith.constant 0 : i32
    return %arg0, %c0_i32, %c0_i32_0 : i32, i32, i32
  }
  func.func @transform_1(%arg0: i32) -> (i32, i32, i32) {
    %c0_i32 = arith.constant 0 : i32
    %c0_i32_0 = arith.constant 0 : i32
    %c0_i32_1 = arith.constant 0 : i32
    return %arg0, %c0_i32, %c0_i32_0 : i32, i32, i32
  }
  func.func @transform_2(%arg0: i32) -> (i32, i32, i32) {
    %c0_i32 = arith.constant 0 : i32
    %c0_i32_0 = arith.constant 0 : i32
    %c0_i32_1 = arith.constant 0 : i32
    %c0_i32_2 = arith.constant 0 : i32
    return %c0_i32, %c0_i32_0, %c0_i32_1 : i32, i32, i32
  }
  func.func @transform_3(%arg0: i32) -> (i32, i32, i32) {
    %c0_i32 = arith.constant 0 : i32
    %c0_i32_0 = arith.constant 0 : i32
    %c0_i32_1 = arith.constant 0 : i32
    %c0_i32_2 = arith.constant 0 : i32
    return %c0_i32, %c0_i32_0, %c0_i32_1 : i32, i32, i32
  }
  func.func @transform_4(%arg0: i32) -> (i32, i32, i32) {
    %c0_i32 = arith.constant 0 : i32
    %c0_i32_0 = arith.constant 0 : i32
    %c0_i32_1 = arith.constant 0 : i32
    %c0_i32_2 = arith.constant 0 : i32
    return %c0_i32, %c0_i32_0, %c0_i32_1 : i32, i32, i32
  }
  func.func @transform_5(%arg0: i32) -> (i32, i32, i32) {
    %c0_i32 = arith.constant 0 : i32
    %c0_i32_0 = arith.constant 0 : i32
    %c0_i32_1 = arith.constant 0 : i32
    %c0_i32_2 = arith.constant 0 : i32
    return %c0_i32, %c0_i32_0, %c0_i32_1 : i32, i32, i32
  }
  func.func @transform_6(%arg0: i32) -> (i32, i32, i32) {
    %c0_i32 = arith.constant 0 : i32
    %c0_i32_0 = arith.constant 0 : i32
    %c0_i32_1 = arith.constant 0 : i32
    %c0_i32_2 = arith.constant 0 : i32
    return %c0_i32, %c0_i32_0, %c0_i32_1 : i32, i32, i32
  }
  func.func @transform_7(%arg0: i32) -> (i32, i32, i32) {
    %c0_i32 = arith.constant 0 : i32
    %c0_i32_0 = arith.constant 0 : i32
    %c0_i32_1 = arith.constant 0 : i32
    %c0_i32_2 = arith.constant 0 : i32
    return %c0_i32, %c0_i32_0, %c0_i32_1 : i32, i32, i32
  }
  func.func @transform_8(%arg0: i32) -> (i32, i32, i32) {
    %c0_i32 = arith.constant 0 : i32
    %c0_i32_0 = arith.constant 0 : i32
    %c0_i32_1 = arith.constant 0 : i32
    %c0_i32_2 = arith.constant 0 : i32
    return %c0_i32, %c0_i32_0, %c0_i32_1 : i32, i32, i32
  }
  func.func @transform_9(%arg0: i32) -> (i32, i32) {
    %c0_i32 = arith.constant 0 : i32
    %c0_i32_0 = arith.constant 0 : i32
    %c0_i32_1 = arith.constant 0 : i32
    return %c0_i32, %c0_i32_0 : i32, i32
  }
  func.func @transform_10(%arg0: i32) -> (i32, i32) {
    %c0_i32 = arith.constant 0 : i32
    %c0_i32_0 = arith.constant 0 : i32
    %c0_i32_1 = arith.constant 0 : i32
    return %c0_i32, %c0_i32_0 : i32, i32
  }
  func.func @transform_11(%arg0: i32) -> (i32, i32) {
    %c0_i32 = arith.constant 0 : i32
    %c0_i32_0 = arith.constant 0 : i32
    %c0_i32_1 = arith.constant 0 : i32
    return %c0_i32, %c0_i32_0 : i32, i32
  }
  func.func @transform_12(%arg0: i32) -> (i32, i32, i32) {
    %c0_i32 = arith.constant 0 : i32
    %c0_i32_0 = arith.constant 0 : i32
    %c0_i32_1 = arith.constant 0 : i32
    return %arg0, %c0_i32, %c0_i32_0 : i32, i32, i32
  }
}

module attributes {stable_mosaic.version = 11 : i64} {
  func.func @_ffn_ln_kernel(%arg0: i32, %arg1: memref<16x32xf32, #tpu.memory_space<vmem>>, %arg2: memref<32x64xf32, #tpu.memory_space<vmem>>, %arg3: memref<1x64xf32, #tpu.memory_space<vmem>>, %arg4: memref<64x32xf32, #tpu.memory_space<vmem>>, %arg5: memref<1x32xf32, #tpu.memory_space<vmem>>, %arg6: memref<1x32xf32, #tpu.memory_space<vmem>>, %arg7: memref<1x32xf32, #tpu.memory_space<vmem>>, %arg8: memref<16x32xf32, #tpu.memory_space<vmem>>) attributes {dimension_semantics = [#tpu.dimension_semantics<parallel>], iteration_bounds = array<i64: 1>, scalar_prefetch = 0 : i64, scratch_operands = 0 : i64, tpu.core_type = #tpu.core_type<tc>, window_params = [{transform_indices = @transform_0, window_bounds = array<i64: 16, 32>}, {pipeline_mode = #tpu.pipeline_mode<synchronous>, transform_indices = @transform_1, window_bounds = array<i64: 32, 64>}, {pipeline_mode = #tpu.pipeline_mode<synchronous>, transform_indices = @transform_2, window_bounds = array<i64: 1, 64>}, {pipeline_mode = #tpu.pipeline_mode<synchronous>, transform_indices = @transform_3, window_bounds = array<i64: 64, 32>}, {pipeline_mode = #tpu.pipeline_mode<synchronous>, transform_indices = @transform_4, window_bounds = array<i64: 1, 32>}, {pipeline_mode = #tpu.pipeline_mode<synchronous>, transform_indices = @transform_5, window_bounds = array<i64: 1, 32>}, {pipeline_mode = #tpu.pipeline_mode<synchronous>, transform_indices = @transform_6, window_bounds = array<i64: 1, 32>}, {transform_indices = @transform_7, window_bounds = array<i64: 16, 32>}]} {
    %c0 = arith.constant 0 : index
    %c0_0 = arith.constant 0 : index
    %0 = vector.load %arg1[%c0, %c0_0] : memref<16x32xf32, #tpu.memory_space<vmem>>, vector<16x32xf32>
    %c0_1 = arith.constant 0 : index
    %c0_2 = arith.constant 0 : index
    %1 = vector.load %arg2[%c0_1, %c0_2] : memref<32x64xf32, #tpu.memory_space<vmem>>, vector<32x64xf32>
    %cst = arith.constant dense<0.000000e+00> : vector<16x64xf32>
    %2 = tpu.matmul %0, %1, %cst {dimension_numbers = #tpu.dot_dimension_numbers<[1], [0], [0], [1], [0, 0, 1, 1], [], []>} : vector<16x32xf32>, vector<32x64xf32>, vector<16x64xf32> -> vector<16x64xf32>
    %c0_3 = arith.constant 0 : index
    %c0_4 = arith.constant 0 : index
    %3 = vector.load %arg3[%c0_3, %c0_4] : memref<1x64xf32, #tpu.memory_space<vmem>>, vector<1x64xf32>
    %4 = vector.broadcast %3 : vector<1x64xf32> to vector<16x64xf32>
    %5 = arith.addf %2, %4 : vector<16x64xf32>
    %cst_5 = arith.constant 0.000000e+00 : f32
    %6 = vector.broadcast %cst_5 : f32 to vector<16x64xf32>
    %7 = arith.maximumf %5, %6 : vector<16x64xf32>
    %c0_6 = arith.constant 0 : index
    %c0_7 = arith.constant 0 : index
    %8 = vector.load %arg4[%c0_6, %c0_7] : memref<64x32xf32, #tpu.memory_space<vmem>>, vector<64x32xf32>
    %cst_8 = arith.constant dense<0.000000e+00> : vector<16x32xf32>
    %9 = tpu.matmul %7, %8, %cst_8 {dimension_numbers = #tpu.dot_dimension_numbers<[1], [0], [0], [1], [0, 0, 1, 1], [], []>} : vector<16x64xf32>, vector<64x32xf32>, vector<16x32xf32> -> vector<16x32xf32>
    %c0_9 = arith.constant 0 : index
    %c0_10 = arith.constant 0 : index
    %10 = vector.load %arg5[%c0_9, %c0_10] : memref<1x32xf32, #tpu.memory_space<vmem>>, vector<1x32xf32>
    %11 = vector.broadcast %10 : vector<1x32xf32> to vector<16x32xf32>
    %12 = arith.addf %9, %11 : vector<16x32xf32>
    %c0_11 = arith.constant 0 : index
    %c0_12 = arith.constant 0 : index
    %13 = vector.load %arg6[%c0_11, %c0_12] : memref<1x32xf32, #tpu.memory_space<vmem>>, vector<1x32xf32>
    %c0_13 = arith.constant 0 : index
    %c0_14 = arith.constant 0 : index
    %14 = vector.load %arg7[%c0_13, %c0_14] : memref<1x32xf32, #tpu.memory_space<vmem>>, vector<1x32xf32>
    %15 = arith.addf %12, %0 : vector<16x32xf32>
    %cst_15 = arith.constant dense<0.000000e+00> : vector<16xf32>
    %16 = vector.multi_reduction <add>, %15, %cst_15 [1] : vector<16x32xf32> to vector<16xf32>
    %17 = vector.shape_cast %16 : vector<16xf32> to vector<16x1xf32>
    %cst_16 = arith.constant 3.200000e+01 : f32
    %18 = vector.broadcast %cst_16 : f32 to vector<16x1xf32>
    %19 = arith.divf %17, %18 : vector<16x1xf32>
    %20 = vector.broadcast %19 : vector<16x1xf32> to vector<16x32xf32>
    %21 = arith.subf %15, %20 : vector<16x32xf32>
    %22 = arith.mulf %21, %21 : vector<16x32xf32>
    %cst_17 = arith.constant dense<0.000000e+00> : vector<16xf32>
    %23 = vector.multi_reduction <add>, %22, %cst_17 [1] : vector<16x32xf32> to vector<16xf32>
    %24 = vector.shape_cast %23 : vector<16xf32> to vector<16x1xf32>
    %cst_18 = arith.constant 3.200000e+01 : f32
    %25 = vector.broadcast %cst_18 : f32 to vector<16x1xf32>
    %26 = arith.divf %24, %25 : vector<16x1xf32>
    %27 = vector.broadcast %19 : vector<16x1xf32> to vector<16x32xf32>
    %28 = arith.subf %15, %27 : vector<16x32xf32>
    %cst_19 = arith.constant 9.99999974E-6 : f32
    %29 = vector.broadcast %cst_19 : f32 to vector<16x1xf32>
    %30 = arith.addf %26, %29 : vector<16x1xf32>
    %31 = math.rsqrt %30 : vector<16x1xf32>
    %32 = vector.broadcast %31 : vector<16x1xf32> to vector<16x32xf32>
    %33 = arith.mulf %28, %32 : vector<16x32xf32>
    %34 = vector.broadcast %13 : vector<1x32xf32> to vector<16x32xf32>
    %35 = arith.mulf %33, %34 : vector<16x32xf32>
    %36 = vector.broadcast %14 : vector<1x32xf32> to vector<16x32xf32>
    %37 = arith.addf %35, %36 : vector<16x32xf32>
    %c0_20 = arith.constant 0 : index
    %c0_21 = arith.constant 0 : index
    %38 = vector.load %arg8[%c0_20, %c0_21] : memref<16x32xf32, #tpu.memory_space<vmem>>, vector<16x32xf32>
    tpu.vector_store %arg8[%c0_20, %c0_21], %37 {strides = array<i32>} : memref<16x32xf32, #tpu.memory_space<vmem>>, vector<16x32xf32>,
    return
  }
  func.func @transform_0(%arg0: i32) -> (i32, i32) {
    %c0_i32 = arith.constant 0 : i32
    %c0_i32_0 = arith.constant 0 : i32
    return %arg0, %c0_i32 : i32, i32
  }
  func.func @transform_1(%arg0: i32) -> (i32, i32) {
    %c0_i32 = arith.constant 0 : i32
    %c0_i32_0 = arith.constant 0 : i32
    %c0_i32_1 = arith.constant 0 : i32
    return %c0_i32, %c0_i32_0 : i32, i32
  }
  func.func @transform_2(%arg0: i32) -> (i32, i32) {
    %c0_i32 = arith.constant 0 : i32
    %c0_i32_0 = arith.constant 0 : i32
    %c0_i32_1 = arith.constant 0 : i32
    return %c0_i32, %c0_i32_0 : i32, i32
  }
  func.func @transform_3(%arg0: i32) -> (i32, i32) {
    %c0_i32 = arith.constant 0 : i32
    %c0_i32_0 = arith.constant 0 : i32
    %c0_i32_1 = arith.constant 0 : i32
    return %c0_i32, %c0_i32_0 : i32, i32
  }
  func.func @transform_4(%arg0: i32) -> (i32, i32) {
    %c0_i32 = arith.constant 0 : i32
    %c0_i32_0 = arith.constant 0 : i32
    %c0_i32_1 = arith.constant 0 : i32
    return %c0_i32, %c0_i32_0 : i32, i32
  }
  func.func @transform_5(%arg0: i32) -> (i32, i32) {
    %c0_i32 = arith.constant 0 : i32
    %c0_i32_0 = arith.constant 0 : i32
    %c0_i32_1 = arith.constant 0 : i32
    return %c0_i32, %c0_i32_0 : i32, i32
  }
  func.func @transform_6(%arg0: i32) -> (i32, i32) {
    %c0_i32 = arith.constant 0 : i32
    %c0_i32_0 = arith.constant 0 : i32
    %c0_i32_1 = arith.constant 0 : i32
    return %c0_i32, %c0_i32_0 : i32, i32
  }
  func.func @transform_7(%arg0: i32) -> (i32, i32) {
    %c0_i32 = arith.constant 0 : i32
    %c0_i32_0 = arith.constant 0 : i32
    return %arg0, %c0_i32 : i32, i32
  }
}

module attributes {stable_mosaic.version = 11 : i64} {
  func.func @_cross_attn_ln_kernel(%arg0: i32, %arg1: memref<1x8x32xf32, #tpu.memory_space<vmem>>, %arg2: memref<1x8x32xf32, #tpu.memory_space<vmem>>, %arg3: memref<1x16x32xf32, #tpu.memory_space<vmem>>, %arg4: memref<1x16x32xf32, #tpu.memory_space<vmem>>, %arg5: memref<4x32x8xf32, #tpu.memory_space<vmem>>, %arg6: memref<4x1x8xf32, #tpu.memory_space<vmem>>, %arg7: memref<4x32x8xf32, #tpu.memory_space<vmem>>, %arg8: memref<4x1x8xf32, #tpu.memory_space<vmem>>, %arg9: memref<4x32x8xf32, #tpu.memory_space<vmem>>, %arg10: memref<4x1x8xf32, #tpu.memory_space<vmem>>, %arg11: memref<4x8x32xf32, #tpu.memory_space<vmem>>, %arg12: memref<1x32xf32, #tpu.memory_space<vmem>>, %arg13: memref<1x32xf32, #tpu.memory_space<vmem>>, %arg14: memref<1x32xf32, #tpu.memory_space<vmem>>, %arg15: memref<1x8x32xf32, #tpu.memory_space<vmem>>) attributes {dimension_semantics = [#tpu.dimension_semantics<parallel>], iteration_bounds = array<i64: 2>, scalar_prefetch = 0 : i64, scratch_operands = 0 : i64, tpu.core_type = #tpu.core_type<tc>, window_params = [{transform_indices = @transform_0, window_bounds = array<i64: 1, 8, 32>}, {transform_indices = @transform_1, window_bounds = array<i64: 1, 8, 32>}, {transform_indices = @transform_2, window_bounds = array<i64: 1, 16, 32>}, {transform_indices = @transform_3, window_bounds = array<i64: 1, 16, 32>}, {pipeline_mode = #tpu.pipeline_mode<synchronous>, transform_indices = @transform_4, window_bounds = array<i64: 4, 32, 8>}, {pipeline_mode = #tpu.pipeline_mode<synchronous>, transform_indices = @transform_5, window_bounds = array<i64: 4, 1, 8>}, {pipeline_mode = #tpu.pipeline_mode<synchronous>, transform_indices = @transform_6, window_bounds = array<i64: 4, 32, 8>}, {pipeline_mode = #tpu.pipeline_mode<synchronous>, transform_indices = @transform_7, window_bounds = array<i64: 4, 1, 8>}, {pipeline_mode = #tpu.pipeline_mode<synchronous>, transform_indices = @transform_8, window_bounds = array<i64: 4, 32, 8>}, {pipeline_mode = #tpu.pipeline_mode<synchronous>, transform_indices = @transform_9, window_bounds = array<i64: 4, 1, 8>}, {pipeline_mode = #tpu.pipeline_mode<synchronous>, transform_indices = @transform_10, window_bounds = array<i64: 4, 8, 32>}, {pipeline_mode = #tpu.pipeline_mode<synchronous>, transform_indices = @transform_11, window_bounds = array<i64: 1, 32>}, {pipeline_mode = #tpu.pipeline_mode<synchronous>, transform_indices = @transform_12, window_bounds = array<i64: 1, 32>}, {pipeline_mode = #tpu.pipeline_mode<synchronous>, transform_indices = @transform_13, window_bounds = array<i64: 1, 32>}, {transform_indices = @transform_14, window_bounds = array<i64: 1, 8, 32>}]} {
    %c0 = arith.constant 0 : index
    %c0_0 = arith.constant 0 : index
    %c0_1 = arith.constant 0 : index
    %0 = vector.load %arg1[%c0, %c0_0, %c0_1] : memref<1x8x32xf32, #tpu.memory_space<vmem>>, vector<1x8x32xf32>
    %1 = vector.shape_cast %0 : vector<1x8x32xf32> to vector<8x32xf32>
    %c0_2 = arith.constant 0 : index
    %c0_3 = arith.constant 0 : index
    %c0_4 = arith.constant 0 : index
    %2 = vector.load %arg2[%c0_2, %c0_3, %c0_4] : memref<1x8x32xf32, #tpu.memory_space<vmem>>, vector<1x8x32xf32>
    %3 = vector.shape_cast %2 : vector<1x8x32xf32> to vector<8x32xf32>
    %4 = arith.addf %1, %3 : vector<8x32xf32>
    %c0_5 = arith.constant 0 : index
    %c0_6 = arith.constant 0 : index
    %c0_7 = arith.constant 0 : index
    %5 = vector.load %arg3[%c0_5, %c0_6, %c0_7] : memref<1x16x32xf32, #tpu.memory_space<vmem>>, vector<1x16x32xf32>
    %6 = vector.shape_cast %5 : vector<1x16x32xf32> to vector<16x32xf32>
    %c0_8 = arith.constant 0 : index
    %c0_9 = arith.constant 0 : index
    %c0_10 = arith.constant 0 : index
    %7 = vector.load %arg4[%c0_8, %c0_9, %c0_10] : memref<1x16x32xf32, #tpu.memory_space<vmem>>, vector<1x16x32xf32>
    %8 = vector.shape_cast %7 : vector<1x16x32xf32> to vector<16x32xf32>
    %9 = arith.addf %6, %8 : vector<16x32xf32>
    %cst = arith.constant 0.000000e+00 : f32
    %10 = vector.broadcast %cst : f32 to vector<8x32xf32>
    %c0_11 = arith.constant 0 : index
    %c0_12 = arith.constant 0 : index
    %c0_13 = arith.constant 0 : index
    %11 = vector.load %arg5[%c0_11, %c0_12, %c0_13] : memref<4x32x8xf32, #tpu.memory_space<vmem>>, vector<1x32x8xf32>
    %12 = vector.shape_cast %11 : vector<1x32x8xf32> to vector<32x8xf32>
    %cst_14 = arith.constant dense<0.000000e+00> : vector<8x8xf32>
    %13 = tpu.matmul %4, %12, %cst_14 {dimension_numbers = #tpu.dot_dimension_numbers<[1], [0], [0], [1], [0, 0, 1, 1], [], []>} : vector<8x32xf32>, vector<32x8xf32>, vector<8x8xf32> -> vector<8x8xf32>
    %c0_15 = arith.constant 0 : index
    %c0_16 = arith.constant 0 : index
    %c0_17 = arith.constant 0 : index
    %14 = vector.load %arg6[%c0_15, %c0_16, %c0_17] : memref<4x1x8xf32, #tpu.memory_space<vmem>>, vector<1x1x8xf32>
    %15 = vector.shape_cast %14 : vector<1x1x8xf32> to vector<1x8xf32>
    %16 = vector.broadcast %15 : vector<1x8xf32> to vector<8x8xf32>
    %17 = arith.addf %13, %16 : vector<8x8xf32>
    %cst_18 = arith.constant 0.353553385 : f32
    %18 = vector.broadcast %cst_18 : f32 to vector<8x8xf32>
    %19 = arith.mulf %17, %18 : vector<8x8xf32>
    %c0_19 = arith.constant 0 : index
    %c0_20 = arith.constant 0 : index
    %c0_21 = arith.constant 0 : index
    %20 = vector.load %arg7[%c0_19, %c0_20, %c0_21] : memref<4x32x8xf32, #tpu.memory_space<vmem>>, vector<1x32x8xf32>
    %21 = vector.shape_cast %20 : vector<1x32x8xf32> to vector<32x8xf32>
    %cst_22 = arith.constant dense<0.000000e+00> : vector<16x8xf32>
    %22 = tpu.matmul %9, %21, %cst_22 {dimension_numbers = #tpu.dot_dimension_numbers<[1], [0], [0], [1], [0, 0, 1, 1], [], []>} : vector<16x32xf32>, vector<32x8xf32>, vector<16x8xf32> -> vector<16x8xf32>
    %c0_23 = arith.constant 0 : index
    %c0_24 = arith.constant 0 : index
    %c0_25 = arith.constant 0 : index
    %23 = vector.load %arg8[%c0_23, %c0_24, %c0_25] : memref<4x1x8xf32, #tpu.memory_space<vmem>>, vector<1x1x8xf32>
    %24 = vector.shape_cast %23 : vector<1x1x8xf32> to vector<1x8xf32>
    %25 = vector.broadcast %24 : vector<1x8xf32> to vector<16x8xf32>
    %26 = arith.addf %22, %25 : vector<16x8xf32>
    %c0_26 = arith.constant 0 : index
    %c0_27 = arith.constant 0 : index
    %c0_28 = arith.constant 0 : index
    %27 = vector.load %arg9[%c0_26, %c0_27, %c0_28] : memref<4x32x8xf32, #tpu.memory_space<vmem>>, vector<1x32x8xf32>
    %28 = vector.shape_cast %27 : vector<1x32x8xf32> to vector<32x8xf32>
    %cst_29 = arith.constant dense<0.000000e+00> : vector<16x8xf32>
    %29 = tpu.matmul %6, %28, %cst_29 {dimension_numbers = #tpu.dot_dimension_numbers<[1], [0], [0], [1], [0, 0, 1, 1], [], []>} : vector<16x32xf32>, vector<32x8xf32>, vector<16x8xf32> -> vector<16x8xf32>
    %c0_30 = arith.constant 0 : index
    %c0_31 = arith.constant 0 : index
    %c0_32 = arith.constant 0 : index
    %30 = vector.load %arg10[%c0_30, %c0_31, %c0_32] : memref<4x1x8xf32, #tpu.memory_space<vmem>>, vector<1x1x8xf32>
    %31 = vector.shape_cast %30 : vector<1x1x8xf32> to vector<1x8xf32>
    %32 = vector.broadcast %31 : vector<1x8xf32> to vector<16x8xf32>
    %33 = arith.addf %29, %32 : vector<16x8xf32>
    %cst_33 = arith.constant dense<0.000000e+00> : vector<8x16xf32>
    %34 = tpu.matmul %19, %26, %cst_33 {dimension_numbers = #tpu.dot_dimension_numbers<[1], [1], [0], [0], [0, 0, 1, 0], [], []>} : vector<8x8xf32>, vector<16x8xf32>, vector<8x16xf32> -> vector<8x16xf32>
    %cst_34 = arith.constant dense<0xFF800000> : vector<8xf32>
    %35 = vector.multi_reduction <maximumf>, %34, %cst_34 [1] : vector<8x16xf32> to vector<8xf32>
    %36 = vector.shape_cast %35 : vector<8xf32> to vector<8x1xf32>
    %37 = vector.broadcast %36 : vector<8x1xf32> to vector<8x16xf32>
    %38 = arith.subf %34, %37 : vector<8x16xf32>
    %39 = math.exp %38 : vector<8x16xf32>
    %cst_35 = arith.constant dense<0.000000e+00> : vector<8xf32>
    %40 = vector.multi_reduction <add>, %39, %cst_35 [1] : vector<8x16xf32> to vector<8xf32>
    %41 = vector.shape_cast %40 : vector<8xf32> to vector<8x1xf32>
    %42 = tpu.reciprocal %41 {approx = true} : vector<8x1xf32> -> vector<8x1xf32>
    %43 = vector.broadcast %42 : vector<8x1xf32> to vector<8x16xf32>
    %44 = arith.mulf %39, %43 : vector<8x16xf32>
    %cst_36 = arith.constant dense<0.000000e+00> : vector<8x8xf32>
    %45 = tpu.matmul %44, %33, %cst_36 {dimension_numbers = #tpu.dot_dimension_numbers<[1], [0], [0], [1], [0, 0, 1, 1], [], []>} : vector<8x16xf32>, vector<16x8xf32>, vector<8x8xf32> -> vector<8x8xf32>
    %c0_37 = arith.constant 0 : index
    %c0_38 = arith.constant 0 : index
    %c0_39 = arith.constant 0 : index
    %46 = vector.load %arg11[%c0_37, %c0_38, %c0_39] : memref<4x8x32xf32, #tpu.memory_space<vmem>>, vector<1x8x32xf32>
    %47 = vector.shape_cast %46 : vector<1x8x32xf32> to vector<8x32xf32>
    %cst_40 = arith.constant dense<0.000000e+00> : vector<8x32xf32>
    %48 = tpu.matmul %45, %47, %cst_40 {dimension_numbers = #tpu.dot_dimension_numbers<[1], [0], [0], [1], [0, 0, 1, 1], [], []>} : vector<8x8xf32>, vector<8x32xf32>, vector<8x32xf32> -> vector<8x32xf32>
    %49 = arith.addf %10, %48 : vector<8x32xf32>
    %c1 = arith.constant 1 : index
    %c0_41 = arith.constant 0 : index
    %c0_42 = arith.constant 0 : index
    %50 = vector.load %arg5[%c1, %c0_41, %c0_42] : memref<4x32x8xf32, #tpu.memory_space<vmem>>, vector<1x32x8xf32>
    %51 = vector.shape_cast %50 : vector<1x32x8xf32> to vector<32x8xf32>
    %cst_43 = arith.constant dense<0.000000e+00> : vector<8x8xf32>
    %52 = tpu.matmul %4, %51, %cst_43 {dimension_numbers = #tpu.dot_dimension_numbers<[1], [0], [0], [1], [0, 0, 1, 1], [], []>} : vector<8x32xf32>, vector<32x8xf32>, vector<8x8xf32> -> vector<8x8xf32>
    %c1_44 = arith.constant 1 : index
    %c0_45 = arith.constant 0 : index
    %c0_46 = arith.constant 0 : index
    %53 = vector.load %arg6[%c1_44, %c0_45, %c0_46] : memref<4x1x8xf32, #tpu.memory_space<vmem>>, vector<1x1x8xf32>
    %54 = vector.shape_cast %53 : vector<1x1x8xf32> to vector<1x8xf32>
    %55 = vector.broadcast %54 : vector<1x8xf32> to vector<8x8xf32>
    %56 = arith.addf %52, %55 : vector<8x8xf32>
    %cst_47 = arith.constant 0.353553385 : f32
    %57 = vector.broadcast %cst_47 : f32 to vector<8x8xf32>
    %58 = arith.mulf %56, %57 : vector<8x8xf32>
    %c1_48 = arith.constant 1 : index
    %c0_49 = arith.constant 0 : index
    %c0_50 = arith.constant 0 : index
    %59 = vector.load %arg7[%c1_48, %c0_49, %c0_50] : memref<4x32x8xf32, #tpu.memory_space<vmem>>, vector<1x32x8xf32>
    %60 = vector.shape_cast %59 : vector<1x32x8xf32> to vector<32x8xf32>
    %cst_51 = arith.constant dense<0.000000e+00> : vector<16x8xf32>
    %61 = tpu.matmul %9, %60, %cst_51 {dimension_numbers = #tpu.dot_dimension_numbers<[1], [0], [0], [1], [0, 0, 1, 1], [], []>} : vector<16x32xf32>, vector<32x8xf32>, vector<16x8xf32> -> vector<16x8xf32>
    %c1_52 = arith.constant 1 : index
    %c0_53 = arith.constant 0 : index
    %c0_54 = arith.constant 0 : index
    %62 = vector.load %arg8[%c1_52, %c0_53, %c0_54] : memref<4x1x8xf32, #tpu.memory_space<vmem>>, vector<1x1x8xf32>
    %63 = vector.shape_cast %62 : vector<1x1x8xf32> to vector<1x8xf32>
    %64 = vector.broadcast %63 : vector<1x8xf32> to vector<16x8xf32>
    %65 = arith.addf %61, %64 : vector<16x8xf32>
    %c1_55 = arith.constant 1 : index
    %c0_56 = arith.constant 0 : index
    %c0_57 = arith.constant 0 : index
    %66 = vector.load %arg9[%c1_55, %c0_56, %c0_57] : memref<4x32x8xf32, #tpu.memory_space<vmem>>, vector<1x32x8xf32>
    %67 = vector.shape_cast %66 : vector<1x32x8xf32> to vector<32x8xf32>
    %cst_58 = arith.constant dense<0.000000e+00> : vector<16x8xf32>
    %68 = tpu.matmul %6, %67, %cst_58 {dimension_numbers = #tpu.dot_dimension_numbers<[1], [0], [0], [1], [0, 0, 1, 1], [], []>} : vector<16x32xf32>, vector<32x8xf32>, vector<16x8xf32> -> vector<16x8xf32>
    %c1_59 = arith.constant 1 : index
    %c0_60 = arith.constant 0 : index
    %c0_61 = arith.constant 0 : index
    %69 = vector.load %arg10[%c1_59, %c0_60, %c0_61] : memref<4x1x8xf32, #tpu.memory_space<vmem>>, vector<1x1x8xf32>
    %70 = vector.shape_cast %69 : vector<1x1x8xf32> to vector<1x8xf32>
    %71 = vector.broadcast %70 : vector<1x8xf32> to vector<16x8xf32>
    %72 = arith.addf %68, %71 : vector<16x8xf32>
    %cst_62 = arith.constant dense<0.000000e+00> : vector<8x16xf32>
    %73 = tpu.matmul %58, %65, %cst_62 {dimension_numbers = #tpu.dot_dimension_numbers<[1], [1], [0], [0], [0, 0, 1, 0], [], []>} : vector<8x8xf32>, vector<16x8xf32>, vector<8x16xf32> -> vector<8x16xf32>
    %cst_63 = arith.constant dense<0xFF800000> : vector<8xf32>
    %74 = vector.multi_reduction <maximumf>, %73, %cst_63 [1] : vector<8x16xf32> to vector<8xf32>
    %75 = vector.shape_cast %74 : vector<8xf32> to vector<8x1xf32>
    %76 = vector.broadcast %75 : vector<8x1xf32> to vector<8x16xf32>
    %77 = arith.subf %73, %76 : vector<8x16xf32>
    %78 = math.exp %77 : vector<8x16xf32>
    %cst_64 = arith.constant dense<0.000000e+00> : vector<8xf32>
    %79 = vector.multi_reduction <add>, %78, %cst_64 [1] : vector<8x16xf32> to vector<8xf32>
    %80 = vector.shape_cast %79 : vector<8xf32> to vector<8x1xf32>
    %81 = tpu.reciprocal %80 {approx = true} : vector<8x1xf32> -> vector<8x1xf32>
    %82 = vector.broadcast %81 : vector<8x1xf32> to vector<8x16xf32>
    %83 = arith.mulf %78, %82 : vector<8x16xf32>
    %cst_65 = arith.constant dense<0.000000e+00> : vector<8x8xf32>
    %84 = tpu.matmul %83, %72, %cst_65 {dimension_numbers = #tpu.dot_dimension_numbers<[1], [0], [0], [1], [0, 0, 1, 1], [], []>} : vector<8x16xf32>, vector<16x8xf32>, vector<8x8xf32> -> vector<8x8xf32>
    %c1_66 = arith.constant 1 : index
    %c0_67 = arith.constant 0 : index
    %c0_68 = arith.constant 0 : index
    %85 = vector.load %arg11[%c1_66, %c0_67, %c0_68] : memref<4x8x32xf32, #tpu.memory_space<vmem>>, vector<1x8x32xf32>
    %86 = vector.shape_cast %85 : vector<1x8x32xf32> to vector<8x32xf32>
    %cst_69 = arith.constant dense<0.000000e+00> : vector<8x32xf32>
    %87 = tpu.matmul %84, %86, %cst_69 {dimension_numbers = #tpu.dot_dimension_numbers<[1], [0], [0], [1], [0, 0, 1, 1], [], []>} : vector<8x8xf32>, vector<8x32xf32>, vector<8x32xf32> -> vector<8x32xf32>
    %88 = arith.addf %49, %87 : vector<8x32xf32>
    %c2 = arith.constant 2 : index
    %c0_70 = arith.constant 0 : index
    %c0_71 = arith.constant 0 : index
    %89 = vector.load %arg5[%c2, %c0_70, %c0_71] : memref<4x32x8xf32, #tpu.memory_space<vmem>>, vector<1x32x8xf32>
    %90 = vector.shape_cast %89 : vector<1x32x8xf32> to vector<32x8xf32>
    %cst_72 = arith.constant dense<0.000000e+00> : vector<8x8xf32>
    %91 = tpu.matmul %4, %90, %cst_72 {dimension_numbers = #tpu.dot_dimension_numbers<[1], [0], [0], [1], [0, 0, 1, 1], [], []>} : vector<8x32xf32>, vector<32x8xf32>, vector<8x8xf32> -> vector<8x8xf32>
    %c2_73 = arith.constant 2 : index
    %c0_74 = arith.constant 0 : index
    %c0_75 = arith.constant 0 : index
    %92 = vector.load %arg6[%c2_73, %c0_74, %c0_75] : memref<4x1x8xf32, #tpu.memory_space<vmem>>, vector<1x1x8xf32>
    %93 = vector.shape_cast %92 : vector<1x1x8xf32> to vector<1x8xf32>
    %94 = vector.broadcast %93 : vector<1x8xf32> to vector<8x8xf32>
    %95 = arith.addf %91, %94 : vector<8x8xf32>
    %cst_76 = arith.constant 0.353553385 : f32
    %96 = vector.broadcast %cst_76 : f32 to vector<8x8xf32>
    %97 = arith.mulf %95, %96 : vector<8x8xf32>
    %c2_77 = arith.constant 2 : index
    %c0_78 = arith.constant 0 : index
    %c0_79 = arith.constant 0 : index
    %98 = vector.load %arg7[%c2_77, %c0_78, %c0_79] : memref<4x32x8xf32, #tpu.memory_space<vmem>>, vector<1x32x8xf32>
    %99 = vector.shape_cast %98 : vector<1x32x8xf32> to vector<32x8xf32>
    %cst_80 = arith.constant dense<0.000000e+00> : vector<16x8xf32>
    %100 = tpu.matmul %9, %99, %cst_80 {dimension_numbers = #tpu.dot_dimension_numbers<[1], [0], [0], [1], [0, 0, 1, 1], [], []>} : vector<16x32xf32>, vector<32x8xf32>, vector<16x8xf32> -> vector<16x8xf32>
    %c2_81 = arith.constant 2 : index
    %c0_82 = arith.constant 0 : index
    %c0_83 = arith.constant 0 : index
    %101 = vector.load %arg8[%c2_81, %c0_82, %c0_83] : memref<4x1x8xf32, #tpu.memory_space<vmem>>, vector<1x1x8xf32>
    %102 = vector.shape_cast %101 : vector<1x1x8xf32> to vector<1x8xf32>
    %103 = vector.broadcast %102 : vector<1x8xf32> to vector<16x8xf32>
    %104 = arith.addf %100, %103 : vector<16x8xf32>
    %c2_84 = arith.constant 2 : index
    %c0_85 = arith.constant 0 : index
    %c0_86 = arith.constant 0 : index
    %105 = vector.load %arg9[%c2_84, %c0_85, %c0_86] : memref<4x32x8xf32, #tpu.memory_space<vmem>>, vector<1x32x8xf32>
    %106 = vector.shape_cast %105 : vector<1x32x8xf32> to vector<32x8xf32>
    %cst_87 = arith.constant dense<0.000000e+00> : vector<16x8xf32>
    %107 = tpu.matmul %6, %106, %cst_87 {dimension_numbers = #tpu.dot_dimension_numbers<[1], [0], [0], [1], [0, 0, 1, 1], [], []>} : vector<16x32xf32>, vector<32x8xf32>, vector<16x8xf32> -> vector<16x8xf32>
    %c2_88 = arith.constant 2 : index
    %c0_89 = arith.constant 0 : index
    %c0_90 = arith.constant 0 : index
    %108 = vector.load %arg10[%c2_88, %c0_89, %c0_90] : memref<4x1x8xf32, #tpu.memory_space<vmem>>, vector<1x1x8xf32>
    %109 = vector.shape_cast %108 : vector<1x1x8xf32> to vector<1x8xf32>
    %110 = vector.broadcast %109 : vector<1x8xf32> to vector<16x8xf32>
    %111 = arith.addf %107, %110 : vector<16x8xf32>
    %cst_91 = arith.constant dense<0.000000e+00> : vector<8x16xf32>
    %112 = tpu.matmul %97, %104, %cst_91 {dimension_numbers = #tpu.dot_dimension_numbers<[1], [1], [0], [0], [0, 0, 1, 0], [], []>} : vector<8x8xf32>, vector<16x8xf32>, vector<8x16xf32> -> vector<8x16xf32>
    %cst_92 = arith.constant dense<0xFF800000> : vector<8xf32>
    %113 = vector.multi_reduction <maximumf>, %112, %cst_92 [1] : vector<8x16xf32> to vector<8xf32>
    %114 = vector.shape_cast %113 : vector<8xf32> to vector<8x1xf32>
    %115 = vector.broadcast %114 : vector<8x1xf32> to vector<8x16xf32>
    %116 = arith.subf %112, %115 : vector<8x16xf32>
    %117 = math.exp %116 : vector<8x16xf32>
    %cst_93 = arith.constant dense<0.000000e+00> : vector<8xf32>
    %118 = vector.multi_reduction <add>, %117, %cst_93 [1] : vector<8x16xf32> to vector<8xf32>
    %119 = vector.shape_cast %118 : vector<8xf32> to vector<8x1xf32>
    %120 = tpu.reciprocal %119 {approx = true} : vector<8x1xf32> -> vector<8x1xf32>
    %121 = vector.broadcast %120 : vector<8x1xf32> to vector<8x16xf32>
    %122 = arith.mulf %117, %121 : vector<8x16xf32>
    %cst_94 = arith.constant dense<0.000000e+00> : vector<8x8xf32>
    %123 = tpu.matmul %122, %111, %cst_94 {dimension_numbers = #tpu.dot_dimension_numbers<[1], [0], [0], [1], [0, 0, 1, 1], [], []>} : vector<8x16xf32>, vector<16x8xf32>, vector<8x8xf32> -> vector<8x8xf32>
    %c2_95 = arith.constant 2 : index
    %c0_96 = arith.constant 0 : index
    %c0_97 = arith.constant 0 : index
    %124 = vector.load %arg11[%c2_95, %c0_96, %c0_97] : memref<4x8x32xf32, #tpu.memory_space<vmem>>, vector<1x8x32xf32>
    %125 = vector.shape_cast %124 : vector<1x8x32xf32> to vector<8x32xf32>
    %cst_98 = arith.constant dense<0.000000e+00> : vector<8x32xf32>
    %126 = tpu.matmul %123, %125, %cst_98 {dimension_numbers = #tpu.dot_dimension_numbers<[1], [0], [0], [1], [0, 0, 1, 1], [], []>} : vector<8x8xf32>, vector<8x32xf32>, vector<8x32xf32> -> vector<8x32xf32>
    %127 = arith.addf %88, %126 : vector<8x32xf32>
    %c3 = arith.constant 3 : index
    %c0_99 = arith.constant 0 : index
    %c0_100 = arith.constant 0 : index
    %128 = vector.load %arg5[%c3, %c0_99, %c0_100] : memref<4x32x8xf32, #tpu.memory_space<vmem>>, vector<1x32x8xf32>
    %129 = vector.shape_cast %128 : vector<1x32x8xf32> to vector<32x8xf32>
    %cst_101 = arith.constant dense<0.000000e+00> : vector<8x8xf32>
    %130 = tpu.matmul %4, %129, %cst_101 {dimension_numbers = #tpu.dot_dimension_numbers<[1], [0], [0], [1], [0, 0, 1, 1], [], []>} : vector<8x32xf32>, vector<32x8xf32>, vector<8x8xf32> -> vector<8x8xf32>
    %c3_102 = arith.constant 3 : index
    %c0_103 = arith.constant 0 : index
    %c0_104 = arith.constant 0 : index
    %131 = vector.load %arg6[%c3_102, %c0_103, %c0_104] : memref<4x1x8xf32, #tpu.memory_space<vmem>>, vector<1x1x8xf32>
    %132 = vector.shape_cast %131 : vector<1x1x8xf32> to vector<1x8xf32>
    %133 = vector.broadcast %132 : vector<1x8xf32> to vector<8x8xf32>
    %134 = arith.addf %130, %133 : vector<8x8xf32>
    %cst_105 = arith.constant 0.353553385 : f32
    %135 = vector.broadcast %cst_105 : f32 to vector<8x8xf32>
    %136 = arith.mulf %134, %135 : vector<8x8xf32>
    %c3_106 = arith.constant 3 : index
    %c0_107 = arith.constant 0 : index
    %c0_108 = arith.constant 0 : index
    %137 = vector.load %arg7[%c3_106, %c0_107, %c0_108] : memref<4x32x8xf32, #tpu.memory_space<vmem>>, vector<1x32x8xf32>
    %138 = vector.shape_cast %137 : vector<1x32x8xf32> to vector<32x8xf32>
    %cst_109 = arith.constant dense<0.000000e+00> : vector<16x8xf32>
    %139 = tpu.matmul %9, %138, %cst_109 {dimension_numbers = #tpu.dot_dimension_numbers<[1], [0], [0], [1], [0, 0, 1, 1], [], []>} : vector<16x32xf32>, vector<32x8xf32>, vector<16x8xf32> -> vector<16x8xf32>
    %c3_110 = arith.constant 3 : index
    %c0_111 = arith.constant 0 : index
    %c0_112 = arith.constant 0 : index
    %140 = vector.load %arg8[%c3_110, %c0_111, %c0_112] : memref<4x1x8xf32, #tpu.memory_space<vmem>>, vector<1x1x8xf32>
    %141 = vector.shape_cast %140 : vector<1x1x8xf32> to vector<1x8xf32>
    %142 = vector.broadcast %141 : vector<1x8xf32> to vector<16x8xf32>
    %143 = arith.addf %139, %142 : vector<16x8xf32>
    %c3_113 = arith.constant 3 : index
    %c0_114 = arith.constant 0 : index
    %c0_115 = arith.constant 0 : index
    %144 = vector.load %arg9[%c3_113, %c0_114, %c0_115] : memref<4x32x8xf32, #tpu.memory_space<vmem>>, vector<1x32x8xf32>
    %145 = vector.shape_cast %144 : vector<1x32x8xf32> to vector<32x8xf32>
    %cst_116 = arith.constant dense<0.000000e+00> : vector<16x8xf32>
    %146 = tpu.matmul %6, %145, %cst_116 {dimension_numbers = #tpu.dot_dimension_numbers<[1], [0], [0], [1], [0, 0, 1, 1], [], []>} : vector<16x32xf32>, vector<32x8xf32>, vector<16x8xf32> -> vector<16x8xf32>
    %c3_117 = arith.constant 3 : index
    %c0_118 = arith.constant 0 : index
    %c0_119 = arith.constant 0 : index
    %147 = vector.load %arg10[%c3_117, %c0_118, %c0_119] : memref<4x1x8xf32, #tpu.memory_space<vmem>>, vector<1x1x8xf32>
    %148 = vector.shape_cast %147 : vector<1x1x8xf32> to vector<1x8xf32>
    %149 = vector.broadcast %148 : vector<1x8xf32> to vector<16x8xf32>
    %150 = arith.addf %146, %149 : vector<16x8xf32>
    %cst_120 = arith.constant dense<0.000000e+00> : vector<8x16xf32>
    %151 = tpu.matmul %136, %143, %cst_120 {dimension_numbers = #tpu.dot_dimension_numbers<[1], [1], [0], [0], [0, 0, 1, 0], [], []>} : vector<8x8xf32>, vector<16x8xf32>, vector<8x16xf32> -> vector<8x16xf32>
    %cst_121 = arith.constant dense<0xFF800000> : vector<8xf32>
    %152 = vector.multi_reduction <maximumf>, %151, %cst_121 [1] : vector<8x16xf32> to vector<8xf32>
    %153 = vector.shape_cast %152 : vector<8xf32> to vector<8x1xf32>
    %154 = vector.broadcast %153 : vector<8x1xf32> to vector<8x16xf32>
    %155 = arith.subf %151, %154 : vector<8x16xf32>
    %156 = math.exp %155 : vector<8x16xf32>
    %cst_122 = arith.constant dense<0.000000e+00> : vector<8xf32>
    %157 = vector.multi_reduction <add>, %156, %cst_122 [1] : vector<8x16xf32> to vector<8xf32>
    %158 = vector.shape_cast %157 : vector<8xf32> to vector<8x1xf32>
    %159 = tpu.reciprocal %158 {approx = true} : vector<8x1xf32> -> vector<8x1xf32>
    %160 = vector.broadcast %159 : vector<8x1xf32> to vector<8x16xf32>
    %161 = arith.mulf %156, %160 : vector<8x16xf32>
    %cst_123 = arith.constant dense<0.000000e+00> : vector<8x8xf32>
    %162 = tpu.matmul %161, %150, %cst_123 {dimension_numbers = #tpu.dot_dimension_numbers<[1], [0], [0], [1], [0, 0, 1, 1], [], []>} : vector<8x16xf32>, vector<16x8xf32>, vector<8x8xf32> -> vector<8x8xf32>
    %c3_124 = arith.constant 3 : index
    %c0_125 = arith.constant 0 : index
    %c0_126 = arith.constant 0 : index
    %163 = vector.load %arg11[%c3_124, %c0_125, %c0_126] : memref<4x8x32xf32, #tpu.memory_space<vmem>>, vector<1x8x32xf32>
    %164 = vector.shape_cast %163 : vector<1x8x32xf32> to vector<8x32xf32>
    %cst_127 = arith.constant dense<0.000000e+00> : vector<8x32xf32>
    %165 = tpu.matmul %162, %164, %cst_127 {dimension_numbers = #tpu.dot_dimension_numbers<[1], [0], [0], [1], [0, 0, 1, 1], [], []>} : vector<8x8xf32>, vector<8x32xf32>, vector<8x32xf32> -> vector<8x32xf32>
    %166 = arith.addf %127, %165 : vector<8x32xf32>
    %c0_128 = arith.constant 0 : index
    %c0_129 = arith.constant 0 : index
    %167 = vector.load %arg12[%c0_128, %c0_129] : memref<1x32xf32, #tpu.memory_space<vmem>>, vector<1x32xf32>
    %168 = vector.broadcast %167 : vector<1x32xf32> to vector<8x32xf32>
    %169 = arith.addf %166, %168 : vector<8x32xf32>
    %c0_130 = arith.constant 0 : index
    %c0_131 = arith.constant 0 : index
    %170 = vector.load %arg13[%c0_130, %c0_131] : memref<1x32xf32, #tpu.memory_space<vmem>>, vector<1x32xf32>
    %c0_132 = arith.constant 0 : index
    %c0_133 = arith.constant 0 : index
    %171 = vector.load %arg14[%c0_132, %c0_133] : memref<1x32xf32, #tpu.memory_space<vmem>>, vector<1x32xf32>
    %172 = arith.addf %169, %1 : vector<8x32xf32>
    %cst_134 = arith.constant dense<0.000000e+00> : vector<8xf32>
    %173 = vector.multi_reduction <add>, %172, %cst_134 [1] : vector<8x32xf32> to vector<8xf32>
    %174 = vector.shape_cast %173 : vector<8xf32> to vector<8x1xf32>
    %cst_135 = arith.constant 3.200000e+01 : f32
    %175 = vector.broadcast %cst_135 : f32 to vector<8x1xf32>
    %176 = arith.divf %174, %175 : vector<8x1xf32>
    %177 = vector.broadcast %176 : vector<8x1xf32> to vector<8x32xf32>
    %178 = arith.subf %172, %177 : vector<8x32xf32>
    %179 = arith.mulf %178, %178 : vector<8x32xf32>
    %cst_136 = arith.constant dense<0.000000e+00> : vector<8xf32>
    %180 = vector.multi_reduction <add>, %179, %cst_136 [1] : vector<8x32xf32> to vector<8xf32>
    %181 = vector.shape_cast %180 : vector<8xf32> to vector<8x1xf32>
    %cst_137 = arith.constant 3.200000e+01 : f32
    %182 = vector.broadcast %cst_137 : f32 to vector<8x1xf32>
    %183 = arith.divf %181, %182 : vector<8x1xf32>
    %184 = vector.broadcast %176 : vector<8x1xf32> to vector<8x32xf32>
    %185 = arith.subf %172, %184 : vector<8x32xf32>
    %cst_138 = arith.constant 9.99999974E-6 : f32
    %186 = vector.broadcast %cst_138 : f32 to vector<8x1xf32>
    %187 = arith.addf %183, %186 : vector<8x1xf32>
    %188 = math.rsqrt %187 : vector<8x1xf32>
    %189 = vector.broadcast %188 : vector<8x1xf32> to vector<8x32xf32>
    %190 = arith.mulf %185, %189 : vector<8x32xf32>
    %191 = vector.broadcast %170 : vector<1x32xf32> to vector<8x32xf32>
    %192 = arith.mulf %190, %191 : vector<8x32xf32>
    %193 = vector.broadcast %171 : vector<1x32xf32> to vector<8x32xf32>
    %194 = arith.addf %192, %193 : vector<8x32xf32>
    %c0_139 = arith.constant 0 : index
    %c0_140 = arith.constant 0 : index
    %c0_141 = arith.constant 0 : index
    %195 = vector.load %arg15[%c0_139, %c0_140, %c0_141] : memref<1x8x32xf32, #tpu.memory_space<vmem>>, vector<1x8x32xf32>
    %196 = vector.shape_cast %195 : vector<1x8x32xf32> to vector<8x32xf32>
    %197 = vector.shape_cast %194 : vector<8x32xf32> to vector<1x8x32xf32>
    tpu.vector_store %arg15[%c0_139, %c0_140, %c0_141], %197 {strides = array<i32>} : memref<1x8x32xf32, #tpu.memory_space<vmem>>, vector<1x8x32xf32>,
    return
  }
  func.func @transform_0(%arg0: i32) -> (i32, i32, i32) {
    %c0_i32 = arith.constant 0 : i32
    %c0_i32_0 = arith.constant 0 : i32
    %c0_i32_1 = arith.constant 0 : i32
    return %arg0, %c0_i32, %c0_i32_0 : i32, i32, i32
  }
  func.func @transform_1(%arg0: i32) -> (i32, i32, i32) {
    %c0_i32 = arith.constant 0 : i32
    %c0_i32_0 = arith.constant 0 : i32
    %c0_i32_1 = arith.constant 0 : i32
    return %arg0, %c0_i32, %c0_i32_0 : i32, i32, i32
  }
  func.func @transform_2(%arg0: i32) -> (i32, i32, i32) {
    %c0_i32 = arith.constant 0 : i32
    %c0_i32_0 = arith.constant 0 : i32
    %c0_i32_1 = arith.constant 0 : i32
    return %arg0, %c0_i32, %c0_i32_0 : i32, i32, i32
  }
  func.func @transform_3(%arg0: i32) -> (i32, i32, i32) {
    %c0_i32 = arith.constant 0 : i32
    %c0_i32_0 = arith.constant 0 : i32
    %c0_i32_1 = arith.constant 0 : i32
    return %arg0, %c0_i32, %c0_i32_0 : i32, i32, i32
  }
  func.func @transform_4(%arg0: i32) -> (i32, i32, i32) {
    %c0_i32 = arith.constant 0 : i32
    %c0_i32_0 = arith.constant 0 : i32
    %c0_i32_1 = arith.constant 0 : i32
    %c0_i32_2 = arith.constant 0 : i32
    return %c0_i32, %c0_i32_0, %c0_i32_1 : i32, i32, i32
  }
  func.func @transform_5(%arg0: i32) -> (i32, i32, i32) {
    %c0_i32 = arith.constant 0 : i32
    %c0_i32_0 = arith.constant 0 : i32
    %c0_i32_1 = arith.constant 0 : i32
    %c0_i32_2 = arith.constant 0 : i32
    return %c0_i32, %c0_i32_0, %c0_i32_1 : i32, i32, i32
  }
  func.func @transform_6(%arg0: i32) -> (i32, i32, i32) {
    %c0_i32 = arith.constant 0 : i32
    %c0_i32_0 = arith.constant 0 : i32
    %c0_i32_1 = arith.constant 0 : i32
    %c0_i32_2 = arith.constant 0 : i32
    return %c0_i32, %c0_i32_0, %c0_i32_1 : i32, i32, i32
  }
  func.func @transform_7(%arg0: i32) -> (i32, i32, i32) {
    %c0_i32 = arith.constant 0 : i32
    %c0_i32_0 = arith.constant 0 : i32
    %c0_i32_1 = arith.constant 0 : i32
    %c0_i32_2 = arith.constant 0 : i32
    return %c0_i32, %c0_i32_0, %c0_i32_1 : i32, i32, i32
  }
  func.func @transform_8(%arg0: i32) -> (i32, i32, i32) {
    %c0_i32 = arith.constant 0 : i32
    %c0_i32_0 = arith.constant 0 : i32
    %c0_i32_1 = arith.constant 0 : i32
    %c0_i32_2 = arith.constant 0 : i32
    return %c0_i32, %c0_i32_0, %c0_i32_1 : i32, i32, i32
  }
  func.func @transform_9(%arg0: i32) -> (i32, i32, i32) {
    %c0_i32 = arith.constant 0 : i32
    %c0_i32_0 = arith.constant 0 : i32
    %c0_i32_1 = arith.constant 0 : i32
    %c0_i32_2 = arith.constant 0 : i32
    return %c0_i32, %c0_i32_0, %c0_i32_1 : i32, i32, i32
  }
  func.func @transform_10(%arg0: i32) -> (i32, i32, i32) {
    %c0_i32 = arith.constant 0 : i32
    %c0_i32_0 = arith.constant 0 : i32
    %c0_i32_1 = arith.constant 0 : i32
    %c0_i32_2 = arith.constant 0 : i32
    return %c0_i32, %c0_i32_0, %c0_i32_1 : i32, i32, i32
  }
  func.func @transform_11(%arg0: i32) -> (i32, i32) {
    %c0_i32 = arith.constant 0 : i32
    %c0_i32_0 = arith.constant 0 : i32
    %c0_i32_1 = arith.constant 0 : i32
    return %c0_i32, %c0_i32_0 : i32, i32
  }
  func.func @transform_12(%arg0: i32) -> (i32, i32) {
    %c0_i32 = arith.constant 0 : i32
    %c0_i32_0 = arith.constant 0 : i32
    %c0_i32_1 = arith.constant 0 : i32
    return %c0_i32, %c0_i32_0 : i32, i32
  }
  func.func @transform_13(%arg0: i32) -> (i32, i32) {
    %c0_i32 = arith.constant 0 : i32
    %c0_i32_0 = arith.constant 0 : i32
    %c0_i32_1 = arith.constant 0 : i32
    return %c0_i32, %c0_i32_0 : i32, i32
  }
  func.func @transform_14(%arg0: i32) -> (i32, i32, i32) {
    %c0_i32 = arith.constant 0 : i32
    %c0_i32_0 = arith.constant 0 : i32
    %c0_i32_1 = arith.constant 0 : i32
    return %arg0, %c0_i32, %c0_i32_0 : i32, i32, i32
  }
}

</mosaic_0001>

<llo_original>
// kernel: transformer_decoder_layer_mma.5
$region0: #{transformer_decoder_layer_mma.5}
  #allocation0 [shape = 'u32[]', space=smem, size = 0x4, offset = 0x4, fixed_abs, tag = 'smem constant byte address 0x4 - core index']
  #allocation1 [shape = 'u32[144,128]{1,0:T(1,128)}', space=vmem, size = 0x12000, scoped, tag = 'internal scratch']
  %s0 = inlined_call_operand.vmem [shape: f32[16,32], index: 0, kind: input, shape index: {}, may-alias: {0,7}]
  %s1 = inlined_call_operand.vmem [shape: f32[32,64], index: 1, kind: input, shape index: {}]
  %s2 = inlined_call_operand.vmem [shape: f32[1,64], index: 2, kind: input, shape index: {}]
  %s3 = inlined_call_operand.vmem [shape: f32[64,32], index: 3, kind: input, shape index: {}]
  %s4 = inlined_call_operand.vmem [shape: f32[1,32], index: 4, kind: input, shape index: {}]
  %s5 = inlined_call_operand.vmem [shape: f32[1,32], index: 5, kind: input, shape index: {}]
  %s6 = inlined_call_operand.vmem [shape: f32[1,32], index: 6, kind: input, shape index: {}]
  %s7 = inlined_call_operand.vmem [shape: f32[16,32], index: 7, kind: output, shape index: {}, may-alias: {0,7}]
  %s8 = sld [smem:[#allocation0]]
  $region38: #{transformer_decoder_layer_mma.5} parent=0
    _
  %s10 = ssub.s32 1, %s8
  %s11 = scalar_select 0, %s10, %s8
  // Predicated region
  $region2: #{transformer_decoder_layer_mma.5} parent=0 // pred_check
    _
  $region3: #{transformer_decoder_layer_mma.5} parent=0 // pred_check_branch
    %13 = sbr.rel (0) target = $region5
  $region4: #{transformer_decoder_layer_mma.5} parent=0 // pred_region
    _
  $region5: #{transformer_decoder_layer_mma.5} parent=0 // pred_fallthru
    _
  // Predicated region
  $region6: #{transformer_decoder_layer_mma.5} parent=0 // pred_check
    _
  $region7: #{transformer_decoder_layer_mma.5} parent=0 // pred_check_branch
    %15 = sbr.rel (0) target = $region9
  $region8: #{transformer_decoder_layer_mma.5} parent=0 // pred_region
    _
  $region9: #{transformer_decoder_layer_mma.5} parent=0 // pred_fallthru
    _
  // Predicated region
  $region10: #{transformer_decoder_layer_mma.5} parent=0 // pred_check
    _
  $region11: #{transformer_decoder_layer_mma.5} parent=0 // pred_check_branch
    %17 = sbr.rel (0) target = $region13
  $region12: #{transformer_decoder_layer_mma.5} parent=0 // pred_region
    _
  $region13: #{transformer_decoder_layer_mma.5} parent=0 // pred_fallthru
    _
  // Predicated region
  $region14: #{transformer_decoder_layer_mma.5} parent=0 // pred_check
    _
  $region15: #{transformer_decoder_layer_mma.5} parent=0 // pred_check_branch
    %19 = sbr.rel (0) target = $region17
  $region16: #{transformer_decoder_layer_mma.5} parent=0 // pred_region
    _
  $region17: #{transformer_decoder_layer_mma.5} parent=0 // pred_fallthru
    _
  // Predicated region
  $region18: #{transformer_decoder_layer_mma.5} parent=0 // pred_check
    _
  $region19: #{transformer_decoder_layer_mma.5} parent=0 // pred_check_branch
    %21 = sbr.rel (0) target = $region21
  $region20: #{transformer_decoder_layer_mma.5} parent=0 // pred_region
    _
  $region21: #{transformer_decoder_layer_mma.5} parent=0 // pred_fallthru
    _
  // Predicated region
  $region22: #{transformer_decoder_layer_mma.5} parent=0 // pred_check
    _
  $region23: #{transformer_decoder_layer_mma.5} parent=0 // pred_check_branch
    %23 = sbr.rel (0) target = $region25
  $region24: #{transformer_decoder_layer_mma.5} parent=0 // pred_region
    _
  $region25: #{transformer_decoder_layer_mma.5} parent=0 // pred_fallthru
    _
  // Predicated region
  $region26: #{transformer_decoder_layer_mma.5} parent=0 // pred_check
    _
  $region27: #{transformer_decoder_layer_mma.5} parent=0 // pred_check_branch
    %25 = sbr.rel (0) target = $region29
  $region28: #{transformer_decoder_layer_mma.5} parent=0 // pred_region
    _
  $region29: #{transformer_decoder_layer_mma.5} parent=0 // pred_fallthru
    _
  %v26 = vld [vmem:[%s0] sm:$0xff]
  %v27 = vld [vmem:[%s0 + $0x8] sm:$0xff]
  %v28 = vld [vmem:[%s1] sm:$0xff]
  %v29 = vld [vmem:[%s1 + $0x8] sm:$0xff]
  %v30 = vld [vmem:[%s1 + $0x10] sm:$0xff]
  %v31 = vld [vmem:[%s1 + $0x18] sm:$0xff]
  %v32 = vld [vmem:[%s2] sm:$0x1]
  %v34 = vlaneseq
  %v35 = vshrl.u32 %v34, 7
  %v36 = vsub.s32 0, %v35
  %v37 = vrot.slane %v32, %v36
  %vm39 = vcmask 261120
  %v41 = vsel %vm39, %v26, 0
  %v44 = vsel %vm39, %v27, 0
  %46 = vmatprep.subr.mxu0 0.0
  %47 = vmatpush1.msra.mxu0 0.0
  %48 = vmatprep.subr.mxu0 0.0
  %49 = vmatpush1.msra.mxu0 0.0
  %50 = vmatprep.subr.mxu0 0.0
  %51 = vmatpush1.msra.mxu0 0.0
  %52 = vmatprep.subr.mxu0 0.0
  %53 = vmatpush1.msra.mxu0 0.0
  %54 = vmatprep.subr.mxu0 0.0
  %55 = vmatpush1.msra.mxu0 0.0
  %56 = vmatprep.subr.mxu0 0.0
  %57 = vmatpush1.msra.mxu0 0.0
  %58 = vmatprep.subr.mxu0 0.0
  %59 = vmatpush1.msra.mxu0 0.0
  %60 = vmatprep.subr.mxu0 0.0
  %61 = vmatpush1.msra.mxu0 0.0
  %62 = vmatprep.subr.mxu0 0.0
  %63 = vmatpush1.msra.mxu0 0.0
  %64 = vmatprep.subr.mxu0 0.0
  %65 = vmatpush1.msra.mxu0 0.0
  %66 = vmatprep.subr.mxu0 0.0
  %67 = vmatpush1.msra.mxu0 0.0
  %68 = vmatprep.subr.mxu0 0.0
  %69 = vmatpush1.msra.mxu0 0.0
  %70 = vmatprep.subr.mxu0 0.0
  %71 = vmatpush1.msra.mxu0 %v31
  %72 = vmatprep.subr.mxu0 0.0
  %73 = vmatpush1.msra.mxu0 %v30
  %74 = vmatprep.subr.mxu0 0.0
  %75 = vmatpush1.msra.mxu0 %v29
  %76 = vmatprep.subr.mxu0 0.0
  %77 = vmatpush1.msra.mxu0 %v28
  %78 = vmatprep.subr.mxu0 0.0
  %79 = vmatpush2.msra.mxu0 0.0
  %80 = vmatprep.subr.mxu0 0.0
  %81 = vmatpush2.msra.mxu0 0.0
  %82 = vmatprep.subr.mxu0 0.0
  %83 = vmatpush2.msra.mxu0 0.0
  %84 = vmatprep.subr.mxu0 0.0
  %85 = vmatpush2.msra.mxu0 0.0
  %86 = vmatprep.subr.mxu0 0.0
  %87 = vmatpush2.msra.mxu0 0.0
  %88 = vmatprep.subr.mxu0 0.0
  %89 = vmatpush2.msra.mxu0 0.0
  %90 = vmatprep.subr.mxu0 0.0
  %91 = vmatpush2.msra.mxu0 0.0
  %92 = vmatprep.subr.mxu0 0.0
  %93 = vmatpush2.msra.mxu0 0.0
  %94 = vmatprep.subr.mxu0 0.0
  %95 = vmatpush2.msra.mxu0 0.0
  %96 = vmatprep.subr.mxu0 0.0
  %97 = vmatpush2.msra.mxu0 0.0
  %98 = vmatprep.subr.mxu0 0.0
  %99 = vmatpush2.msra.mxu0 0.0
  %100 = vmatprep.subr.mxu0 0.0
  %101 = vmatpush2.msra.mxu0 0.0
  %102 = vmatprep.subr.mxu0 0.0
  %103 = vmatpush2.msra.mxu0 0.0
  %104 = vmatprep.subr.mxu0 0.0
  %105 = vmatpush2.msra.mxu0 0.0
  %106 = vmatprep.subr.mxu0 0.0
  %107 = vmatpush2.msra.mxu0 0.0
  %108 = vmatprep.subr.mxu0 0.0
  %109 = vmatpush2.msra.mxu0 0.0
  %110 = vmatprep.mubr.f32.mxu0 0.0
  %111 = vmatmul.mubr.f32.gmra.mxu0 %v41
  %v112 = vpop.f32.mrf.mxu0
  %v113 = vadd.f32 %v37, %v112
  %v114 = vpop.f32.mrf.mxu0
  %115 = vmatprep.mubr.f32.mxu0 0.0
  %116 = vmatmul.mubr.f32.gmra.mxu0 %v44
  %v117 = vpop.f32.mrf.mxu0
  %v118 = vadd.f32 %v37, %v117
  %v119 = vpop.f32.mrf.mxu0
  %120 = vdwg.mxu0
  %v121 = vmax.f32 %v113, 0.0
  %v122 = vmax.f32 %v118, 0.0
  %v123 = vld [vmem:[%s3] sm:$0xff]
  %v124 = vld [vmem:[%s3 + $0x8] sm:$0xff]
  %v125 = vld [vmem:[%s3 + $0x10] sm:$0xff]
  %v126 = vld [vmem:[%s3 + $0x18] sm:$0xff]
  %v127 = vld [vmem:[%s3 + $0x20] sm:$0xff]
  %v128 = vld [vmem:[%s3 + $0x28] sm:$0xff]
  %v129 = vld [vmem:[%s3 + $0x30] sm:$0xff]
  %v130 = vld [vmem:[%s3 + $0x38] sm:$0xff]
  %v131 = vld [vmem:[%s4] sm:$0x1]
  %v133 = vlaneseq
  %v134 = vshrl.u32 %v133, 7
  %v135 = vsub.s32 0, %v134
  %v136 = vrot.slane %v131, %v135
  %vm138 = vcmask 523264
  %v140 = vsel %vm138, %v121, 0
  %v143 = vsel %vm138, %v122, 0
  %145 = vmatprep.subr.mxu0 0.0
  %146 = vmatpush1.msra.mxu0 0.0
  %147 = vmatprep.subr.mxu0 0.0
  %148 = vmatpush1.msra.mxu0 0.0
  %149 = vmatprep.subr.mxu0 0.0
  %150 = vmatpush1.msra.mxu0 0.0
  %151 = vmatprep.subr.mxu0 0.0
  %152 = vmatpush1.msra.mxu0 0.0
  %153 = vmatprep.subr.mxu0 0.0
  %154 = vmatpush1.msra.mxu0 0.0
  %155 = vmatprep.subr.mxu0 0.0
  %156 = vmatpush1.msra.mxu0 0.0
  %157 = vmatprep.subr.mxu0 0.0
  %158 = vmatpush1.msra.mxu0 0.0
  %159 = vmatprep.subr.mxu0 0.0
  %160 = vmatpush1.msra.mxu0 0.0
  %161 = vmatprep.subr.mxu0 0.0
  %162 = vmatpush1.msra.mxu0 %v130
  %163 = vmatprep.subr.mxu0 0.0
  %164 = vmatpush1.msra.mxu0 %v129
  %165 = vmatprep.subr.mxu0 0.0
  %166 = vmatpush1.msra.mxu0 %v128
  %167 = vmatprep.subr.mxu0 0.0
  %168 = vmatpush1.msra.mxu0 %v127
  %169 = vmatprep.subr.mxu0 0.0
  %170 = vmatpush1.msra.mxu0 %v126
  %171 = vmatprep.subr.mxu0 0.0
  %172 = vmatpush1.msra.mxu0 %v125
  %173 = vmatprep.subr.mxu0 0.0
  %174 = vmatpush1.msra.mxu0 %v124
  %175 = vmatprep.subr.mxu0 0.0
  %176 = vmatpush1.msra.mxu0 %v123
  %177 = vmatprep.subr.mxu0 0.0
  %178 = vmatpush2.msra.mxu0 0.0
  %179 = vmatprep.subr.mxu0 0.0
  %180 = vmatpush2.msra.mxu0 0.0
  %181 = vmatprep.subr.mxu0 0.0
  %182 = vmatpush2.msra.mxu0 0.0
  %183 = vmatprep.subr.mxu0 0.0
  %184 = vmatpush2.msra.mxu0 0.0
  %185 = vmatprep.subr.mxu0 0.0
  %186 = vmatpush2.msra.mxu0 0.0
  %187 = vmatprep.subr.mxu0 0.0
  %188 = vmatpush2.msra.mxu0 0.0
  %189 = vmatprep.subr.mxu0 0.0
  %190 = vmatpush2.msra.mxu0 0.0
  %191 = vmatprep.subr.mxu0 0.0
  %192 = vmatpush2.msra.mxu0 0.0
  %193 = vmatprep.subr.mxu0 0.0
  %194 = vmatpush2.msra.mxu0 0.0
  %195 = vmatprep.subr.mxu0 0.0
  %196 = vmatpush2.msra.mxu0 0.0
  %197 = vmatprep.subr.mxu0 0.0
  %198 = vmatpush2.msra.mxu0 0.0
  %199 = vmatprep.subr.mxu0 0.0
  %200 = vmatpush2.msra.mxu0 0.0
  %201 = vmatprep.subr.mxu0 0.0
  %202 = vmatpush2.msra.mxu0 0.0
  %203 = vmatprep.subr.mxu0 0.0
  %204 = vmatpush2.msra.mxu0 0.0
  %205 = vmatprep.subr.mxu0 0.0
  %206 = vmatpush2.msra.mxu0 0.0
  %207 = vmatprep.subr.mxu0 0.0
  %208 = vmatpush2.msra.mxu0 0.0
  %209 = vmatprep.mubr.f32.mxu0 0.0
  %210 = vmatmul.mubr.f32.gmra.mxu0 %v140
  %v211 = vpop.f32.mrf.mxu0
  %v212 = vadd.f32 %v136, %v211
  %v213 = vpop.f32.mrf.mxu0
  %214 = vmatprep.mubr.f32.mxu0 0.0
  %215 = vmatmul.mubr.f32.gmra.mxu0 %v143
  %v216 = vpop.f32.mrf.mxu0
  %v217 = vadd.f32 %v136, %v216
  %v218 = vpop.f32.mrf.mxu0
  %219 = vdwg.mxu0
  %v220 = vld [vmem:[%s5] sm:$0x1]
  %v221 = vld [vmem:[%s6] sm:$0x1]
  %v222 = vadd.f32 %v212, %v26
  %v223 = vadd.f32 %v217, %v27
  %v224 = vsel %vm39, %v222, 0.0
  %225 = vadd.xlane.f32.xlu0 %v224
  %v226 = vpop.xlane.xlu0 %225
  %v227 = vsel %vm39, %v223, 0.0
  %228 = vadd.xlane.f32.xlu0 %v227
  %v229 = vpop.xlane.xlu0 %228
  %v230 = vrcp.pop 32.0
  %v231 = vmul.f32 %v226, %v230
  %v232 = vmul.f32 %v229, %v230
  %v233 = vsub.f32 %v222, %v231
  %v234 = vsub.f32 %v223, %v232
  %v235 = vmul.f32 %v233, %v233
  %v236 = vmul.f32 %v234, %v234
  %v237 = vsel %vm39, %v235, 0.0
  %238 = vadd.xlane.f32.xlu0 %v237
  %v239 = vpop.xlane.xlu0 %238
  %v240 = vsel %vm39, %v236, 0.0
  %241 = vadd.xlane.f32.xlu0 %v240
  %v242 = vpop.xlane.xlu0 %241
  %v243 = vmul.f32 %v239, %v230
  %v244 = vmul.f32 %v242, %v230
  %v245 = vadd.f32 %v243, 1e-05
  %v246 = vadd.f32 %v244, 1e-05
  %v247 = vrsqrt.pop %v245
  %v248 = vrsqrt.pop %v246
  %v249 = vmul.f32 %v233, %v247
  %v250 = vmul.f32 %v234, %v248
  %v252 = vlaneseq
  %v253 = vshrl.u32 %v252, 7
  %v254 = vsub.s32 0, %v253
  %v255 = vrot.slane %v220, %v254
  %v257 = vmul.f32 %v249, %v255
  %v258 = vmul.f32 %v250, %v255
  %v260 = vlaneseq
  %v261 = vshrl.u32 %v260, 7
  %v262 = vsub.s32 0, %v261
  %v263 = vrot.slane %v221, %v262
  %v265 = vadd.f32 %v257, %v263
  %v266 = vadd.f32 %v258, %v263
  %267 = vst.msk [vmem:[%s7] sm:$0xff] %vm39, %v265
  %268 = vst.msk [vmem:[%s7 + $0x8] sm:$0xff] %vm39, %v266
  // Predicated region
  $region30: #{transformer_decoder_layer_mma.5} parent=0 // pred_check
    _
  $region31: #{transformer_decoder_layer_mma.5} parent=0 // pred_check_branch
    %270 = sbr.rel (0) target = $region33
  $region32: #{transformer_decoder_layer_mma.5} parent=0 // pred_region
    _
  $region33: #{transformer_decoder_layer_mma.5} parent=0 // pred_fallthru
    _
  // Predicated region
  $region34: #{transformer_decoder_layer_mma.5} parent=0 // pred_check
    _
  $region35: #{transformer_decoder_layer_mma.5} parent=0 // pred_check_branch
    %272 = sbr.rel (0) target = $region37
  $region36: #{transformer_decoder_layer_mma.5} parent=0 // pred_region
    _
  $region37: #{transformer_decoder_layer_mma.5} parent=0 // pred_fallthru
    _

// kernel: transformer_decoder_layer_mma.3
$region0: #{transformer_decoder_layer_mma.3}
  #allocation0 [shape = 'u32[]', space=smem, size = 0x4, offset = 0x4, fixed_abs, tag = 'smem constant byte address 0x4 - core index']
  #allocation1 [shape = 'u32[144,128]{1,0:T(1,128)}', space=vmem, size = 0x12000, scoped, tag = 'internal scratch']
  %s0 = inlined_call_operand.vmem [shape: f32[2,8,32], index: 0, kind: input, shape index: {}, may-alias: {0,12}]
  %s1 = inlined_call_operand.vmem [shape: f32[2,8,32], index: 1, kind: input, shape index: {}]
  %s2 = inlined_call_operand.vmem [shape: f32[4,32,8], index: 2, kind: input, shape index: {}]
  %s3 = inlined_call_operand.vmem [shape: f32[4,1,8], index: 3, kind: input, shape index: {}]
  %s4 = inlined_call_operand.vmem [shape: f32[4,32,8], index: 4, kind: input, shape index: {}]
  %s5 = inlined_call_operand.vmem [shape: f32[4,1,8], index: 5, kind: input, shape index: {}]
  %s6 = inlined_call_operand.vmem [shape: f32[4,32,8], index: 6, kind: input, shape index: {}]
  %s7 = inlined_call_operand.vmem [shape: f32[4,1,8], index: 7, kind: input, shape index: {}]
  %s8 = inlined_call_operand.vmem [shape: f32[4,8,32], index: 8, kind: input, shape index: {}]
  %s9 = inlined_call_operand.vmem [shape: f32[1,32], index: 9, kind: input, shape index: {}]
  %s10 = inlined_call_operand.vmem [shape: f32[1,32], index: 10, kind: input, shape index: {}]
  %s11 = inlined_call_operand.vmem [shape: f32[1,32], index: 11, kind: input, shape index: {}]
  %s12 = inlined_call_operand.vmem [shape: f32[2,8,32], index: 12, kind: output, shape index: {}, may-alias: {0,12}]
  %s13 = sld [smem:[#allocation0]]
  $region81: #{transformer_decoder_layer_mma.3} parent=0
    _
  %s15 = ssub.s32 1, %s13
  %s16 = scalar_select 0, %s15, %s13
  loop: start=0, step=1, limit=4
  $region2: #{transformer_decoder_layer_mma.3} parent=0 // loop_pre_header
    _
  $region3: #{transformer_decoder_layer_mma.3} parent=0 // loop_header
    %s18 = sphi 0, %s22
    %p19 = scmp.ge.s32.totalorder %s18, 4
    %s28 = sphi 0, %s30
    %s31 = sphi 0, %s28
    %s32 = sphi 0, %s31
    %s48 = sphi 0, %s32
    %s54 = sphi 0, %s56
    %s57 = sphi 0, %s54
    %s58 = sphi 0, %s57
    %s74 = sphi 0, %s58
    %s78 = sphi 0, %s78
    %s80 = sphi 0, %s78
    %s81 = sphi 0, %s80
    %s95 = sphi 0, %s81
    %s99 = sphi 0, %s99
    %s101 = sphi 0, %s99
    %s102 = sphi 0, %s101
    %s116 = sphi 0, %s102
    %s120 = sphi 0, %s120
    %s122 = sphi 0, %s120
    %s123 = sphi 0, %s122
    %s137 = sphi 0, %s123
    %s141 = sphi 0, %s141
    %s143 = sphi 0, %s141
    %s144 = sphi 0, %s143
    %s158 = sphi 0, %s144
    %s162 = sphi 0, %s162
    %s164 = sphi 0, %s162
    %s165 = sphi 0, %s164
    %s179 = sphi 0, %s165
    %s183 = sphi 0, %s183
    %s185 = sphi 0, %s183
    %s186 = sphi 0, %s185
    %s200 = sphi 0, %s186
    %s204 = sphi 0, %s204
    %s206 = sphi 0, %s204
    %s207 = sphi 0, %s206
    %s221 = sphi 0, %s207
    %s225 = sphi 0, %s225
    %s227 = sphi 0, %s225
    %s228 = sphi 0, %s227
    %s242 = sphi 0, %s228
    %s246 = sphi 0, %s246
    %s248 = sphi 0, %s246
    %s249 = sphi 0, %s248
    %s263 = sphi 0, %s249
    %s267 = sphi 0, %s267
    %s269 = sphi 0, %s267
    %s270 = sphi 0, %s269
    %s284 = sphi 0, %s270
    %s290 = sphi 0, %s292
    %s293 = sphi 0, %s290
    %s294 = sphi 0, %s293
    %s310 = sphi 0, %s294
  $region4: #{transformer_decoder_layer_mma.3} parent=0 // loop_header_branch
    %21 = sbr.rel (%p19) target = $region8
  $region5: #{transformer_decoder_layer_mma.3} parent=0 // loop_body
    %s23 = ssub.s32 %s18, 1
    %s24 = ssub.s32 %s18, 2
    %s25 = sadd.s32 %s18, 1
    %s26 = ssub.s32 %s18, %s25
    %p27 = scmp.eq.s32.totalorder %s26, 0
    %s29 = sadd.s32 %s28, 1
    %s30 = scalar_select %p27, %s28, %s29
    %p33 = pneg %p27
    %p34 = scmp.eq.s32.totalorder %s18, 1
    %p35 = por %p33, %p34
    %p36 = scmp.ne.s32.totalorder %s28, %s31
    %p37 = scmp.eq.s32.totalorder %s18, 0
    %p38 = por %p36, %p37
    %p39 = scmp.ne.s32.totalorder %s28, %s31
    %p40 = scmp.eq.s32.totalorder %s23, 1
    %p41 = por %p39, %p40
    %p42 = scmp.ne.s32.totalorder %s31, %s32
    %p43 = scmp.eq.s32.totalorder %s23, 0
    %p44 = por %p42, %p43
    %p45 = scmp.ne.s32.totalorder %s31, %s32
    %p46 = scmp.eq.s32.totalorder %s24, 1
    %p47 = por %p45, %p46
    %p49 = scmp.ne.s32.totalorder %s32, %s48
    %p50 = scmp.eq.s32.totalorder %s24, 0
    %p51 = por %p49, %p50
    %s52 = ssub.s32 %s18, %s25
    %p53 = scmp.eq.s32.totalorder %s52, 0
    %s55 = sadd.s32 %s54, 1
    %s56 = scalar_select %p53, %s54, %s55
    %p59 = pneg %p53
    %p60 = scmp.eq.s32.totalorder %s18, 1
    %p61 = por %p59, %p60
    %p62 = scmp.ne.s32.totalorder %s54, %s57
    %p63 = scmp.eq.s32.totalorder %s18, 0
    %p64 = por %p62, %p63
    %p65 = scmp.ne.s32.totalorder %s54, %s57
    %p66 = scmp.eq.s32.totalorder %s23, 1
    %p67 = por %p65, %p66
    %p68 = scmp.ne.s32.totalorder %s57, %s58
    %p69 = scmp.eq.s32.totalorder %s23, 0
    %p70 = por %p68, %p69
    %p71 = scmp.ne.s32.totalorder %s57, %s58
    %p72 = scmp.eq.s32.totalorder %s24, 1
    %p73 = por %p71, %p72
    %p75 = scmp.ne.s32.totalorder %s58, %s74
    %p76 = scmp.eq.s32.totalorder %s24, 0
    %p77 = por %p75, %p76
    %s79 = sadd.s32 %s78, 1
    %p82 = scmp.eq.s32.totalorder %s18, 1
    %p83 = scmp.ne.s32.totalorder %s78, %s80
    %p84 = scmp.eq.s32.totalorder %s18, 0
    %p85 = por %p83, %p84
    %p86 = scmp.ne.s32.totalorder %s78, %s80
    %p87 = scmp.eq.s32.totalorder %s23, 1
    %p88 = por %p86, %p87
    %p89 = scmp.ne.s32.totalorder %s80, %s81
    %p90 = scmp.eq.s32.totalorder %s23, 0
    %p91 = por %p89, %p90
    %p92 = scmp.ne.s32.totalorder %s80, %s81
    %p93 = scmp.eq.s32.totalorder %s24, 1
    %p94 = por %p92, %p93
    %p96 = scmp.ne.s32.totalorder %s81, %s95
    %p97 = scmp.eq.s32.totalorder %s24, 0
    %p98 = por %p96, %p97
    %s100 = sadd.s32 %s99, 1
    %p103 = scmp.eq.s32.totalorder %s18, 1
    %p104 = scmp.ne.s32.totalorder %s99, %s101
    %p105 = scmp.eq.s32.totalorder %s18, 0
    %p106 = por %p104, %p105
    %p107 = scmp.ne.s32.totalorder %s99, %s101
    %p108 = scmp.eq.s32.totalorder %s23, 1
    %p109 = por %p107, %p108
    %p110 = scmp.ne.s32.totalorder %s101, %s102
    %p111 = scmp.eq.s32.totalorder %s23, 0
    %p112 = por %p110, %p111
    %p113 = scmp.ne.s32.totalorder %s101, %s102
    %p114 = scmp.eq.s32.totalorder %s24, 1
    %p115 = por %p113, %p114
    %p117 = scmp.ne.s32.totalorder %s102, %s116
    %p118 = scmp.eq.s32.totalorder %s24, 0
    %p119 = por %p117, %p118
    %s121 = sadd.s32 %s120, 1
    %p124 = scmp.eq.s32.totalorder %s18, 1
    %p125 = scmp.ne.s32.totalorder %s120, %s122
    %p126 = scmp.eq.s32.totalorder %s18, 0
    %p127 = por %p125, %p126
    %p128 = scmp.ne.s32.totalorder %s120, %s122
    %p129 = scmp.eq.s32.totalorder %s23, 1
    %p130 = por %p128, %p129
    %p131 = scmp.ne.s32.totalorder %s122, %s123
    %p132 = scmp.eq.s32.totalorder %s23, 0
    %p133 = por %p131, %p132
    %p134 = scmp.ne.s32.totalorder %s122, %s123
    %p135 = scmp.eq.s32.totalorder %s24, 1
    %p136 = por %p134, %p135
    %p138 = scmp.ne.s32.totalorder %s123, %s137
    %p139 = scmp.eq.s32.totalorder %s24, 0
    %p140 = por %p138, %p139
    %s142 = sadd.s32 %s141, 1
    %p145 = scmp.eq.s32.totalorder %s18, 1
    %p146 = scmp.ne.s32.totalorder %s141, %s143
    %p147 = scmp.eq.s32.totalorder %s18, 0
    %p148 = por %p146, %p147
    %p149 = scmp.ne.s32.totalorder %s141, %s143
    %p150 = scmp.eq.s32.totalorder %s23, 1
    %p151 = por %p149, %p150
    %p152 = scmp.ne.s32.totalorder %s143, %s144
    %p153 = scmp.eq.s32.totalorder %s23, 0
    %p154 = por %p152, %p153
    %p155 = scmp.ne.s32.totalorder %s143, %s144
    %p156 = scmp.eq.s32.totalorder %s24, 1
    %p157 = por %p155, %p156
    %p159 = scmp.ne.s32.totalorder %s144, %s158
    %p160 = scmp.eq.s32.totalorder %s24, 0
    %p161 = por %p159, %p160
    %s163 = sadd.s32 %s162, 1
    %p166 = scmp.eq.s32.totalorder %s18, 1
    %p167 = scmp.ne.s32.totalorder %s162, %s164
    %p168 = scmp.eq.s32.totalorder %s18, 0
    %p169 = por %p167, %p168
    %p170 = scmp.ne.s32.totalorder %s162, %s164
    %p171 = scmp.eq.s32.totalorder %s23, 1
    %p172 = por %p170, %p171
    %p173 = scmp.ne.s32.totalorder %s164, %s165
    %p174 = scmp.eq.s32.totalorder %s23, 0
    %p175 = por %p173, %p174
    %p176 = scmp.ne.s32.totalorder %s164, %s165
    %p177 = scmp.eq.s32.totalorder %s24, 1
    %p178 = por %p176, %p177
    %p180 = scmp.ne.s32.totalorder %s165, %s179
    %p181 = scmp.eq.s32.totalorder %s24, 0
    %p182 = por %p180, %p181
    %s184 = sadd.s32 %s183, 1
    %p187 = scmp.eq.s32.totalorder %s18, 1
    %p188 = scmp.ne.s32.totalorder %s183, %s185
    %p189 = scmp.eq.s32.totalorder %s18, 0
    %p190 = por %p188, %p189
    %p191 = scmp.ne.s32.totalorder %s183, %s185
    %p192 = scmp.eq.s32.totalorder %s23, 1
    %p193 = por %p191, %p192
    %p194 = scmp.ne.s32.totalorder %s185, %s186
    %p195 = scmp.eq.s32.totalorder %s23, 0
    %p196 = por %p194, %p195
    %p197 = scmp.ne.s32.totalorder %s185, %s186
    %p198 = scmp.eq.s32.totalorder %s24, 1
    %p199 = por %p197, %p198
    %p201 = scmp.ne.s32.totalorder %s186, %s200
    %p202 = scmp.eq.s32.totalorder %s24, 0
    %p203 = por %p201, %p202
    %s205 = sadd.s32 %s204, 1
    %p208 = scmp.eq.s32.totalorder %s18, 1
    %p209 = scmp.ne.s32.totalorder %s204, %s206
    %p210 = scmp.eq.s32.totalorder %s18, 0
    %p211 = por %p209, %p210
    %p212 = scmp.ne.s32.totalorder %s204, %s206
    %p213 = scmp.eq.s32.totalorder %s23, 1
    %p214 = por %p212, %p213
    %p215 = scmp.ne.s32.totalorder %s206, %s207
    %p216 = scmp.eq.s32.totalorder %s23, 0
    %p217 = por %p215, %p216
    %p218 = scmp.ne.s32.totalorder %s206, %s207
    %p219 = scmp.eq.s32.totalorder %s24, 1
    %p220 = por %p218, %p219
    %p222 = scmp.ne.s32.totalorder %s207, %s221
    %p223 = scmp.eq.s32.totalorder %s24, 0
    %p224 = por %p222, %p223
    %s226 = sadd.s32 %s225, 1
    %p229 = scmp.eq.s32.totalorder %s18, 1
    %p230 = scmp.ne.s32.totalorder %s225, %s227
    %p231 = scmp.eq.s32.totalorder %s18, 0
    %p232 = por %p230, %p231
    %p233 = scmp.ne.s32.totalorder %s225, %s227
    %p234 = scmp.eq.s32.totalorder %s23, 1
    %p235 = por %p233, %p234
    %p236 = scmp.ne.s32.totalorder %s227, %s228
    %p237 = scmp.eq.s32.totalorder %s23, 0
    %p238 = por %p236, %p237
    %p239 = scmp.ne.s32.totalorder %s227, %s228
    %p240 = scmp.eq.s32.totalorder %s24, 1
    %p241 = por %p239, %p240
    %p243 = scmp.ne.s32.totalorder %s228, %s242
    %p244 = scmp.eq.s32.totalorder %s24, 0
    %p245 = por %p243, %p244
    %s247 = sadd.s32 %s246, 1
    %p250 = scmp.eq.s32.totalorder %s18, 1
    %p251 = scmp.ne.s32.totalorder %s246, %s248
    %p252 = scmp.eq.s32.totalorder %s18, 0
    %p253 = por %p251, %p252
    %p254 = scmp.ne.s32.totalorder %s246, %s248
    %p255 = scmp.eq.s32.totalorder %s23, 1
    %p256 = por %p254, %p255
    %p257 = scmp.ne.s32.totalorder %s248, %s249
    %p258 = scmp.eq.s32.totalorder %s23, 0
    %p259 = por %p257, %p258
    %p260 = scmp.ne.s32.totalorder %s248, %s249
    %p261 = scmp.eq.s32.totalorder %s24, 1
    %p262 = por %p260, %p261
    %p264 = scmp.ne.s32.totalorder %s249, %s263
    %p265 = scmp.eq.s32.totalorder %s24, 0
    %p266 = por %p264, %p265
    %s268 = sadd.s32 %s267, 1
    %p271 = scmp.eq.s32.totalorder %s18, 1
    %p272 = scmp.ne.s32.totalorder %s267, %s269
    %p273 = scmp.eq.s32.totalorder %s18, 0
    %p274 = por %p272, %p273
    %p275 = scmp.ne.s32.totalorder %s267, %s269
    %p276 = scmp.eq.s32.totalorder %s23, 1
    %p277 = por %p275, %p276
    %p278 = scmp.ne.s32.totalorder %s269, %s270
    %p279 = scmp.eq.s32.totalorder %s23, 0
    %p280 = por %p278, %p279
    %p281 = scmp.ne.s32.totalorder %s269, %s270
    %p282 = scmp.eq.s32.totalorder %s24, 1
    %p283 = por %p281, %p282
    %p285 = scmp.ne.s32.totalorder %s270, %s284
    %p286 = scmp.eq.s32.totalorder %s24, 0
    %p287 = por %p285, %p286
    %s288 = ssub.s32 %s18, %s25
    %p289 = scmp.eq.s32.totalorder %s288, 0
    %s291 = sadd.s32 %s290, 1
    %s292 = scalar_select %p289, %s290, %s291
    %p295 = pneg %p289
    %p296 = scmp.eq.s32.totalorder %s18, 1
    %p297 = por %p295, %p296
    %p298 = scmp.ne.s32.totalorder %s290, %s293
    %p299 = scmp.eq.s32.totalorder %s18, 0
    %p300 = por %p298, %p299
    %p301 = scmp.ne.s32.totalorder %s290, %s293
    %p302 = scmp.eq.s32.totalorder %s23, 1
    %p303 = por %p301, %p302
    %p304 = scmp.ne.s32.totalorder %s293, %s294
    %p305 = scmp.eq.s32.totalorder %s23, 0
    %p306 = por %p304, %p305
    %p307 = scmp.ne.s32.totalorder %s293, %s294
    %p308 = scmp.eq.s32.totalorder %s24, 1
    %p309 = por %p307, %p308
    %p311 = scmp.ne.s32.totalorder %s294, %s310
    %p312 = scmp.eq.s32.totalorder %s24, 0
    %p313 = por %p311, %p312
    %p314 = scmp.le.s32.totalorder 1, %s18
    %p315 = scmp.lt.s32.totalorder %s18, 3
    %p316 = pnand %p314, %p315
    %p317 = pneg %p316
    // Predicated region
    $region9: #{transformer_decoder_layer_mma.3} parent=5 // pred_check
      _
    $region10: #{transformer_decoder_layer_mma.3} parent=5 // pred_check_branch
      %319 = sbr.rel (%p316) target = $region12
    $region11: #{transformer_decoder_layer_mma.3} parent=5 // pred_region
      %s320 = ssub.s32 %s18, 1
      // Predicated region
      $region13: #{transformer_decoder_layer_mma.3} parent=11 // pred_check
        %p321 = pneg %p91
      $region14: #{transformer_decoder_layer_mma.3} parent=11 // pred_check_branch
        %323 = sbr.rel (%p321) target = $region16
      $region15: #{transformer_decoder_layer_mma.3} parent=11 // pred_region
        _
      $region16: #{transformer_decoder_layer_mma.3} parent=11 // pred_fallthru
        _
      // Predicated region
      $region17: #{transformer_decoder_layer_mma.3} parent=11 // pred_check
        %p324 = pneg %p112
      $region18: #{transformer_decoder_layer_mma.3} parent=11 // pred_check_branch
        %326 = sbr.rel (%p324) target = $region20
      $region19: #{transformer_decoder_layer_mma.3} parent=11 // pred_region
        _
      $region20: #{transformer_decoder_layer_mma.3} parent=11 // pred_fallthru
        _
      // Predicated region
      $region21: #{transformer_decoder_layer_mma.3} parent=11 // pred_check
        %p327 = pneg %p133
      $region22: #{transformer_decoder_layer_mma.3} parent=11 // pred_check_branch
        %329 = sbr.rel (%p327) target = $region24
      $region23: #{transformer_decoder_layer_mma.3} parent=11 // pred_region
        _
      $region24: #{transformer_decoder_layer_mma.3} parent=11 // pred_fallthru
        _
      // Predicated region
      $region25: #{transformer_decoder_layer_mma.3} parent=11 // pred_check
        %p330 = pneg %p154
      $region26: #{transformer_decoder_layer_mma.3} parent=11 // pred_check_branch
        %332 = sbr.rel (%p330) target = $region28
      $region27: #{transformer_decoder_layer_mma.3} parent=11 // pred_region
        _
      $region28: #{transformer_decoder_layer_mma.3} parent=11 // pred_fallthru
        _
      // Predicated region
      $region29: #{transformer_decoder_layer_mma.3} parent=11 // pred_check
        %p333 = pneg %p175
      $region30: #{transformer_decoder_layer_mma.3} parent=11 // pred_check_branch
        %335 = sbr.rel (%p333) target = $region32
      $region31: #{transformer_decoder_layer_mma.3} parent=11 // pred_region
        _
      $region32: #{transformer_decoder_layer_mma.3} parent=11 // pred_fallthru
        _
      // Predicated region
      $region33: #{transformer_decoder_layer_mma.3} parent=11 // pred_check
        %p336 = pneg %p196
      $region34: #{transformer_decoder_layer_mma.3} parent=11 // pred_check_branch
        %338 = sbr.rel (%p336) target = $region36
      $region35: #{transformer_decoder_layer_mma.3} parent=11 // pred_region
        _
      $region36: #{transformer_decoder_layer_mma.3} parent=11 // pred_fallthru
        _
      // Predicated region
      $region37: #{transformer_decoder_layer_mma.3} parent=11 // pred_check
        %p339 = pneg %p217
      $region38: #{transformer_decoder_layer_mma.3} parent=11 // pred_check_branch
        %341 = sbr.rel (%p339) target = $region40
      $region39: #{transformer_decoder_layer_mma.3} parent=11 // pred_region
        _
      $region40: #{transformer_decoder_layer_mma.3} parent=11 // pred_fallthru
        _
      // Predicated region
      $region41: #{transformer_decoder_layer_mma.3} parent=11 // pred_check
        %p342 = pneg %p238
      $region42: #{transformer_decoder_layer_mma.3} parent=11 // pred_check_branch
        %344 = sbr.rel (%p342) target = $region44
      $region43: #{transformer_decoder_layer_mma.3} parent=11 // pred_region
        _
      $region44: #{transformer_decoder_layer_mma.3} parent=11 // pred_fallthru
        _
      // Predicated region
      $region45: #{transformer_decoder_layer_mma.3} parent=11 // pred_check
        %p345 = pneg %p259
      $region46: #{transformer_decoder_layer_mma.3} parent=11 // pred_check_branch
        %347 = sbr.rel (%p345) target = $region48
      $region47: #{transformer_decoder_layer_mma.3} parent=11 // pred_region
        _
      $region48: #{transformer_decoder_layer_mma.3} parent=11 // pred_fallthru
        _
      // Predicated region
      $region49: #{transformer_decoder_layer_mma.3} parent=11 // pred_check
        %p348 = pneg %p280
      $region50: #{transformer_decoder_layer_mma.3} parent=11 // pred_check_branch
        %350 = sbr.rel (%p348) target = $region52
      $region51: #{transformer_decoder_layer_mma.3} parent=11 // pred_region
        _
      $region52: #{transformer_decoder_layer_mma.3} parent=11 // pred_fallthru
        _
    $region12: #{transformer_decoder_layer_mma.3} parent=5 // pred_fallthru
      _
    %p351 = scmp.lt.s32.totalorder %s18, 2
    // Predicated region
    $region53: #{transformer_decoder_layer_mma.3} parent=5 // pred_check
      %p352 = pneg %p351
    $region54: #{transformer_decoder_layer_mma.3} parent=5 // pred_check_branch
      %354 = sbr.rel (%p352) target = $region56
    $region55: #{transformer_decoder_layer_mma.3} parent=5 // pred_region
      // Predicated region
      $region57: #{transformer_decoder_layer_mma.3} parent=55 // pred_check
        %p355 = pneg %p38
      $region58: #{transformer_decoder_layer_mma.3} parent=55 // pred_check_branch
        %357 = sbr.rel (%p355) target = $region60
      $region59: #{transformer_decoder_layer_mma.3} parent=55 // pred_region
        %p358 = scmp.lt.s32.totalorder %s18, 1
        %s359 = scalar_select %p358, %s18, 1
        %s360 = smul.addr %s359, 8
        %s361 = scalar_lea.vmem %s0, %s360
      $region60: #{transformer_decoder_layer_mma.3} parent=55 // pred_fallthru
        _
      // Predicated region
      $region61: #{transformer_decoder_layer_mma.3} parent=55 // pred_check
        %p362 = pneg %p64
      $region62: #{transformer_decoder_layer_mma.3} parent=55 // pred_check_branch
        %364 = sbr.rel (%p362) target = $region64
      $region63: #{transformer_decoder_layer_mma.3} parent=55 // pred_region
        %p365 = scmp.lt.s32.totalorder %s18, 1
        %s366 = scalar_select %p365, %s18, 1
        %s367 = smul.addr %s366, 8
        %s368 = scalar_lea.vmem %s1, %s367
      $region64: #{transformer_decoder_layer_mma.3} parent=55 // pred_fallthru
        _
    $region56: #{transformer_decoder_layer_mma.3} parent=5 // pred_fallthru
      _
    %p369 = scmp.le.s32.totalorder 1, %s18
    %p370 = scmp.lt.s32.totalorder %s18, 3
    %p371 = pnand %p369, %p370
    %p372 = pneg %p371
    // Predicated region
    $region65: #{transformer_decoder_layer_mma.3} parent=5 // pred_check
      _
    $region66: #{transformer_decoder_layer_mma.3} parent=5 // pred_check_branch
      %374 = sbr.rel (%p371) target = $region68
    $region67: #{transformer_decoder_layer_mma.3} parent=5 // pred_region
      %s375 = ssub.s32 %s18, 1
      %p376 = scmp.lt.s32.totalorder %s23, 1
      %s377 = scalar_select %p376, %s23, 1
      %s378 = smul.addr %s377, 8
      %s379 = scalar_lea.vmem %s0, %s378
      %p380 = pneg %p44
      %p381 = pneg %p41
      %p382 = scmp.lt.s32.totalorder %s23, 1
      %s383 = scalar_select %p382, %s23, 1
      %s384 = smul.addr %s383, 8
      %s385 = scalar_lea.vmem %s1, %s384
      %p386 = pneg %p70
      %p387 = pneg %p67
      %p388 = pneg %p91
      %p389 = pneg %p88
      %p390 = pneg %p112
      %p391 = pneg %p109
      %p392 = pneg %p133
      %p393 = pneg %p130
      %p394 = pneg %p154
      %p395 = pneg %p151
      %p396 = pneg %p175
      %p397 = pneg %p172
      %p398 = pneg %p196
      %p399 = pneg %p193
      %p400 = pneg %p217
      %p401 = pneg %p214
      %p402 = pneg %p238
      %p403 = pneg %p235
      %p404 = pneg %p259
      %p405 = pneg %p256
      %p406 = pneg %p280
      %p407 = pneg %p277
      %p408 = pneg %p306
      %p409 = pneg %p303
      %p410 = scmp.lt.s32.totalorder %s23, 1
      %s411 = scalar_select %p410, %s23, 1
      %s412 = smul.addr %s411, 8
      %s413 = scalar_lea.vmem %s12, %s412
      %p414 = scmp.lt.s32.totalorder %s23, 1
      %s415 = scalar_select %p414, %s23, 1
      %s416 = smul.addr %s415, 8
      %s417 = scalar_lea.vmem %s0, %s416
      %p418 = scmp.lt.s32.totalorder %s23, 1
      %s419 = scalar_select %p418, %s23, 1
      %s420 = smul.addr %s419, 8
      %s421 = scalar_lea.vmem %s1, %s420
      %p422 = scmp.lt.s32.totalorder %s23, 1
      %s423 = scalar_select %p422, %s23, 1
      %s424 = smul.addr %s423, 8
      %s425 = scalar_lea.vmem %s12, %s424
      %v426 = vld [vmem:[%s417] sm:$0xff]
      %v427 = vld [vmem:[%s421] sm:$0xff]
      %v428 = vadd.f32 %v426, %v427
      %v429 = vld [vmem:[%s2] sm:$0xff]
      %v430 = vld [vmem:[%s2 + $0x8] sm:$0xff]
      %v431 = vld [vmem:[%s2 + $0x10] sm:$0xff]
      %v432 = vld [vmem:[%s2 + $0x18] sm:$0xff]
      %v433 = vld [vmem:[%s3] sm:$0x1]
      %v435 = vlaneseq
      %v436 = vshrl.u32 %v435, 7
      %v437 = vsub.s32 0, %v436
      %v438 = vrot.slane %v433, %v437
      %vm440 = vcmask 261120
      %v442 = vsel %vm440, %v428, 0
      %444 = vmatprep.subr.mxu0 0.0
      %445 = vmatpush1.msra.mxu0 0.0
      %446 = vmatprep.subr.mxu0 0.0
      %447 = vmatpush1.msra.mxu0 0.0
      %448 = vmatprep.subr.mxu0 0.0
      %449 = vmatpush1.msra.mxu0 0.0
      %450 = vmatprep.subr.mxu0 0.0
      %451 = vmatpush1.msra.mxu0 0.0
      %452 = vmatprep.subr.mxu0 0.0
      %453 = vmatpush1.msra.mxu0 0.0
      %454 = vmatprep.subr.mxu0 0.0
      %455 = vmatpush1.msra.mxu0 0.0
      %456 = vmatprep.subr.mxu0 0.0
      %457 = vmatpush1.msra.mxu0 0.0
      %458 = vmatprep.subr.mxu0 0.0
      %459 = vmatpush1.msra.mxu0 0.0
      %460 = vmatprep.subr.mxu0 0.0
      %461 = vmatpush1.msra.mxu0 0.0
      %462 = vmatprep.subr.mxu0 0.0
      %463 = vmatpush1.msra.mxu0 0.0
      %464 = vmatprep.subr.mxu0 0.0
      %465 = vmatpush1.msra.mxu0 0.0
      %466 = vmatprep.subr.mxu0 0.0
      %467 = vmatpush1.msra.mxu0 0.0
      %468 = vmatprep.subr.mxu0 0.0
      %469 = vmatpush1.msra.mxu0 %v432
      %470 = vmatprep.subr.mxu0 0.0
      %471 = vmatpush1.msra.mxu0 %v431
      %472 = vmatprep.subr.mxu0 0.0
      %473 = vmatpush1.msra.mxu0 %v430
      %474 = vmatprep.subr.mxu0 0.0
      %475 = vmatpush1.msra.mxu0 %v429
      %476 = vmatprep.subr.mxu0 0.0
      %477 = vmatpush2.msra.mxu0 0.0
      %478 = vmatprep.subr.mxu0 0.0
      %479 = vmatpush2.msra.mxu0 0.0
      %480 = vmatprep.subr.mxu0 0.0
      %481 = vmatpush2.msra.mxu0 0.0
      %482 = vmatprep.subr.mxu0 0.0
      %483 = vmatpush2.msra.mxu0 0.0
      %484 = vmatprep.subr.mxu0 0.0
      %485 = vmatpush2.msra.mxu0 0.0
      %486 = vmatprep.subr.mxu0 0.0
      %487 = vmatpush2.msra.mxu0 0.0
      %488 = vmatprep.subr.mxu0 0.0
      %489 = vmatpush2.msra.mxu0 0.0
      %490 = vmatprep.subr.mxu0 0.0
      %491 = vmatpush2.msra.mxu0 0.0
      %492 = vmatprep.subr.mxu0 0.0
      %493 = vmatpush2.msra.mxu0 0.0
      %494 = vmatprep.subr.mxu0 0.0
      %495 = vmatpush2.msra.mxu0 0.0
      %496 = vmatprep.subr.mxu0 0.0
      %497 = vmatpush2.msra.mxu0 0.0
      %498 = vmatprep.subr.mxu0 0.0
      %499 = vmatpush2.msra.mxu0 0.0
      %500 = vmatprep.subr.mxu0 0.0
      %501 = vmatpush2.msra.mxu0 0.0
      %502 = vmatprep.subr.mxu0 0.0
      %503 = vmatpush2.msra.mxu0 0.0
      %504 = vmatprep.subr.mxu0 0.0
      %505 = vmatpush2.msra.mxu0 0.0
      %506 = vmatprep.subr.mxu0 0.0
      %507 = vmatpush2.msra.mxu0 0.0
      %508 = vmatprep.mubr.f32.mxu0 0.0
      %509 = vmatmul.mubr.f32.gmra.mxu0 %v442
      %v510 = vpop.f32.mrf.mxu0
      %v511 = vadd.f32 %v438, %v510
      %v512 = vpop.f32.mrf.mxu0
      %513 = vdwg.mxu0
      %v514 = vmul.f32 %v511, 0.35355338
      %v515 = vld [vmem:[%s4] sm:$0xff]
      %v516 = vld [vmem:[%s4 + $0x8] sm:$0xff]
      %v517 = vld [vmem:[%s4 + $0x10] sm:$0xff]
      %v518 = vld [vmem:[%s4 + $0x18] sm:$0xff]
      %v519 = vld [vmem:[%s5] sm:$0x1]
      %v521 = vlaneseq
      %v522 = vshrl.u32 %v521, 7
      %v523 = vsub.s32 0, %v522
      %v524 = vrot.slane %v519, %v523
      %526 = vmatprep.subr.mxu0 0.0
      %527 = vmatpush1.msra.mxu0 0.0
      %528 = vmatprep.subr.mxu0 0.0
      %529 = vmatpush1.msra.mxu0 0.0
      %530 = vmatprep.subr.mxu0 0.0
      %531 = vmatpush1.msra.mxu0 0.0
      %532 = vmatprep.subr.mxu0 0.0
      %533 = vmatpush1.msra.mxu0 0.0
      %534 = vmatprep.subr.mxu0 0.0
      %535 = vmatpush1.msra.mxu0 0.0
      %536 = vmatprep.subr.mxu0 0.0
      %537 = vmatpush1.msra.mxu0 0.0
      %538 = vmatprep.subr.mxu0 0.0
      %539 = vmatpush1.msra.mxu0 0.0
      %540 = vmatprep.subr.mxu0 0.0
      %541 = vmatpush1.msra.mxu0 0.0
      %542 = vmatprep.subr.mxu0 0.0
      %543 = vmatpush1.msra.mxu0 0.0
      %544 = vmatprep.subr.mxu0 0.0
      %545 = vmatpush1.msra.mxu0 0.0
      %546 = vmatprep.subr.mxu0 0.0
      %547 = vmatpush1.msra.mxu0 0.0
      %548 = vmatprep.subr.mxu0 0.0
      %549 = vmatpush1.msra.mxu0 0.0
      %550 = vmatprep.subr.mxu0 0.0
      %551 = vmatpush1.msra.mxu0 %v518
      %552 = vmatprep.subr.mxu0 0.0
      %553 = vmatpush1.msra.mxu0 %v517
      %554 = vmatprep.subr.mxu0 0.0
      %555 = vmatpush1.msra.mxu0 %v516
      %556 = vmatprep.subr.mxu0 0.0
      %557 = vmatpush1.msra.mxu0 %v515
      %558 = vmatprep.subr.mxu0 0.0
      %559 = vmatpush2.msra.mxu0 0.0
      %560 = vmatprep.subr.mxu0 0.0
      %561 = vmatpush2.msra.mxu0 0.0
      %562 = vmatprep.subr.mxu0 0.0
      %563 = vmatpush2.msra.mxu0 0.0
      %564 = vmatprep.subr.mxu0 0.0
      %565 = vmatpush2.msra.mxu0 0.0
      %566 = vmatprep.subr.mxu0 0.0
      %567 = vmatpush2.msra.mxu0 0.0
      %568 = vmatprep.subr.mxu0 0.0
      %569 = vmatpush2.msra.mxu0 0.0
      %570 = vmatprep.subr.mxu0 0.0
      %571 = vmatpush2.msra.mxu0 0.0
      %572 = vmatprep.subr.mxu0 0.0
      %573 = vmatpush2.msra.mxu0 0.0
      %574 = vmatprep.subr.mxu0 0.0
      %575 = vmatpush2.msra.mxu0 0.0
      %576 = vmatprep.subr.mxu0 0.0
      %577 = vmatpush2.msra.mxu0 0.0
      %578 = vmatprep.subr.mxu0 0.0
      %579 = vmatpush2.msra.mxu0 0.0
      %580 = vmatprep.subr.mxu0 0.0
      %581 = vmatpush2.msra.mxu0 0.0
      %582 = vmatprep.subr.mxu0 0.0
      %583 = vmatpush2.msra.mxu0 0.0
      %584 = vmatprep.subr.mxu0 0.0
      %585 = vmatpush2.msra.mxu0 0.0
      %586 = vmatprep.subr.mxu0 0.0
      %587 = vmatpush2.msra.mxu0 0.0
      %588 = vmatprep.subr.mxu0 0.0
      %589 = vmatpush2.msra.mxu0 0.0
      %590 = vmatprep.mubr.f32.mxu0 0.0
      %591 = vmatmul.mubr.f32.gmra.mxu0 %v442
      %v592 = vpop.f32.mrf.mxu0
      %v593 = vadd.f32 %v524, %v592
      %v594 = vpop.f32.mrf.mxu0
      %595 = vdwg.mxu0
      %v596 = vld [vmem:[%s6] sm:$0xff]
      %v597 = vld [vmem:[%s6 + $0x8] sm:$0xff]
      %v598 = vld [vmem:[%s6 + $0x10] sm:$0xff]
      %v599 = vld [vmem:[%s6 + $0x18] sm:$0xff]
      %v600 = vld [vmem:[%s7] sm:$0x1]
      %v602 = vlaneseq
      %v603 = vshrl.u32 %v602, 7
      %v604 = vsub.s32 0, %v603
      %v605 = vrot.slane %v600, %v604
      %v608 = vsel %vm440, %v426, 0
      %610 = vmatprep.subr.mxu0 0.0
      %611 = vmatpush1.msra.mxu0 0.0
      %612 = vmatprep.subr.mxu0 0.0
      %613 = vmatpush1.msra.mxu0 0.0
      %614 = vmatprep.subr.mxu0 0.0
      %615 = vmatpush1.msra.mxu0 0.0
      %616 = vmatprep.subr.mxu0 0.0
      %617 = vmatpush1.msra.mxu0 0.0
      %618 = vmatprep.subr.mxu0 0.0
      %619 = vmatpush1.msra.mxu0 0.0
      %620 = vmatprep.subr.mxu0 0.0
      %621 = vmatpush1.msra.mxu0 0.0
      %622 = vmatprep.subr.mxu0 0.0
      %623 = vmatpush1.msra.mxu0 0.0
      %624 = vmatprep.subr.mxu0 0.0
      %625 = vmatpush1.msra.mxu0 0.0
      %626 = vmatprep.subr.mxu0 0.0
      %627 = vmatpush1.msra.mxu0 0.0
      %628 = vmatprep.subr.mxu0 0.0
      %629 = vmatpush1.msra.mxu0 0.0
      %630 = vmatprep.subr.mxu0 0.0
      %631 = vmatpush1.msra.mxu0 0.0
      %632 = vmatprep.subr.mxu0 0.0
      %633 = vmatpush1.msra.mxu0 0.0
      %634 = vmatprep.subr.mxu0 0.0
      %635 = vmatpush1.msra.mxu0 %v599
      %636 = vmatprep.subr.mxu0 0.0
      %637 = vmatpush1.msra.mxu0 %v598
      %638 = vmatprep.subr.mxu0 0.0
      %639 = vmatpush1.msra.mxu0 %v597
      %640 = vmatprep.subr.mxu0 0.0
      %641 = vmatpush1.msra.mxu0 %v596
      %642 = vmatprep.subr.mxu0 0.0
      %643 = vmatpush2.msra.mxu0 0.0
      %644 = vmatprep.subr.mxu0 0.0
      %645 = vmatpush2.msra.mxu0 0.0
      %646 = vmatprep.subr.mxu0 0.0
      %647 = vmatpush2.msra.mxu0 0.0
      %648 = vmatprep.subr.mxu0 0.0
      %649 = vmatpush2.msra.mxu0 0.0
      %650 = vmatprep.subr.mxu0 0.0
      %651 = vmatpush2.msra.mxu0 0.0
      %652 = vmatprep.subr.mxu0 0.0
      %653 = vmatpush2.msra.mxu0 0.0
      %654 = vmatprep.subr.mxu0 0.0
      %655 = vmatpush2.msra.mxu0 0.0
      %656 = vmatprep.subr.mxu0 0.0
      %657 = vmatpush2.msra.mxu0 0.0
      %658 = vmatprep.subr.mxu0 0.0
      %659 = vmatpush2.msra.mxu0 0.0
      %660 = vmatprep.subr.mxu0 0.0
      %661 = vmatpush2.msra.mxu0 0.0
      %662 = vmatprep.subr.mxu0 0.0
      %663 = vmatpush2.msra.mxu0 0.0
      %664 = vmatprep.subr.mxu0 0.0
      %665 = vmatpush2.msra.mxu0 0.0
      %666 = vmatprep.subr.mxu0 0.0
      %667 = vmatpush2.msra.mxu0 0.0
      %668 = vmatprep.subr.mxu0 0.0
      %669 = vmatpush2.msra.mxu0 0.0
      %670 = vmatprep.subr.mxu0 0.0
      %671 = vmatpush2.msra.mxu0 0.0
      %672 = vmatprep.subr.mxu0 0.0
      %673 = vmatpush2.msra.mxu0 0.0
      %674 = vmatprep.mubr.f32.mxu0 0.0
      %675 = vmatmul.mubr.f32.gmra.mxu0 %v608
      %v676 = vpop.f32.mrf.mxu0
      %v677 = vadd.f32 %v605, %v676
      %v678 = vpop.f32.mrf.mxu0
      %679 = vdwg.mxu0
      %vm680 = vcmask 64512
      %v682 = vsel %vm680, %v514, 0
      %v685 = vsel %vm680, %v593, 0
      %687 = vmatprep.subr.mxu0 0.0
      %688 = vmatpush1.xpose.msra.mxu0 0.0
      %689 = vmatprep.subr.mxu0 0.0
      %690 = vmatpush1.xpose.msra.mxu0 0.0
      %691 = vmatprep.subr.mxu0 0.0
      %692 = vmatpush1.xpose.msra.mxu0 0.0
      %693 = vmatprep.subr.mxu0 0.0
      %694 = vmatpush1.xpose.msra.mxu0 0.0
      %695 = vmatprep.subr.mxu0 0.0
      %696 = vmatpush1.xpose.msra.mxu0 0.0
      %697 = vmatprep.subr.mxu0 0.0
      %698 = vmatpush1.xpose.msra.mxu0 0.0
      %699 = vmatprep.subr.mxu0 0.0
      %700 = vmatpush1.xpose.msra.mxu0 0.0
      %701 = vmatprep.subr.mxu0 0.0
      %702 = vmatpush1.xpose.msra.mxu0 0.0
      %703 = vmatprep.subr.mxu0 0.0
      %704 = vmatpush1.xpose.msra.mxu0 0.0
      %705 = vmatprep.subr.mxu0 0.0
      %706 = vmatpush1.xpose.msra.mxu0 0.0
      %707 = vmatprep.subr.mxu0 0.0
      %708 = vmatpush1.xpose.msra.mxu0 0.0
      %709 = vmatprep.subr.mxu0 0.0
      %710 = vmatpush1.xpose.msra.mxu0 0.0
      %711 = vmatprep.subr.mxu0 0.0
      %712 = vmatpush1.xpose.msra.mxu0 0.0
      %713 = vmatprep.subr.mxu0 0.0
      %714 = vmatpush1.xpose.msra.mxu0 0.0
      %715 = vmatprep.subr.mxu0 0.0
      %716 = vmatpush1.xpose.msra.mxu0 0.0
      %717 = vmatprep.subr.mxu0 0.0
      %718 = vmatpush1.xpose.msra.mxu0 %v685
      %719 = vmatprep.subr.mxu0 0.0
      %720 = vmatpush2.xpose.msra.mxu0 0.0
      %721 = vmatprep.subr.mxu0 0.0
      %722 = vmatpush2.xpose.msra.mxu0 0.0
      %723 = vmatprep.subr.mxu0 0.0
      %724 = vmatpush2.xpose.msra.mxu0 0.0
      %725 = vmatprep.subr.mxu0 0.0
      %726 = vmatpush2.xpose.msra.mxu0 0.0
      %727 = vmatprep.subr.mxu0 0.0
      %728 = vmatpush2.xpose.msra.mxu0 0.0
      %729 = vmatprep.subr.mxu0 0.0
      %730 = vmatpush2.xpose.msra.mxu0 0.0
      %731 = vmatprep.subr.mxu0 0.0
      %732 = vmatpush2.xpose.msra.mxu0 0.0
      %733 = vmatprep.subr.mxu0 0.0
      %734 = vmatpush2.xpose.msra.mxu0 0.0
      %735 = vmatprep.subr.mxu0 0.0
      %736 = vmatpush2.xpose.msra.mxu0 0.0
      %737 = vmatprep.subr.mxu0 0.0
      %738 = vmatpush2.xpose.msra.mxu0 0.0
      %739 = vmatprep.subr.mxu0 0.0
      %740 = vmatpush2.xpose.msra.mxu0 0.0
      %741 = vmatprep.subr.mxu0 0.0
      %742 = vmatpush2.xpose.msra.mxu0 0.0
      %743 = vmatprep.subr.mxu0 0.0
      %744 = vmatpush2.xpose.msra.mxu0 0.0
      %745 = vmatprep.subr.mxu0 0.0
      %746 = vmatpush2.xpose.msra.mxu0 0.0
      %747 = vmatprep.subr.mxu0 0.0
      %748 = vmatpush2.xpose.msra.mxu0 0.0
      %749 = vmatprep.subr.mxu0 0.0
      %750 = vmatpush2.xpose.msra.mxu0 0.0
      %751 = vmatprep.mubr.f32.mxu0 0.0
      %752 = vmatmul.mubr.f32.gmra.mxu0 %v682
      %v753 = vpop.f32.mrf.mxu0
      %v754 = vadd.f32 0.0, %v753
      %v755 = vpop.f32.mrf.mxu0
      %756 = vdwg.mxu0
      %v757 = vsel %vm680, %v754, -inf
      %758 = vmax.xlane.f32.xlu0 %v757
      %v759 = vpop.xlane.xlu0 %758
      %v760 = vsub.f32 %v754, %v759
      %v761 = vmul.f32 %v760, 1.442695
      %v762 = vpow.pop %v761
      %v763 = vsel %vm680, %v762, 0.0
      %764 = vadd.xlane.f32.xlu0 %v763
      %v765 = vpop.xlane.xlu0 %764
      %v766 = vrcp.pop %v765
      %v767 = vmul.f32 %v762, %v766
      %v769 = vsel %vm680, %v767, 0
      %771 = vmatprep.subr.mxu0 0.0
      %772 = vmatpush1.msra.mxu0 0.0
      %773 = vmatprep.subr.mxu0 0.0
      %774 = vmatpush1.msra.mxu0 0.0
      %775 = vmatprep.subr.mxu0 0.0
      %776 = vmatpush1.msra.mxu0 0.0
      %777 = vmatprep.subr.mxu0 0.0
      %778 = vmatpush1.msra.mxu0 0.0
      %779 = vmatprep.subr.mxu0 0.0
      %780 = vmatpush1.msra.mxu0 0.0
      %781 = vmatprep.subr.mxu0 0.0
      %782 = vmatpush1.msra.mxu0 0.0
      %783 = vmatprep.subr.mxu0 0.0
      %784 = vmatpush1.msra.mxu0 0.0
      %785 = vmatprep.subr.mxu0 0.0
      %786 = vmatpush1.msra.mxu0 0.0
      %787 = vmatprep.subr.mxu0 0.0
      %788 = vmatpush1.msra.mxu0 0.0
      %789 = vmatprep.subr.mxu0 0.0
      %790 = vmatpush1.msra.mxu0 0.0
      %791 = vmatprep.subr.mxu0 0.0
      %792 = vmatpush1.msra.mxu0 0.0
      %793 = vmatprep.subr.mxu0 0.0
      %794 = vmatpush1.msra.mxu0 0.0
      %795 = vmatprep.subr.mxu0 0.0
      %796 = vmatpush1.msra.mxu0 0.0
      %797 = vmatprep.subr.mxu0 0.0
      %798 = vmatpush1.msra.mxu0 0.0
      %799 = vmatprep.subr.mxu0 0.0
      %800 = vmatpush1.msra.mxu0 0.0
      %801 = vmatprep.subr.mxu0 0.0
      %802 = vmatpush1.msra.mxu0 %v677
      %803 = vmatprep.subr.mxu0 0.0
      %804 = vmatpush2.msra.mxu0 0.0
      %805 = vmatprep.subr.mxu0 0.0
      %806 = vmatpush2.msra.mxu0 0.0
      %807 = vmatprep.subr.mxu0 0.0
      %808 = vmatpush2.msra.mxu0 0.0
      %809 = vmatprep.subr.mxu0 0.0
      %810 = vmatpush2.msra.mxu0 0.0
      %811 = vmatprep.subr.mxu0 0.0
      %812 = vmatpush2.msra.mxu0 0.0
      %813 = vmatprep.subr.mxu0 0.0
      %814 = vmatpush2.msra.mxu0 0.0
      %815 = vmatprep.subr.mxu0 0.0
      %816 = vmatpush2.msra.mxu0 0.0
      %817 = vmatprep.subr.mxu0 0.0
      %818 = vmatpush2.msra.mxu0 0.0
      %819 = vmatprep.subr.mxu0 0.0
      %820 = vmatpush2.msra.mxu0 0.0
      %821 = vmatprep.subr.mxu0 0.0
      %822 = vmatpush2.msra.mxu0 0.0
      %823 = vmatprep.subr.mxu0 0.0
      %824 = vmatpush2.msra.mxu0 0.0
      %825 = vmatprep.subr.mxu0 0.0
      %826 = vmatpush2.msra.mxu0 0.0
      %827 = vmatprep.subr.mxu0 0.0
      %828 = vmatpush2.msra.mxu0 0.0
      %829 = vmatprep.subr.mxu0 0.0
      %830 = vmatpush2.msra.mxu0 0.0
      %831 = vmatprep.subr.mxu0 0.0
      %832 = vmatpush2.msra.mxu0 0.0
      %833 = vmatprep.subr.mxu0 0.0
      %834 = vmatpush2.msra.mxu0 0.0
      %835 = vmatprep.mubr.f32.mxu0 0.0
      %836 = vmatmul.mubr.f32.gmra.mxu0 %v769
      %v837 = vpop.f32.mrf.mxu0
      %v838 = vadd.f32 0.0, %v837
      %v839 = vpop.f32.mrf.mxu0
      %840 = vdwg.mxu0
      %v841 = vld [vmem:[%s8] sm:$0xff]
      %s842 = scalar_lea.vmem %s2, 32
      %v843 = vld [vmem:[%s842] sm:$0xff]
      %v844 = vld [vmem:[%s842 + $0x8] sm:$0xff]
      %v845 = vld [vmem:[%s842 + $0x10] sm:$0xff]
      %v846 = vld [vmem:[%s842 + $0x18] sm:$0xff]
      %s847 = scalar_lea.vmem %s3, 1
      %v848 = vld [vmem:[%s847] sm:$0x1]
      %v850 = vlaneseq
      %v851 = vshrl.u32 %v850, 7
      %v852 = vsub.s32 0, %v851
      %v853 = vrot.slane %v848, %v852
      %855 = vmatprep.subr.mxu0 0.0
      %856 = vmatpush1.msra.mxu0 0.0
      %857 = vmatprep.subr.mxu0 0.0
      %858 = vmatpush1.msra.mxu0 0.0
      %859 = vmatprep.subr.mxu0 0.0
      %860 = vmatpush1.msra.mxu0 0.0
      %861 = vmatprep.subr.mxu0 0.0
      %862 = vmatpush1.msra.mxu0 0.0
      %863 = vmatprep.subr.mxu0 0.0
      %864 = vmatpush1.msra.mxu0 0.0
      %865 = vmatprep.subr.mxu0 0.0
      %866 = vmatpush1.msra.mxu0 0.0
      %867 = vmatprep.subr.mxu0 0.0
      %868 = vmatpush1.msra.mxu0 0.0
      %869 = vmatprep.subr.mxu0 0.0
      %870 = vmatpush1.msra.mxu0 0.0
      %871 = vmatprep.subr.mxu0 0.0
      %872 = vmatpush1.msra.mxu0 0.0
      %873 = vmatprep.subr.mxu0 0.0
      %874 = vmatpush1.msra.mxu0 0.0
      %875 = vmatprep.subr.mxu0 0.0
      %876 = vmatpush1.msra.mxu0 0.0
      %877 = vmatprep.subr.mxu0 0.0
      %878 = vmatpush1.msra.mxu0 0.0
      %879 = vmatprep.subr.mxu0 0.0
      %880 = vmatpush1.msra.mxu0 %v846
      %881 = vmatprep.subr.mxu0 0.0
      %882 = vmatpush1.msra.mxu0 %v845
      %883 = vmatprep.subr.mxu0 0.0
      %884 = vmatpush1.msra.mxu0 %v844
      %885 = vmatprep.subr.mxu0 0.0
      %886 = vmatpush1.msra.mxu0 %v843
      %887 = vmatprep.subr.mxu0 0.0
      %888 = vmatpush2.msra.mxu0 0.0
      %889 = vmatprep.subr.mxu0 0.0
      %890 = vmatpush2.msra.mxu0 0.0
      %891 = vmatprep.subr.mxu0 0.0
      %892 = vmatpush2.msra.mxu0 0.0
      %893 = vmatprep.subr.mxu0 0.0
      %894 = vmatpush2.msra.mxu0 0.0
      %895 = vmatprep.subr.mxu0 0.0
      %896 = vmatpush2.msra.mxu0 0.0
      %897 = vmatprep.subr.mxu0 0.0
      %898 = vmatpush2.msra.mxu0 0.0
      %899 = vmatprep.subr.mxu0 0.0
      %900 = vmatpush2.msra.mxu0 0.0
      %901 = vmatprep.subr.mxu0 0.0
      %902 = vmatpush2.msra.mxu0 0.0
      %903 = vmatprep.subr.mxu0 0.0
      %904 = vmatpush2.msra.mxu0 0.0
      %905 = vmatprep.subr.mxu0 0.0
      %906 = vmatpush2.msra.mxu0 0.0
      %907 = vmatprep.subr.mxu0 0.0
      %908 = vmatpush2.msra.mxu0 0.0
      %909 = vmatprep.subr.mxu0 0.0
      %910 = vmatpush2.msra.mxu0 0.0
      %911 = vmatprep.subr.mxu0 0.0
      %912 = vmatpush2.msra.mxu0 0.0
      %913 = vmatprep.subr.mxu0 0.0
      %914 = vmatpush2.msra.mxu0 0.0
      %915 = vmatprep.subr.mxu0 0.0
      %916 = vmatpush2.msra.mxu0 0.0
      %917 = vmatprep.subr.mxu0 0.0
      %918 = vmatpush2.msra.mxu0 0.0
      %919 = vmatprep.mubr.f32.mxu0 0.0
      %920 = vmatmul.mubr.f32.gmra.mxu0 %v442
      %v921 = vpop.f32.mrf.mxu0
      %v922 = vadd.f32 %v853, %v921
      %v923 = vpop.f32.mrf.mxu0
      %924 = vdwg.mxu0
      %v925 = vmul.f32 %v922, 0.35355338
      %s926 = scalar_lea.vmem %s4, 32
      %v927 = vld [vmem:[%s926] sm:$0xff]
      %v928 = vld [vmem:[%s926 + $0x8] sm:$0xff]
      %v929 = vld [vmem:[%s926 + $0x10] sm:$0xff]
      %v930 = vld [vmem:[%s926 + $0x18] sm:$0xff]
      %s931 = scalar_lea.vmem %s5, 1
      %v932 = vld [vmem:[%s931] sm:$0x1]
      %v934 = vlaneseq
      %v935 = vshrl.u32 %v934, 7
      %v936 = vsub.s32 0, %v935
      %v937 = vrot.slane %v932, %v936
      %939 = vmatprep.subr.mxu0 0.0
      %940 = vmatpush1.msra.mxu0 0.0
      %941 = vmatprep.subr.mxu0 0.0
      %942 = vmatpush1.msra.mxu0 0.0
      %943 = vmatprep.subr.mxu0 0.0
      %944 = vmatpush1.msra.mxu0 0.0
      %945 = vmatprep.subr.mxu0 0.0
      %946 = vmatpush1.msra.mxu0 0.0
      %947 = vmatprep.subr.mxu0 0.0
      %948 = vmatpush1.msra.mxu0 0.0
      %949 = vmatprep.subr.mxu0 0.0
      %950 = vmatpush1.msra.mxu0 0.0
      %951 = vmatprep.subr.mxu0 0.0
      %952 = vmatpush1.msra.mxu0 0.0
      %953 = vmatprep.subr.mxu0 0.0
      %954 = vmatpush1.msra.mxu0 0.0
      %955 = vmatprep.subr.mxu0 0.0
      %956 = vmatpush1.msra.mxu0 0.0
      %957 = vmatprep.subr.mxu0 0.0
      %958 = vmatpush1.msra.mxu0 0.0
      %959 = vmatprep.subr.mxu0 0.0
      %960 = vmatpush1.msra.mxu0 0.0
      %961 = vmatprep.subr.mxu0 0.0
      %962 = vmatpush1.msra.mxu0 0.0
      %963 = vmatprep.subr.mxu0 0.0
      %964 = vmatpush1.msra.mxu0 %v930
      %965 = vmatprep.subr.mxu0 0.0
      %966 = vmatpush1.msra.mxu0 %v929
      %967 = vmatprep.subr.mxu0 0.0
      %968 = vmatpush1.msra.mxu0 %v928
      %969 = vmatprep.subr.mxu0 0.0
      %970 = vmatpush1.msra.mxu0 %v927
      %971 = vmatprep.subr.mxu0 0.0
      %972 = vmatpush2.msra.mxu0 0.0
      %973 = vmatprep.subr.mxu0 0.0
      %974 = vmatpush2.msra.mxu0 0.0
      %975 = vmatprep.subr.mxu0 0.0
      %976 = vmatpush2.msra.mxu0 0.0
      %977 = vmatprep.subr.mxu0 0.0
      %978 = vmatpush2.msra.mxu0 0.0
      %979 = vmatprep.subr.mxu0 0.0
      %980 = vmatpush2.msra.mxu0 0.0
      %981 = vmatprep.subr.mxu0 0.0
      %982 = vmatpush2.msra.mxu0 0.0
      %983 = vmatprep.subr.mxu0 0.0
      %984 = vmatpush2.msra.mxu0 0.0
      %985 = vmatprep.subr.mxu0 0.0
      %986 = vmatpush2.msra.mxu0 0.0
      %987 = vmatprep.subr.mxu0 0.0
      %988 = vmatpush2.msra.mxu0 0.0
      %989 = vmatprep.subr.mxu0 0.0
      %990 = vmatpush2.msra.mxu0 0.0
      %991 = vmatprep.subr.mxu0 0.0
      %992 = vmatpush2.msra.mxu0 0.0
      %993 = vmatprep.subr.mxu0 0.0
      %994 = vmatpush2.msra.mxu0 0.0
      %995 = vmatprep.subr.mxu0 0.0
      %996 = vmatpush2.msra.mxu0 0.0
      %997 = vmatprep.subr.mxu0 0.0
      %998 = vmatpush2.msra.mxu0 0.0
      %999 = vmatprep.subr.mxu0 0.0
      %1000 = vmatpush2.msra.mxu0 0.0
      %1001 = vmatprep.subr.mxu0 0.0
      %1002 = vmatpush2.msra.mxu0 0.0
      %1003 = vmatprep.mubr.f32.mxu0 0.0
      %1004 = vmatmul.mubr.f32.gmra.mxu0 %v442
      %v1005 = vpop.f32.mrf.mxu0
      %v1006 = vadd.f32 %v937, %v1005
      %v1007 = vpop.f32.mrf.mxu0
      %1008 = vdwg.mxu0
      %s1009 = scalar_lea.vmem %s6, 32
      %v1010 = vld [vmem:[%s1009] sm:$0xff]
      %v1011 = vld [vmem:[%s1009 + $0x8] sm:$0xff]
      %v1012 = vld [vmem:[%s1009 + $0x10] sm:$0xff]
      %v1013 = vld [vmem:[%s1009 + $0x18] sm:$0xff]
      %s1014 = scalar_lea.vmem %s7, 1
      %v1015 = vld [vmem:[%s1014] sm:$0x1]
      %v1017 = vlaneseq
      %v1018 = vshrl.u32 %v1017, 7
      %v1019 = vsub.s32 0, %v1018
      %v1020 = vrot.slane %v1015, %v1019
      %1022 = vmatprep.subr.mxu0 0.0
      %1023 = vmatpush1.msra.mxu0 0.0
      %1024 = vmatprep.subr.mxu0 0.0
      %1025 = vmatpush1.msra.mxu0 0.0
      %1026 = vmatprep.subr.mxu0 0.0
      %1027 = vmatpush1.msra.mxu0 0.0
      %1028 = vmatprep.subr.mxu0 0.0
      %1029 = vmatpush1.msra.mxu0 0.0
      %1030 = vmatprep.subr.mxu0 0.0
      %1031 = vmatpush1.msra.mxu0 0.0
      %1032 = vmatprep.subr.mxu0 0.0
      %1033 = vmatpush1.msra.mxu0 0.0
      %1034 = vmatprep.subr.mxu0 0.0
      %1035 = vmatpush1.msra.mxu0 0.0
      %1036 = vmatprep.subr.mxu0 0.0
      %1037 = vmatpush1.msra.mxu0 0.0
      %1038 = vmatprep.subr.mxu0 0.0
      %1039 = vmatpush1.msra.mxu0 0.0
      %1040 = vmatprep.subr.mxu0 0.0
      %1041 = vmatpush1.msra.mxu0 0.0
      %1042 = vmatprep.subr.mxu0 0.0
      %1043 = vmatpush1.msra.mxu0 0.0
      %1044 = vmatprep.subr.mxu0 0.0
      %1045 = vmatpush1.msra.mxu0 0.0
      %1046 = vmatprep.subr.mxu0 0.0
      %1047 = vmatpush1.msra.mxu0 %v1013
      %1048 = vmatprep.subr.mxu0 0.0
      %1049 = vmatpush1.msra.mxu0 %v1012
      %1050 = vmatprep.subr.mxu0 0.0
      %1051 = vmatpush1.msra.mxu0 %v1011
      %1052 = vmatprep.subr.mxu0 0.0
      %1053 = vmatpush1.msra.mxu0 %v1010
      %1054 = vmatprep.subr.mxu0 0.0
      %1055 = vmatpush2.msra.mxu0 0.0
      %1056 = vmatprep.subr.mxu0 0.0
      %1057 = vmatpush2.msra.mxu0 0.0
      %1058 = vmatprep.subr.mxu0 0.0
      %1059 = vmatpush2.msra.mxu0 0.0
      %1060 = vmatprep.subr.mxu0 0.0
      %1061 = vmatpush2.msra.mxu0 0.0
      %1062 = vmatprep.subr.mxu0 0.0
      %1063 = vmatpush2.msra.mxu0 0.0
      %1064 = vmatprep.subr.mxu0 0.0
      %1065 = vmatpush2.msra.mxu0 0.0
      %1066 = vmatprep.subr.mxu0 0.0
      %1067 = vmatpush2.msra.mxu0 0.0
      %1068 = vmatprep.subr.mxu0 0.0
      %1069 = vmatpush2.msra.mxu0 0.0
      %1070 = vmatprep.subr.mxu0 0.0
      %1071 = vmatpush2.msra.mxu0 0.0
      %1072 = vmatprep.subr.mxu0 0.0
      %1073 = vmatpush2.msra.mxu0 0.0
      %1074 = vmatprep.subr.mxu0 0.0
      %1075 = vmatpush2.msra.mxu0 0.0
      %1076 = vmatprep.subr.mxu0 0.0
      %1077 = vmatpush2.msra.mxu0 0.0
      %1078 = vmatprep.subr.mxu0 0.0
      %1079 = vmatpush2.msra.mxu0 0.0
      %1080 = vmatprep.subr.mxu0 0.0
      %1081 = vmatpush2.msra.mxu0 0.0
      %1082 = vmatprep.subr.mxu0 0.0
      %1083 = vmatpush2.msra.mxu0 0.0
      %1084 = vmatprep.subr.mxu0 0.0
      %1085 = vmatpush2.msra.mxu0 0.0
      %1086 = vmatprep.mubr.f32.mxu0 0.0
      %1087 = vmatmul.mubr.f32.gmra.mxu0 %v608
      %v1088 = vpop.f32.mrf.mxu0
      %v1089 = vadd.f32 %v1020, %v1088
      %v1090 = vpop.f32.mrf.mxu0
      %1091 = vdwg.mxu0
      %v1093 = vsel %vm680, %v925, 0
      %v1096 = vsel %vm680, %v1006, 0
      %1098 = vmatprep.subr.mxu0 0.0
      %1099 = vmatpush1.xpose.msra.mxu0 0.0
      %1100 = vmatprep.subr.mxu0 0.0
      %1101 = vmatpush1.xpose.msra.mxu0 0.0
      %1102 = vmatprep.subr.mxu0 0.0
      %1103 = vmatpush1.xpose.msra.mxu0 0.0
      %1104 = vmatprep.subr.mxu0 0.0
      %1105 = vmatpush1.xpose.msra.mxu0 0.0
      %1106 = vmatprep.subr.mxu0 0.0
      %1107 = vmatpush1.xpose.msra.mxu0 0.0
      %1108 = vmatprep.subr.mxu0 0.0
      %1109 = vmatpush1.xpose.msra.mxu0 0.0
      %1110 = vmatprep.subr.mxu0 0.0
      %1111 = vmatpush1.xpose.msra.mxu0 0.0
      %1112 = vmatprep.subr.mxu0 0.0
      %1113 = vmatpush1.xpose.msra.mxu0 0.0
      %1114 = vmatprep.subr.mxu0 0.0
      %1115 = vmatpush1.xpose.msra.mxu0 0.0
      %1116 = vmatprep.subr.mxu0 0.0
      %1117 = vmatpush1.xpose.msra.mxu0 0.0
      %1118 = vmatprep.subr.mxu0 0.0
      %1119 = vmatpush1.xpose.msra.mxu0 0.0
      %1120 = vmatprep.subr.mxu0 0.0
      %1121 = vmatpush1.xpose.msra.mxu0 0.0
      %1122 = vmatprep.subr.mxu0 0.0
      %1123 = vmatpush1.xpose.msra.mxu0 0.0
      %1124 = vmatprep.subr.mxu0 0.0
      %1125 = vmatpush1.xpose.msra.mxu0 0.0
      %1126 = vmatprep.subr.mxu0 0.0
      %1127 = vmatpush1.xpose.msra.mxu0 0.0
      %1128 = vmatprep.subr.mxu0 0.0
      %1129 = vmatpush1.xpose.msra.mxu0 %v1096
      %1130 = vmatprep.subr.mxu0 0.0
      %1131 = vmatpush2.xpose.msra.mxu0 0.0
      %1132 = vmatprep.subr.mxu0 0.0
      %1133 = vmatpush2.xpose.msra.mxu0 0.0
      %1134 = vmatprep.subr.mxu0 0.0
      %1135 = vmatpush2.xpose.msra.mxu0 0.0
      %1136 = vmatprep.subr.mxu0 0.0
      %1137 = vmatpush2.xpose.msra.mxu0 0.0
      %1138 = vmatprep.subr.mxu0 0.0
      %1139 = vmatpush2.xpose.msra.mxu0 0.0
      %1140 = vmatprep.subr.mxu0 0.0
      %1141 = vmatpush2.xpose.msra.mxu0 0.0
      %1142 = vmatprep.subr.mxu0 0.0
      %1143 = vmatpush2.xpose.msra.mxu0 0.0
      %1144 = vmatprep.subr.mxu0 0.0
      %1145 = vmatpush2.xpose.msra.mxu0 0.0
      %1146 = vmatprep.subr.mxu0 0.0
      %1147 = vmatpush2.xpose.msra.mxu0 0.0
      %1148 = vmatprep.subr.mxu0 0.0
      %1149 = vmatpush2.xpose.msra.mxu0 0.0
      %1150 = vmatprep.subr.mxu0 0.0
      %1151 = vmatpush2.xpose.msra.mxu0 0.0
      %1152 = vmatprep.subr.mxu0 0.0
      %1153 = vmatpush2.xpose.msra.mxu0 0.0
      %1154 = vmatprep.subr.mxu0 0.0
      %1155 = vmatpush2.xpose.msra.mxu0 0.0
      %1156 = vmatprep.subr.mxu0 0.0
      %1157 = vmatpush2.xpose.msra.mxu0 0.0
      %1158 = vmatprep.subr.mxu0 0.0
      %1159 = vmatpush2.xpose.msra.mxu0 0.0
      %1160 = vmatprep.subr.mxu0 0.0
      %1161 = vmatpush2.xpose.msra.mxu0 0.0
      %1162 = vmatprep.mubr.f32.mxu0 0.0
      %1163 = vmatmul.mubr.f32.gmra.mxu0 %v1093
      %v1164 = vpop.f32.mrf.mxu0
      %v1165 = vadd.f32 0.0, %v1164
      %v1166 = vpop.f32.mrf.mxu0
      %1167 = vdwg.mxu0
      %v1168 = vsel %vm680, %v1165, -inf
      %1169 = vmax.xlane.f32.xlu0 %v1168
      %v1170 = vpop.xlane.xlu0 %1169
      %v1171 = vsub.f32 %v1165, %v1170
      %v1172 = vmul.f32 %v1171, 1.442695
      %v1173 = vpow.pop %v1172
      %v1174 = vsel %vm680, %v1173, 0.0
      %1175 = vadd.xlane.f32.xlu0 %v1174
      %v1176 = vpop.xlane.xlu0 %1175
      %v1177 = vrcp.pop %v1176
      %v1178 = vmul.f32 %v1173, %v1177
      %v1180 = vsel %vm680, %v1178, 0
      %1182 = vmatprep.subr.mxu0 0.0
      %1183 = vmatpush1.msra.mxu0 0.0
      %1184 = vmatprep.subr.mxu0 0.0
      %1185 = vmatpush1.msra.mxu0 0.0
      %1186 = vmatprep.subr.mxu0 0.0
      %1187 = vmatpush1.msra.mxu0 0.0
      %1188 = vmatprep.subr.mxu0 0.0
      %1189 = vmatpush1.msra.mxu0 0.0
      %1190 = vmatprep.subr.mxu0 0.0
      %1191 = vmatpush1.msra.mxu0 0.0
      %1192 = vmatprep.subr.mxu0 0.0
      %1193 = vmatpush1.msra.mxu0 0.0
      %1194 = vmatprep.subr.mxu0 0.0
      %1195 = vmatpush1.msra.mxu0 0.0
      %1196 = vmatprep.subr.mxu0 0.0
      %1197 = vmatpush1.msra.mxu0 0.0
      %1198 = vmatprep.subr.mxu0 0.0
      %1199 = vmatpush1.msra.mxu0 0.0
      %1200 = vmatprep.subr.mxu0 0.0
      %1201 = vmatpush1.msra.mxu0 0.0
      %1202 = vmatprep.subr.mxu0 0.0
      %1203 = vmatpush1.msra.mxu0 0.0
      %1204 = vmatprep.subr.mxu0 0.0
      %1205 = vmatpush1.msra.mxu0 0.0
      %1206 = vmatprep.subr.mxu0 0.0
      %1207 = vmatpush1.msra.mxu0 0.0
      %1208 = vmatprep.subr.mxu0 0.0
      %1209 = vmatpush1.msra.mxu0 0.0
      %1210 = vmatprep.subr.mxu0 0.0
      %1211 = vmatpush1.msra.mxu0 0.0
      %1212 = vmatprep.subr.mxu0 0.0
      %1213 = vmatpush1.msra.mxu0 %v1089
      %1214 = vmatprep.subr.mxu0 0.0
      %1215 = vmatpush2.msra.mxu0 0.0
      %1216 = vmatprep.subr.mxu0 0.0
      %1217 = vmatpush2.msra.mxu0 0.0
      %1218 = vmatprep.subr.mxu0 0.0
      %1219 = vmatpush2.msra.mxu0 0.0
      %1220 = vmatprep.subr.mxu0 0.0
      %1221 = vmatpush2.msra.mxu0 0.0
      %1222 = vmatprep.subr.mxu0 0.0
      %1223 = vmatpush2.msra.mxu0 0.0
      %1224 = vmatprep.subr.mxu0 0.0
      %1225 = vmatpush2.msra.mxu0 0.0
      %1226 = vmatprep.subr.mxu0 0.0
      %1227 = vmatpush2.msra.mxu0 0.0
      %1228 = vmatprep.subr.mxu0 0.0
      %1229 = vmatpush2.msra.mxu0 0.0
      %1230 = vmatprep.subr.mxu0 0.0
      %1231 = vmatpush2.msra.mxu0 0.0
      %1232 = vmatprep.subr.mxu0 0.0
      %1233 = vmatpush2.msra.mxu0 0.0
      %1234 = vmatprep.subr.mxu0 0.0
      %1235 = vmatpush2.msra.mxu0 0.0
      %1236 = vmatprep.subr.mxu0 0.0
      %1237 = vmatpush2.msra.mxu0 0.0
      %1238 = vmatprep.subr.mxu0 0.0
      %1239 = vmatpush2.msra.mxu0 0.0
      %1240 = vmatprep.subr.mxu0 0.0
      %1241 = vmatpush2.msra.mxu0 0.0
      %1242 = vmatprep.subr.mxu0 0.0
      %1243 = vmatpush2.msra.mxu0 0.0
      %1244 = vmatprep.subr.mxu0 0.0
      %1245 = vmatpush2.msra.mxu0 0.0
      %1246 = vmatprep.mubr.f32.mxu0 0.0
      %1247 = vmatmul.mubr.f32.gmra.mxu0 %v1180
      %v1248 = vpop.f32.mrf.mxu0
      %v1249 = vadd.f32 0.0, %v1248
      %v1250 = vpop.f32.mrf.mxu0
      %1251 = vdwg.mxu0
      %s1252 = scalar_lea.vmem %s8, 8
      %v1253 = vld [vmem:[%s1252] sm:$0xff]
      %v1255 = vsel %vm680, %v1249, 0
      %1257 = vmatprep.subr.mxu0 0.0
      %1258 = vmatpush1.msra.mxu0 0.0
      %1259 = vmatprep.subr.mxu0 0.0
      %1260 = vmatpush1.msra.mxu0 0.0
      %1261 = vmatprep.subr.mxu0 0.0
      %1262 = vmatpush1.msra.mxu0 0.0
      %1263 = vmatprep.subr.mxu0 0.0
      %1264 = vmatpush1.msra.mxu0 0.0
      %1265 = vmatprep.subr.mxu0 0.0
      %1266 = vmatpush1.msra.mxu0 0.0
      %1267 = vmatprep.subr.mxu0 0.0
      %1268 = vmatpush1.msra.mxu0 0.0
      %1269 = vmatprep.subr.mxu0 0.0
      %1270 = vmatpush1.msra.mxu0 0.0
      %1271 = vmatprep.subr.mxu0 0.0
      %1272 = vmatpush1.msra.mxu0 0.0
      %1273 = vmatprep.subr.mxu0 0.0
      %1274 = vmatpush1.msra.mxu0 0.0
      %1275 = vmatprep.subr.mxu0 0.0
      %1276 = vmatpush1.msra.mxu0 0.0
      %1277 = vmatprep.subr.mxu0 0.0
      %1278 = vmatpush1.msra.mxu0 0.0
      %1279 = vmatprep.subr.mxu0 0.0
      %1280 = vmatpush1.msra.mxu0 0.0
      %1281 = vmatprep.subr.mxu0 0.0
      %1282 = vmatpush1.msra.mxu0 0.0
      %1283 = vmatprep.subr.mxu0 0.0
      %1284 = vmatpush1.msra.mxu0 0.0
      %1285 = vmatprep.subr.mxu0 0.0
      %1286 = vmatpush1.msra.mxu0 0.0
      %1287 = vmatprep.subr.mxu0 0.0
      %1288 = vmatpush1.msra.mxu0 %v1253
      %1289 = vmatprep.subr.mxu0 0.0
      %1290 = vmatpush2.msra.mxu0 0.0
      %1291 = vmatprep.subr.mxu0 0.0
      %1292 = vmatpush2.msra.mxu0 0.0
      %1293 = vmatprep.subr.mxu0 0.0
      %1294 = vmatpush2.msra.mxu0 0.0
      %1295 = vmatprep.subr.mxu0 0.0
      %1296 = vmatpush2.msra.mxu0 0.0
      %1297 = vmatprep.subr.mxu0 0.0
      %1298 = vmatpush2.msra.mxu0 0.0
      %1299 = vmatprep.subr.mxu0 0.0
      %1300 = vmatpush2.msra.mxu0 0.0
      %1301 = vmatprep.subr.mxu0 0.0
      %1302 = vmatpush2.msra.mxu0 0.0
      %1303 = vmatprep.subr.mxu0 0.0
      %1304 = vmatpush2.msra.mxu0 0.0
      %1305 = vmatprep.subr.mxu0 0.0
      %1306 = vmatpush2.msra.mxu0 0.0
      %1307 = vmatprep.subr.mxu0 0.0
      %1308 = vmatpush2.msra.mxu0 0.0
      %1309 = vmatprep.subr.mxu0 0.0
      %1310 = vmatpush2.msra.mxu0 0.0
      %1311 = vmatprep.subr.mxu0 0.0
      %1312 = vmatpush2.msra.mxu0 0.0
      %1313 = vmatprep.subr.mxu0 0.0
      %1314 = vmatpush2.msra.mxu0 0.0
      %1315 = vmatprep.subr.mxu0 0.0
      %1316 = vmatpush2.msra.mxu0 0.0
      %1317 = vmatprep.subr.mxu0 0.0
      %1318 = vmatpush2.msra.mxu0 0.0
      %1319 = vmatprep.subr.mxu0 0.0
      %1320 = vmatpush2.msra.mxu0 0.0
      %1321 = vmatprep.mubr.f32.mxu0 0.0
      %1322 = vmatmul.mubr.f32.gmra.mxu0 %v1255
      %v1323 = vpop.f32.mrf.mxu0
      %v1324 = vadd.f32 0.0, %v1323
      %v1325 = vpop.f32.mrf.mxu0
      %1326 = vdwg.mxu0
      %v1328 = vsel %vm680, %v838, 0
      %1330 = vmatprep.subr.mxu0 0.0
      %1331 = vmatpush1.msra.mxu0 0.0
      %1332 = vmatprep.subr.mxu0 0.0
      %1333 = vmatpush1.msra.mxu0 0.0
      %1334 = vmatprep.subr.mxu0 0.0
      %1335 = vmatpush1.msra.mxu0 0.0
      %1336 = vmatprep.subr.mxu0 0.0
      %1337 = vmatpush1.msra.mxu0 0.0
      %1338 = vmatprep.subr.mxu0 0.0
      %1339 = vmatpush1.msra.mxu0 0.0
      %1340 = vmatprep.subr.mxu0 0.0
      %1341 = vmatpush1.msra.mxu0 0.0
      %1342 = vmatprep.subr.mxu0 0.0
      %1343 = vmatpush1.msra.mxu0 0.0
      %1344 = vmatprep.subr.mxu0 0.0
      %1345 = vmatpush1.msra.mxu0 0.0
      %1346 = vmatprep.subr.mxu0 0.0
      %1347 = vmatpush1.msra.mxu0 0.0
      %1348 = vmatprep.subr.mxu0 0.0
      %1349 = vmatpush1.msra.mxu0 0.0
      %1350 = vmatprep.subr.mxu0 0.0
      %1351 = vmatpush1.msra.mxu0 0.0
      %1352 = vmatprep.subr.mxu0 0.0
      %1353 = vmatpush1.msra.mxu0 0.0
      %1354 = vmatprep.subr.mxu0 0.0
      %1355 = vmatpush1.msra.mxu0 0.0
      %1356 = vmatprep.subr.mxu0 0.0
      %1357 = vmatpush1.msra.mxu0 0.0
      %1358 = vmatprep.subr.mxu0 0.0
      %1359 = vmatpush1.msra.mxu0 0.0
      %1360 = vmatprep.subr.mxu0 0.0
      %1361 = vmatpush1.msra.mxu0 %v841
      %1362 = vmatprep.subr.mxu0 0.0
      %1363 = vmatpush2.msra.mxu0 0.0
      %1364 = vmatprep.subr.mxu0 0.0
      %1365 = vmatpush2.msra.mxu0 0.0
      %1366 = vmatprep.subr.mxu0 0.0
      %1367 = vmatpush2.msra.mxu0 0.0
      %1368 = vmatprep.subr.mxu0 0.0
      %1369 = vmatpush2.msra.mxu0 0.0
      %1370 = vmatprep.subr.mxu0 0.0
      %1371 = vmatpush2.msra.mxu0 0.0
      %1372 = vmatprep.subr.mxu0 0.0
      %1373 = vmatpush2.msra.mxu0 0.0
      %1374 = vmatprep.subr.mxu0 0.0
      %1375 = vmatpush2.msra.mxu0 0.0
      %1376 = vmatprep.subr.mxu0 0.0
      %1377 = vmatpush2.msra.mxu0 0.0
      %1378 = vmatprep.subr.mxu0 0.0
      %1379 = vmatpush2.msra.mxu0 0.0
      %1380 = vmatprep.subr.mxu0 0.0
      %1381 = vmatpush2.msra.mxu0 0.0
      %1382 = vmatprep.subr.mxu0 0.0
      %1383 = vmatpush2.msra.mxu0 0.0
      %1384 = vmatprep.subr.mxu0 0.0
      %1385 = vmatpush2.msra.mxu0 0.0
      %1386 = vmatprep.subr.mxu0 0.0
      %1387 = vmatpush2.msra.mxu0 0.0
      %1388 = vmatprep.subr.mxu0 0.0
      %1389 = vmatpush2.msra.mxu0 0.0
      %1390 = vmatprep.subr.mxu0 0.0
      %1391 = vmatpush2.msra.mxu0 0.0
      %1392 = vmatprep.subr.mxu0 0.0
      %1393 = vmatpush2.msra.mxu0 0.0
      %1394 = vmatprep.mubr.f32.mxu0 0.0
      %1395 = vmatmul.mubr.f32.gmra.mxu0 %v1328
      %v1396 = vpop.f32.mrf.mxu0
      %v1397 = vadd.f32 %v1324, %v1396
      %v1398 = vpop.f32.mrf.mxu0
      %1399 = vdwg.mxu0
      %s1400 = scalar_lea.vmem %s2, 64
      %v1401 = vld [vmem:[%s1400] sm:$0xff]
      %v1402 = vld [vmem:[%s1400 + $0x8] sm:$0xff]
      %v1403 = vld [vmem:[%s1400 + $0x10] sm:$0xff]
      %v1404 = vld [vmem:[%s1400 + $0x18] sm:$0xff]
      %s1405 = scalar_lea.vmem %s3, 2
      %v1406 = vld [vmem:[%s1405] sm:$0x1]
      %v1408 = vlaneseq
      %v1409 = vshrl.u32 %v1408, 7
      %v1410 = vsub.s32 0, %v1409
      %v1411 = vrot.slane %v1406, %v1410
      %1413 = vmatprep.subr.mxu0 0.0
      %1414 = vmatpush1.msra.mxu0 0.0
      %1415 = vmatprep.subr.mxu0 0.0
      %1416 = vmatpush1.msra.mxu0 0.0
      %1417 = vmatprep.subr.mxu0 0.0
      %1418 = vmatpush1.msra.mxu0 0.0
      %1419 = vmatprep.subr.mxu0 0.0
      %1420 = vmatpush1.msra.mxu0 0.0
      %1421 = vmatprep.subr.mxu0 0.0
      %1422 = vmatpush1.msra.mxu0 0.0
      %1423 = vmatprep.subr.mxu0 0.0
      %1424 = vmatpush1.msra.mxu0 0.0
      %1425 = vmatprep.subr.mxu0 0.0
      %1426 = vmatpush1.msra.mxu0 0.0
      %1427 = vmatprep.subr.mxu0 0.0
      %1428 = vmatpush1.msra.mxu0 0.0
      %1429 = vmatprep.subr.mxu0 0.0
      %1430 = vmatpush1.msra.mxu0 0.0
      %1431 = vmatprep.subr.mxu0 0.0
      %1432 = vmatpush1.msra.mxu0 0.0
      %1433 = vmatprep.subr.mxu0 0.0
      %1434 = vmatpush1.msra.mxu0 0.0
      %1435 = vmatprep.subr.mxu0 0.0
      %1436 = vmatpush1.msra.mxu0 0.0
      %1437 = vmatprep.subr.mxu0 0.0
      %1438 = vmatpush1.msra.mxu0 %v1404
      %1439 = vmatprep.subr.mxu0 0.0
      %1440 = vmatpush1.msra.mxu0 %v1403
      %1441 = vmatprep.subr.mxu0 0.0
      %1442 = vmatpush1.msra.mxu0 %v1402
      %1443 = vmatprep.subr.mxu0 0.0
      %1444 = vmatpush1.msra.mxu0 %v1401
      %1445 = vmatprep.subr.mxu0 0.0
      %1446 = vmatpush2.msra.mxu0 0.0
      %1447 = vmatprep.subr.mxu0 0.0
      %1448 = vmatpush2.msra.mxu0 0.0
      %1449 = vmatprep.subr.mxu0 0.0
      %1450 = vmatpush2.msra.mxu0 0.0
      %1451 = vmatprep.subr.mxu0 0.0
      %1452 = vmatpush2.msra.mxu0 0.0
      %1453 = vmatprep.subr.mxu0 0.0
      %1454 = vmatpush2.msra.mxu0 0.0
      %1455 = vmatprep.subr.mxu0 0.0
      %1456 = vmatpush2.msra.mxu0 0.0
      %1457 = vmatprep.subr.mxu0 0.0
      %1458 = vmatpush2.msra.mxu0 0.0
      %1459 = vmatprep.subr.mxu0 0.0
      %1460 = vmatpush2.msra.mxu0 0.0
      %1461 = vmatprep.subr.mxu0 0.0
      %1462 = vmatpush2.msra.mxu0 0.0
      %1463 = vmatprep.subr.mxu0 0.0
      %1464 = vmatpush2.msra.mxu0 0.0
      %1465 = vmatprep.subr.mxu0 0.0
      %1466 = vmatpush2.msra.mxu0 0.0
      %1467 = vmatprep.subr.mxu0 0.0
      %1468 = vmatpush2.msra.mxu0 0.0
      %1469 = vmatprep.subr.mxu0 0.0
      %1470 = vmatpush2.msra.mxu0 0.0
      %1471 = vmatprep.subr.mxu0 0.0
      %1472 = vmatpush2.msra.mxu0 0.0
      %1473 = vmatprep.subr.mxu0 0.0
      %1474 = vmatpush2.msra.mxu0 0.0
      %1475 = vmatprep.subr.mxu0 0.0
      %1476 = vmatpush2.msra.mxu0 0.0
      %1477 = vmatprep.mubr.f32.mxu0 0.0
      %1478 = vmatmul.mubr.f32.gmra.mxu0 %v442
      %v1479 = vpop.f32.mrf.mxu0
      %v1480 = vadd.f32 %v1411, %v1479
      %v1481 = vpop.f32.mrf.mxu0
      %1482 = vdwg.mxu0
      %v1483 = vmul.f32 %v1480, 0.35355338
      %s1484 = scalar_lea.vmem %s4, 64
      %v1485 = vld [vmem:[%s1484] sm:$0xff]
      %v1486 = vld [vmem:[%s1484 + $0x8] sm:$0xff]
      %v1487 = vld [vmem:[%s1484 + $0x10] sm:$0xff]
      %v1488 = vld [vmem:[%s1484 + $0x18] sm:$0xff]
      %s1489 = scalar_lea.vmem %s5, 2
      %v1490 = vld [vmem:[%s1489] sm:$0x1]
      %v1492 = vlaneseq
      %v1493 = vshrl.u32 %v1492, 7
      %v1494 = vsub.s32 0, %v1493
      %v1495 = vrot.slane %v1490, %v1494
      %1497 = vmatprep.subr.mxu0 0.0
      %1498 = vmatpush1.msra.mxu0 0.0
      %1499 = vmatprep.subr.mxu0 0.0
      %1500 = vmatpush1.msra.mxu0 0.0
      %1501 = vmatprep.subr.mxu0 0.0
      %1502 = vmatpush1.msra.mxu0 0.0
      %1503 = vmatprep.subr.mxu0 0.0
      %1504 = vmatpush1.msra.mxu0 0.0
      %1505 = vmatprep.subr.mxu0 0.0
      %1506 = vmatpush1.msra.mxu0 0.0
      %1507 = vmatprep.subr.mxu0 0.0
      %1508 = vmatpush1.msra.mxu0 0.0
      %1509 = vmatprep.subr.mxu0 0.0
      %1510 = vmatpush1.msra.mxu0 0.0
      %1511 = vmatprep.subr.mxu0 0.0
      %1512 = vmatpush1.msra.mxu0 0.0
      %1513 = vmatprep.subr.mxu0 0.0
      %1514 = vmatpush1.msra.mxu0 0.0
      %1515 = vmatprep.subr.mxu0 0.0
      %1516 = vmatpush1.msra.mxu0 0.0
      %1517 = vmatprep.subr.mxu0 0.0
      %1518 = vmatpush1.msra.mxu0 0.0
      %1519 = vmatprep.subr.mxu0 0.0
      %1520 = vmatpush1.msra.mxu0 0.0
      %1521 = vmatprep.subr.mxu0 0.0
      %1522 = vmatpush1.msra.mxu0 %v1488
      %1523 = vmatprep.subr.mxu0 0.0
      %1524 = vmatpush1.msra.mxu0 %v1487
      %1525 = vmatprep.subr.mxu0 0.0
      %1526 = vmatpush1.msra.mxu0 %v1486
      %1527 = vmatprep.subr.mxu0 0.0
      %1528 = vmatpush1.msra.mxu0 %v1485
      %1529 = vmatprep.subr.mxu0 0.0
      %1530 = vmatpush2.msra.mxu0 0.0
      %1531 = vmatprep.subr.mxu0 0.0
      %1532 = vmatpush2.msra.mxu0 0.0
      %1533 = vmatprep.subr.mxu0 0.0
      %1534 = vmatpush2.msra.mxu0 0.0
      %1535 = vmatprep.subr.mxu0 0.0
      %1536 = vmatpush2.msra.mxu0 0.0
      %1537 = vmatprep.subr.mxu0 0.0
      %1538 = vmatpush2.msra.mxu0 0.0
      %1539 = vmatprep.subr.mxu0 0.0
      %1540 = vmatpush2.msra.mxu0 0.0
      %1541 = vmatprep.subr.mxu0 0.0
      %1542 = vmatpush2.msra.mxu0 0.0
      %1543 = vmatprep.subr.mxu0 0.0
      %1544 = vmatpush2.msra.mxu0 0.0
      %1545 = vmatprep.subr.mxu0 0.0
      %1546 = vmatpush2.msra.mxu0 0.0
      %1547 = vmatprep.subr.mxu0 0.0
      %1548 = vmatpush2.msra.mxu0 0.0
      %1549 = vmatprep.subr.mxu0 0.0
      %1550 = vmatpush2.msra.mxu0 0.0
      %1551 = vmatprep.subr.mxu0 0.0
      %1552 = vmatpush2.msra.mxu0 0.0
      %1553 = vmatprep.subr.mxu0 0.0
      %1554 = vmatpush2.msra.mxu0 0.0
      %1555 = vmatprep.subr.mxu0 0.0
      %1556 = vmatpush2.msra.mxu0 0.0
      %1557 = vmatprep.subr.mxu0 0.0
      %1558 = vmatpush2.msra.mxu0 0.0
      %1559 = vmatprep.subr.mxu0 0.0
      %1560 = vmatpush2.msra.mxu0 0.0
      %1561 = vmatprep.mubr.f32.mxu0 0.0
      %1562 = vmatmul.mubr.f32.gmra.mxu0 %v442
      %v1563 = vpop.f32.mrf.mxu0
      %v1564 = vadd.f32 %v1495, %v1563
      %v1565 = vpop.f32.mrf.mxu0
      %1566 = vdwg.mxu0
      %s1567 = scalar_lea.vmem %s6, 64
      %v1568 = vld [vmem:[%s1567] sm:$0xff]
      %v1569 = vld [vmem:[%s1567 + $0x8] sm:$0xff]
      %v1570 = vld [vmem:[%s1567 + $0x10] sm:$0xff]
      %v1571 = vld [vmem:[%s1567 + $0x18] sm:$0xff]
      %s1572 = scalar_lea.vmem %s7, 2
      %v1573 = vld [vmem:[%s1572] sm:$0x1]
      %v1575 = vlaneseq
      %v1576 = vshrl.u32 %v1575, 7
      %v1577 = vsub.s32 0, %v1576
      %v1578 = vrot.slane %v1573, %v1577
      %1580 = vmatprep.subr.mxu0 0.0
      %1581 = vmatpush1.msra.mxu0 0.0
      %1582 = vmatprep.subr.mxu0 0.0
      %1583 = vmatpush1.msra.mxu0 0.0
      %1584 = vmatprep.subr.mxu0 0.0
      %1585 = vmatpush1.msra.mxu0 0.0
      %1586 = vmatprep.subr.mxu0 0.0
      %1587 = vmatpush1.msra.mxu0 0.0
      %1588 = vmatprep.subr.mxu0 0.0
      %1589 = vmatpush1.msra.mxu0 0.0
      %1590 = vmatprep.subr.mxu0 0.0
      %1591 = vmatpush1.msra.mxu0 0.0
      %1592 = vmatprep.subr.mxu0 0.0
      %1593 = vmatpush1.msra.mxu0 0.0
      %1594 = vmatprep.subr.mxu0 0.0
      %1595 = vmatpush1.msra.mxu0 0.0
      %1596 = vmatprep.subr.mxu0 0.0
      %1597 = vmatpush1.msra.mxu0 0.0
      %1598 = vmatprep.subr.mxu0 0.0
      %1599 = vmatpush1.msra.mxu0 0.0
      %1600 = vmatprep.subr.mxu0 0.0
      %1601 = vmatpush1.msra.mxu0 0.0
      %1602 = vmatprep.subr.mxu0 0.0
      %1603 = vmatpush1.msra.mxu0 0.0
      %1604 = vmatprep.subr.mxu0 0.0
      %1605 = vmatpush1.msra.mxu0 %v1571
      %1606 = vmatprep.subr.mxu0 0.0
      %1607 = vmatpush1.msra.mxu0 %v1570
      %1608 = vmatprep.subr.mxu0 0.0
      %1609 = vmatpush1.msra.mxu0 %v1569
      %1610 = vmatprep.subr.mxu0 0.0
      %1611 = vmatpush1.msra.mxu0 %v1568
      %1612 = vmatprep.subr.mxu0 0.0
      %1613 = vmatpush2.msra.mxu0 0.0
      %1614 = vmatprep.subr.mxu0 0.0
      %1615 = vmatpush2.msra.mxu0 0.0
      %1616 = vmatprep.subr.mxu0 0.0
      %1617 = vmatpush2.msra.mxu0 0.0
      %1618 = vmatprep.subr.mxu0 0.0
      %1619 = vmatpush2.msra.mxu0 0.0
      %1620 = vmatprep.subr.mxu0 0.0
      %1621 = vmatpush2.msra.mxu0 0.0
      %1622 = vmatprep.subr.mxu0 0.0
      %1623 = vmatpush2.msra.mxu0 0.0
      %1624 = vmatprep.subr.mxu0 0.0
      %1625 = vmatpush2.msra.mxu0 0.0
      %1626 = vmatprep.subr.mxu0 0.0
      %1627 = vmatpush2.msra.mxu0 0.0
      %1628 = vmatprep.subr.mxu0 0.0
      %1629 = vmatpush2.msra.mxu0 0.0
      %1630 = vmatprep.subr.mxu0 0.0
      %1631 = vmatpush2.msra.mxu0 0.0
      %1632 = vmatprep.subr.mxu0 0.0
      %1633 = vmatpush2.msra.mxu0 0.0
      %1634 = vmatprep.subr.mxu0 0.0
      %1635 = vmatpush2.msra.mxu0 0.0
      %1636 = vmatprep.subr.mxu0 0.0
      %1637 = vmatpush2.msra.mxu0 0.0
      %1638 = vmatprep.subr.mxu0 0.0
      %1639 = vmatpush2.msra.mxu0 0.0
      %1640 = vmatprep.subr.mxu0 0.0
      %1641 = vmatpush2.msra.mxu0 0.0
      %1642 = vmatprep.subr.mxu0 0.0
      %1643 = vmatpush2.msra.mxu0 0.0
      %1644 = vmatprep.mubr.f32.mxu0 0.0
      %1645 = vmatmul.mubr.f32.gmra.mxu0 %v608
      %v1646 = vpop.f32.mrf.mxu0
      %v1647 = vadd.f32 %v1578, %v1646
      %v1648 = vpop.f32.mrf.mxu0
      %1649 = vdwg.mxu0
      %v1651 = vsel %vm680, %v1483, 0
      %v1654 = vsel %vm680, %v1564, 0
      %1656 = vmatprep.subr.mxu0 0.0
      %1657 = vmatpush1.xpose.msra.mxu0 0.0
      %1658 = vmatprep.subr.mxu0 0.0
      %1659 = vmatpush1.xpose.msra.mxu0 0.0
      %1660 = vmatprep.subr.mxu0 0.0
      %1661 = vmatpush1.xpose.msra.mxu0 0.0
      %1662 = vmatprep.subr.mxu0 0.0
      %1663 = vmatpush1.xpose.msra.mxu0 0.0
      %1664 = vmatprep.subr.mxu0 0.0
      %1665 = vmatpush1.xpose.msra.mxu0 0.0
      %1666 = vmatprep.subr.mxu0 0.0
      %1667 = vmatpush1.xpose.msra.mxu0 0.0
      %1668 = vmatprep.subr.mxu0 0.0
      %1669 = vmatpush1.xpose.msra.mxu0 0.0
      %1670 = vmatprep.subr.mxu0 0.0
      %1671 = vmatpush1.xpose.msra.mxu0 0.0
      %1672 = vmatprep.subr.mxu0 0.0
      %1673 = vmatpush1.xpose.msra.mxu0 0.0
      %1674 = vmatprep.subr.mxu0 0.0
      %1675 = vmatpush1.xpose.msra.mxu0 0.0
      %1676 = vmatprep.subr.mxu0 0.0
      %1677 = vmatpush1.xpose.msra.mxu0 0.0
      %1678 = vmatprep.subr.mxu0 0.0
      %1679 = vmatpush1.xpose.msra.mxu0 0.0
      %1680 = vmatprep.subr.mxu0 0.0
      %1681 = vmatpush1.xpose.msra.mxu0 0.0
      %1682 = vmatprep.subr.mxu0 0.0
      %1683 = vmatpush1.xpose.msra.mxu0 0.0
      %1684 = vmatprep.subr.mxu0 0.0
      %1685 = vmatpush1.xpose.msra.mxu0 0.0
      %1686 = vmatprep.subr.mxu0 0.0
      %1687 = vmatpush1.xpose.msra.mxu0 %v1654
      %1688 = vmatprep.subr.mxu0 0.0
      %1689 = vmatpush2.xpose.msra.mxu0 0.0
      %1690 = vmatprep.subr.mxu0 0.0
      %1691 = vmatpush2.xpose.msra.mxu0 0.0
      %1692 = vmatprep.subr.mxu0 0.0
      %1693 = vmatpush2.xpose.msra.mxu0 0.0
      %1694 = vmatprep.subr.mxu0 0.0
      %1695 = vmatpush2.xpose.msra.mxu0 0.0
      %1696 = vmatprep.subr.mxu0 0.0
      %1697 = vmatpush2.xpose.msra.mxu0 0.0
      %1698 = vmatprep.subr.mxu0 0.0
      %1699 = vmatpush2.xpose.msra.mxu0 0.0
      %1700 = vmatprep.subr.mxu0 0.0
      %1701 = vmatpush2.xpose.msra.mxu0 0.0
      %1702 = vmatprep.subr.mxu0 0.0
      %1703 = vmatpush2.xpose.msra.mxu0 0.0
      %1704 = vmatprep.subr.mxu0 0.0
      %1705 = vmatpush2.xpose.msra.mxu0 0.0
      %1706 = vmatprep.subr.mxu0 0.0
      %1707 = vmatpush2.xpose.msra.mxu0 0.0
      %1708 = vmatprep.subr.mxu0 0.0
      %1709 = vmatpush2.xpose.msra.mxu0 0.0
      %1710 = vmatprep.subr.mxu0 0.0
      %1711 = vmatpush2.xpose.msra.mxu0 0.0
      %1712 = vmatprep.subr.mxu0 0.0
      %1713 = vmatpush2.xpose.msra.mxu0 0.0
      %1714 = vmatprep.subr.mxu0 0.0
      %1715 = vmatpush2.xpose.msra.mxu0 0.0
      %1716 = vmatprep.subr.mxu0 0.0
      %1717 = vmatpush2.xpose.msra.mxu0 0.0
      %1718 = vmatprep.subr.mxu0 0.0
      %1719 = vmatpush2.xpose.msra.mxu0 0.0
      %1720 = vmatprep.mubr.f32.mxu0 0.0
      %1721 = vmatmul.mubr.f32.gmra.mxu0 %v1651
      %v1722 = vpop.f32.mrf.mxu0
      %v1723 = vadd.f32 0.0, %v1722
      %v1724 = vpop.f32.mrf.mxu0
      %1725 = vdwg.mxu0
      %v1726 = vsel %vm680, %v1723, -inf
      %1727 = vmax.xlane.f32.xlu0 %v1726
      %v1728 = vpop.xlane.xlu0 %1727
      %v1729 = vsub.f32 %v1723, %v1728
      %v1730 = vmul.f32 %v1729, 1.442695
      %v1731 = vpow.pop %v1730
      %v1732 = vsel %vm680, %v1731, 0.0
      %1733 = vadd.xlane.f32.xlu0 %v1732
      %v1734 = vpop.xlane.xlu0 %1733
      %v1735 = vrcp.pop %v1734
      %v1736 = vmul.f32 %v1731, %v1735
      %v1738 = vsel %vm680, %v1736, 0
      %1740 = vmatprep.subr.mxu0 0.0
      %1741 = vmatpush1.msra.mxu0 0.0
      %1742 = vmatprep.subr.mxu0 0.0
      %1743 = vmatpush1.msra.mxu0 0.0
      %1744 = vmatprep.subr.mxu0 0.0
      %1745 = vmatpush1.msra.mxu0 0.0
      %1746 = vmatprep.subr.mxu0 0.0
      %1747 = vmatpush1.msra.mxu0 0.0
      %1748 = vmatprep.subr.mxu0 0.0
      %1749 = vmatpush1.msra.mxu0 0.0
      %1750 = vmatprep.subr.mxu0 0.0
      %1751 = vmatpush1.msra.mxu0 0.0
      %1752 = vmatprep.subr.mxu0 0.0
      %1753 = vmatpush1.msra.mxu0 0.0
      %1754 = vmatprep.subr.mxu0 0.0
      %1755 = vmatpush1.msra.mxu0 0.0
      %1756 = vmatprep.subr.mxu0 0.0
      %1757 = vmatpush1.msra.mxu0 0.0
      %1758 = vmatprep.subr.mxu0 0.0
      %1759 = vmatpush1.msra.mxu0 0.0
      %1760 = vmatprep.subr.mxu0 0.0
      %1761 = vmatpush1.msra.mxu0 0.0
      %1762 = vmatprep.subr.mxu0 0.0
      %1763 = vmatpush1.msra.mxu0 0.0
      %1764 = vmatprep.subr.mxu0 0.0
      %1765 = vmatpush1.msra.mxu0 0.0
      %1766 = vmatprep.subr.mxu0 0.0
      %1767 = vmatpush1.msra.mxu0 0.0
      %1768 = vmatprep.subr.mxu0 0.0
      %1769 = vmatpush1.msra.mxu0 0.0
      %1770 = vmatprep.subr.mxu0 0.0
      %1771 = vmatpush1.msra.mxu0 %v1647
      %1772 = vmatprep.subr.mxu0 0.0
      %1773 = vmatpush2.msra.mxu0 0.0
      %1774 = vmatprep.subr.mxu0 0.0
      %1775 = vmatpush2.msra.mxu0 0.0
      %1776 = vmatprep.subr.mxu0 0.0
      %1777 = vmatpush2.msra.mxu0 0.0
      %1778 = vmatprep.subr.mxu0 0.0
      %1779 = vmatpush2.msra.mxu0 0.0
      %1780 = vmatprep.subr.mxu0 0.0
      %1781 = vmatpush2.msra.mxu0 0.0
      %1782 = vmatprep.subr.mxu0 0.0
      %1783 = vmatpush2.msra.mxu0 0.0
      %1784 = vmatprep.subr.mxu0 0.0
      %1785 = vmatpush2.msra.mxu0 0.0
      %1786 = vmatprep.subr.mxu0 0.0
      %1787 = vmatpush2.msra.mxu0 0.0
      %1788 = vmatprep.subr.mxu0 0.0
      %1789 = vmatpush2.msra.mxu0 0.0
      %1790 = vmatprep.subr.mxu0 0.0
      %1791 = vmatpush2.msra.mxu0 0.0
      %1792 = vmatprep.subr.mxu0 0.0
      %1793 = vmatpush2.msra.mxu0 0.0
      %1794 = vmatprep.subr.mxu0 0.0
      %1795 = vmatpush2.msra.mxu0 0.0
      %1796 = vmatprep.subr.mxu0 0.0
      %1797 = vmatpush2.msra.mxu0 0.0
      %1798 = vmatprep.subr.mxu0 0.0
      %1799 = vmatpush2.msra.mxu0 0.0
      %1800 = vmatprep.subr.mxu0 0.0
      %1801 = vmatpush2.msra.mxu0 0.0
      %1802 = vmatprep.subr.mxu0 0.0
      %1803 = vmatpush2.msra.mxu0 0.0
      %1804 = vmatprep.mubr.f32.mxu0 0.0
      %1805 = vmatmul.mubr.f32.gmra.mxu0 %v1738
      %v1806 = vpop.f32.mrf.mxu0
      %v1807 = vadd.f32 0.0, %v1806
      %v1808 = vpop.f32.mrf.mxu0
      %1809 = vdwg.mxu0
      %s1810 = scalar_lea.vmem %s8, 16
      %v1811 = vld [vmem:[%s1810] sm:$0xff]
      %v1813 = vsel %vm680, %v1807, 0
      %1815 = vmatprep.subr.mxu0 0.0
      %1816 = vmatpush1.msra.mxu0 0.0
      %1817 = vmatprep.subr.mxu0 0.0
      %1818 = vmatpush1.msra.mxu0 0.0
      %1819 = vmatprep.subr.mxu0 0.0
      %1820 = vmatpush1.msra.mxu0 0.0
      %1821 = vmatprep.subr.mxu0 0.0
      %1822 = vmatpush1.msra.mxu0 0.0
      %1823 = vmatprep.subr.mxu0 0.0
      %1824 = vmatpush1.msra.mxu0 0.0
      %1825 = vmatprep.subr.mxu0 0.0
      %1826 = vmatpush1.msra.mxu0 0.0
      %1827 = vmatprep.subr.mxu0 0.0
      %1828 = vmatpush1.msra.mxu0 0.0
      %1829 = vmatprep.subr.mxu0 0.0
      %1830 = vmatpush1.msra.mxu0 0.0
      %1831 = vmatprep.subr.mxu0 0.0
      %1832 = vmatpush1.msra.mxu0 0.0
      %1833 = vmatprep.subr.mxu0 0.0
      %1834 = vmatpush1.msra.mxu0 0.0
      %1835 = vmatprep.subr.mxu0 0.0
      %1836 = vmatpush1.msra.mxu0 0.0
      %1837 = vmatprep.subr.mxu0 0.0
      %1838 = vmatpush1.msra.mxu0 0.0
      %1839 = vmatprep.subr.mxu0 0.0
      %1840 = vmatpush1.msra.mxu0 0.0
      %1841 = vmatprep.subr.mxu0 0.0
      %1842 = vmatpush1.msra.mxu0 0.0
      %1843 = vmatprep.subr.mxu0 0.0
      %1844 = vmatpush1.msra.mxu0 0.0
      %1845 = vmatprep.subr.mxu0 0.0
      %1846 = vmatpush1.msra.mxu0 %v1811
      %1847 = vmatprep.subr.mxu0 0.0
      %1848 = vmatpush2.msra.mxu0 0.0
      %1849 = vmatprep.subr.mxu0 0.0
      %1850 = vmatpush2.msra.mxu0 0.0
      %1851 = vmatprep.subr.mxu0 0.0
      %1852 = vmatpush2.msra.mxu0 0.0
      %1853 = vmatprep.subr.mxu0 0.0
      %1854 = vmatpush2.msra.mxu0 0.0
      %1855 = vmatprep.subr.mxu0 0.0
      %1856 = vmatpush2.msra.mxu0 0.0
      %1857 = vmatprep.subr.mxu0 0.0
      %1858 = vmatpush2.msra.mxu0 0.0
      %1859 = vmatprep.subr.mxu0 0.0
      %1860 = vmatpush2.msra.mxu0 0.0
      %1861 = vmatprep.subr.mxu0 0.0
      %1862 = vmatpush2.msra.mxu0 0.0
      %1863 = vmatprep.subr.mxu0 0.0
      %1864 = vmatpush2.msra.mxu0 0.0
      %1865 = vmatprep.subr.mxu0 0.0
      %1866 = vmatpush2.msra.mxu0 0.0
      %1867 = vmatprep.subr.mxu0 0.0
      %1868 = vmatpush2.msra.mxu0 0.0
      %1869 = vmatprep.subr.mxu0 0.0
      %1870 = vmatpush2.msra.mxu0 0.0
      %1871 = vmatprep.subr.mxu0 0.0
      %1872 = vmatpush2.msra.mxu0 0.0
      %1873 = vmatprep.subr.mxu0 0.0
      %1874 = vmatpush2.msra.mxu0 0.0
      %1875 = vmatprep.subr.mxu0 0.0
      %1876 = vmatpush2.msra.mxu0 0.0
      %1877 = vmatprep.subr.mxu0 0.0
      %1878 = vmatpush2.msra.mxu0 0.0
      %1879 = vmatprep.mubr.f32.mxu0 0.0
      %1880 = vmatmul.mubr.f32.gmra.mxu0 %v1813
      %v1881 = vpop.f32.mrf.mxu0
      %v1882 = vadd.f32 0.0, %v1881
      %v1883 = vpop.f32.mrf.mxu0
      %1884 = vdwg.mxu0
      %v1885 = vadd.f32 %v1397, %v1882
      %s1886 = scalar_lea.vmem %s2, 96
      %v1887 = vld [vmem:[%s1886] sm:$0xff]
      %v1888 = vld [vmem:[%s1886 + $0x8] sm:$0xff]
      %v1889 = vld [vmem:[%s1886 + $0x10] sm:$0xff]
      %v1890 = vld [vmem:[%s1886 + $0x18] sm:$0xff]
      %s1891 = scalar_lea.vmem %s3, 3
      %v1892 = vld [vmem:[%s1891] sm:$0x1]
      %v1894 = vlaneseq
      %v1895 = vshrl.u32 %v1894, 7
      %v1896 = vsub.s32 0, %v1895
      %v1897 = vrot.slane %v1892, %v1896
      %1899 = vmatprep.subr.mxu0 0.0
      %1900 = vmatpush1.msra.mxu0 0.0
      %1901 = vmatprep.subr.mxu0 0.0
      %1902 = vmatpush1.msra.mxu0 0.0
      %1903 = vmatprep.subr.mxu0 0.0
      %1904 = vmatpush1.msra.mxu0 0.0
      %1905 = vmatprep.subr.mxu0 0.0
      %1906 = vmatpush1.msra.mxu0 0.0
      %1907 = vmatprep.subr.mxu0 0.0
      %1908 = vmatpush1.msra.mxu0 0.0
      %1909 = vmatprep.subr.mxu0 0.0
      %1910 = vmatpush1.msra.mxu0 0.0
      %1911 = vmatprep.subr.mxu0 0.0
      %1912 = vmatpush1.msra.mxu0 0.0
      %1913 = vmatprep.subr.mxu0 0.0
      %1914 = vmatpush1.msra.mxu0 0.0
      %1915 = vmatprep.subr.mxu0 0.0
      %1916 = vmatpush1.msra.mxu0 0.0
      %1917 = vmatprep.subr.mxu0 0.0
      %1918 = vmatpush1.msra.mxu0 0.0
      %1919 = vmatprep.subr.mxu0 0.0
      %1920 = vmatpush1.msra.mxu0 0.0
      %1921 = vmatprep.subr.mxu0 0.0
      %1922 = vmatpush1.msra.mxu0 0.0
      %1923 = vmatprep.subr.mxu0 0.0
      %1924 = vmatpush1.msra.mxu0 %v1890
      %1925 = vmatprep.subr.mxu0 0.0
      %1926 = vmatpush1.msra.mxu0 %v1889
      %1927 = vmatprep.subr.mxu0 0.0
      %1928 = vmatpush1.msra.mxu0 %v1888
      %1929 = vmatprep.subr.mxu0 0.0
      %1930 = vmatpush1.msra.mxu0 %v1887
      %1931 = vmatprep.subr.mxu0 0.0
      %1932 = vmatpush2.msra.mxu0 0.0
      %1933 = vmatprep.subr.mxu0 0.0
      %1934 = vmatpush2.msra.mxu0 0.0
      %1935 = vmatprep.subr.mxu0 0.0
      %1936 = vmatpush2.msra.mxu0 0.0
      %1937 = vmatprep.subr.mxu0 0.0
      %1938 = vmatpush2.msra.mxu0 0.0
      %1939 = vmatprep.subr.mxu0 0.0
      %1940 = vmatpush2.msra.mxu0 0.0
      %1941 = vmatprep.subr.mxu0 0.0
      %1942 = vmatpush2.msra.mxu0 0.0
      %1943 = vmatprep.subr.mxu0 0.0
      %1944 = vmatpush2.msra.mxu0 0.0
      %1945 = vmatprep.subr.mxu0 0.0
      %1946 = vmatpush2.msra.mxu0 0.0
      %1947 = vmatprep.subr.mxu0 0.0
      %1948 = vmatpush2.msra.mxu0 0.0
      %1949 = vmatprep.subr.mxu0 0.0
      %1950 = vmatpush2.msra.mxu0 0.0
      %1951 = vmatprep.subr.mxu0 0.0
      %1952 = vmatpush2.msra.mxu0 0.0
      %1953 = vmatprep.subr.mxu0 0.0
      %1954 = vmatpush2.msra.mxu0 0.0
      %1955 = vmatprep.subr.mxu0 0.0
      %1956 = vmatpush2.msra.mxu0 0.0
      %1957 = vmatprep.subr.mxu0 0.0
      %1958 = vmatpush2.msra.mxu0 0.0
      %1959 = vmatprep.subr.mxu0 0.0
      %1960 = vmatpush2.msra.mxu0 0.0
      %1961 = vmatprep.subr.mxu0 0.0
      %1962 = vmatpush2.msra.mxu0 0.0
      %1963 = vmatprep.mubr.f32.mxu0 0.0
      %1964 = vmatmul.mubr.f32.gmra.mxu0 %v442
      %v1965 = vpop.f32.mrf.mxu0
      %v1966 = vadd.f32 %v1897, %v1965
      %v1967 = vpop.f32.mrf.mxu0
      %1968 = vdwg.mxu0
      %v1969 = vmul.f32 %v1966, 0.35355338
      %s1970 = scalar_lea.vmem %s4, 96
      %v1971 = vld [vmem:[%s1970] sm:$0xff]
      %v1972 = vld [vmem:[%s1970 + $0x8] sm:$0xff]
      %v1973 = vld [vmem:[%s1970 + $0x10] sm:$0xff]
      %v1974 = vld [vmem:[%s1970 + $0x18] sm:$0xff]
      %s1975 = scalar_lea.vmem %s5, 3
      %v1976 = vld [vmem:[%s1975] sm:$0x1]
      %v1978 = vlaneseq
      %v1979 = vshrl.u32 %v1978, 7
      %v1980 = vsub.s32 0, %v1979
      %v1981 = vrot.slane %v1976, %v1980
      %1983 = vmatprep.subr.mxu0 0.0
      %1984 = vmatpush1.msra.mxu0 0.0
      %1985 = vmatprep.subr.mxu0 0.0
      %1986 = vmatpush1.msra.mxu0 0.0
      %1987 = vmatprep.subr.mxu0 0.0
      %1988 = vmatpush1.msra.mxu0 0.0
      %1989 = vmatprep.subr.mxu0 0.0
      %1990 = vmatpush1.msra.mxu0 0.0
      %1991 = vmatprep.subr.mxu0 0.0
      %1992 = vmatpush1.msra.mxu0 0.0
      %1993 = vmatprep.subr.mxu0 0.0
      %1994 = vmatpush1.msra.mxu0 0.0
      %1995 = vmatprep.subr.mxu0 0.0
      %1996 = vmatpush1.msra.mxu0 0.0
      %1997 = vmatprep.subr.mxu0 0.0
      %1998 = vmatpush1.msra.mxu0 0.0
      %1999 = vmatprep.subr.mxu0 0.0
      %2000 = vmatpush1.msra.mxu0 0.0
      %2001 = vmatprep.subr.mxu0 0.0
      %2002 = vmatpush1.msra.mxu0 0.0
      %2003 = vmatprep.subr.mxu0 0.0
      %2004 = vmatpush1.msra.mxu0 0.0
      %2005 = vmatprep.subr.mxu0 0.0
      %2006 = vmatpush1.msra.mxu0 0.0
      %2007 = vmatprep.subr.mxu0 0.0
      %2008 = vmatpush1.msra.mxu0 %v1974
      %2009 = vmatprep.subr.mxu0 0.0
      %2010 = vmatpush1.msra.mxu0 %v1973
      %2011 = vmatprep.subr.mxu0 0.0
      %2012 = vmatpush1.msra.mxu0 %v1972
      %2013 = vmatprep.subr.mxu0 0.0
      %2014 = vmatpush1.msra.mxu0 %v1971
      %2015 = vmatprep.subr.mxu0 0.0
      %2016 = vmatpush2.msra.mxu0 0.0
      %2017 = vmatprep.subr.mxu0 0.0
      %2018 = vmatpush2.msra.mxu0 0.0
      %2019 = vmatprep.subr.mxu0 0.0
      %2020 = vmatpush2.msra.mxu0 0.0
      %2021 = vmatprep.subr.mxu0 0.0
      %2022 = vmatpush2.msra.mxu0 0.0
      %2023 = vmatprep.subr.mxu0 0.0
      %2024 = vmatpush2.msra.mxu0 0.0
      %2025 = vmatprep.subr.mxu0 0.0
      %2026 = vmatpush2.msra.mxu0 0.0
      %2027 = vmatprep.subr.mxu0 0.0
      %2028 = vmatpush2.msra.mxu0 0.0
      %2029 = vmatprep.subr.mxu0 0.0
      %2030 = vmatpush2.msra.mxu0 0.0
      %2031 = vmatprep.subr.mxu0 0.0
      %2032 = vmatpush2.msra.mxu0 0.0
      %2033 = vmatprep.subr.mxu0 0.0
      %2034 = vmatpush2.msra.mxu0 0.0
      %2035 = vmatprep.subr.mxu0 0.0
      %2036 = vmatpush2.msra.mxu0 0.0
      %2037 = vmatprep.subr.mxu0 0.0
      %2038 = vmatpush2.msra.mxu0 0.0
      %2039 = vmatprep.subr.mxu0 0.0
      %2040 = vmatpush2.msra.mxu0 0.0
      %2041 = vmatprep.subr.mxu0 0.0
      %2042 = vmatpush2.msra.mxu0 0.0
      %2043 = vmatprep.subr.mxu0 0.0
      %2044 = vmatpush2.msra.mxu0 0.0
      %2045 = vmatprep.subr.mxu0 0.0
      %2046 = vmatpush2.msra.mxu0 0.0
      %2047 = vmatprep.mubr.f32.mxu0 0.0
      %2048 = vmatmul.mubr.f32.gmra.mxu0 %v442
      %v2049 = vpop.f32.mrf.mxu0
      %v2050 = vadd.f32 %v1981, %v2049
      %v2051 = vpop.f32.mrf.mxu0
      %2052 = vdwg.mxu0
      %s2053 = scalar_lea.vmem %s6, 96
      %v2054 = vld [vmem:[%s2053] sm:$0xff]
      %v2055 = vld [vmem:[%s2053 + $0x8] sm:$0xff]
      %v2056 = vld [vmem:[%s2053 + $0x10] sm:$0xff]
      %v2057 = vld [vmem:[%s2053 + $0x18] sm:$0xff]
      %s2058 = scalar_lea.vmem %s7, 3
      %v2059 = vld [vmem:[%s2058] sm:$0x1]
      %v2061 = vlaneseq
      %v2062 = vshrl.u32 %v2061, 7
      %v2063 = vsub.s32 0, %v2062
      %v2064 = vrot.slane %v2059, %v2063
      %2066 = vmatprep.subr.mxu0 0.0
      %2067 = vmatpush1.msra.mxu0 0.0
      %2068 = vmatprep.subr.mxu0 0.0
      %2069 = vmatpush1.msra.mxu0 0.0
      %2070 = vmatprep.subr.mxu0 0.0
      %2071 = vmatpush1.msra.mxu0 0.0
      %2072 = vmatprep.subr.mxu0 0.0
      %2073 = vmatpush1.msra.mxu0 0.0
      %2074 = vmatprep.subr.mxu0 0.0
      %2075 = vmatpush1.msra.mxu0 0.0
      %2076 = vmatprep.subr.mxu0 0.0
      %2077 = vmatpush1.msra.mxu0 0.0
      %2078 = vmatprep.subr.mxu0 0.0
      %2079 = vmatpush1.msra.mxu0 0.0
      %2080 = vmatprep.subr.mxu0 0.0
      %2081 = vmatpush1.msra.mxu0 0.0
      %2082 = vmatprep.subr.mxu0 0.0
      %2083 = vmatpush1.msra.mxu0 0.0
      %2084 = vmatprep.subr.mxu0 0.0
      %2085 = vmatpush1.msra.mxu0 0.0
      %2086 = vmatprep.subr.mxu0 0.0
      %2087 = vmatpush1.msra.mxu0 0.0
      %2088 = vmatprep.subr.mxu0 0.0
      %2089 = vmatpush1.msra.mxu0 0.0
      %2090 = vmatprep.subr.mxu0 0.0
      %2091 = vmatpush1.msra.mxu0 %v2057
      %2092 = vmatprep.subr.mxu0 0.0
      %2093 = vmatpush1.msra.mxu0 %v2056
      %2094 = vmatprep.subr.mxu0 0.0
      %2095 = vmatpush1.msra.mxu0 %v2055
      %2096 = vmatprep.subr.mxu0 0.0
      %2097 = vmatpush1.msra.mxu0 %v2054
      %2098 = vmatprep.subr.mxu0 0.0
      %2099 = vmatpush2.msra.mxu0 0.0
      %2100 = vmatprep.subr.mxu0 0.0
      %2101 = vmatpush2.msra.mxu0 0.0
      %2102 = vmatprep.subr.mxu0 0.0
      %2103 = vmatpush2.msra.mxu0 0.0
      %2104 = vmatprep.subr.mxu0 0.0
      %2105 = vmatpush2.msra.mxu0 0.0
      %2106 = vmatprep.subr.mxu0 0.0
      %2107 = vmatpush2.msra.mxu0 0.0
      %2108 = vmatprep.subr.mxu0 0.0
      %2109 = vmatpush2.msra.mxu0 0.0
      %2110 = vmatprep.subr.mxu0 0.0
      %2111 = vmatpush2.msra.mxu0 0.0
      %2112 = vmatprep.subr.mxu0 0.0
      %2113 = vmatpush2.msra.mxu0 0.0
      %2114 = vmatprep.subr.mxu0 0.0
      %2115 = vmatpush2.msra.mxu0 0.0
      %2116 = vmatprep.subr.mxu0 0.0
      %2117 = vmatpush2.msra.mxu0 0.0
      %2118 = vmatprep.subr.mxu0 0.0
      %2119 = vmatpush2.msra.mxu0 0.0
      %2120 = vmatprep.subr.mxu0 0.0
      %2121 = vmatpush2.msra.mxu0 0.0
      %2122 = vmatprep.subr.mxu0 0.0
      %2123 = vmatpush2.msra.mxu0 0.0
      %2124 = vmatprep.subr.mxu0 0.0
      %2125 = vmatpush2.msra.mxu0 0.0
      %2126 = vmatprep.subr.mxu0 0.0
      %2127 = vmatpush2.msra.mxu0 0.0
      %2128 = vmatprep.subr.mxu0 0.0
      %2129 = vmatpush2.msra.mxu0 0.0
      %2130 = vmatprep.mubr.f32.mxu0 0.0
      %2131 = vmatmul.mubr.f32.gmra.mxu0 %v608
      %v2132 = vpop.f32.mrf.mxu0
      %v2133 = vadd.f32 %v2064, %v2132
      %v2134 = vpop.f32.mrf.mxu0
      %2135 = vdwg.mxu0
      %v2137 = vsel %vm680, %v1969, 0
      %v2140 = vsel %vm680, %v2050, 0
      %2142 = vmatprep.subr.mxu0 0.0
      %2143 = vmatpush1.xpose.msra.mxu0 0.0
      %2144 = vmatprep.subr.mxu0 0.0
      %2145 = vmatpush1.xpose.msra.mxu0 0.0
      %2146 = vmatprep.subr.mxu0 0.0
      %2147 = vmatpush1.xpose.msra.mxu0 0.0
      %2148 = vmatprep.subr.mxu0 0.0
      %2149 = vmatpush1.xpose.msra.mxu0 0.0
      %2150 = vmatprep.subr.mxu0 0.0
      %2151 = vmatpush1.xpose.msra.mxu0 0.0
      %2152 = vmatprep.subr.mxu0 0.0
      %2153 = vmatpush1.xpose.msra.mxu0 0.0
      %2154 = vmatprep.subr.mxu0 0.0
      %2155 = vmatpush1.xpose.msra.mxu0 0.0
      %2156 = vmatprep.subr.mxu0 0.0
      %2157 = vmatpush1.xpose.msra.mxu0 0.0
      %2158 = vmatprep.subr.mxu0 0.0
      %2159 = vmatpush1.xpose.msra.mxu0 0.0
      %2160 = vmatprep.subr.mxu0 0.0
      %2161 = vmatpush1.xpose.msra.mxu0 0.0
      %2162 = vmatprep.subr.mxu0 0.0
      %2163 = vmatpush1.xpose.msra.mxu0 0.0
      %2164 = vmatprep.subr.mxu0 0.0
      %2165 = vmatpush1.xpose.msra.mxu0 0.0
      %2166 = vmatprep.subr.mxu0 0.0
      %2167 = vmatpush1.xpose.msra.mxu0 0.0
      %2168 = vmatprep.subr.mxu0 0.0
      %2169 = vmatpush1.xpose.msra.mxu0 0.0
      %2170 = vmatprep.subr.mxu0 0.0
      %2171 = vmatpush1.xpose.msra.mxu0 0.0
      %2172 = vmatprep.subr.mxu0 0.0
      %2173 = vmatpush1.xpose.msra.mxu0 %v2140
      %2174 = vmatprep.subr.mxu0 0.0
      %2175 = vmatpush2.xpose.msra.mxu0 0.0
      %2176 = vmatprep.subr.mxu0 0.0
      %2177 = vmatpush2.xpose.msra.mxu0 0.0
      %2178 = vmatprep.subr.mxu0 0.0
      %2179 = vmatpush2.xpose.msra.mxu0 0.0
      %2180 = vmatprep.subr.mxu0 0.0
      %2181 = vmatpush2.xpose.msra.mxu0 0.0
      %2182 = vmatprep.subr.mxu0 0.0
      %2183 = vmatpush2.xpose.msra.mxu0 0.0
      %2184 = vmatprep.subr.mxu0 0.0
      %2185 = vmatpush2.xpose.msra.mxu0 0.0
      %2186 = vmatprep.subr.mxu0 0.0
      %2187 = vmatpush2.xpose.msra.mxu0 0.0
      %2188 = vmatprep.subr.mxu0 0.0
      %2189 = vmatpush2.xpose.msra.mxu0 0.0
      %2190 = vmatprep.subr.mxu0 0.0
      %2191 = vmatpush2.xpose.msra.mxu0 0.0
      %2192 = vmatprep.subr.mxu0 0.0
      %2193 = vmatpush2.xpose.msra.mxu0 0.0
      %2194 = vmatprep.subr.mxu0 0.0
      %2195 = vmatpush2.xpose.msra.mxu0 0.0
      %2196 = vmatprep.subr.mxu0 0.0
      %2197 = vmatpush2.xpose.msra.mxu0 0.0
      %2198 = vmatprep.subr.mxu0 0.0
      %2199 = vmatpush2.xpose.msra.mxu0 0.0
      %2200 = vmatprep.subr.mxu0 0.0
      %2201 = vmatpush2.xpose.msra.mxu0 0.0
      %2202 = vmatprep.subr.mxu0 0.0
      %2203 = vmatpush2.xpose.msra.mxu0 0.0
      %2204 = vmatprep.subr.mxu0 0.0
      %2205 = vmatpush2.xpose.msra.mxu0 0.0
      %2206 = vmatprep.mubr.f32.mxu0 0.0
      %2207 = vmatmul.mubr.f32.gmra.mxu0 %v2137
      %v2208 = vpop.f32.mrf.mxu0
      %v2209 = vadd.f32 0.0, %v2208
      %v2210 = vpop.f32.mrf.mxu0
      %2211 = vdwg.mxu0
      %v2212 = vsel %vm680, %v2209, -inf
      %2213 = vmax.xlane.f32.xlu0 %v2212
      %v2214 = vpop.xlane.xlu0 %2213
      %v2215 = vsub.f32 %v2209, %v2214
      %v2216 = vmul.f32 %v2215, 1.442695
      %v2217 = vpow.pop %v2216
      %v2218 = vsel %vm680, %v2217, 0.0
      %2219 = vadd.xlane.f32.xlu0 %v2218
      %v2220 = vpop.xlane.xlu0 %2219
      %v2221 = vrcp.pop %v2220
      %v2222 = vmul.f32 %v2217, %v2221
      %v2224 = vsel %vm680, %v2222, 0
      %2226 = vmatprep.subr.mxu0 0.0
      %2227 = vmatpush1.msra.mxu0 0.0
      %2228 = vmatprep.subr.mxu0 0.0
      %2229 = vmatpush1.msra.mxu0 0.0
      %2230 = vmatprep.subr.mxu0 0.0
      %2231 = vmatpush1.msra.mxu0 0.0
      %2232 = vmatprep.subr.mxu0 0.0
      %2233 = vmatpush1.msra.mxu0 0.0
      %2234 = vmatprep.subr.mxu0 0.0
      %2235 = vmatpush1.msra.mxu0 0.0
      %2236 = vmatprep.subr.mxu0 0.0
      %2237 = vmatpush1.msra.mxu0 0.0
      %2238 = vmatprep.subr.mxu0 0.0
      %2239 = vmatpush1.msra.mxu0 0.0
      %2240 = vmatprep.subr.mxu0 0.0
      %2241 = vmatpush1.msra.mxu0 0.0
      %2242 = vmatprep.subr.mxu0 0.0
      %2243 = vmatpush1.msra.mxu0 0.0
      %2244 = vmatprep.subr.mxu0 0.0
      %2245 = vmatpush1.msra.mxu0 0.0
      %2246 = vmatprep.subr.mxu0 0.0
      %2247 = vmatpush1.msra.mxu0 0.0
      %2248 = vmatprep.subr.mxu0 0.0
      %2249 = vmatpush1.msra.mxu0 0.0
      %2250 = vmatprep.subr.mxu0 0.0
      %2251 = vmatpush1.msra.mxu0 0.0
      %2252 = vmatprep.subr.mxu0 0.0
      %2253 = vmatpush1.msra.mxu0 0.0
      %2254 = vmatprep.subr.mxu0 0.0
      %2255 = vmatpush1.msra.mxu0 0.0
      %2256 = vmatprep.subr.mxu0 0.0
      %2257 = vmatpush1.msra.mxu0 %v2133
      %2258 = vmatprep.subr.mxu0 0.0
      %2259 = vmatpush2.msra.mxu0 0.0
      %2260 = vmatprep.subr.mxu0 0.0
      %2261 = vmatpush2.msra.mxu0 0.0
      %2262 = vmatprep.subr.mxu0 0.0
      %2263 = vmatpush2.msra.mxu0 0.0
      %2264 = vmatprep.subr.mxu0 0.0
      %2265 = vmatpush2.msra.mxu0 0.0
      %2266 = vmatprep.subr.mxu0 0.0
      %2267 = vmatpush2.msra.mxu0 0.0
      %2268 = vmatprep.subr.mxu0 0.0
      %2269 = vmatpush2.msra.mxu0 0.0
      %2270 = vmatprep.subr.mxu0 0.0
      %2271 = vmatpush2.msra.mxu0 0.0
      %2272 = vmatprep.subr.mxu0 0.0
      %2273 = vmatpush2.msra.mxu0 0.0
      %2274 = vmatprep.subr.mxu0 0.0
      %2275 = vmatpush2.msra.mxu0 0.0
      %2276 = vmatprep.subr.mxu0 0.0
      %2277 = vmatpush2.msra.mxu0 0.0
      %2278 = vmatprep.subr.mxu0 0.0
      %2279 = vmatpush2.msra.mxu0 0.0
      %2280 = vmatprep.subr.mxu0 0.0
      %2281 = vmatpush2.msra.mxu0 0.0
      %2282 = vmatprep.subr.mxu0 0.0
      %2283 = vmatpush2.msra.mxu0 0.0
      %2284 = vmatprep.subr.mxu0 0.0
      %2285 = vmatpush2.msra.mxu0 0.0
      %2286 = vmatprep.subr.mxu0 0.0
      %2287 = vmatpush2.msra.mxu0 0.0
      %2288 = vmatprep.subr.mxu0 0.0
      %2289 = vmatpush2.msra.mxu0 0.0
      %2290 = vmatprep.mubr.f32.mxu0 0.0
      %2291 = vmatmul.mubr.f32.gmra.mxu0 %v2224
      %v2292 = vpop.f32.mrf.mxu0
      %v2293 = vadd.f32 0.0, %v2292
      %v2294 = vpop.f32.mrf.mxu0
      %2295 = vdwg.mxu0
      %s2296 = scalar_lea.vmem %s8, 24
      %v2297 = vld [vmem:[%s2296] sm:$0xff]
      %v2299 = vsel %vm680, %v2293, 0
      %2301 = vmatprep.subr.mxu0 0.0
      %2302 = vmatpush1.msra.mxu0 0.0
      %2303 = vmatprep.subr.mxu0 0.0
      %2304 = vmatpush1.msra.mxu0 0.0
      %2305 = vmatprep.subr.mxu0 0.0
      %2306 = vmatpush1.msra.mxu0 0.0
      %2307 = vmatprep.subr.mxu0 0.0
      %2308 = vmatpush1.msra.mxu0 0.0
      %2309 = vmatprep.subr.mxu0 0.0
      %2310 = vmatpush1.msra.mxu0 0.0
      %2311 = vmatprep.subr.mxu0 0.0
      %2312 = vmatpush1.msra.mxu0 0.0
      %2313 = vmatprep.subr.mxu0 0.0
      %2314 = vmatpush1.msra.mxu0 0.0
      %2315 = vmatprep.subr.mxu0 0.0
      %2316 = vmatpush1.msra.mxu0 0.0
      %2317 = vmatprep.subr.mxu0 0.0
      %2318 = vmatpush1.msra.mxu0 0.0
      %2319 = vmatprep.subr.mxu0 0.0
      %2320 = vmatpush1.msra.mxu0 0.0
      %2321 = vmatprep.subr.mxu0 0.0
      %2322 = vmatpush1.msra.mxu0 0.0
      %2323 = vmatprep.subr.mxu0 0.0
      %2324 = vmatpush1.msra.mxu0 0.0
      %2325 = vmatprep.subr.mxu0 0.0
      %2326 = vmatpush1.msra.mxu0 0.0
      %2327 = vmatprep.subr.mxu0 0.0
      %2328 = vmatpush1.msra.mxu0 0.0
      %2329 = vmatprep.subr.mxu0 0.0
      %2330 = vmatpush1.msra.mxu0 0.0
      %2331 = vmatprep.subr.mxu0 0.0
      %2332 = vmatpush1.msra.mxu0 %v2297
      %2333 = vmatprep.subr.mxu0 0.0
      %2334 = vmatpush2.msra.mxu0 0.0
      %2335 = vmatprep.subr.mxu0 0.0
      %2336 = vmatpush2.msra.mxu0 0.0
      %2337 = vmatprep.subr.mxu0 0.0
      %2338 = vmatpush2.msra.mxu0 0.0
      %2339 = vmatprep.subr.mxu0 0.0
      %2340 = vmatpush2.msra.mxu0 0.0
      %2341 = vmatprep.subr.mxu0 0.0
      %2342 = vmatpush2.msra.mxu0 0.0
      %2343 = vmatprep.subr.mxu0 0.0
      %2344 = vmatpush2.msra.mxu0 0.0
      %2345 = vmatprep.subr.mxu0 0.0
      %2346 = vmatpush2.msra.mxu0 0.0
      %2347 = vmatprep.subr.mxu0 0.0
      %2348 = vmatpush2.msra.mxu0 0.0
      %2349 = vmatprep.subr.mxu0 0.0
      %2350 = vmatpush2.msra.mxu0 0.0
      %2351 = vmatprep.subr.mxu0 0.0
      %2352 = vmatpush2.msra.mxu0 0.0
      %2353 = vmatprep.subr.mxu0 0.0
      %2354 = vmatpush2.msra.mxu0 0.0
      %2355 = vmatprep.subr.mxu0 0.0
      %2356 = vmatpush2.msra.mxu0 0.0
      %2357 = vmatprep.subr.mxu0 0.0
      %2358 = vmatpush2.msra.mxu0 0.0
      %2359 = vmatprep.subr.mxu0 0.0
      %2360 = vmatpush2.msra.mxu0 0.0
      %2361 = vmatprep.subr.mxu0 0.0
      %2362 = vmatpush2.msra.mxu0 0.0
      %2363 = vmatprep.subr.mxu0 0.0
      %2364 = vmatpush2.msra.mxu0 0.0
      %2365 = vmatprep.mubr.f32.mxu0 0.0
      %2366 = vmatmul.mubr.f32.gmra.mxu0 %v2299
      %v2367 = vpop.f32.mrf.mxu0
      %v2368 = vadd.f32 0.0, %v2367
      %v2369 = vpop.f32.mrf.mxu0
      %2370 = vdwg.mxu0
      %v2371 = vadd.f32 %v1885, %v2368
      %v2372 = vld [vmem:[%s9] sm:$0x1]
      %v2374 = vlaneseq
      %v2375 = vshrl.u32 %v2374, 7
      %v2376 = vsub.s32 0, %v2375
      %v2377 = vrot.slane %v2372, %v2376
      %v2379 = vadd.f32 %v2371, %v2377
      %v2380 = vld [vmem:[%s10] sm:$0x1]
      %v2381 = vld [vmem:[%s11] sm:$0x1]
      %v2382 = vadd.f32 %v2379, %v426
      %v2383 = vsel %vm440, %v2382, 0.0
      %2384 = vadd.xlane.f32.xlu0 %v2383
      %v2385 = vpop.xlane.xlu0 %2384
      %v2386 = vrcp.pop 32.0
      %v2387 = vmul.f32 %v2385, %v2386
      %v2388 = vsub.f32 %v2382, %v2387
      %v2389 = vmul.f32 %v2388, %v2388
      %v2390 = vsel %vm440, %v2389, 0.0
      %2391 = vadd.xlane.f32.xlu0 %v2390
      %v2392 = vpop.xlane.xlu0 %2391
      %v2393 = vmul.f32 %v2392, %v2386
      %v2394 = vadd.f32 %v2393, 1e-05
      %v2395 = vrsqrt.pop %v2394
      %v2396 = vmul.f32 %v2388, %v2395
      %v2398 = vlaneseq
      %v2399 = vshrl.u32 %v2398, 7
      %v2400 = vsub.s32 0, %v2399
      %v2401 = vrot.slane %v2380, %v2400
      %v2403 = vmul.f32 %v2396, %v2401
      %v2405 = vlaneseq
      %v2406 = vshrl.u32 %v2405, 7
      %v2407 = vsub.s32 0, %v2406
      %v2408 = vrot.slane %v2381, %v2407
      %v2410 = vadd.f32 %v2403, %v2408
      %2411 = vst.msk [vmem:[%s425] sm:$0xff] %vm440, %v2410
      %p2412 = scmp.lt.s32.totalorder %s23, 1
      %s2413 = scalar_select %p2412, %s23, 1
      %s2414 = smul.addr %s2413, 8
      %s2415 = scalar_lea.vmem %s12, %s2414
      // Predicated region
      $region69: #{transformer_decoder_layer_mma.3} parent=67 // pred_check
        %p2416 = pneg %p303
      $region70: #{transformer_decoder_layer_mma.3} parent=67 // pred_check_branch
        %2418 = sbr.rel (%p2416) target = $region72
      $region71: #{transformer_decoder_layer_mma.3} parent=67 // pred_region
        _
      $region72: #{transformer_decoder_layer_mma.3} parent=67 // pred_fallthru
        _
    $region68: #{transformer_decoder_layer_mma.3} parent=5 // pred_fallthru
      _
    %p2419 = scmp.le.s32.totalorder 2, %s18
    // Predicated region
    $region73: #{transformer_decoder_layer_mma.3} parent=5 // pred_check
      %p2420 = pneg %p2419
    $region74: #{transformer_decoder_layer_mma.3} parent=5 // pred_check_branch
      %2422 = sbr.rel (%p2420) target = $region76
    $region75: #{transformer_decoder_layer_mma.3} parent=5 // pred_region
      %s2423 = ssub.s32 %s18, 2
      // Predicated region
      $region77: #{transformer_decoder_layer_mma.3} parent=75 // pred_check
        %p2424 = pneg %p309
      $region78: #{transformer_decoder_layer_mma.3} parent=75 // pred_check_branch
        %2426 = sbr.rel (%p2424) target = $region80
      $region79: #{transformer_decoder_layer_mma.3} parent=75 // pred_region
        %p2427 = scmp.lt.s32.totalorder %s24, 1
        %s2428 = scalar_select %p2427, %s24, 1
        %s2429 = smul.addr %s2428, 8
        %s2430 = scalar_lea.vmem %s12, %s2429
      $region80: #{transformer_decoder_layer_mma.3} parent=75 // pred_fallthru
        _
    $region76: #{transformer_decoder_layer_mma.3} parent=5 // pred_fallthru
      _
  $region6: #{transformer_decoder_layer_mma.3} parent=0 // loop_footer
    %s22 = sadd.s32 1, %s18
  $region7: #{transformer_decoder_layer_mma.3} parent=0 // loop_footer_branch
    %17 = sbr.rel target = $region3
  $region8: #{transformer_decoder_layer_mma.3} parent=0 // loop_exit
    _

// kernel: transformer_decoder_layer_mma.4
$region0: #{transformer_decoder_layer_mma.4}
  #allocation0 [shape = 'u32[]', space=smem, size = 0x4, offset = 0x4, fixed_abs, tag = 'smem constant byte address 0x4 - core index']
  #allocation1 [shape = 'u32[144,128]{1,0:T(1,128)}', space=vmem, size = 0x12000, scoped, tag = 'internal scratch']
  %s0 = inlined_call_operand.vmem [shape: f32[2,8,32], index: 0, kind: input, shape index: {}, may-alias: {0,14}]
  %s1 = inlined_call_operand.vmem [shape: f32[2,8,32], index: 1, kind: input, shape index: {}]
  %s2 = inlined_call_operand.vmem [shape: f32[2,16,32], index: 2, kind: input, shape index: {}]
  %s3 = inlined_call_operand.vmem [shape: f32[2,16,32], index: 3, kind: input, shape index: {}]
  %s4 = inlined_call_operand.vmem [shape: f32[4,32,8], index: 4, kind: input, shape index: {}]
  %s5 = inlined_call_operand.vmem [shape: f32[4,1,8], index: 5, kind: input, shape index: {}]
  %s6 = inlined_call_operand.vmem [shape: f32[4,32,8], index: 6, kind: input, shape index: {}]
  %s7 = inlined_call_operand.vmem [shape: f32[4,1,8], index: 7, kind: input, shape index: {}]
  %s8 = inlined_call_operand.vmem [shape: f32[4,32,8], index: 8, kind: input, shape index: {}]
  %s9 = inlined_call_operand.vmem [shape: f32[4,1,8], index: 9, kind: input, shape index: {}]
  %s10 = inlined_call_operand.vmem [shape: f32[4,8,32], index: 10, kind: input, shape index: {}]
  %s11 = inlined_call_operand.vmem [shape: f32[1,32], index: 11, kind: input, shape index: {}]
  %s12 = inlined_call_operand.vmem [shape: f32[1,32], index: 12, kind: input, shape index: {}]
  %s13 = inlined_call_operand.vmem [shape: f32[1,32], index: 13, kind: input, shape index: {}]
  %s14 = inlined_call_operand.vmem [shape: f32[2,8,32], index: 14, kind: output, shape index: {}, may-alias: {0,14}]
  %s15 = sld [smem:[#allocation0]]
  $region89: #{transformer_decoder_layer_mma.4} parent=0
    _
  %s17 = ssub.s32 1, %s15
  %s18 = scalar_select 0, %s17, %s15
  loop: start=0, step=1, limit=4
  $region2: #{transformer_decoder_layer_mma.4} parent=0 // loop_pre_header
    _
  $region3: #{transformer_decoder_layer_mma.4} parent=0 // loop_header
    %s20 = sphi 0, %s24
    %p21 = scmp.ge.s32.totalorder %s20, 4
    %s30 = sphi 0, %s32
    %s33 = sphi 0, %s30
    %s34 = sphi 0, %s33
    %s50 = sphi 0, %s34
    %s56 = sphi 0, %s58
    %s59 = sphi 0, %s56
    %s60 = sphi 0, %s59
    %s76 = sphi 0, %s60
    %s82 = sphi 0, %s84
    %s85 = sphi 0, %s82
    %s86 = sphi 0, %s85
    %s102 = sphi 0, %s86
    %s108 = sphi 0, %s110
    %s111 = sphi 0, %s108
    %s112 = sphi 0, %s111
    %s128 = sphi 0, %s112
    %s132 = sphi 0, %s132
    %s134 = sphi 0, %s132
    %s135 = sphi 0, %s134
    %s149 = sphi 0, %s135
    %s153 = sphi 0, %s153
    %s155 = sphi 0, %s153
    %s156 = sphi 0, %s155
    %s170 = sphi 0, %s156
    %s174 = sphi 0, %s174
    %s176 = sphi 0, %s174
    %s177 = sphi 0, %s176
    %s191 = sphi 0, %s177
    %s195 = sphi 0, %s195
    %s197 = sphi 0, %s195
    %s198 = sphi 0, %s197
    %s212 = sphi 0, %s198
    %s216 = sphi 0, %s216
    %s218 = sphi 0, %s216
    %s219 = sphi 0, %s218
    %s233 = sphi 0, %s219
    %s237 = sphi 0, %s237
    %s239 = sphi 0, %s237
    %s240 = sphi 0, %s239
    %s254 = sphi 0, %s240
    %s258 = sphi 0, %s258
    %s260 = sphi 0, %s258
    %s261 = sphi 0, %s260
    %s275 = sphi 0, %s261
    %s279 = sphi 0, %s279
    %s281 = sphi 0, %s279
    %s282 = sphi 0, %s281
    %s296 = sphi 0, %s282
    %s300 = sphi 0, %s300
    %s302 = sphi 0, %s300
    %s303 = sphi 0, %s302
    %s317 = sphi 0, %s303
    %s321 = sphi 0, %s321
    %s323 = sphi 0, %s321
    %s324 = sphi 0, %s323
    %s338 = sphi 0, %s324
    %s344 = sphi 0, %s346
    %s347 = sphi 0, %s344
    %s348 = sphi 0, %s347
    %s364 = sphi 0, %s348
  $region4: #{transformer_decoder_layer_mma.4} parent=0 // loop_header_branch
    %23 = sbr.rel (%p21) target = $region8
  $region5: #{transformer_decoder_layer_mma.4} parent=0 // loop_body
    %s25 = ssub.s32 %s20, 1
    %s26 = ssub.s32 %s20, 2
    %s27 = sadd.s32 %s20, 1
    %s28 = ssub.s32 %s20, %s27
    %p29 = scmp.eq.s32.totalorder %s28, 0
    %s31 = sadd.s32 %s30, 1
    %s32 = scalar_select %p29, %s30, %s31
    %p35 = pneg %p29
    %p36 = scmp.eq.s32.totalorder %s20, 1
    %p37 = por %p35, %p36
    %p38 = scmp.ne.s32.totalorder %s30, %s33
    %p39 = scmp.eq.s32.totalorder %s20, 0
    %p40 = por %p38, %p39
    %p41 = scmp.ne.s32.totalorder %s30, %s33
    %p42 = scmp.eq.s32.totalorder %s25, 1
    %p43 = por %p41, %p42
    %p44 = scmp.ne.s32.totalorder %s33, %s34
    %p45 = scmp.eq.s32.totalorder %s25, 0
    %p46 = por %p44, %p45
    %p47 = scmp.ne.s32.totalorder %s33, %s34
    %p48 = scmp.eq.s32.totalorder %s26, 1
    %p49 = por %p47, %p48
    %p51 = scmp.ne.s32.totalorder %s34, %s50
    %p52 = scmp.eq.s32.totalorder %s26, 0
    %p53 = por %p51, %p52
    %s54 = ssub.s32 %s20, %s27
    %p55 = scmp.eq.s32.totalorder %s54, 0
    %s57 = sadd.s32 %s56, 1
    %s58 = scalar_select %p55, %s56, %s57
    %p61 = pneg %p55
    %p62 = scmp.eq.s32.totalorder %s20, 1
    %p63 = por %p61, %p62
    %p64 = scmp.ne.s32.totalorder %s56, %s59
    %p65 = scmp.eq.s32.totalorder %s20, 0
    %p66 = por %p64, %p65
    %p67 = scmp.ne.s32.totalorder %s56, %s59
    %p68 = scmp.eq.s32.totalorder %s25, 1
    %p69 = por %p67, %p68
    %p70 = scmp.ne.s32.totalorder %s59, %s60
    %p71 = scmp.eq.s32.totalorder %s25, 0
    %p72 = por %p70, %p71
    %p73 = scmp.ne.s32.totalorder %s59, %s60
    %p74 = scmp.eq.s32.totalorder %s26, 1
    %p75 = por %p73, %p74
    %p77 = scmp.ne.s32.totalorder %s60, %s76
    %p78 = scmp.eq.s32.totalorder %s26, 0
    %p79 = por %p77, %p78
    %s80 = ssub.s32 %s20, %s27
    %p81 = scmp.eq.s32.totalorder %s80, 0
    %s83 = sadd.s32 %s82, 1
    %s84 = scalar_select %p81, %s82, %s83
    %p87 = pneg %p81
    %p88 = scmp.eq.s32.totalorder %s20, 1
    %p89 = por %p87, %p88
    %p90 = scmp.ne.s32.totalorder %s82, %s85
    %p91 = scmp.eq.s32.totalorder %s20, 0
    %p92 = por %p90, %p91
    %p93 = scmp.ne.s32.totalorder %s82, %s85
    %p94 = scmp.eq.s32.totalorder %s25, 1
    %p95 = por %p93, %p94
    %p96 = scmp.ne.s32.totalorder %s85, %s86
    %p97 = scmp.eq.s32.totalorder %s25, 0
    %p98 = por %p96, %p97
    %p99 = scmp.ne.s32.totalorder %s85, %s86
    %p100 = scmp.eq.s32.totalorder %s26, 1
    %p101 = por %p99, %p100
    %p103 = scmp.ne.s32.totalorder %s86, %s102
    %p104 = scmp.eq.s32.totalorder %s26, 0
    %p105 = por %p103, %p104
    %s106 = ssub.s32 %s20, %s27
    %p107 = scmp.eq.s32.totalorder %s106, 0
    %s109 = sadd.s32 %s108, 1
    %s110 = scalar_select %p107, %s108, %s109
    %p113 = pneg %p107
    %p114 = scmp.eq.s32.totalorder %s20, 1
    %p115 = por %p113, %p114
    %p116 = scmp.ne.s32.totalorder %s108, %s111
    %p117 = scmp.eq.s32.totalorder %s20, 0
    %p118 = por %p116, %p117
    %p119 = scmp.ne.s32.totalorder %s108, %s111
    %p120 = scmp.eq.s32.totalorder %s25, 1
    %p121 = por %p119, %p120
    %p122 = scmp.ne.s32.totalorder %s111, %s112
    %p123 = scmp.eq.s32.totalorder %s25, 0
    %p124 = por %p122, %p123
    %p125 = scmp.ne.s32.totalorder %s111, %s112
    %p126 = scmp.eq.s32.totalorder %s26, 1
    %p127 = por %p125, %p126
    %p129 = scmp.ne.s32.totalorder %s112, %s128
    %p130 = scmp.eq.s32.totalorder %s26, 0
    %p131 = por %p129, %p130
    %s133 = sadd.s32 %s132, 1
    %p136 = scmp.eq.s32.totalorder %s20, 1
    %p137 = scmp.ne.s32.totalorder %s132, %s134
    %p138 = scmp.eq.s32.totalorder %s20, 0
    %p139 = por %p137, %p138
    %p140 = scmp.ne.s32.totalorder %s132, %s134
    %p141 = scmp.eq.s32.totalorder %s25, 1
    %p142 = por %p140, %p141
    %p143 = scmp.ne.s32.totalorder %s134, %s135
    %p144 = scmp.eq.s32.totalorder %s25, 0
    %p145 = por %p143, %p144
    %p146 = scmp.ne.s32.totalorder %s134, %s135
    %p147 = scmp.eq.s32.totalorder %s26, 1
    %p148 = por %p146, %p147
    %p150 = scmp.ne.s32.totalorder %s135, %s149
    %p151 = scmp.eq.s32.totalorder %s26, 0
    %p152 = por %p150, %p151
    %s154 = sadd.s32 %s153, 1
    %p157 = scmp.eq.s32.totalorder %s20, 1
    %p158 = scmp.ne.s32.totalorder %s153, %s155
    %p159 = scmp.eq.s32.totalorder %s20, 0
    %p160 = por %p158, %p159
    %p161 = scmp.ne.s32.totalorder %s153, %s155
    %p162 = scmp.eq.s32.totalorder %s25, 1
    %p163 = por %p161, %p162
    %p164 = scmp.ne.s32.totalorder %s155, %s156
    %p165 = scmp.eq.s32.totalorder %s25, 0
    %p166 = por %p164, %p165
    %p167 = scmp.ne.s32.totalorder %s155, %s156
    %p168 = scmp.eq.s32.totalorder %s26, 1
    %p169 = por %p167, %p168
    %p171 = scmp.ne.s32.totalorder %s156, %s170
    %p172 = scmp.eq.s32.totalorder %s26, 0
    %p173 = por %p171, %p172
    %s175 = sadd.s32 %s174, 1
    %p178 = scmp.eq.s32.totalorder %s20, 1
    %p179 = scmp.ne.s32.totalorder %s174, %s176
    %p180 = scmp.eq.s32.totalorder %s20, 0
    %p181 = por %p179, %p180
    %p182 = scmp.ne.s32.totalorder %s174, %s176
    %p183 = scmp.eq.s32.totalorder %s25, 1
    %p184 = por %p182, %p183
    %p185 = scmp.ne.s32.totalorder %s176, %s177
    %p186 = scmp.eq.s32.totalorder %s25, 0
    %p187 = por %p185, %p186
    %p188 = scmp.ne.s32.totalorder %s176, %s177
    %p189 = scmp.eq.s32.totalorder %s26, 1
    %p190 = por %p188, %p189
    %p192 = scmp.ne.s32.totalorder %s177, %s191
    %p193 = scmp.eq.s32.totalorder %s26, 0
    %p194 = por %p192, %p193
    %s196 = sadd.s32 %s195, 1
    %p199 = scmp.eq.s32.totalorder %s20, 1
    %p200 = scmp.ne.s32.totalorder %s195, %s197
    %p201 = scmp.eq.s32.totalorder %s20, 0
    %p202 = por %p200, %p201
    %p203 = scmp.ne.s32.totalorder %s195, %s197
    %p204 = scmp.eq.s32.totalorder %s25, 1
    %p205 = por %p203, %p204
    %p206 = scmp.ne.s32.totalorder %s197, %s198
    %p207 = scmp.eq.s32.totalorder %s25, 0
    %p208 = por %p206, %p207
    %p209 = scmp.ne.s32.totalorder %s197, %s198
    %p210 = scmp.eq.s32.totalorder %s26, 1
    %p211 = por %p209, %p210
    %p213 = scmp.ne.s32.totalorder %s198, %s212
    %p214 = scmp.eq.s32.totalorder %s26, 0
    %p215 = por %p213, %p214
    %s217 = sadd.s32 %s216, 1
    %p220 = scmp.eq.s32.totalorder %s20, 1
    %p221 = scmp.ne.s32.totalorder %s216, %s218
    %p222 = scmp.eq.s32.totalorder %s20, 0
    %p223 = por %p221, %p222
    %p224 = scmp.ne.s32.totalorder %s216, %s218
    %p225 = scmp.eq.s32.totalorder %s25, 1
    %p226 = por %p224, %p225
    %p227 = scmp.ne.s32.totalorder %s218, %s219
    %p228 = scmp.eq.s32.totalorder %s25, 0
    %p229 = por %p227, %p228
    %p230 = scmp.ne.s32.totalorder %s218, %s219
    %p231 = scmp.eq.s32.totalorder %s26, 1
    %p232 = por %p230, %p231
    %p234 = scmp.ne.s32.totalorder %s219, %s233
    %p235 = scmp.eq.s32.totalorder %s26, 0
    %p236 = por %p234, %p235
    %s238 = sadd.s32 %s237, 1
    %p241 = scmp.eq.s32.totalorder %s20, 1
    %p242 = scmp.ne.s32.totalorder %s237, %s239
    %p243 = scmp.eq.s32.totalorder %s20, 0
    %p244 = por %p242, %p243
    %p245 = scmp.ne.s32.totalorder %s237, %s239
    %p246 = scmp.eq.s32.totalorder %s25, 1
    %p247 = por %p245, %p246
    %p248 = scmp.ne.s32.totalorder %s239, %s240
    %p249 = scmp.eq.s32.totalorder %s25, 0
    %p250 = por %p248, %p249
    %p251 = scmp.ne.s32.totalorder %s239, %s240
    %p252 = scmp.eq.s32.totalorder %s26, 1
    %p253 = por %p251, %p252
    %p255 = scmp.ne.s32.totalorder %s240, %s254
    %p256 = scmp.eq.s32.totalorder %s26, 0
    %p257 = por %p255, %p256
    %s259 = sadd.s32 %s258, 1
    %p262 = scmp.eq.s32.totalorder %s20, 1
    %p263 = scmp.ne.s32.totalorder %s258, %s260
    %p264 = scmp.eq.s32.totalorder %s20, 0
    %p265 = por %p263, %p264
    %p266 = scmp.ne.s32.totalorder %s258, %s260
    %p267 = scmp.eq.s32.totalorder %s25, 1
    %p268 = por %p266, %p267
    %p269 = scmp.ne.s32.totalorder %s260, %s261
    %p270 = scmp.eq.s32.totalorder %s25, 0
    %p271 = por %p269, %p270
    %p272 = scmp.ne.s32.totalorder %s260, %s261
    %p273 = scmp.eq.s32.totalorder %s26, 1
    %p274 = por %p272, %p273
    %p276 = scmp.ne.s32.totalorder %s261, %s275
    %p277 = scmp.eq.s32.totalorder %s26, 0
    %p278 = por %p276, %p277
    %s280 = sadd.s32 %s279, 1
    %p283 = scmp.eq.s32.totalorder %s20, 1
    %p284 = scmp.ne.s32.totalorder %s279, %s281
    %p285 = scmp.eq.s32.totalorder %s20, 0
    %p286 = por %p284, %p285
    %p287 = scmp.ne.s32.totalorder %s279, %s281
    %p288 = scmp.eq.s32.totalorder %s25, 1
    %p289 = por %p287, %p288
    %p290 = scmp.ne.s32.totalorder %s281, %s282
    %p291 = scmp.eq.s32.totalorder %s25, 0
    %p292 = por %p290, %p291
    %p293 = scmp.ne.s32.totalorder %s281, %s282
    %p294 = scmp.eq.s32.totalorder %s26, 1
    %p295 = por %p293, %p294
    %p297 = scmp.ne.s32.totalorder %s282, %s296
    %p298 = scmp.eq.s32.totalorder %s26, 0
    %p299 = por %p297, %p298
    %s301 = sadd.s32 %s300, 1
    %p304 = scmp.eq.s32.totalorder %s20, 1
    %p305 = scmp.ne.s32.totalorder %s300, %s302
    %p306 = scmp.eq.s32.totalorder %s20, 0
    %p307 = por %p305, %p306
    %p308 = scmp.ne.s32.totalorder %s300, %s302
    %p309 = scmp.eq.s32.totalorder %s25, 1
    %p310 = por %p308, %p309
    %p311 = scmp.ne.s32.totalorder %s302, %s303
    %p312 = scmp.eq.s32.totalorder %s25, 0
    %p313 = por %p311, %p312
    %p314 = scmp.ne.s32.totalorder %s302, %s303
    %p315 = scmp.eq.s32.totalorder %s26, 1
    %p316 = por %p314, %p315
    %p318 = scmp.ne.s32.totalorder %s303, %s317
    %p319 = scmp.eq.s32.totalorder %s26, 0
    %p320 = por %p318, %p319
    %s322 = sadd.s32 %s321, 1
    %p325 = scmp.eq.s32.totalorder %s20, 1
    %p326 = scmp.ne.s32.totalorder %s321, %s323
    %p327 = scmp.eq.s32.totalorder %s20, 0
    %p328 = por %p326, %p327
    %p329 = scmp.ne.s32.totalorder %s321, %s323
    %p330 = scmp.eq.s32.totalorder %s25, 1
    %p331 = por %p329, %p330
    %p332 = scmp.ne.s32.totalorder %s323, %s324
    %p333 = scmp.eq.s32.totalorder %s25, 0
    %p334 = por %p332, %p333
    %p335 = scmp.ne.s32.totalorder %s323, %s324
    %p336 = scmp.eq.s32.totalorder %s26, 1
    %p337 = por %p335, %p336
    %p339 = scmp.ne.s32.totalorder %s324, %s338
    %p340 = scmp.eq.s32.totalorder %s26, 0
    %p341 = por %p339, %p340
    %s342 = ssub.s32 %s20, %s27
    %p343 = scmp.eq.s32.totalorder %s342, 0
    %s345 = sadd.s32 %s344, 1
    %s346 = scalar_select %p343, %s344, %s345
    %p349 = pneg %p343
    %p350 = scmp.eq.s32.totalorder %s20, 1
    %p351 = por %p349, %p350
    %p352 = scmp.ne.s32.totalorder %s344, %s347
    %p353 = scmp.eq.s32.totalorder %s20, 0
    %p354 = por %p352, %p353
    %p355 = scmp.ne.s32.totalorder %s344, %s347
    %p356 = scmp.eq.s32.totalorder %s25, 1
    %p357 = por %p355, %p356
    %p358 = scmp.ne.s32.totalorder %s347, %s348
    %p359 = scmp.eq.s32.totalorder %s25, 0
    %p360 = por %p358, %p359
    %p361 = scmp.ne.s32.totalorder %s347, %s348
    %p362 = scmp.eq.s32.totalorder %s26, 1
    %p363 = por %p361, %p362
    %p365 = scmp.ne.s32.totalorder %s348, %s364
    %p366 = scmp.eq.s32.totalorder %s26, 0
    %p367 = por %p365, %p366
    %p368 = scmp.le.s32.totalorder 1, %s20
    %p369 = scmp.lt.s32.totalorder %s20, 3
    %p370 = pnand %p368, %p369
    %p371 = pneg %p370
    // Predicated region
    $region9: #{transformer_decoder_layer_mma.4} parent=5 // pred_check
      _
    $region10: #{transformer_decoder_layer_mma.4} parent=5 // pred_check_branch
      %373 = sbr.rel (%p370) target = $region12
    $region11: #{transformer_decoder_layer_mma.4} parent=5 // pred_region
      %s374 = ssub.s32 %s20, 1
      // Predicated region
      $region13: #{transformer_decoder_layer_mma.4} parent=11 // pred_check
        %p375 = pneg %p145
      $region14: #{transformer_decoder_layer_mma.4} parent=11 // pred_check_branch
        %377 = sbr.rel (%p375) target = $region16
      $region15: #{transformer_decoder_layer_mma.4} parent=11 // pred_region
        _
      $region16: #{transformer_decoder_layer_mma.4} parent=11 // pred_fallthru
        _
      // Predicated region
      $region17: #{transformer_decoder_layer_mma.4} parent=11 // pred_check
        %p378 = pneg %p166
      $region18: #{transformer_decoder_layer_mma.4} parent=11 // pred_check_branch
        %380 = sbr.rel (%p378) target = $region20
      $region19: #{transformer_decoder_layer_mma.4} parent=11 // pred_region
        _
      $region20: #{transformer_decoder_layer_mma.4} parent=11 // pred_fallthru
        _
      // Predicated region
      $region21: #{transformer_decoder_layer_mma.4} parent=11 // pred_check
        %p381 = pneg %p187
      $region22: #{transformer_decoder_layer_mma.4} parent=11 // pred_check_branch
        %383 = sbr.rel (%p381) target = $region24
      $region23: #{transformer_decoder_layer_mma.4} parent=11 // pred_region
        _
      $region24: #{transformer_decoder_layer_mma.4} parent=11 // pred_fallthru
        _
      // Predicated region
      $region25: #{transformer_decoder_layer_mma.4} parent=11 // pred_check
        %p384 = pneg %p208
      $region26: #{transformer_decoder_layer_mma.4} parent=11 // pred_check_branch
        %386 = sbr.rel (%p384) target = $region28
      $region27: #{transformer_decoder_layer_mma.4} parent=11 // pred_region
        _
      $region28: #{transformer_decoder_layer_mma.4} parent=11 // pred_fallthru
        _
      // Predicated region
      $region29: #{transformer_decoder_layer_mma.4} parent=11 // pred_check
        %p387 = pneg %p229
      $region30: #{transformer_decoder_layer_mma.4} parent=11 // pred_check_branch
        %389 = sbr.rel (%p387) target = $region32
      $region31: #{transformer_decoder_layer_mma.4} parent=11 // pred_region
        _
      $region32: #{transformer_decoder_layer_mma.4} parent=11 // pred_fallthru
        _
      // Predicated region
      $region33: #{transformer_decoder_layer_mma.4} parent=11 // pred_check
        %p390 = pneg %p250
      $region34: #{transformer_decoder_layer_mma.4} parent=11 // pred_check_branch
        %392 = sbr.rel (%p390) target = $region36
      $region35: #{transformer_decoder_layer_mma.4} parent=11 // pred_region
        _
      $region36: #{transformer_decoder_layer_mma.4} parent=11 // pred_fallthru
        _
      // Predicated region
      $region37: #{transformer_decoder_layer_mma.4} parent=11 // pred_check
        %p393 = pneg %p271
      $region38: #{transformer_decoder_layer_mma.4} parent=11 // pred_check_branch
        %395 = sbr.rel (%p393) target = $region40
      $region39: #{transformer_decoder_layer_mma.4} parent=11 // pred_region
        _
      $region40: #{transformer_decoder_layer_mma.4} parent=11 // pred_fallthru
        _
      // Predicated region
      $region41: #{transformer_decoder_layer_mma.4} parent=11 // pred_check
        %p396 = pneg %p292
      $region42: #{transformer_decoder_layer_mma.4} parent=11 // pred_check_branch
        %398 = sbr.rel (%p396) target = $region44
      $region43: #{transformer_decoder_layer_mma.4} parent=11 // pred_region
        _
      $region44: #{transformer_decoder_layer_mma.4} parent=11 // pred_fallthru
        _
      // Predicated region
      $region45: #{transformer_decoder_layer_mma.4} parent=11 // pred_check
        %p399 = pneg %p313
      $region46: #{transformer_decoder_layer_mma.4} parent=11 // pred_check_branch
        %401 = sbr.rel (%p399) target = $region48
      $region47: #{transformer_decoder_layer_mma.4} parent=11 // pred_region
        _
      $region48: #{transformer_decoder_layer_mma.4} parent=11 // pred_fallthru
        _
      // Predicated region
      $region49: #{transformer_decoder_layer_mma.4} parent=11 // pred_check
        %p402 = pneg %p334
      $region50: #{transformer_decoder_layer_mma.4} parent=11 // pred_check_branch
        %404 = sbr.rel (%p402) target = $region52
      $region51: #{transformer_decoder_layer_mma.4} parent=11 // pred_region
        _
      $region52: #{transformer_decoder_layer_mma.4} parent=11 // pred_fallthru
        _
    $region12: #{transformer_decoder_layer_mma.4} parent=5 // pred_fallthru
      _
    %p405 = scmp.lt.s32.totalorder %s20, 2
    // Predicated region
    $region53: #{transformer_decoder_layer_mma.4} parent=5 // pred_check
      %p406 = pneg %p405
    $region54: #{transformer_decoder_layer_mma.4} parent=5 // pred_check_branch
      %408 = sbr.rel (%p406) target = $region56
    $region55: #{transformer_decoder_layer_mma.4} parent=5 // pred_region
      // Predicated region
      $region57: #{transformer_decoder_layer_mma.4} parent=55 // pred_check
        %p409 = pneg %p40
      $region58: #{transformer_decoder_layer_mma.4} parent=55 // pred_check_branch
        %411 = sbr.rel (%p409) target = $region60
      $region59: #{transformer_decoder_layer_mma.4} parent=55 // pred_region
        %p412 = scmp.lt.s32.totalorder %s20, 1
        %s413 = scalar_select %p412, %s20, 1
        %s414 = smul.addr %s413, 8
        %s415 = scalar_lea.vmem %s0, %s414
      $region60: #{transformer_decoder_layer_mma.4} parent=55 // pred_fallthru
        _
      // Predicated region
      $region61: #{transformer_decoder_layer_mma.4} parent=55 // pred_check
        %p416 = pneg %p66
      $region62: #{transformer_decoder_layer_mma.4} parent=55 // pred_check_branch
        %418 = sbr.rel (%p416) target = $region64
      $region63: #{transformer_decoder_layer_mma.4} parent=55 // pred_region
        %p419 = scmp.lt.s32.totalorder %s20, 1
        %s420 = scalar_select %p419, %s20, 1
        %s421 = smul.addr %s420, 8
        %s422 = scalar_lea.vmem %s1, %s421
      $region64: #{transformer_decoder_layer_mma.4} parent=55 // pred_fallthru
        _
      // Predicated region
      $region65: #{transformer_decoder_layer_mma.4} parent=55 // pred_check
        %p423 = pneg %p92
      $region66: #{transformer_decoder_layer_mma.4} parent=55 // pred_check_branch
        %425 = sbr.rel (%p423) target = $region68
      $region67: #{transformer_decoder_layer_mma.4} parent=55 // pred_region
        %p426 = scmp.lt.s32.totalorder %s20, 1
        %s427 = scalar_select %p426, %s20, 1
        %s428 = smul.addr %s427, 2
        %s429 = smul.addr %s428, 8
        %s430 = scalar_lea.vmem %s2, %s429
      $region68: #{transformer_decoder_layer_mma.4} parent=55 // pred_fallthru
        _
      // Predicated region
      $region69: #{transformer_decoder_layer_mma.4} parent=55 // pred_check
        %p431 = pneg %p118
      $region70: #{transformer_decoder_layer_mma.4} parent=55 // pred_check_branch
        %433 = sbr.rel (%p431) target = $region72
      $region71: #{transformer_decoder_layer_mma.4} parent=55 // pred_region
        %p434 = scmp.lt.s32.totalorder %s20, 1
        %s435 = scalar_select %p434, %s20, 1
        %s436 = smul.addr %s435, 2
        %s437 = smul.addr %s436, 8
        %s438 = scalar_lea.vmem %s3, %s437
      $region72: #{transformer_decoder_layer_mma.4} parent=55 // pred_fallthru
        _
    $region56: #{transformer_decoder_layer_mma.4} parent=5 // pred_fallthru
      _
    %p439 = scmp.le.s32.totalorder 1, %s20
    %p440 = scmp.lt.s32.totalorder %s20, 3
    %p441 = pnand %p439, %p440
    %p442 = pneg %p441
    // Predicated region
    $region73: #{transformer_decoder_layer_mma.4} parent=5 // pred_check
      _
    $region74: #{transformer_decoder_layer_mma.4} parent=5 // pred_check_branch
      %444 = sbr.rel (%p441) target = $region76
    $region75: #{transformer_decoder_layer_mma.4} parent=5 // pred_region
      %s445 = ssub.s32 %s20, 1
      %p446 = scmp.lt.s32.totalorder %s25, 1
      %s447 = scalar_select %p446, %s25, 1
      %s448 = smul.addr %s447, 8
      %s449 = scalar_lea.vmem %s0, %s448
      %p450 = pneg %p46
      %p451 = pneg %p43
      %p452 = scmp.lt.s32.totalorder %s25, 1
      %s453 = scalar_select %p452, %s25, 1
      %s454 = smul.addr %s453, 8
      %s455 = scalar_lea.vmem %s1, %s454
      %p456 = pneg %p72
      %p457 = pneg %p69
      %p458 = scmp.lt.s32.totalorder %s25, 1
      %s459 = scalar_select %p458, %s25, 1
      %s460 = smul.addr %s459, 2
      %s461 = smul.addr %s460, 8
      %s462 = scalar_lea.vmem %s2, %s461
      %p463 = pneg %p98
      %p464 = pneg %p95
      %p465 = scmp.lt.s32.totalorder %s25, 1
      %s466 = scalar_select %p465, %s25, 1
      %s467 = smul.addr %s466, 2
      %s468 = smul.addr %s467, 8
      %s469 = scalar_lea.vmem %s3, %s468
      %p470 = pneg %p124
      %p471 = pneg %p121
      %p472 = pneg %p145
      %p473 = pneg %p142
      %p474 = pneg %p166
      %p475 = pneg %p163
      %p476 = pneg %p187
      %p477 = pneg %p184
      %p478 = pneg %p208
      %p479 = pneg %p205
      %p480 = pneg %p229
      %p481 = pneg %p226
      %p482 = pneg %p250
      %p483 = pneg %p247
      %p484 = pneg %p271
      %p485 = pneg %p268
      %p486 = pneg %p292
      %p487 = pneg %p289
      %p488 = pneg %p313
      %p489 = pneg %p310
      %p490 = pneg %p334
      %p491 = pneg %p331
      %p492 = pneg %p360
      %p493 = pneg %p357
      %p494 = scmp.lt.s32.totalorder %s25, 1
      %s495 = scalar_select %p494, %s25, 1
      %s496 = smul.addr %s495, 8
      %s497 = scalar_lea.vmem %s14, %s496
      %p498 = scmp.lt.s32.totalorder %s25, 1
      %s499 = scalar_select %p498, %s25, 1
      %s500 = smul.addr %s499, 8
      %s501 = scalar_lea.vmem %s0, %s500
      %p502 = scmp.lt.s32.totalorder %s25, 1
      %s503 = scalar_select %p502, %s25, 1
      %s504 = smul.addr %s503, 8
      %s505 = scalar_lea.vmem %s1, %s504
      %p506 = scmp.lt.s32.totalorder %s25, 1
      %s507 = scalar_select %p506, %s25, 1
      %s508 = smul.addr %s507, 2
      %s509 = smul.addr %s508, 8
      %s510 = scalar_lea.vmem %s2, %s509
      %p511 = scmp.lt.s32.totalorder %s25, 1
      %s512 = scalar_select %p511, %s25, 1
      %s513 = smul.addr %s512, 2
      %s514 = smul.addr %s513, 8
      %s515 = scalar_lea.vmem %s3, %s514
      %p516 = scmp.lt.s32.totalorder %s25, 1
      %s517 = scalar_select %p516, %s25, 1
      %s518 = smul.addr %s517, 8
      %s519 = scalar_lea.vmem %s14, %s518
      %v520 = vld [vmem:[%s501] sm:$0xff]
      %v521 = vld [vmem:[%s505] sm:$0xff]
      %v522 = vadd.f32 %v520, %v521
      %v523 = vld [vmem:[%s510] sm:$0xff]
      %v524 = vld [vmem:[%s510 + $0x8] sm:$0xff]
      %v525 = vld [vmem:[%s515] sm:$0xff]
      %v526 = vld [vmem:[%s515 + $0x8] sm:$0xff]
      %v527 = vadd.f32 %v523, %v525
      %v528 = vadd.f32 %v524, %v526
      %v529 = vld [vmem:[%s4] sm:$0xff]
      %v530 = vld [vmem:[%s4 + $0x8] sm:$0xff]
      %v531 = vld [vmem:[%s4 + $0x10] sm:$0xff]
      %v532 = vld [vmem:[%s4 + $0x18] sm:$0xff]
      %v533 = vld [vmem:[%s5] sm:$0x1]
      %v535 = vlaneseq
      %v536 = vshrl.u32 %v535, 7
      %v537 = vsub.s32 0, %v536
      %v538 = vrot.slane %v533, %v537
      %vm540 = vcmask 261120
      %v542 = vsel %vm540, %v522, 0
      %544 = vmatprep.subr.mxu0 0.0
      %545 = vmatpush1.msra.mxu0 0.0
      %546 = vmatprep.subr.mxu0 0.0
      %547 = vmatpush1.msra.mxu0 0.0
      %548 = vmatprep.subr.mxu0 0.0
      %549 = vmatpush1.msra.mxu0 0.0
      %550 = vmatprep.subr.mxu0 0.0
      %551 = vmatpush1.msra.mxu0 0.0
      %552 = vmatprep.subr.mxu0 0.0
      %553 = vmatpush1.msra.mxu0 0.0
      %554 = vmatprep.subr.mxu0 0.0
      %555 = vmatpush1.msra.mxu0 0.0
      %556 = vmatprep.subr.mxu0 0.0
      %557 = vmatpush1.msra.mxu0 0.0
      %558 = vmatprep.subr.mxu0 0.0
      %559 = vmatpush1.msra.mxu0 0.0
      %560 = vmatprep.subr.mxu0 0.0
      %561 = vmatpush1.msra.mxu0 0.0
      %562 = vmatprep.subr.mxu0 0.0
      %563 = vmatpush1.msra.mxu0 0.0
      %564 = vmatprep.subr.mxu0 0.0
      %565 = vmatpush1.msra.mxu0 0.0
      %566 = vmatprep.subr.mxu0 0.0
      %567 = vmatpush1.msra.mxu0 0.0
      %568 = vmatprep.subr.mxu0 0.0
      %569 = vmatpush1.msra.mxu0 %v532
      %570 = vmatprep.subr.mxu0 0.0
      %571 = vmatpush1.msra.mxu0 %v531
      %572 = vmatprep.subr.mxu0 0.0
      %573 = vmatpush1.msra.mxu0 %v530
      %574 = vmatprep.subr.mxu0 0.0
      %575 = vmatpush1.msra.mxu0 %v529
      %576 = vmatprep.subr.mxu0 0.0
      %577 = vmatpush2.msra.mxu0 0.0
      %578 = vmatprep.subr.mxu0 0.0
      %579 = vmatpush2.msra.mxu0 0.0
      %580 = vmatprep.subr.mxu0 0.0
      %581 = vmatpush2.msra.mxu0 0.0
      %582 = vmatprep.subr.mxu0 0.0
      %583 = vmatpush2.msra.mxu0 0.0
      %584 = vmatprep.subr.mxu0 0.0
      %585 = vmatpush2.msra.mxu0 0.0
      %586 = vmatprep.subr.mxu0 0.0
      %587 = vmatpush2.msra.mxu0 0.0
      %588 = vmatprep.subr.mxu0 0.0
      %589 = vmatpush2.msra.mxu0 0.0
      %590 = vmatprep.subr.mxu0 0.0
      %591 = vmatpush2.msra.mxu0 0.0
      %592 = vmatprep.subr.mxu0 0.0
      %593 = vmatpush2.msra.mxu0 0.0
      %594 = vmatprep.subr.mxu0 0.0
      %595 = vmatpush2.msra.mxu0 0.0
      %596 = vmatprep.subr.mxu0 0.0
      %597 = vmatpush2.msra.mxu0 0.0
      %598 = vmatprep.subr.mxu0 0.0
      %599 = vmatpush2.msra.mxu0 0.0
      %600 = vmatprep.subr.mxu0 0.0
      %601 = vmatpush2.msra.mxu0 0.0
      %602 = vmatprep.subr.mxu0 0.0
      %603 = vmatpush2.msra.mxu0 0.0
      %604 = vmatprep.subr.mxu0 0.0
      %605 = vmatpush2.msra.mxu0 0.0
      %606 = vmatprep.subr.mxu0 0.0
      %607 = vmatpush2.msra.mxu0 0.0
      %608 = vmatprep.mubr.f32.mxu0 0.0
      %609 = vmatmul.mubr.f32.gmra.mxu0 %v542
      %v610 = vpop.f32.mrf.mxu0
      %v611 = vadd.f32 %v538, %v610
      %v612 = vpop.f32.mrf.mxu0
      %613 = vdwg.mxu0
      %v614 = vmul.f32 %v611, 0.35355338
      %v615 = vld [vmem:[%s6] sm:$0xff]
      %v616 = vld [vmem:[%s6 + $0x8] sm:$0xff]
      %v617 = vld [vmem:[%s6 + $0x10] sm:$0xff]
      %v618 = vld [vmem:[%s6 + $0x18] sm:$0xff]
      %v619 = vld [vmem:[%s7] sm:$0x1]
      %v621 = vlaneseq
      %v622 = vshrl.u32 %v621, 7
      %v623 = vsub.s32 0, %v622
      %v624 = vrot.slane %v619, %v623
      %v627 = vsel %vm540, %v527, 0
      %v630 = vsel %vm540, %v528, 0
      %632 = vmatprep.subr.mxu0 0.0
      %633 = vmatpush1.msra.mxu0 0.0
      %634 = vmatprep.subr.mxu0 0.0
      %635 = vmatpush1.msra.mxu0 0.0
      %636 = vmatprep.subr.mxu0 0.0
      %637 = vmatpush1.msra.mxu0 0.0
      %638 = vmatprep.subr.mxu0 0.0
      %639 = vmatpush1.msra.mxu0 0.0
      %640 = vmatprep.subr.mxu0 0.0
      %641 = vmatpush1.msra.mxu0 0.0
      %642 = vmatprep.subr.mxu0 0.0
      %643 = vmatpush1.msra.mxu0 0.0
      %644 = vmatprep.subr.mxu0 0.0
      %645 = vmatpush1.msra.mxu0 0.0
      %646 = vmatprep.subr.mxu0 0.0
      %647 = vmatpush1.msra.mxu0 0.0
      %648 = vmatprep.subr.mxu0 0.0
      %649 = vmatpush1.msra.mxu0 0.0
      %650 = vmatprep.subr.mxu0 0.0
      %651 = vmatpush1.msra.mxu0 0.0
      %652 = vmatprep.subr.mxu0 0.0
      %653 = vmatpush1.msra.mxu0 0.0
      %654 = vmatprep.subr.mxu0 0.0
      %655 = vmatpush1.msra.mxu0 0.0
      %656 = vmatprep.subr.mxu0 0.0
      %657 = vmatpush1.msra.mxu0 %v618
      %658 = vmatprep.subr.mxu0 0.0
      %659 = vmatpush1.msra.mxu0 %v617
      %660 = vmatprep.subr.mxu0 0.0
      %661 = vmatpush1.msra.mxu0 %v616
      %662 = vmatprep.subr.mxu0 0.0
      %663 = vmatpush1.msra.mxu0 %v615
      %664 = vmatprep.subr.mxu0 0.0
      %665 = vmatpush2.msra.mxu0 0.0
      %666 = vmatprep.subr.mxu0 0.0
      %667 = vmatpush2.msra.mxu0 0.0
      %668 = vmatprep.subr.mxu0 0.0
      %669 = vmatpush2.msra.mxu0 0.0
      %670 = vmatprep.subr.mxu0 0.0
      %671 = vmatpush2.msra.mxu0 0.0
      %672 = vmatprep.subr.mxu0 0.0
      %673 = vmatpush2.msra.mxu0 0.0
      %674 = vmatprep.subr.mxu0 0.0
      %675 = vmatpush2.msra.mxu0 0.0
      %676 = vmatprep.subr.mxu0 0.0
      %677 = vmatpush2.msra.mxu0 0.0
      %678 = vmatprep.subr.mxu0 0.0
      %679 = vmatpush2.msra.mxu0 0.0
      %680 = vmatprep.subr.mxu0 0.0
      %681 = vmatpush2.msra.mxu0 0.0
      %682 = vmatprep.subr.mxu0 0.0
      %683 = vmatpush2.msra.mxu0 0.0
      %684 = vmatprep.subr.mxu0 0.0
      %685 = vmatpush2.msra.mxu0 0.0
      %686 = vmatprep.subr.mxu0 0.0
      %687 = vmatpush2.msra.mxu0 0.0
      %688 = vmatprep.subr.mxu0 0.0
      %689 = vmatpush2.msra.mxu0 0.0
      %690 = vmatprep.subr.mxu0 0.0
      %691 = vmatpush2.msra.mxu0 0.0
      %692 = vmatprep.subr.mxu0 0.0
      %693 = vmatpush2.msra.mxu0 0.0
      %694 = vmatprep.subr.mxu0 0.0
      %695 = vmatpush2.msra.mxu0 0.0
      %696 = vmatprep.mubr.f32.mxu0 0.0
      %697 = vmatmul.mubr.f32.gmra.mxu0 %v627
      %v698 = vpop.f32.mrf.mxu0
      %v699 = vadd.f32 %v624, %v698
      %v700 = vpop.f32.mrf.mxu0
      %701 = vmatprep.mubr.f32.mxu0 0.0
      %702 = vmatmul.mubr.f32.gmra.mxu0 %v630
      %v703 = vpop.f32.mrf.mxu0
      %v704 = vadd.f32 %v624, %v703
      %v705 = vpop.f32.mrf.mxu0
      %706 = vdwg.mxu0
      %v707 = vld [vmem:[%s8] sm:$0xff]
      %v708 = vld [vmem:[%s8 + $0x8] sm:$0xff]
      %v709 = vld [vmem:[%s8 + $0x10] sm:$0xff]
      %v710 = vld [vmem:[%s8 + $0x18] sm:$0xff]
      %v711 = vld [vmem:[%s9] sm:$0x1]
      %v713 = vlaneseq
      %v714 = vshrl.u32 %v713, 7
      %v715 = vsub.s32 0, %v714
      %v716 = vrot.slane %v711, %v715
      %v719 = vsel %vm540, %v523, 0
      %v722 = vsel %vm540, %v524, 0
      %724 = vmatprep.subr.mxu0 0.0
      %725 = vmatpush1.msra.mxu0 0.0
      %726 = vmatprep.subr.mxu0 0.0
      %727 = vmatpush1.msra.mxu0 0.0
      %728 = vmatprep.subr.mxu0 0.0
      %729 = vmatpush1.msra.mxu0 0.0
      %730 = vmatprep.subr.mxu0 0.0
      %731 = vmatpush1.msra.mxu0 0.0
      %732 = vmatprep.subr.mxu0 0.0
      %733 = vmatpush1.msra.mxu0 0.0
      %734 = vmatprep.subr.mxu0 0.0
      %735 = vmatpush1.msra.mxu0 0.0
      %736 = vmatprep.subr.mxu0 0.0
      %737 = vmatpush1.msra.mxu0 0.0
      %738 = vmatprep.subr.mxu0 0.0
      %739 = vmatpush1.msra.mxu0 0.0
      %740 = vmatprep.subr.mxu0 0.0
      %741 = vmatpush1.msra.mxu0 0.0
      %742 = vmatprep.subr.mxu0 0.0
      %743 = vmatpush1.msra.mxu0 0.0
      %744 = vmatprep.subr.mxu0 0.0
      %745 = vmatpush1.msra.mxu0 0.0
      %746 = vmatprep.subr.mxu0 0.0
      %747 = vmatpush1.msra.mxu0 0.0
      %748 = vmatprep.subr.mxu0 0.0
      %749 = vmatpush1.msra.mxu0 %v710
      %750 = vmatprep.subr.mxu0 0.0
      %751 = vmatpush1.msra.mxu0 %v709
      %752 = vmatprep.subr.mxu0 0.0
      %753 = vmatpush1.msra.mxu0 %v708
      %754 = vmatprep.subr.mxu0 0.0
      %755 = vmatpush1.msra.mxu0 %v707
      %756 = vmatprep.subr.mxu0 0.0
      %757 = vmatpush2.msra.mxu0 0.0
      %758 = vmatprep.subr.mxu0 0.0
      %759 = vmatpush2.msra.mxu0 0.0
      %760 = vmatprep.subr.mxu0 0.0
      %761 = vmatpush2.msra.mxu0 0.0
      %762 = vmatprep.subr.mxu0 0.0
      %763 = vmatpush2.msra.mxu0 0.0
      %764 = vmatprep.subr.mxu0 0.0
      %765 = vmatpush2.msra.mxu0 0.0
      %766 = vmatprep.subr.mxu0 0.0
      %767 = vmatpush2.msra.mxu0 0.0
      %768 = vmatprep.subr.mxu0 0.0
      %769 = vmatpush2.msra.mxu0 0.0
      %770 = vmatprep.subr.mxu0 0.0
      %771 = vmatpush2.msra.mxu0 0.0
      %772 = vmatprep.subr.mxu0 0.0
      %773 = vmatpush2.msra.mxu0 0.0
      %774 = vmatprep.subr.mxu0 0.0
      %775 = vmatpush2.msra.mxu0 0.0
      %776 = vmatprep.subr.mxu0 0.0
      %777 = vmatpush2.msra.mxu0 0.0
      %778 = vmatprep.subr.mxu0 0.0
      %779 = vmatpush2.msra.mxu0 0.0
      %780 = vmatprep.subr.mxu0 0.0
      %781 = vmatpush2.msra.mxu0 0.0
      %782 = vmatprep.subr.mxu0 0.0
      %783 = vmatpush2.msra.mxu0 0.0
      %784 = vmatprep.subr.mxu0 0.0
      %785 = vmatpush2.msra.mxu0 0.0
      %786 = vmatprep.subr.mxu0 0.0
      %787 = vmatpush2.msra.mxu0 0.0
      %788 = vmatprep.mubr.f32.mxu0 0.0
      %789 = vmatmul.mubr.f32.gmra.mxu0 %v719
      %v790 = vpop.f32.mrf.mxu0
      %v791 = vadd.f32 %v716, %v790
      %v792 = vpop.f32.mrf.mxu0
      %793 = vmatprep.mubr.f32.mxu0 0.0
      %794 = vmatmul.mubr.f32.gmra.mxu0 %v722
      %v795 = vpop.f32.mrf.mxu0
      %v796 = vadd.f32 %v716, %v795
      %v797 = vpop.f32.mrf.mxu0
      %798 = vdwg.mxu0
      %vm799 = vcmask 64512
      %v801 = vsel %vm799, %v614, 0
      %v804 = vsel %vm799, %v699, 0
      %v807 = vsel %vm799, %v704, 0
      %809 = vmatprep.subr.mxu0 0.0
      %810 = vmatpush1.xpose.msra.mxu0 0.0
      %811 = vmatprep.subr.mxu0 0.0
      %812 = vmatpush1.xpose.msra.mxu0 0.0
      %813 = vmatprep.subr.mxu0 0.0
      %814 = vmatpush1.xpose.msra.mxu0 0.0
      %815 = vmatprep.subr.mxu0 0.0
      %816 = vmatpush1.xpose.msra.mxu0 0.0
      %817 = vmatprep.subr.mxu0 0.0
      %818 = vmatpush1.xpose.msra.mxu0 0.0
      %819 = vmatprep.subr.mxu0 0.0
      %820 = vmatpush1.xpose.msra.mxu0 0.0
      %821 = vmatprep.subr.mxu0 0.0
      %822 = vmatpush1.xpose.msra.mxu0 0.0
      %823 = vmatprep.subr.mxu0 0.0
      %824 = vmatpush1.xpose.msra.mxu0 0.0
      %825 = vmatprep.subr.mxu0 0.0
      %826 = vmatpush1.xpose.msra.mxu0 0.0
      %827 = vmatprep.subr.mxu0 0.0
      %828 = vmatpush1.xpose.msra.mxu0 0.0
      %829 = vmatprep.subr.mxu0 0.0
      %830 = vmatpush1.xpose.msra.mxu0 0.0
      %831 = vmatprep.subr.mxu0 0.0
      %832 = vmatpush1.xpose.msra.mxu0 0.0
      %833 = vmatprep.subr.mxu0 0.0
      %834 = vmatpush1.xpose.msra.mxu0 0.0
      %835 = vmatprep.subr.mxu0 0.0
      %836 = vmatpush1.xpose.msra.mxu0 0.0
      %837 = vmatprep.subr.mxu0 0.0
      %838 = vmatpush1.xpose.msra.mxu0 %v807
      %839 = vmatprep.subr.mxu0 0.0
      %840 = vmatpush1.xpose.msra.mxu0 %v804
      %841 = vmatprep.subr.mxu0 0.0
      %842 = vmatpush2.xpose.msra.mxu0 0.0
      %843 = vmatprep.subr.mxu0 0.0
      %844 = vmatpush2.xpose.msra.mxu0 0.0
      %845 = vmatprep.subr.mxu0 0.0
      %846 = vmatpush2.xpose.msra.mxu0 0.0
      %847 = vmatprep.subr.mxu0 0.0
      %848 = vmatpush2.xpose.msra.mxu0 0.0
      %849 = vmatprep.subr.mxu0 0.0
      %850 = vmatpush2.xpose.msra.mxu0 0.0
      %851 = vmatprep.subr.mxu0 0.0
      %852 = vmatpush2.xpose.msra.mxu0 0.0
      %853 = vmatprep.subr.mxu0 0.0
      %854 = vmatpush2.xpose.msra.mxu0 0.0
      %855 = vmatprep.subr.mxu0 0.0
      %856 = vmatpush2.xpose.msra.mxu0 0.0
      %857 = vmatprep.subr.mxu0 0.0
      %858 = vmatpush2.xpose.msra.mxu0 0.0
      %859 = vmatprep.subr.mxu0 0.0
      %860 = vmatpush2.xpose.msra.mxu0 0.0
      %861 = vmatprep.subr.mxu0 0.0
      %862 = vmatpush2.xpose.msra.mxu0 0.0
      %863 = vmatprep.subr.mxu0 0.0
      %864 = vmatpush2.xpose.msra.mxu0 0.0
      %865 = vmatprep.subr.mxu0 0.0
      %866 = vmatpush2.xpose.msra.mxu0 0.0
      %867 = vmatprep.subr.mxu0 0.0
      %868 = vmatpush2.xpose.msra.mxu0 0.0
      %869 = vmatprep.subr.mxu0 0.0
      %870 = vmatpush2.xpose.msra.mxu0 0.0
      %871 = vmatprep.subr.mxu0 0.0
      %872 = vmatpush2.xpose.msra.mxu0 0.0
      %873 = vmatprep.mubr.f32.mxu0 0.0
      %874 = vmatmul.mubr.f32.gmra.mxu0 %v801
      %v875 = vpop.f32.mrf.mxu0
      %v876 = vadd.f32 0.0, %v875
      %v877 = vpop.f32.mrf.mxu0
      %878 = vdwg.mxu0
      %vm879 = vcmask 130048
      %v880 = vsel %vm879, %v876, -inf
      %881 = vmax.xlane.f32.xlu0 %v880
      %v882 = vpop.xlane.xlu0 %881
      %v883 = vsub.f32 %v876, %v882
      %v884 = vmul.f32 %v883, 1.442695
      %v885 = vpow.pop %v884
      %v886 = vsel %vm879, %v885, 0.0
      %887 = vadd.xlane.f32.xlu0 %v886
      %v888 = vpop.xlane.xlu0 %887
      %v889 = vrcp.pop %v888
      %v890 = vmul.f32 %v885, %v889
      %v892 = vsel %vm879, %v890, 0
      %894 = vmatprep.subr.mxu0 0.0
      %895 = vmatpush1.msra.mxu0 0.0
      %896 = vmatprep.subr.mxu0 0.0
      %897 = vmatpush1.msra.mxu0 0.0
      %898 = vmatprep.subr.mxu0 0.0
      %899 = vmatpush1.msra.mxu0 0.0
      %900 = vmatprep.subr.mxu0 0.0
      %901 = vmatpush1.msra.mxu0 0.0
      %902 = vmatprep.subr.mxu0 0.0
      %903 = vmatpush1.msra.mxu0 0.0
      %904 = vmatprep.subr.mxu0 0.0
      %905 = vmatpush1.msra.mxu0 0.0
      %906 = vmatprep.subr.mxu0 0.0
      %907 = vmatpush1.msra.mxu0 0.0
      %908 = vmatprep.subr.mxu0 0.0
      %909 = vmatpush1.msra.mxu0 0.0
      %910 = vmatprep.subr.mxu0 0.0
      %911 = vmatpush1.msra.mxu0 0.0
      %912 = vmatprep.subr.mxu0 0.0
      %913 = vmatpush1.msra.mxu0 0.0
      %914 = vmatprep.subr.mxu0 0.0
      %915 = vmatpush1.msra.mxu0 0.0
      %916 = vmatprep.subr.mxu0 0.0
      %917 = vmatpush1.msra.mxu0 0.0
      %918 = vmatprep.subr.mxu0 0.0
      %919 = vmatpush1.msra.mxu0 0.0
      %920 = vmatprep.subr.mxu0 0.0
      %921 = vmatpush1.msra.mxu0 0.0
      %922 = vmatprep.subr.mxu0 0.0
      %923 = vmatpush1.msra.mxu0 %v796
      %924 = vmatprep.subr.mxu0 0.0
      %925 = vmatpush1.msra.mxu0 %v791
      %926 = vmatprep.subr.mxu0 0.0
      %927 = vmatpush2.msra.mxu0 0.0
      %928 = vmatprep.subr.mxu0 0.0
      %929 = vmatpush2.msra.mxu0 0.0
      %930 = vmatprep.subr.mxu0 0.0
      %931 = vmatpush2.msra.mxu0 0.0
      %932 = vmatprep.subr.mxu0 0.0
      %933 = vmatpush2.msra.mxu0 0.0
      %934 = vmatprep.subr.mxu0 0.0
      %935 = vmatpush2.msra.mxu0 0.0
      %936 = vmatprep.subr.mxu0 0.0
      %937 = vmatpush2.msra.mxu0 0.0
      %938 = vmatprep.subr.mxu0 0.0
      %939 = vmatpush2.msra.mxu0 0.0
      %940 = vmatprep.subr.mxu0 0.0
      %941 = vmatpush2.msra.mxu0 0.0
      %942 = vmatprep.subr.mxu0 0.0
      %943 = vmatpush2.msra.mxu0 0.0
      %944 = vmatprep.subr.mxu0 0.0
      %945 = vmatpush2.msra.mxu0 0.0
      %946 = vmatprep.subr.mxu0 0.0
      %947 = vmatpush2.msra.mxu0 0.0
      %948 = vmatprep.subr.mxu0 0.0
      %949 = vmatpush2.msra.mxu0 0.0
      %950 = vmatprep.subr.mxu0 0.0
      %951 = vmatpush2.msra.mxu0 0.0
      %952 = vmatprep.subr.mxu0 0.0
      %953 = vmatpush2.msra.mxu0 0.0
      %954 = vmatprep.subr.mxu0 0.0
      %955 = vmatpush2.msra.mxu0 0.0
      %956 = vmatprep.subr.mxu0 0.0
      %957 = vmatpush2.msra.mxu0 0.0
      %958 = vmatprep.mubr.f32.mxu0 0.0
      %959 = vmatmul.mubr.f32.gmra.mxu0 %v892
      %v960 = vpop.f32.mrf.mxu0
      %v961 = vadd.f32 0.0, %v960
      %v962 = vpop.f32.mrf.mxu0
      %963 = vdwg.mxu0
      %v964 = vld [vmem:[%s10] sm:$0xff]
      %s965 = scalar_lea.vmem %s4, 32
      %v966 = vld [vmem:[%s965] sm:$0xff]
      %v967 = vld [vmem:[%s965 + $0x8] sm:$0xff]
      %v968 = vld [vmem:[%s965 + $0x10] sm:$0xff]
      %v969 = vld [vmem:[%s965 + $0x18] sm:$0xff]
      %s970 = scalar_lea.vmem %s5, 1
      %v971 = vld [vmem:[%s970] sm:$0x1]
      %v973 = vlaneseq
      %v974 = vshrl.u32 %v973, 7
      %v975 = vsub.s32 0, %v974
      %v976 = vrot.slane %v971, %v975
      %978 = vmatprep.subr.mxu0 0.0
      %979 = vmatpush1.msra.mxu0 0.0
      %980 = vmatprep.subr.mxu0 0.0
      %981 = vmatpush1.msra.mxu0 0.0
      %982 = vmatprep.subr.mxu0 0.0
      %983 = vmatpush1.msra.mxu0 0.0
      %984 = vmatprep.subr.mxu0 0.0
      %985 = vmatpush1.msra.mxu0 0.0
      %986 = vmatprep.subr.mxu0 0.0
      %987 = vmatpush1.msra.mxu0 0.0
      %988 = vmatprep.subr.mxu0 0.0
      %989 = vmatpush1.msra.mxu0 0.0
      %990 = vmatprep.subr.mxu0 0.0
      %991 = vmatpush1.msra.mxu0 0.0
      %992 = vmatprep.subr.mxu0 0.0
      %993 = vmatpush1.msra.mxu0 0.0
      %994 = vmatprep.subr.mxu0 0.0
      %995 = vmatpush1.msra.mxu0 0.0
      %996 = vmatprep.subr.mxu0 0.0
      %997 = vmatpush1.msra.mxu0 0.0
      %998 = vmatprep.subr.mxu0 0.0
      %999 = vmatpush1.msra.mxu0 0.0
      %1000 = vmatprep.subr.mxu0 0.0
      %1001 = vmatpush1.msra.mxu0 0.0
      %1002 = vmatprep.subr.mxu0 0.0
      %1003 = vmatpush1.msra.mxu0 %v969
      %1004 = vmatprep.subr.mxu0 0.0
      %1005 = vmatpush1.msra.mxu0 %v968
      %1006 = vmatprep.subr.mxu0 0.0
      %1007 = vmatpush1.msra.mxu0 %v967
      %1008 = vmatprep.subr.mxu0 0.0
      %1009 = vmatpush1.msra.mxu0 %v966
      %1010 = vmatprep.subr.mxu0 0.0
      %1011 = vmatpush2.msra.mxu0 0.0
      %1012 = vmatprep.subr.mxu0 0.0
      %1013 = vmatpush2.msra.mxu0 0.0
      %1014 = vmatprep.subr.mxu0 0.0
      %1015 = vmatpush2.msra.mxu0 0.0
      %1016 = vmatprep.subr.mxu0 0.0
      %1017 = vmatpush2.msra.mxu0 0.0
      %1018 = vmatprep.subr.mxu0 0.0
      %1019 = vmatpush2.msra.mxu0 0.0
      %1020 = vmatprep.subr.mxu0 0.0
      %1021 = vmatpush2.msra.mxu0 0.0
      %1022 = vmatprep.subr.mxu0 0.0
      %1023 = vmatpush2.msra.mxu0 0.0
      %1024 = vmatprep.subr.mxu0 0.0
      %1025 = vmatpush2.msra.mxu0 0.0
      %1026 = vmatprep.subr.mxu0 0.0
      %1027 = vmatpush2.msra.mxu0 0.0
      %1028 = vmatprep.subr.mxu0 0.0
      %1029 = vmatpush2.msra.mxu0 0.0
      %1030 = vmatprep.subr.mxu0 0.0
      %1031 = vmatpush2.msra.mxu0 0.0
      %1032 = vmatprep.subr.mxu0 0.0
      %1033 = vmatpush2.msra.mxu0 0.0
      %1034 = vmatprep.subr.mxu0 0.0
      %1035 = vmatpush2.msra.mxu0 0.0
      %1036 = vmatprep.subr.mxu0 0.0
      %1037 = vmatpush2.msra.mxu0 0.0
      %1038 = vmatprep.subr.mxu0 0.0
      %1039 = vmatpush2.msra.mxu0 0.0
      %1040 = vmatprep.subr.mxu0 0.0
      %1041 = vmatpush2.msra.mxu0 0.0
      %1042 = vmatprep.mubr.f32.mxu0 0.0
      %1043 = vmatmul.mubr.f32.gmra.mxu0 %v542
      %v1044 = vpop.f32.mrf.mxu0
      %v1045 = vadd.f32 %v976, %v1044
      %v1046 = vpop.f32.mrf.mxu0
      %1047 = vdwg.mxu0
      %v1048 = vmul.f32 %v1045, 0.35355338
      %s1049 = scalar_lea.vmem %s6, 32
      %v1050 = vld [vmem:[%s1049] sm:$0xff]
      %v1051 = vld [vmem:[%s1049 + $0x8] sm:$0xff]
      %v1052 = vld [vmem:[%s1049 + $0x10] sm:$0xff]
      %v1053 = vld [vmem:[%s1049 + $0x18] sm:$0xff]
      %s1054 = scalar_lea.vmem %s7, 1
      %v1055 = vld [vmem:[%s1054] sm:$0x1]
      %v1057 = vlaneseq
      %v1058 = vshrl.u32 %v1057, 7
      %v1059 = vsub.s32 0, %v1058
      %v1060 = vrot.slane %v1055, %v1059
      %1062 = vmatprep.subr.mxu0 0.0
      %1063 = vmatpush1.msra.mxu0 0.0
      %1064 = vmatprep.subr.mxu0 0.0
      %1065 = vmatpush1.msra.mxu0 0.0
      %1066 = vmatprep.subr.mxu0 0.0
      %1067 = vmatpush1.msra.mxu0 0.0
      %1068 = vmatprep.subr.mxu0 0.0
      %1069 = vmatpush1.msra.mxu0 0.0
      %1070 = vmatprep.subr.mxu0 0.0
      %1071 = vmatpush1.msra.mxu0 0.0
      %1072 = vmatprep.subr.mxu0 0.0
      %1073 = vmatpush1.msra.mxu0 0.0
      %1074 = vmatprep.subr.mxu0 0.0
      %1075 = vmatpush1.msra.mxu0 0.0
      %1076 = vmatprep.subr.mxu0 0.0
      %1077 = vmatpush1.msra.mxu0 0.0
      %1078 = vmatprep.subr.mxu0 0.0
      %1079 = vmatpush1.msra.mxu0 0.0
      %1080 = vmatprep.subr.mxu0 0.0
      %1081 = vmatpush1.msra.mxu0 0.0
      %1082 = vmatprep.subr.mxu0 0.0
      %1083 = vmatpush1.msra.mxu0 0.0
      %1084 = vmatprep.subr.mxu0 0.0
      %1085 = vmatpush1.msra.mxu0 0.0
      %1086 = vmatprep.subr.mxu0 0.0
      %1087 = vmatpush1.msra.mxu0 %v1053
      %1088 = vmatprep.subr.mxu0 0.0
      %1089 = vmatpush1.msra.mxu0 %v1052
      %1090 = vmatprep.subr.mxu0 0.0
      %1091 = vmatpush1.msra.mxu0 %v1051
      %1092 = vmatprep.subr.mxu0 0.0
      %1093 = vmatpush1.msra.mxu0 %v1050
      %1094 = vmatprep.subr.mxu0 0.0
      %1095 = vmatpush2.msra.mxu0 0.0
      %1096 = vmatprep.subr.mxu0 0.0
      %1097 = vmatpush2.msra.mxu0 0.0
      %1098 = vmatprep.subr.mxu0 0.0
      %1099 = vmatpush2.msra.mxu0 0.0
      %1100 = vmatprep.subr.mxu0 0.0
      %1101 = vmatpush2.msra.mxu0 0.0
      %1102 = vmatprep.subr.mxu0 0.0
      %1103 = vmatpush2.msra.mxu0 0.0
      %1104 = vmatprep.subr.mxu0 0.0
      %1105 = vmatpush2.msra.mxu0 0.0
      %1106 = vmatprep.subr.mxu0 0.0
      %1107 = vmatpush2.msra.mxu0 0.0
      %1108 = vmatprep.subr.mxu0 0.0
      %1109 = vmatpush2.msra.mxu0 0.0
      %1110 = vmatprep.subr.mxu0 0.0
      %1111 = vmatpush2.msra.mxu0 0.0
      %1112 = vmatprep.subr.mxu0 0.0
      %1113 = vmatpush2.msra.mxu0 0.0
      %1114 = vmatprep.subr.mxu0 0.0
      %1115 = vmatpush2.msra.mxu0 0.0
      %1116 = vmatprep.subr.mxu0 0.0
      %1117 = vmatpush2.msra.mxu0 0.0
      %1118 = vmatprep.subr.mxu0 0.0
      %1119 = vmatpush2.msra.mxu0 0.0
      %1120 = vmatprep.subr.mxu0 0.0
      %1121 = vmatpush2.msra.mxu0 0.0
      %1122 = vmatprep.subr.mxu0 0.0
      %1123 = vmatpush2.msra.mxu0 0.0
      %1124 = vmatprep.subr.mxu0 0.0
      %1125 = vmatpush2.msra.mxu0 0.0
      %1126 = vmatprep.mubr.f32.mxu0 0.0
      %1127 = vmatmul.mubr.f32.gmra.mxu0 %v627
      %v1128 = vpop.f32.mrf.mxu0
      %v1129 = vadd.f32 %v1060, %v1128
      %v1130 = vpop.f32.mrf.mxu0
      %1131 = vmatprep.mubr.f32.mxu0 0.0
      %1132 = vmatmul.mubr.f32.gmra.mxu0 %v630
      %v1133 = vpop.f32.mrf.mxu0
      %v1134 = vadd.f32 %v1060, %v1133
      %v1135 = vpop.f32.mrf.mxu0
      %1136 = vdwg.mxu0
      %s1137 = scalar_lea.vmem %s8, 32
      %v1138 = vld [vmem:[%s1137] sm:$0xff]
      %v1139 = vld [vmem:[%s1137 + $0x8] sm:$0xff]
      %v1140 = vld [vmem:[%s1137 + $0x10] sm:$0xff]
      %v1141 = vld [vmem:[%s1137 + $0x18] sm:$0xff]
      %s1142 = scalar_lea.vmem %s9, 1
      %v1143 = vld [vmem:[%s1142] sm:$0x1]
      %v1145 = vlaneseq
      %v1146 = vshrl.u32 %v1145, 7
      %v1147 = vsub.s32 0, %v1146
      %v1148 = vrot.slane %v1143, %v1147
      %1150 = vmatprep.subr.mxu0 0.0
      %1151 = vmatpush1.msra.mxu0 0.0
      %1152 = vmatprep.subr.mxu0 0.0
      %1153 = vmatpush1.msra.mxu0 0.0
      %1154 = vmatprep.subr.mxu0 0.0
      %1155 = vmatpush1.msra.mxu0 0.0
      %1156 = vmatprep.subr.mxu0 0.0
      %1157 = vmatpush1.msra.mxu0 0.0
      %1158 = vmatprep.subr.mxu0 0.0
      %1159 = vmatpush1.msra.mxu0 0.0
      %1160 = vmatprep.subr.mxu0 0.0
      %1161 = vmatpush1.msra.mxu0 0.0
      %1162 = vmatprep.subr.mxu0 0.0
      %1163 = vmatpush1.msra.mxu0 0.0
      %1164 = vmatprep.subr.mxu0 0.0
      %1165 = vmatpush1.msra.mxu0 0.0
      %1166 = vmatprep.subr.mxu0 0.0
      %1167 = vmatpush1.msra.mxu0 0.0
      %1168 = vmatprep.subr.mxu0 0.0
      %1169 = vmatpush1.msra.mxu0 0.0
      %1170 = vmatprep.subr.mxu0 0.0
      %1171 = vmatpush1.msra.mxu0 0.0
      %1172 = vmatprep.subr.mxu0 0.0
      %1173 = vmatpush1.msra.mxu0 0.0
      %1174 = vmatprep.subr.mxu0 0.0
      %1175 = vmatpush1.msra.mxu0 %v1141
      %1176 = vmatprep.subr.mxu0 0.0
      %1177 = vmatpush1.msra.mxu0 %v1140
      %1178 = vmatprep.subr.mxu0 0.0
      %1179 = vmatpush1.msra.mxu0 %v1139
      %1180 = vmatprep.subr.mxu0 0.0
      %1181 = vmatpush1.msra.mxu0 %v1138
      %1182 = vmatprep.subr.mxu0 0.0
      %1183 = vmatpush2.msra.mxu0 0.0
      %1184 = vmatprep.subr.mxu0 0.0
      %1185 = vmatpush2.msra.mxu0 0.0
      %1186 = vmatprep.subr.mxu0 0.0
      %1187 = vmatpush2.msra.mxu0 0.0
      %1188 = vmatprep.subr.mxu0 0.0
      %1189 = vmatpush2.msra.mxu0 0.0
      %1190 = vmatprep.subr.mxu0 0.0
      %1191 = vmatpush2.msra.mxu0 0.0
      %1192 = vmatprep.subr.mxu0 0.0
      %1193 = vmatpush2.msra.mxu0 0.0
      %1194 = vmatprep.subr.mxu0 0.0
      %1195 = vmatpush2.msra.mxu0 0.0
      %1196 = vmatprep.subr.mxu0 0.0
      %1197 = vmatpush2.msra.mxu0 0.0
      %1198 = vmatprep.subr.mxu0 0.0
      %1199 = vmatpush2.msra.mxu0 0.0
      %1200 = vmatprep.subr.mxu0 0.0
      %1201 = vmatpush2.msra.mxu0 0.0
      %1202 = vmatprep.subr.mxu0 0.0
      %1203 = vmatpush2.msra.mxu0 0.0
      %1204 = vmatprep.subr.mxu0 0.0
      %1205 = vmatpush2.msra.mxu0 0.0
      %1206 = vmatprep.subr.mxu0 0.0
      %1207 = vmatpush2.msra.mxu0 0.0
      %1208 = vmatprep.subr.mxu0 0.0
      %1209 = vmatpush2.msra.mxu0 0.0
      %1210 = vmatprep.subr.mxu0 0.0
      %1211 = vmatpush2.msra.mxu0 0.0
      %1212 = vmatprep.subr.mxu0 0.0
      %1213 = vmatpush2.msra.mxu0 0.0
      %1214 = vmatprep.mubr.f32.mxu0 0.0
      %1215 = vmatmul.mubr.f32.gmra.mxu0 %v719
      %v1216 = vpop.f32.mrf.mxu0
      %v1217 = vadd.f32 %v1148, %v1216
      %v1218 = vpop.f32.mrf.mxu0
      %1219 = vmatprep.mubr.f32.mxu0 0.0
      %1220 = vmatmul.mubr.f32.gmra.mxu0 %v722
      %v1221 = vpop.f32.mrf.mxu0
      %v1222 = vadd.f32 %v1148, %v1221
      %v1223 = vpop.f32.mrf.mxu0
      %1224 = vdwg.mxu0
      %v1226 = vsel %vm799, %v1048, 0
      %v1229 = vsel %vm799, %v1129, 0
      %v1232 = vsel %vm799, %v1134, 0
      %1234 = vmatprep.subr.mxu0 0.0
      %1235 = vmatpush1.xpose.msra.mxu0 0.0
      %1236 = vmatprep.subr.mxu0 0.0
      %1237 = vmatpush1.xpose.msra.mxu0 0.0
      %1238 = vmatprep.subr.mxu0 0.0
      %1239 = vmatpush1.xpose.msra.mxu0 0.0
      %1240 = vmatprep.subr.mxu0 0.0
      %1241 = vmatpush1.xpose.msra.mxu0 0.0
      %1242 = vmatprep.subr.mxu0 0.0
      %1243 = vmatpush1.xpose.msra.mxu0 0.0
      %1244 = vmatprep.subr.mxu0 0.0
      %1245 = vmatpush1.xpose.msra.mxu0 0.0
      %1246 = vmatprep.subr.mxu0 0.0
      %1247 = vmatpush1.xpose.msra.mxu0 0.0
      %1248 = vmatprep.subr.mxu0 0.0
      %1249 = vmatpush1.xpose.msra.mxu0 0.0
      %1250 = vmatprep.subr.mxu0 0.0
      %1251 = vmatpush1.xpose.msra.mxu0 0.0
      %1252 = vmatprep.subr.mxu0 0.0
      %1253 = vmatpush1.xpose.msra.mxu0 0.0
      %1254 = vmatprep.subr.mxu0 0.0
      %1255 = vmatpush1.xpose.msra.mxu0 0.0
      %1256 = vmatprep.subr.mxu0 0.0
      %1257 = vmatpush1.xpose.msra.mxu0 0.0
      %1258 = vmatprep.subr.mxu0 0.0
      %1259 = vmatpush1.xpose.msra.mxu0 0.0
      %1260 = vmatprep.subr.mxu0 0.0
      %1261 = vmatpush1.xpose.msra.mxu0 0.0
      %1262 = vmatprep.subr.mxu0 0.0
      %1263 = vmatpush1.xpose.msra.mxu0 %v1232
      %1264 = vmatprep.subr.mxu0 0.0
      %1265 = vmatpush1.xpose.msra.mxu0 %v1229
      %1266 = vmatprep.subr.mxu0 0.0
      %1267 = vmatpush2.xpose.msra.mxu0 0.0
      %1268 = vmatprep.subr.mxu0 0.0
      %1269 = vmatpush2.xpose.msra.mxu0 0.0
      %1270 = vmatprep.subr.mxu0 0.0
      %1271 = vmatpush2.xpose.msra.mxu0 0.0
      %1272 = vmatprep.subr.mxu0 0.0
      %1273 = vmatpush2.xpose.msra.mxu0 0.0
      %1274 = vmatprep.subr.mxu0 0.0
      %1275 = vmatpush2.xpose.msra.mxu0 0.0
      %1276 = vmatprep.subr.mxu0 0.0
      %1277 = vmatpush2.xpose.msra.mxu0 0.0
      %1278 = vmatprep.subr.mxu0 0.0
      %1279 = vmatpush2.xpose.msra.mxu0 0.0
      %1280 = vmatprep.subr.mxu0 0.0
      %1281 = vmatpush2.xpose.msra.mxu0 0.0
      %1282 = vmatprep.subr.mxu0 0.0
      %1283 = vmatpush2.xpose.msra.mxu0 0.0
      %1284 = vmatprep.subr.mxu0 0.0
      %1285 = vmatpush2.xpose.msra.mxu0 0.0
      %1286 = vmatprep.subr.mxu0 0.0
      %1287 = vmatpush2.xpose.msra.mxu0 0.0
      %1288 = vmatprep.subr.mxu0 0.0
      %1289 = vmatpush2.xpose.msra.mxu0 0.0
      %1290 = vmatprep.subr.mxu0 0.0
      %1291 = vmatpush2.xpose.msra.mxu0 0.0
      %1292 = vmatprep.subr.mxu0 0.0
      %1293 = vmatpush2.xpose.msra.mxu0 0.0
      %1294 = vmatprep.subr.mxu0 0.0
      %1295 = vmatpush2.xpose.msra.mxu0 0.0
      %1296 = vmatprep.subr.mxu0 0.0
      %1297 = vmatpush2.xpose.msra.mxu0 0.0
      %1298 = vmatprep.mubr.f32.mxu0 0.0
      %1299 = vmatmul.mubr.f32.gmra.mxu0 %v1226
      %v1300 = vpop.f32.mrf.mxu0
      %v1301 = vadd.f32 0.0, %v1300
      %v1302 = vpop.f32.mrf.mxu0
      %1303 = vdwg.mxu0
      %v1304 = vsel %vm879, %v1301, -inf
      %1305 = vmax.xlane.f32.xlu0 %v1304
      %v1306 = vpop.xlane.xlu0 %1305
      %v1307 = vsub.f32 %v1301, %v1306
      %v1308 = vmul.f32 %v1307, 1.442695
      %v1309 = vpow.pop %v1308
      %v1310 = vsel %vm879, %v1309, 0.0
      %1311 = vadd.xlane.f32.xlu0 %v1310
      %v1312 = vpop.xlane.xlu0 %1311
      %v1313 = vrcp.pop %v1312
      %v1314 = vmul.f32 %v1309, %v1313
      %v1316 = vsel %vm879, %v1314, 0
      %1318 = vmatprep.subr.mxu0 0.0
      %1319 = vmatpush1.msra.mxu0 0.0
      %1320 = vmatprep.subr.mxu0 0.0
      %1321 = vmatpush1.msra.mxu0 0.0
      %1322 = vmatprep.subr.mxu0 0.0
      %1323 = vmatpush1.msra.mxu0 0.0
      %1324 = vmatprep.subr.mxu0 0.0
      %1325 = vmatpush1.msra.mxu0 0.0
      %1326 = vmatprep.subr.mxu0 0.0
      %1327 = vmatpush1.msra.mxu0 0.0
      %1328 = vmatprep.subr.mxu0 0.0
      %1329 = vmatpush1.msra.mxu0 0.0
      %1330 = vmatprep.subr.mxu0 0.0
      %1331 = vmatpush1.msra.mxu0 0.0
      %1332 = vmatprep.subr.mxu0 0.0
      %1333 = vmatpush1.msra.mxu0 0.0
      %1334 = vmatprep.subr.mxu0 0.0
      %1335 = vmatpush1.msra.mxu0 0.0
      %1336 = vmatprep.subr.mxu0 0.0
      %1337 = vmatpush1.msra.mxu0 0.0
      %1338 = vmatprep.subr.mxu0 0.0
      %1339 = vmatpush1.msra.mxu0 0.0
      %1340 = vmatprep.subr.mxu0 0.0
      %1341 = vmatpush1.msra.mxu0 0.0
      %1342 = vmatprep.subr.mxu0 0.0
      %1343 = vmatpush1.msra.mxu0 0.0
      %1344 = vmatprep.subr.mxu0 0.0
      %1345 = vmatpush1.msra.mxu0 0.0
      %1346 = vmatprep.subr.mxu0 0.0
      %1347 = vmatpush1.msra.mxu0 %v1222
      %1348 = vmatprep.subr.mxu0 0.0
      %1349 = vmatpush1.msra.mxu0 %v1217
      %1350 = vmatprep.subr.mxu0 0.0
      %1351 = vmatpush2.msra.mxu0 0.0
      %1352 = vmatprep.subr.mxu0 0.0
      %1353 = vmatpush2.msra.mxu0 0.0
      %1354 = vmatprep.subr.mxu0 0.0
      %1355 = vmatpush2.msra.mxu0 0.0
      %1356 = vmatprep.subr.mxu0 0.0
      %1357 = vmatpush2.msra.mxu0 0.0
      %1358 = vmatprep.subr.mxu0 0.0
      %1359 = vmatpush2.msra.mxu0 0.0
      %1360 = vmatprep.subr.mxu0 0.0
      %1361 = vmatpush2.msra.mxu0 0.0
      %1362 = vmatprep.subr.mxu0 0.0
      %1363 = vmatpush2.msra.mxu0 0.0
      %1364 = vmatprep.subr.mxu0 0.0
      %1365 = vmatpush2.msra.mxu0 0.0
      %1366 = vmatprep.subr.mxu0 0.0
      %1367 = vmatpush2.msra.mxu0 0.0
      %1368 = vmatprep.subr.mxu0 0.0
      %1369 = vmatpush2.msra.mxu0 0.0
      %1370 = vmatprep.subr.mxu0 0.0
      %1371 = vmatpush2.msra.mxu0 0.0
      %1372 = vmatprep.subr.mxu0 0.0
      %1373 = vmatpush2.msra.mxu0 0.0
      %1374 = vmatprep.subr.mxu0 0.0
      %1375 = vmatpush2.msra.mxu0 0.0
      %1376 = vmatprep.subr.mxu0 0.0
      %1377 = vmatpush2.msra.mxu0 0.0
      %1378 = vmatprep.subr.mxu0 0.0
      %1379 = vmatpush2.msra.mxu0 0.0
      %1380 = vmatprep.subr.mxu0 0.0
      %1381 = vmatpush2.msra.mxu0 0.0
      %1382 = vmatprep.mubr.f32.mxu0 0.0
      %1383 = vmatmul.mubr.f32.gmra.mxu0 %v1316
      %v1384 = vpop.f32.mrf.mxu0
      %v1385 = vadd.f32 0.0, %v1384
      %v1386 = vpop.f32.mrf.mxu0
      %1387 = vdwg.mxu0
      %s1388 = scalar_lea.vmem %s10, 8
      %v1389 = vld [vmem:[%s1388] sm:$0xff]
      %v1391 = vsel %vm799, %v1385, 0
      %1393 = vmatprep.subr.mxu0 0.0
      %1394 = vmatpush1.msra.mxu0 0.0
      %1395 = vmatprep.subr.mxu0 0.0
      %1396 = vmatpush1.msra.mxu0 0.0
      %1397 = vmatprep.subr.mxu0 0.0
      %1398 = vmatpush1.msra.mxu0 0.0
      %1399 = vmatprep.subr.mxu0 0.0
      %1400 = vmatpush1.msra.mxu0 0.0
      %1401 = vmatprep.subr.mxu0 0.0
      %1402 = vmatpush1.msra.mxu0 0.0
      %1403 = vmatprep.subr.mxu0 0.0
      %1404 = vmatpush1.msra.mxu0 0.0
      %1405 = vmatprep.subr.mxu0 0.0
      %1406 = vmatpush1.msra.mxu0 0.0
      %1407 = vmatprep.subr.mxu0 0.0
      %1408 = vmatpush1.msra.mxu0 0.0
      %1409 = vmatprep.subr.mxu0 0.0
      %1410 = vmatpush1.msra.mxu0 0.0
      %1411 = vmatprep.subr.mxu0 0.0
      %1412 = vmatpush1.msra.mxu0 0.0
      %1413 = vmatprep.subr.mxu0 0.0
      %1414 = vmatpush1.msra.mxu0 0.0
      %1415 = vmatprep.subr.mxu0 0.0
      %1416 = vmatpush1.msra.mxu0 0.0
      %1417 = vmatprep.subr.mxu0 0.0
      %1418 = vmatpush1.msra.mxu0 0.0
      %1419 = vmatprep.subr.mxu0 0.0
      %1420 = vmatpush1.msra.mxu0 0.0
      %1421 = vmatprep.subr.mxu0 0.0
      %1422 = vmatpush1.msra.mxu0 0.0
      %1423 = vmatprep.subr.mxu0 0.0
      %1424 = vmatpush1.msra.mxu0 %v1389
      %1425 = vmatprep.subr.mxu0 0.0
      %1426 = vmatpush2.msra.mxu0 0.0
      %1427 = vmatprep.subr.mxu0 0.0
      %1428 = vmatpush2.msra.mxu0 0.0
      %1429 = vmatprep.subr.mxu0 0.0
      %1430 = vmatpush2.msra.mxu0 0.0
      %1431 = vmatprep.subr.mxu0 0.0
      %1432 = vmatpush2.msra.mxu0 0.0
      %1433 = vmatprep.subr.mxu0 0.0
      %1434 = vmatpush2.msra.mxu0 0.0
      %1435 = vmatprep.subr.mxu0 0.0
      %1436 = vmatpush2.msra.mxu0 0.0
      %1437 = vmatprep.subr.mxu0 0.0
      %1438 = vmatpush2.msra.mxu0 0.0
      %1439 = vmatprep.subr.mxu0 0.0
      %1440 = vmatpush2.msra.mxu0 0.0
      %1441 = vmatprep.subr.mxu0 0.0
      %1442 = vmatpush2.msra.mxu0 0.0
      %1443 = vmatprep.subr.mxu0 0.0
      %1444 = vmatpush2.msra.mxu0 0.0
      %1445 = vmatprep.subr.mxu0 0.0
      %1446 = vmatpush2.msra.mxu0 0.0
      %1447 = vmatprep.subr.mxu0 0.0
      %1448 = vmatpush2.msra.mxu0 0.0
      %1449 = vmatprep.subr.mxu0 0.0
      %1450 = vmatpush2.msra.mxu0 0.0
      %1451 = vmatprep.subr.mxu0 0.0
      %1452 = vmatpush2.msra.mxu0 0.0
      %1453 = vmatprep.subr.mxu0 0.0
      %1454 = vmatpush2.msra.mxu0 0.0
      %1455 = vmatprep.subr.mxu0 0.0
      %1456 = vmatpush2.msra.mxu0 0.0
      %1457 = vmatprep.mubr.f32.mxu0 0.0
      %1458 = vmatmul.mubr.f32.gmra.mxu0 %v1391
      %v1459 = vpop.f32.mrf.mxu0
      %v1460 = vadd.f32 0.0, %v1459
      %v1461 = vpop.f32.mrf.mxu0
      %1462 = vdwg.mxu0
      %v1464 = vsel %vm799, %v961, 0
      %1466 = vmatprep.subr.mxu0 0.0
      %1467 = vmatpush1.msra.mxu0 0.0
      %1468 = vmatprep.subr.mxu0 0.0
      %1469 = vmatpush1.msra.mxu0 0.0
      %1470 = vmatprep.subr.mxu0 0.0
      %1471 = vmatpush1.msra.mxu0 0.0
      %1472 = vmatprep.subr.mxu0 0.0
      %1473 = vmatpush1.msra.mxu0 0.0
      %1474 = vmatprep.subr.mxu0 0.0
      %1475 = vmatpush1.msra.mxu0 0.0
      %1476 = vmatprep.subr.mxu0 0.0
      %1477 = vmatpush1.msra.mxu0 0.0
      %1478 = vmatprep.subr.mxu0 0.0
      %1479 = vmatpush1.msra.mxu0 0.0
      %1480 = vmatprep.subr.mxu0 0.0
      %1481 = vmatpush1.msra.mxu0 0.0
      %1482 = vmatprep.subr.mxu0 0.0
      %1483 = vmatpush1.msra.mxu0 0.0
      %1484 = vmatprep.subr.mxu0 0.0
      %1485 = vmatpush1.msra.mxu0 0.0
      %1486 = vmatprep.subr.mxu0 0.0
      %1487 = vmatpush1.msra.mxu0 0.0
      %1488 = vmatprep.subr.mxu0 0.0
      %1489 = vmatpush1.msra.mxu0 0.0
      %1490 = vmatprep.subr.mxu0 0.0
      %1491 = vmatpush1.msra.mxu0 0.0
      %1492 = vmatprep.subr.mxu0 0.0
      %1493 = vmatpush1.msra.mxu0 0.0
      %1494 = vmatprep.subr.mxu0 0.0
      %1495 = vmatpush1.msra.mxu0 0.0
      %1496 = vmatprep.subr.mxu0 0.0
      %1497 = vmatpush1.msra.mxu0 %v964
      %1498 = vmatprep.subr.mxu0 0.0
      %1499 = vmatpush2.msra.mxu0 0.0
      %1500 = vmatprep.subr.mxu0 0.0
      %1501 = vmatpush2.msra.mxu0 0.0
      %1502 = vmatprep.subr.mxu0 0.0
      %1503 = vmatpush2.msra.mxu0 0.0
      %1504 = vmatprep.subr.mxu0 0.0
      %1505 = vmatpush2.msra.mxu0 0.0
      %1506 = vmatprep.subr.mxu0 0.0
      %1507 = vmatpush2.msra.mxu0 0.0
      %1508 = vmatprep.subr.mxu0 0.0
      %1509 = vmatpush2.msra.mxu0 0.0
      %1510 = vmatprep.subr.mxu0 0.0
      %1511 = vmatpush2.msra.mxu0 0.0
      %1512 = vmatprep.subr.mxu0 0.0
      %1513 = vmatpush2.msra.mxu0 0.0
      %1514 = vmatprep.subr.mxu0 0.0
      %1515 = vmatpush2.msra.mxu0 0.0
      %1516 = vmatprep.subr.mxu0 0.0
      %1517 = vmatpush2.msra.mxu0 0.0
      %1518 = vmatprep.subr.mxu0 0.0
      %1519 = vmatpush2.msra.mxu0 0.0
      %1520 = vmatprep.subr.mxu0 0.0
      %1521 = vmatpush2.msra.mxu0 0.0
      %1522 = vmatprep.subr.mxu0 0.0
      %1523 = vmatpush2.msra.mxu0 0.0
      %1524 = vmatprep.subr.mxu0 0.0
      %1525 = vmatpush2.msra.mxu0 0.0
      %1526 = vmatprep.subr.mxu0 0.0
      %1527 = vmatpush2.msra.mxu0 0.0
      %1528 = vmatprep.subr.mxu0 0.0
      %1529 = vmatpush2.msra.mxu0 0.0
      %1530 = vmatprep.mubr.f32.mxu0 0.0
      %1531 = vmatmul.mubr.f32.gmra.mxu0 %v1464
      %v1532 = vpop.f32.mrf.mxu0
      %v1533 = vadd.f32 %v1460, %v1532
      %v1534 = vpop.f32.mrf.mxu0
      %1535 = vdwg.mxu0
      %s1536 = scalar_lea.vmem %s4, 64
      %v1537 = vld [vmem:[%s1536] sm:$0xff]
      %v1538 = vld [vmem:[%s1536 + $0x8] sm:$0xff]
      %v1539 = vld [vmem:[%s1536 + $0x10] sm:$0xff]
      %v1540 = vld [vmem:[%s1536 + $0x18] sm:$0xff]
      %s1541 = scalar_lea.vmem %s5, 2
      %v1542 = vld [vmem:[%s1541] sm:$0x1]
      %v1544 = vlaneseq
      %v1545 = vshrl.u32 %v1544, 7
      %v1546 = vsub.s32 0, %v1545
      %v1547 = vrot.slane %v1542, %v1546
      %1549 = vmatprep.subr.mxu0 0.0
      %1550 = vmatpush1.msra.mxu0 0.0
      %1551 = vmatprep.subr.mxu0 0.0
      %1552 = vmatpush1.msra.mxu0 0.0
      %1553 = vmatprep.subr.mxu0 0.0
      %1554 = vmatpush1.msra.mxu0 0.0
      %1555 = vmatprep.subr.mxu0 0.0
      %1556 = vmatpush1.msra.mxu0 0.0
      %1557 = vmatprep.subr.mxu0 0.0
      %1558 = vmatpush1.msra.mxu0 0.0
      %1559 = vmatprep.subr.mxu0 0.0
      %1560 = vmatpush1.msra.mxu0 0.0
      %1561 = vmatprep.subr.mxu0 0.0
      %1562 = vmatpush1.msra.mxu0 0.0
      %1563 = vmatprep.subr.mxu0 0.0
      %1564 = vmatpush1.msra.mxu0 0.0
      %1565 = vmatprep.subr.mxu0 0.0
      %1566 = vmatpush1.msra.mxu0 0.0
      %1567 = vmatprep.subr.mxu0 0.0
      %1568 = vmatpush1.msra.mxu0 0.0
      %1569 = vmatprep.subr.mxu0 0.0
      %1570 = vmatpush1.msra.mxu0 0.0
      %1571 = vmatprep.subr.mxu0 0.0
      %1572 = vmatpush1.msra.mxu0 0.0
      %1573 = vmatprep.subr.mxu0 0.0
      %1574 = vmatpush1.msra.mxu0 %v1540
      %1575 = vmatprep.subr.mxu0 0.0
      %1576 = vmatpush1.msra.mxu0 %v1539
      %1577 = vmatprep.subr.mxu0 0.0
      %1578 = vmatpush1.msra.mxu0 %v1538
      %1579 = vmatprep.subr.mxu0 0.0
      %1580 = vmatpush1.msra.mxu0 %v1537
      %1581 = vmatprep.subr.mxu0 0.0
      %1582 = vmatpush2.msra.mxu0 0.0
      %1583 = vmatprep.subr.mxu0 0.0
      %1584 = vmatpush2.msra.mxu0 0.0
      %1585 = vmatprep.subr.mxu0 0.0
      %1586 = vmatpush2.msra.mxu0 0.0
      %1587 = vmatprep.subr.mxu0 0.0
      %1588 = vmatpush2.msra.mxu0 0.0
      %1589 = vmatprep.subr.mxu0 0.0
      %1590 = vmatpush2.msra.mxu0 0.0
      %1591 = vmatprep.subr.mxu0 0.0
      %1592 = vmatpush2.msra.mxu0 0.0
      %1593 = vmatprep.subr.mxu0 0.0
      %1594 = vmatpush2.msra.mxu0 0.0
      %1595 = vmatprep.subr.mxu0 0.0
      %1596 = vmatpush2.msra.mxu0 0.0
      %1597 = vmatprep.subr.mxu0 0.0
      %1598 = vmatpush2.msra.mxu0 0.0
      %1599 = vmatprep.subr.mxu0 0.0
      %1600 = vmatpush2.msra.mxu0 0.0
      %1601 = vmatprep.subr.mxu0 0.0
      %1602 = vmatpush2.msra.mxu0 0.0
      %1603 = vmatprep.subr.mxu0 0.0
      %1604 = vmatpush2.msra.mxu0 0.0
      %1605 = vmatprep.subr.mxu0 0.0
      %1606 = vmatpush2.msra.mxu0 0.0
      %1607 = vmatprep.subr.mxu0 0.0
      %1608 = vmatpush2.msra.mxu0 0.0
      %1609 = vmatprep.subr.mxu0 0.0
      %1610 = vmatpush2.msra.mxu0 0.0
      %1611 = vmatprep.subr.mxu0 0.0
      %1612 = vmatpush2.msra.mxu0 0.0
      %1613 = vmatprep.mubr.f32.mxu0 0.0
      %1614 = vmatmul.mubr.f32.gmra.mxu0 %v542
      %v1615 = vpop.f32.mrf.mxu0
      %v1616 = vadd.f32 %v1547, %v1615
      %v1617 = vpop.f32.mrf.mxu0
      %1618 = vdwg.mxu0
      %v1619 = vmul.f32 %v1616, 0.35355338
      %s1620 = scalar_lea.vmem %s6, 64
      %v1621 = vld [vmem:[%s1620] sm:$0xff]
      %v1622 = vld [vmem:[%s1620 + $0x8] sm:$0xff]
      %v1623 = vld [vmem:[%s1620 + $0x10] sm:$0xff]
      %v1624 = vld [vmem:[%s1620 + $0x18] sm:$0xff]
      %s1625 = scalar_lea.vmem %s7, 2
      %v1626 = vld [vmem:[%s1625] sm:$0x1]
      %v1628 = vlaneseq
      %v1629 = vshrl.u32 %v1628, 7
      %v1630 = vsub.s32 0, %v1629
      %v1631 = vrot.slane %v1626, %v1630
      %1633 = vmatprep.subr.mxu0 0.0
      %1634 = vmatpush1.msra.mxu0 0.0
      %1635 = vmatprep.subr.mxu0 0.0
      %1636 = vmatpush1.msra.mxu0 0.0
      %1637 = vmatprep.subr.mxu0 0.0
      %1638 = vmatpush1.msra.mxu0 0.0
      %1639 = vmatprep.subr.mxu0 0.0
      %1640 = vmatpush1.msra.mxu0 0.0
      %1641 = vmatprep.subr.mxu0 0.0
      %1642 = vmatpush1.msra.mxu0 0.0
      %1643 = vmatprep.subr.mxu0 0.0
      %1644 = vmatpush1.msra.mxu0 0.0
      %1645 = vmatprep.subr.mxu0 0.0
      %1646 = vmatpush1.msra.mxu0 0.0
      %1647 = vmatprep.subr.mxu0 0.0
      %1648 = vmatpush1.msra.mxu0 0.0
      %1649 = vmatprep.subr.mxu0 0.0
      %1650 = vmatpush1.msra.mxu0 0.0
      %1651 = vmatprep.subr.mxu0 0.0
      %1652 = vmatpush1.msra.mxu0 0.0
      %1653 = vmatprep.subr.mxu0 0.0
      %1654 = vmatpush1.msra.mxu0 0.0
      %1655 = vmatprep.subr.mxu0 0.0
      %1656 = vmatpush1.msra.mxu0 0.0
      %1657 = vmatprep.subr.mxu0 0.0
      %1658 = vmatpush1.msra.mxu0 %v1624
      %1659 = vmatprep.subr.mxu0 0.0
      %1660 = vmatpush1.msra.mxu0 %v1623
      %1661 = vmatprep.subr.mxu0 0.0
      %1662 = vmatpush1.msra.mxu0 %v1622
      %1663 = vmatprep.subr.mxu0 0.0
      %1664 = vmatpush1.msra.mxu0 %v1621
      %1665 = vmatprep.subr.mxu0 0.0
      %1666 = vmatpush2.msra.mxu0 0.0
      %1667 = vmatprep.subr.mxu0 0.0
      %1668 = vmatpush2.msra.mxu0 0.0
      %1669 = vmatprep.subr.mxu0 0.0
      %1670 = vmatpush2.msra.mxu0 0.0
      %1671 = vmatprep.subr.mxu0 0.0
      %1672 = vmatpush2.msra.mxu0 0.0
      %1673 = vmatprep.subr.mxu0 0.0
      %1674 = vmatpush2.msra.mxu0 0.0
      %1675 = vmatprep.subr.mxu0 0.0
      %1676 = vmatpush2.msra.mxu0 0.0
      %1677 = vmatprep.subr.mxu0 0.0
      %1678 = vmatpush2.msra.mxu0 0.0
      %1679 = vmatprep.subr.mxu0 0.0
      %1680 = vmatpush2.msra.mxu0 0.0
      %1681 = vmatprep.subr.mxu0 0.0
      %1682 = vmatpush2.msra.mxu0 0.0
      %1683 = vmatprep.subr.mxu0 0.0
      %1684 = vmatpush2.msra.mxu0 0.0
      %1685 = vmatprep.subr.mxu0 0.0
      %1686 = vmatpush2.msra.mxu0 0.0
      %1687 = vmatprep.subr.mxu0 0.0
      %1688 = vmatpush2.msra.mxu0 0.0
      %1689 = vmatprep.subr.mxu0 0.0
      %1690 = vmatpush2.msra.mxu0 0.0
      %1691 = vmatprep.subr.mxu0 0.0
      %1692 = vmatpush2.msra.mxu0 0.0
      %1693 = vmatprep.subr.mxu0 0.0
      %1694 = vmatpush2.msra.mxu0 0.0
      %1695 = vmatprep.subr.mxu0 0.0
      %1696 = vmatpush2.msra.mxu0 0.0
      %1697 = vmatprep.mubr.f32.mxu0 0.0
      %1698 = vmatmul.mubr.f32.gmra.mxu0 %v627
      %v1699 = vpop.f32.mrf.mxu0
      %v1700 = vadd.f32 %v1631, %v1699
      %v1701 = vpop.f32.mrf.mxu0
      %1702 = vmatprep.mubr.f32.mxu0 0.0
      %1703 = vmatmul.mubr.f32.gmra.mxu0 %v630
      %v1704 = vpop.f32.mrf.mxu0
      %v1705 = vadd.f32 %v1631, %v1704
      %v1706 = vpop.f32.mrf.mxu0
      %1707 = vdwg.mxu0
      %s1708 = scalar_lea.vmem %s8, 64
      %v1709 = vld [vmem:[%s1708] sm:$0xff]
      %v1710 = vld [vmem:[%s1708 + $0x8] sm:$0xff]
      %v1711 = vld [vmem:[%s1708 + $0x10] sm:$0xff]
      %v1712 = vld [vmem:[%s1708 + $0x18] sm:$0xff]
      %s1713 = scalar_lea.vmem %s9, 2
      %v1714 = vld [vmem:[%s1713] sm:$0x1]
      %v1716 = vlaneseq
      %v1717 = vshrl.u32 %v1716, 7
      %v1718 = vsub.s32 0, %v1717
      %v1719 = vrot.slane %v1714, %v1718
      %1721 = vmatprep.subr.mxu0 0.0
      %1722 = vmatpush1.msra.mxu0 0.0
      %1723 = vmatprep.subr.mxu0 0.0
      %1724 = vmatpush1.msra.mxu0 0.0
      %1725 = vmatprep.subr.mxu0 0.0
      %1726 = vmatpush1.msra.mxu0 0.0
      %1727 = vmatprep.subr.mxu0 0.0
      %1728 = vmatpush1.msra.mxu0 0.0
      %1729 = vmatprep.subr.mxu0 0.0
      %1730 = vmatpush1.msra.mxu0 0.0
      %1731 = vmatprep.subr.mxu0 0.0
      %1732 = vmatpush1.msra.mxu0 0.0
      %1733 = vmatprep.subr.mxu0 0.0
      %1734 = vmatpush1.msra.mxu0 0.0
      %1735 = vmatprep.subr.mxu0 0.0
      %1736 = vmatpush1.msra.mxu0 0.0
      %1737 = vmatprep.subr.mxu0 0.0
      %1738 = vmatpush1.msra.mxu0 0.0
      %1739 = vmatprep.subr.mxu0 0.0
      %1740 = vmatpush1.msra.mxu0 0.0
      %1741 = vmatprep.subr.mxu0 0.0
      %1742 = vmatpush1.msra.mxu0 0.0
      %1743 = vmatprep.subr.mxu0 0.0
      %1744 = vmatpush1.msra.mxu0 0.0
      %1745 = vmatprep.subr.mxu0 0.0
      %1746 = vmatpush1.msra.mxu0 %v1712
      %1747 = vmatprep.subr.mxu0 0.0
      %1748 = vmatpush1.msra.mxu0 %v1711
      %1749 = vmatprep.subr.mxu0 0.0
      %1750 = vmatpush1.msra.mxu0 %v1710
      %1751 = vmatprep.subr.mxu0 0.0
      %1752 = vmatpush1.msra.mxu0 %v1709
      %1753 = vmatprep.subr.mxu0 0.0
      %1754 = vmatpush2.msra.mxu0 0.0
      %1755 = vmatprep.subr.mxu0 0.0
      %1756 = vmatpush2.msra.mxu0 0.0
      %1757 = vmatprep.subr.mxu0 0.0
      %1758 = vmatpush2.msra.mxu0 0.0
      %1759 = vmatprep.subr.mxu0 0.0
      %1760 = vmatpush2.msra.mxu0 0.0
      %1761 = vmatprep.subr.mxu0 0.0
      %1762 = vmatpush2.msra.mxu0 0.0
      %1763 = vmatprep.subr.mxu0 0.0
      %1764 = vmatpush2.msra.mxu0 0.0
      %1765 = vmatprep.subr.mxu0 0.0
      %1766 = vmatpush2.msra.mxu0 0.0
      %1767 = vmatprep.subr.mxu0 0.0
      %1768 = vmatpush2.msra.mxu0 0.0
      %1769 = vmatprep.subr.mxu0 0.0
      %1770 = vmatpush2.msra.mxu0 0.0
      %1771 = vmatprep.subr.mxu0 0.0
      %1772 = vmatpush2.msra.mxu0 0.0
      %1773 = vmatprep.subr.mxu0 0.0
      %1774 = vmatpush2.msra.mxu0 0.0
      %1775 = vmatprep.subr.mxu0 0.0
      %1776 = vmatpush2.msra.mxu0 0.0
      %1777 = vmatprep.subr.mxu0 0.0
      %1778 = vmatpush2.msra.mxu0 0.0
      %1779 = vmatprep.subr.mxu0 0.0
      %1780 = vmatpush2.msra.mxu0 0.0
      %1781 = vmatprep.subr.mxu0 0.0
      %1782 = vmatpush2.msra.mxu0 0.0
      %1783 = vmatprep.subr.mxu0 0.0
      %1784 = vmatpush2.msra.mxu0 0.0
      %1785 = vmatprep.mubr.f32.mxu0 0.0
      %1786 = vmatmul.mubr.f32.gmra.mxu0 %v719
      %v1787 = vpop.f32.mrf.mxu0
      %v1788 = vadd.f32 %v1719, %v1787
      %v1789 = vpop.f32.mrf.mxu0
      %1790 = vmatprep.mubr.f32.mxu0 0.0
      %1791 = vmatmul.mubr.f32.gmra.mxu0 %v722
      %v1792 = vpop.f32.mrf.mxu0
      %v1793 = vadd.f32 %v1719, %v1792
      %v1794 = vpop.f32.mrf.mxu0
      %1795 = vdwg.mxu0
      %v1797 = vsel %vm799, %v1619, 0
      %v1800 = vsel %vm799, %v1700, 0
      %v1803 = vsel %vm799, %v1705, 0
      %1805 = vmatprep.subr.mxu0 0.0
      %1806 = vmatpush1.xpose.msra.mxu0 0.0
      %1807 = vmatprep.subr.mxu0 0.0
      %1808 = vmatpush1.xpose.msra.mxu0 0.0
      %1809 = vmatprep.subr.mxu0 0.0
      %1810 = vmatpush1.xpose.msra.mxu0 0.0
      %1811 = vmatprep.subr.mxu0 0.0
      %1812 = vmatpush1.xpose.msra.mxu0 0.0
      %1813 = vmatprep.subr.mxu0 0.0
      %1814 = vmatpush1.xpose.msra.mxu0 0.0
      %1815 = vmatprep.subr.mxu0 0.0
      %1816 = vmatpush1.xpose.msra.mxu0 0.0
      %1817 = vmatprep.subr.mxu0 0.0
      %1818 = vmatpush1.xpose.msra.mxu0 0.0
      %1819 = vmatprep.subr.mxu0 0.0
      %1820 = vmatpush1.xpose.msra.mxu0 0.0
      %1821 = vmatprep.subr.mxu0 0.0
      %1822 = vmatpush1.xpose.msra.mxu0 0.0
      %1823 = vmatprep.subr.mxu0 0.0
      %1824 = vmatpush1.xpose.msra.mxu0 0.0
      %1825 = vmatprep.subr.mxu0 0.0
      %1826 = vmatpush1.xpose.msra.mxu0 0.0
      %1827 = vmatprep.subr.mxu0 0.0
      %1828 = vmatpush1.xpose.msra.mxu0 0.0
      %1829 = vmatprep.subr.mxu0 0.0
      %1830 = vmatpush1.xpose.msra.mxu0 0.0
      %1831 = vmatprep.subr.mxu0 0.0
      %1832 = vmatpush1.xpose.msra.mxu0 0.0
      %1833 = vmatprep.subr.mxu0 0.0
      %1834 = vmatpush1.xpose.msra.mxu0 %v1803
      %1835 = vmatprep.subr.mxu0 0.0
      %1836 = vmatpush1.xpose.msra.mxu0 %v1800
      %1837 = vmatprep.subr.mxu0 0.0
      %1838 = vmatpush2.xpose.msra.mxu0 0.0
      %1839 = vmatprep.subr.mxu0 0.0
      %1840 = vmatpush2.xpose.msra.mxu0 0.0
      %1841 = vmatprep.subr.mxu0 0.0
      %1842 = vmatpush2.xpose.msra.mxu0 0.0
      %1843 = vmatprep.subr.mxu0 0.0
      %1844 = vmatpush2.xpose.msra.mxu0 0.0
      %1845 = vmatprep.subr.mxu0 0.0
      %1846 = vmatpush2.xpose.msra.mxu0 0.0
      %1847 = vmatprep.subr.mxu0 0.0
      %1848 = vmatpush2.xpose.msra.mxu0 0.0
      %1849 = vmatprep.subr.mxu0 0.0
      %1850 = vmatpush2.xpose.msra.mxu0 0.0
      %1851 = vmatprep.subr.mxu0 0.0
      %1852 = vmatpush2.xpose.msra.mxu0 0.0
      %1853 = vmatprep.subr.mxu0 0.0
      %1854 = vmatpush2.xpose.msra.mxu0 0.0
      %1855 = vmatprep.subr.mxu0 0.0
      %1856 = vmatpush2.xpose.msra.mxu0 0.0
      %1857 = vmatprep.subr.mxu0 0.0
      %1858 = vmatpush2.xpose.msra.mxu0 0.0
      %1859 = vmatprep.subr.mxu0 0.0
      %1860 = vmatpush2.xpose.msra.mxu0 0.0
      %1861 = vmatprep.subr.mxu0 0.0
      %1862 = vmatpush2.xpose.msra.mxu0 0.0
      %1863 = vmatprep.subr.mxu0 0.0
      %1864 = vmatpush2.xpose.msra.mxu0 0.0
      %1865 = vmatprep.subr.mxu0 0.0
      %1866 = vmatpush2.xpose.msra.mxu0 0.0
      %1867 = vmatprep.subr.mxu0 0.0
      %1868 = vmatpush2.xpose.msra.mxu0 0.0
      %1869 = vmatprep.mubr.f32.mxu0 0.0
      %1870 = vmatmul.mubr.f32.gmra.mxu0 %v1797
      %v1871 = vpop.f32.mrf.mxu0
      %v1872 = vadd.f32 0.0, %v1871
      %v1873 = vpop.f32.mrf.mxu0
      %1874 = vdwg.mxu0
      %v1875 = vsel %vm879, %v1872, -inf
      %1876 = vmax.xlane.f32.xlu0 %v1875
      %v1877 = vpop.xlane.xlu0 %1876
      %v1878 = vsub.f32 %v1872, %v1877
      %v1879 = vmul.f32 %v1878, 1.442695
      %v1880 = vpow.pop %v1879
      %v1881 = vsel %vm879, %v1880, 0.0
      %1882 = vadd.xlane.f32.xlu0 %v1881
      %v1883 = vpop.xlane.xlu0 %1882
      %v1884 = vrcp.pop %v1883
      %v1885 = vmul.f32 %v1880, %v1884
      %v1887 = vsel %vm879, %v1885, 0
      %1889 = vmatprep.subr.mxu0 0.0
      %1890 = vmatpush1.msra.mxu0 0.0
      %1891 = vmatprep.subr.mxu0 0.0
      %1892 = vmatpush1.msra.mxu0 0.0
      %1893 = vmatprep.subr.mxu0 0.0
      %1894 = vmatpush1.msra.mxu0 0.0
      %1895 = vmatprep.subr.mxu0 0.0
      %1896 = vmatpush1.msra.mxu0 0.0
      %1897 = vmatprep.subr.mxu0 0.0
      %1898 = vmatpush1.msra.mxu0 0.0
      %1899 = vmatprep.subr.mxu0 0.0
      %1900 = vmatpush1.msra.mxu0 0.0
      %1901 = vmatprep.subr.mxu0 0.0
      %1902 = vmatpush1.msra.mxu0 0.0
      %1903 = vmatprep.subr.mxu0 0.0
      %1904 = vmatpush1.msra.mxu0 0.0
      %1905 = vmatprep.subr.mxu0 0.0
      %1906 = vmatpush1.msra.mxu0 0.0
      %1907 = vmatprep.subr.mxu0 0.0
      %1908 = vmatpush1.msra.mxu0 0.0
      %1909 = vmatprep.subr.mxu0 0.0
      %1910 = vmatpush1.msra.mxu0 0.0
      %1911 = vmatprep.subr.mxu0 0.0
      %1912 = vmatpush1.msra.mxu0 0.0
      %1913 = vmatprep.subr.mxu0 0.0
      %1914 = vmatpush1.msra.mxu0 0.0
      %1915 = vmatprep.subr.mxu0 0.0
      %1916 = vmatpush1.msra.mxu0 0.0
      %1917 = vmatprep.subr.mxu0 0.0
      %1918 = vmatpush1.msra.mxu0 %v1793
      %1919 = vmatprep.subr.mxu0 0.0
      %1920 = vmatpush1.msra.mxu0 %v1788
      %1921 = vmatprep.subr.mxu0 0.0
      %1922 = vmatpush2.msra.mxu0 0.0
      %1923 = vmatprep.subr.mxu0 0.0
      %1924 = vmatpush2.msra.mxu0 0.0
      %1925 = vmatprep.subr.mxu0 0.0
      %1926 = vmatpush2.msra.mxu0 0.0
      %1927 = vmatprep.subr.mxu0 0.0
      %1928 = vmatpush2.msra.mxu0 0.0
      %1929 = vmatprep.subr.mxu0 0.0
      %1930 = vmatpush2.msra.mxu0 0.0
      %1931 = vmatprep.subr.mxu0 0.0
      %1932 = vmatpush2.msra.mxu0 0.0
      %1933 = vmatprep.subr.mxu0 0.0
      %1934 = vmatpush2.msra.mxu0 0.0
      %1935 = vmatprep.subr.mxu0 0.0
      %1936 = vmatpush2.msra.mxu0 0.0
      %1937 = vmatprep.subr.mxu0 0.0
      %1938 = vmatpush2.msra.mxu0 0.0
      %1939 = vmatprep.subr.mxu0 0.0
      %1940 = vmatpush2.msra.mxu0 0.0
      %1941 = vmatprep.subr.mxu0 0.0
      %1942 = vmatpush2.msra.mxu0 0.0
      %1943 = vmatprep.subr.mxu0 0.0
      %1944 = vmatpush2.msra.mxu0 0.0
      %1945 = vmatprep.subr.mxu0 0.0
      %1946 = vmatpush2.msra.mxu0 0.0
      %1947 = vmatprep.subr.mxu0 0.0
      %1948 = vmatpush2.msra.mxu0 0.0
      %1949 = vmatprep.subr.mxu0 0.0
      %1950 = vmatpush2.msra.mxu0 0.0
      %1951 = vmatprep.subr.mxu0 0.0
      %1952 = vmatpush2.msra.mxu0 0.0
      %1953 = vmatprep.mubr.f32.mxu0 0.0
      %1954 = vmatmul.mubr.f32.gmra.mxu0 %v1887
      %v1955 = vpop.f32.mrf.mxu0
      %v1956 = vadd.f32 0.0, %v1955
      %v1957 = vpop.f32.mrf.mxu0
      %1958 = vdwg.mxu0
      %s1959 = scalar_lea.vmem %s10, 16
      %v1960 = vld [vmem:[%s1959] sm:$0xff]
      %v1962 = vsel %vm799, %v1956, 0
      %1964 = vmatprep.subr.mxu0 0.0
      %1965 = vmatpush1.msra.mxu0 0.0
      %1966 = vmatprep.subr.mxu0 0.0
      %1967 = vmatpush1.msra.mxu0 0.0
      %1968 = vmatprep.subr.mxu0 0.0
      %1969 = vmatpush1.msra.mxu0 0.0
      %1970 = vmatprep.subr.mxu0 0.0
      %1971 = vmatpush1.msra.mxu0 0.0
      %1972 = vmatprep.subr.mxu0 0.0
      %1973 = vmatpush1.msra.mxu0 0.0
      %1974 = vmatprep.subr.mxu0 0.0
      %1975 = vmatpush1.msra.mxu0 0.0
      %1976 = vmatprep.subr.mxu0 0.0
      %1977 = vmatpush1.msra.mxu0 0.0
      %1978 = vmatprep.subr.mxu0 0.0
      %1979 = vmatpush1.msra.mxu0 0.0
      %1980 = vmatprep.subr.mxu0 0.0
      %1981 = vmatpush1.msra.mxu0 0.0
      %1982 = vmatprep.subr.mxu0 0.0
      %1983 = vmatpush1.msra.mxu0 0.0
      %1984 = vmatprep.subr.mxu0 0.0
      %1985 = vmatpush1.msra.mxu0 0.0
      %1986 = vmatprep.subr.mxu0 0.0
      %1987 = vmatpush1.msra.mxu0 0.0
      %1988 = vmatprep.subr.mxu0 0.0
      %1989 = vmatpush1.msra.mxu0 0.0
      %1990 = vmatprep.subr.mxu0 0.0
      %1991 = vmatpush1.msra.mxu0 0.0
      %1992 = vmatprep.subr.mxu0 0.0
      %1993 = vmatpush1.msra.mxu0 0.0
      %1994 = vmatprep.subr.mxu0 0.0
      %1995 = vmatpush1.msra.mxu0 %v1960
      %1996 = vmatprep.subr.mxu0 0.0
      %1997 = vmatpush2.msra.mxu0 0.0
      %1998 = vmatprep.subr.mxu0 0.0
      %1999 = vmatpush2.msra.mxu0 0.0
      %2000 = vmatprep.subr.mxu0 0.0
      %2001 = vmatpush2.msra.mxu0 0.0
      %2002 = vmatprep.subr.mxu0 0.0
      %2003 = vmatpush2.msra.mxu0 0.0
      %2004 = vmatprep.subr.mxu0 0.0
      %2005 = vmatpush2.msra.mxu0 0.0
      %2006 = vmatprep.subr.mxu0 0.0
      %2007 = vmatpush2.msra.mxu0 0.0
      %2008 = vmatprep.subr.mxu0 0.0
      %2009 = vmatpush2.msra.mxu0 0.0
      %2010 = vmatprep.subr.mxu0 0.0
      %2011 = vmatpush2.msra.mxu0 0.0
      %2012 = vmatprep.subr.mxu0 0.0
      %2013 = vmatpush2.msra.mxu0 0.0
      %2014 = vmatprep.subr.mxu0 0.0
      %2015 = vmatpush2.msra.mxu0 0.0
      %2016 = vmatprep.subr.mxu0 0.0
      %2017 = vmatpush2.msra.mxu0 0.0
      %2018 = vmatprep.subr.mxu0 0.0
      %2019 = vmatpush2.msra.mxu0 0.0
      %2020 = vmatprep.subr.mxu0 0.0
      %2021 = vmatpush2.msra.mxu0 0.0
      %2022 = vmatprep.subr.mxu0 0.0
      %2023 = vmatpush2.msra.mxu0 0.0
      %2024 = vmatprep.subr.mxu0 0.0
      %2025 = vmatpush2.msra.mxu0 0.0
      %2026 = vmatprep.subr.mxu0 0.0
      %2027 = vmatpush2.msra.mxu0 0.0
      %2028 = vmatprep.mubr.f32.mxu0 0.0
      %2029 = vmatmul.mubr.f32.gmra.mxu0 %v1962
      %v2030 = vpop.f32.mrf.mxu0
      %v2031 = vadd.f32 0.0, %v2030
      %v2032 = vpop.f32.mrf.mxu0
      %2033 = vdwg.mxu0
      %v2034 = vadd.f32 %v1533, %v2031
      %s2035 = scalar_lea.vmem %s4, 96
      %v2036 = vld [vmem:[%s2035] sm:$0xff]
      %v2037 = vld [vmem:[%s2035 + $0x8] sm:$0xff]
      %v2038 = vld [vmem:[%s2035 + $0x10] sm:$0xff]
      %v2039 = vld [vmem:[%s2035 + $0x18] sm:$0xff]
      %s2040 = scalar_lea.vmem %s5, 3
      %v2041 = vld [vmem:[%s2040] sm:$0x1]
      %v2043 = vlaneseq
      %v2044 = vshrl.u32 %v2043, 7
      %v2045 = vsub.s32 0, %v2044
      %v2046 = vrot.slane %v2041, %v2045
      %2048 = vmatprep.subr.mxu0 0.0
      %2049 = vmatpush1.msra.mxu0 0.0
      %2050 = vmatprep.subr.mxu0 0.0
      %2051 = vmatpush1.msra.mxu0 0.0
      %2052 = vmatprep.subr.mxu0 0.0
      %2053 = vmatpush1.msra.mxu0 0.0
      %2054 = vmatprep.subr.mxu0 0.0
      %2055 = vmatpush1.msra.mxu0 0.0
      %2056 = vmatprep.subr.mxu0 0.0
      %2057 = vmatpush1.msra.mxu0 0.0
      %2058 = vmatprep.subr.mxu0 0.0
      %2059 = vmatpush1.msra.mxu0 0.0
      %2060 = vmatprep.subr.mxu0 0.0
      %2061 = vmatpush1.msra.mxu0 0.0
      %2062 = vmatprep.subr.mxu0 0.0
      %2063 = vmatpush1.msra.mxu0 0.0
      %2064 = vmatprep.subr.mxu0 0.0
      %2065 = vmatpush1.msra.mxu0 0.0
      %2066 = vmatprep.subr.mxu0 0.0
      %2067 = vmatpush1.msra.mxu0 0.0
      %2068 = vmatprep.subr.mxu0 0.0
      %2069 = vmatpush1.msra.mxu0 0.0
      %2070 = vmatprep.subr.mxu0 0.0
      %2071 = vmatpush1.msra.mxu0 0.0
      %2072 = vmatprep.subr.mxu0 0.0
      %2073 = vmatpush1.msra.mxu0 %v2039
      %2074 = vmatprep.subr.mxu0 0.0
      %2075 = vmatpush1.msra.mxu0 %v2038
      %2076 = vmatprep.subr.mxu0 0.0
      %2077 = vmatpush1.msra.mxu0 %v2037
      %2078 = vmatprep.subr.mxu0 0.0
      %2079 = vmatpush1.msra.mxu0 %v2036
      %2080 = vmatprep.subr.mxu0 0.0
      %2081 = vmatpush2.msra.mxu0 0.0
      %2082 = vmatprep.subr.mxu0 0.0
      %2083 = vmatpush2.msra.mxu0 0.0
      %2084 = vmatprep.subr.mxu0 0.0
      %2085 = vmatpush2.msra.mxu0 0.0
      %2086 = vmatprep.subr.mxu0 0.0
      %2087 = vmatpush2.msra.mxu0 0.0
      %2088 = vmatprep.subr.mxu0 0.0
      %2089 = vmatpush2.msra.mxu0 0.0
      %2090 = vmatprep.subr.mxu0 0.0
      %2091 = vmatpush2.msra.mxu0 0.0
      %2092 = vmatprep.subr.mxu0 0.0
      %2093 = vmatpush2.msra.mxu0 0.0
      %2094 = vmatprep.subr.mxu0 0.0
      %2095 = vmatpush2.msra.mxu0 0.0
      %2096 = vmatprep.subr.mxu0 0.0
      %2097 = vmatpush2.msra.mxu0 0.0
      %2098 = vmatprep.subr.mxu0 0.0
      %2099 = vmatpush2.msra.mxu0 0.0
      %2100 = vmatprep.subr.mxu0 0.0
      %2101 = vmatpush2.msra.mxu0 0.0
      %2102 = vmatprep.subr.mxu0 0.0
      %2103 = vmatpush2.msra.mxu0 0.0
      %2104 = vmatprep.subr.mxu0 0.0
      %2105 = vmatpush2.msra.mxu0 0.0
      %2106 = vmatprep.subr.mxu0 0.0
      %2107 = vmatpush2.msra.mxu0 0.0
      %2108 = vmatprep.subr.mxu0 0.0
      %2109 = vmatpush2.msra.mxu0 0.0
      %2110 = vmatprep.subr.mxu0 0.0
      %2111 = vmatpush2.msra.mxu0 0.0
      %2112 = vmatprep.mubr.f32.mxu0 0.0
      %2113 = vmatmul.mubr.f32.gmra.mxu0 %v542
      %v2114 = vpop.f32.mrf.mxu0
      %v2115 = vadd.f32 %v2046, %v2114
      %v2116 = vpop.f32.mrf.mxu0
      %2117 = vdwg.mxu0
      %v2118 = vmul.f32 %v2115, 0.35355338
      %s2119 = scalar_lea.vmem %s6, 96
      %v2120 = vld [vmem:[%s2119] sm:$0xff]
      %v2121 = vld [vmem:[%s2119 + $0x8] sm:$0xff]
      %v2122 = vld [vmem:[%s2119 + $0x10] sm:$0xff]
      %v2123 = vld [vmem:[%s2119 + $0x18] sm:$0xff]
      %s2124 = scalar_lea.vmem %s7, 3
      %v2125 = vld [vmem:[%s2124] sm:$0x1]
      %v2127 = vlaneseq
      %v2128 = vshrl.u32 %v2127, 7
      %v2129 = vsub.s32 0, %v2128
      %v2130 = vrot.slane %v2125, %v2129
      %2132 = vmatprep.subr.mxu0 0.0
      %2133 = vmatpush1.msra.mxu0 0.0
      %2134 = vmatprep.subr.mxu0 0.0
      %2135 = vmatpush1.msra.mxu0 0.0
      %2136 = vmatprep.subr.mxu0 0.0
      %2137 = vmatpush1.msra.mxu0 0.0
      %2138 = vmatprep.subr.mxu0 0.0
      %2139 = vmatpush1.msra.mxu0 0.0
      %2140 = vmatprep.subr.mxu0 0.0
      %2141 = vmatpush1.msra.mxu0 0.0
      %2142 = vmatprep.subr.mxu0 0.0
      %2143 = vmatpush1.msra.mxu0 0.0
      %2144 = vmatprep.subr.mxu0 0.0
      %2145 = vmatpush1.msra.mxu0 0.0
      %2146 = vmatprep.subr.mxu0 0.0
      %2147 = vmatpush1.msra.mxu0 0.0
      %2148 = vmatprep.subr.mxu0 0.0
      %2149 = vmatpush1.msra.mxu0 0.0
      %2150 = vmatprep.subr.mxu0 0.0
      %2151 = vmatpush1.msra.mxu0 0.0
      %2152 = vmatprep.subr.mxu0 0.0
      %2153 = vmatpush1.msra.mxu0 0.0
      %2154 = vmatprep.subr.mxu0 0.0
      %2155 = vmatpush1.msra.mxu0 0.0
      %2156 = vmatprep.subr.mxu0 0.0
      %2157 = vmatpush1.msra.mxu0 %v2123
      %2158 = vmatprep.subr.mxu0 0.0
      %2159 = vmatpush1.msra.mxu0 %v2122
      %2160 = vmatprep.subr.mxu0 0.0
      %2161 = vmatpush1.msra.mxu0 %v2121
      %2162 = vmatprep.subr.mxu0 0.0
      %2163 = vmatpush1.msra.mxu0 %v2120
      %2164 = vmatprep.subr.mxu0 0.0
      %2165 = vmatpush2.msra.mxu0 0.0
      %2166 = vmatprep.subr.mxu0 0.0
      %2167 = vmatpush2.msra.mxu0 0.0
      %2168 = vmatprep.subr.mxu0 0.0
      %2169 = vmatpush2.msra.mxu0 0.0
      %2170 = vmatprep.subr.mxu0 0.0
      %2171 = vmatpush2.msra.mxu0 0.0
      %2172 = vmatprep.subr.mxu0 0.0
      %2173 = vmatpush2.msra.mxu0 0.0
      %2174 = vmatprep.subr.mxu0 0.0
      %2175 = vmatpush2.msra.mxu0 0.0
      %2176 = vmatprep.subr.mxu0 0.0
      %2177 = vmatpush2.msra.mxu0 0.0
      %2178 = vmatprep.subr.mxu0 0.0
      %2179 = vmatpush2.msra.mxu0 0.0
      %2180 = vmatprep.subr.mxu0 0.0
      %2181 = vmatpush2.msra.mxu0 0.0
      %2182 = vmatprep.subr.mxu0 0.0
      %2183 = vmatpush2.msra.mxu0 0.0
      %2184 = vmatprep.subr.mxu0 0.0
      %2185 = vmatpush2.msra.mxu0 0.0
      %2186 = vmatprep.subr.mxu0 0.0
      %2187 = vmatpush2.msra.mxu0 0.0
      %2188 = vmatprep.subr.mxu0 0.0
      %2189 = vmatpush2.msra.mxu0 0.0
      %2190 = vmatprep.subr.mxu0 0.0
      %2191 = vmatpush2.msra.mxu0 0.0
      %2192 = vmatprep.subr.mxu0 0.0
      %2193 = vmatpush2.msra.mxu0 0.0
      %2194 = vmatprep.subr.mxu0 0.0
      %2195 = vmatpush2.msra.mxu0 0.0
      %2196 = vmatprep.mubr.f32.mxu0 0.0
      %2197 = vmatmul.mubr.f32.gmra.mxu0 %v627
      %v2198 = vpop.f32.mrf.mxu0
      %v2199 = vadd.f32 %v2130, %v2198
      %v2200 = vpop.f32.mrf.mxu0
      %2201 = vmatprep.mubr.f32.mxu0 0.0
      %2202 = vmatmul.mubr.f32.gmra.mxu0 %v630
      %v2203 = vpop.f32.mrf.mxu0
      %v2204 = vadd.f32 %v2130, %v2203
      %v2205 = vpop.f32.mrf.mxu0
      %2206 = vdwg.mxu0
      %s2207 = scalar_lea.vmem %s8, 96
      %v2208 = vld [vmem:[%s2207] sm:$0xff]
      %v2209 = vld [vmem:[%s2207 + $0x8] sm:$0xff]
      %v2210 = vld [vmem:[%s2207 + $0x10] sm:$0xff]
      %v2211 = vld [vmem:[%s2207 + $0x18] sm:$0xff]
      %s2212 = scalar_lea.vmem %s9, 3
      %v2213 = vld [vmem:[%s2212] sm:$0x1]
      %v2215 = vlaneseq
      %v2216 = vshrl.u32 %v2215, 7
      %v2217 = vsub.s32 0, %v2216
      %v2218 = vrot.slane %v2213, %v2217
      %2220 = vmatprep.subr.mxu0 0.0
      %2221 = vmatpush1.msra.mxu0 0.0
      %2222 = vmatprep.subr.mxu0 0.0
      %2223 = vmatpush1.msra.mxu0 0.0
      %2224 = vmatprep.subr.mxu0 0.0
      %2225 = vmatpush1.msra.mxu0 0.0
      %2226 = vmatprep.subr.mxu0 0.0
      %2227 = vmatpush1.msra.mxu0 0.0
      %2228 = vmatprep.subr.mxu0 0.0
      %2229 = vmatpush1.msra.mxu0 0.0
      %2230 = vmatprep.subr.mxu0 0.0
      %2231 = vmatpush1.msra.mxu0 0.0
      %2232 = vmatprep.subr.mxu0 0.0
      %2233 = vmatpush1.msra.mxu0 0.0
      %2234 = vmatprep.subr.mxu0 0.0
      %2235 = vmatpush1.msra.mxu0 0.0
      %2236 = vmatprep.subr.mxu0 0.0
      %2237 = vmatpush1.msra.mxu0 0.0
      %2238 = vmatprep.subr.mxu0 0.0
      %2239 = vmatpush1.msra.mxu0 0.0
      %2240 = vmatprep.subr.mxu0 0.0
      %2241 = vmatpush1.msra.mxu0 0.0
      %2242 = vmatprep.subr.mxu0 0.0
      %2243 = vmatpush1.msra.mxu0 0.0
      %2244 = vmatprep.subr.mxu0 0.0
      %2245 = vmatpush1.msra.mxu0 %v2211
      %2246 = vmatprep.subr.mxu0 0.0
      %2247 = vmatpush1.msra.mxu0 %v2210
      %2248 = vmatprep.subr.mxu0 0.0
      %2249 = vmatpush1.msra.mxu0 %v2209
      %2250 = vmatprep.subr.mxu0 0.0
      %2251 = vmatpush1.msra.mxu0 %v2208
      %2252 = vmatprep.subr.mxu0 0.0
      %2253 = vmatpush2.msra.mxu0 0.0
      %2254 = vmatprep.subr.mxu0 0.0
      %2255 = vmatpush2.msra.mxu0 0.0
      %2256 = vmatprep.subr.mxu0 0.0
      %2257 = vmatpush2.msra.mxu0 0.0
      %2258 = vmatprep.subr.mxu0 0.0
      %2259 = vmatpush2.msra.mxu0 0.0
      %2260 = vmatprep.subr.mxu0 0.0
      %2261 = vmatpush2.msra.mxu0 0.0
      %2262 = vmatprep.subr.mxu0 0.0
      %2263 = vmatpush2.msra.mxu0 0.0
      %2264 = vmatprep.subr.mxu0 0.0
      %2265 = vmatpush2.msra.mxu0 0.0
      %2266 = vmatprep.subr.mxu0 0.0
      %2267 = vmatpush2.msra.mxu0 0.0
      %2268 = vmatprep.subr.mxu0 0.0
      %2269 = vmatpush2.msra.mxu0 0.0
      %2270 = vmatprep.subr.mxu0 0.0
      %2271 = vmatpush2.msra.mxu0 0.0
      %2272 = vmatprep.subr.mxu0 0.0
      %2273 = vmatpush2.msra.mxu0 0.0
      %2274 = vmatprep.subr.mxu0 0.0
      %2275 = vmatpush2.msra.mxu0 0.0
      %2276 = vmatprep.subr.mxu0 0.0
      %2277 = vmatpush2.msra.mxu0 0.0
      %2278 = vmatprep.subr.mxu0 0.0
      %2279 = vmatpush2.msra.mxu0 0.0
      %2280 = vmatprep.subr.mxu0 0.0
      %2281 = vmatpush2.msra.mxu0 0.0
      %2282 = vmatprep.subr.mxu0 0.0
      %2283 = vmatpush2.msra.mxu0 0.0
      %2284 = vmatprep.mubr.f32.mxu0 0.0
      %2285 = vmatmul.mubr.f32.gmra.mxu0 %v719
      %v2286 = vpop.f32.mrf.mxu0
      %v2287 = vadd.f32 %v2218, %v2286
      %v2288 = vpop.f32.mrf.mxu0
      %2289 = vmatprep.mubr.f32.mxu0 0.0
      %2290 = vmatmul.mubr.f32.gmra.mxu0 %v722
      %v2291 = vpop.f32.mrf.mxu0
      %v2292 = vadd.f32 %v2218, %v2291
      %v2293 = vpop.f32.mrf.mxu0
      %2294 = vdwg.mxu0
      %v2296 = vsel %vm799, %v2118, 0
      %v2299 = vsel %vm799, %v2199, 0
      %v2302 = vsel %vm799, %v2204, 0
      %2304 = vmatprep.subr.mxu0 0.0
      %2305 = vmatpush1.xpose.msra.mxu0 0.0
      %2306 = vmatprep.subr.mxu0 0.0
      %2307 = vmatpush1.xpose.msra.mxu0 0.0
      %2308 = vmatprep.subr.mxu0 0.0
      %2309 = vmatpush1.xpose.msra.mxu0 0.0
      %2310 = vmatprep.subr.mxu0 0.0
      %2311 = vmatpush1.xpose.msra.mxu0 0.0
      %2312 = vmatprep.subr.mxu0 0.0
      %2313 = vmatpush1.xpose.msra.mxu0 0.0
      %2314 = vmatprep.subr.mxu0 0.0
      %2315 = vmatpush1.xpose.msra.mxu0 0.0
      %2316 = vmatprep.subr.mxu0 0.0
      %2317 = vmatpush1.xpose.msra.mxu0 0.0
      %2318 = vmatprep.subr.mxu0 0.0
      %2319 = vmatpush1.xpose.msra.mxu0 0.0
      %2320 = vmatprep.subr.mxu0 0.0
      %2321 = vmatpush1.xpose.msra.mxu0 0.0
      %2322 = vmatprep.subr.mxu0 0.0
      %2323 = vmatpush1.xpose.msra.mxu0 0.0
      %2324 = vmatprep.subr.mxu0 0.0
      %2325 = vmatpush1.xpose.msra.mxu0 0.0
      %2326 = vmatprep.subr.mxu0 0.0
      %2327 = vmatpush1.xpose.msra.mxu0 0.0
      %2328 = vmatprep.subr.mxu0 0.0
      %2329 = vmatpush1.xpose.msra.mxu0 0.0
      %2330 = vmatprep.subr.mxu0 0.0
      %2331 = vmatpush1.xpose.msra.mxu0 0.0
      %2332 = vmatprep.subr.mxu0 0.0
      %2333 = vmatpush1.xpose.msra.mxu0 %v2302
      %2334 = vmatprep.subr.mxu0 0.0
      %2335 = vmatpush1.xpose.msra.mxu0 %v2299
      %2336 = vmatprep.subr.mxu0 0.0
      %2337 = vmatpush2.xpose.msra.mxu0 0.0
      %2338 = vmatprep.subr.mxu0 0.0
      %2339 = vmatpush2.xpose.msra.mxu0 0.0
      %2340 = vmatprep.subr.mxu0 0.0
      %2341 = vmatpush2.xpose.msra.mxu0 0.0
      %2342 = vmatprep.subr.mxu0 0.0
      %2343 = vmatpush2.xpose.msra.mxu0 0.0
      %2344 = vmatprep.subr.mxu0 0.0
      %2345 = vmatpush2.xpose.msra.mxu0 0.0
      %2346 = vmatprep.subr.mxu0 0.0
      %2347 = vmatpush2.xpose.msra.mxu0 0.0
      %2348 = vmatprep.subr.mxu0 0.0
      %2349 = vmatpush2.xpose.msra.mxu0 0.0
      %2350 = vmatprep.subr.mxu0 0.0
      %2351 = vmatpush2.xpose.msra.mxu0 0.0
      %2352 = vmatprep.subr.mxu0 0.0
      %2353 = vmatpush2.xpose.msra.mxu0 0.0
      %2354 = vmatprep.subr.mxu0 0.0
      %2355 = vmatpush2.xpose.msra.mxu0 0.0
      %2356 = vmatprep.subr.mxu0 0.0
      %2357 = vmatpush2.xpose.msra.mxu0 0.0
      %2358 = vmatprep.subr.mxu0 0.0
      %2359 = vmatpush2.xpose.msra.mxu0 0.0
      %2360 = vmatprep.subr.mxu0 0.0
      %2361 = vmatpush2.xpose.msra.mxu0 0.0
      %2362 = vmatprep.subr.mxu0 0.0
      %2363 = vmatpush2.xpose.msra.mxu0 0.0
      %2364 = vmatprep.subr.mxu0 0.0
      %2365 = vmatpush2.xpose.msra.mxu0 0.0
      %2366 = vmatprep.subr.mxu0 0.0
      %2367 = vmatpush2.xpose.msra.mxu0 0.0
      %2368 = vmatprep.mubr.f32.mxu0 0.0
      %2369 = vmatmul.mubr.f32.gmra.mxu0 %v2296
      %v2370 = vpop.f32.mrf.mxu0
      %v2371 = vadd.f32 0.0, %v2370
      %v2372 = vpop.f32.mrf.mxu0
      %2373 = vdwg.mxu0
      %v2374 = vsel %vm879, %v2371, -inf
      %2375 = vmax.xlane.f32.xlu0 %v2374
      %v2376 = vpop.xlane.xlu0 %2375
      %v2377 = vsub.f32 %v2371, %v2376
      %v2378 = vmul.f32 %v2377, 1.442695
      %v2379 = vpow.pop %v2378
      %v2380 = vsel %vm879, %v2379, 0.0
      %2381 = vadd.xlane.f32.xlu0 %v2380
      %v2382 = vpop.xlane.xlu0 %2381
      %v2383 = vrcp.pop %v2382
      %v2384 = vmul.f32 %v2379, %v2383
      %v2386 = vsel %vm879, %v2384, 0
      %2388 = vmatprep.subr.mxu0 0.0
      %2389 = vmatpush1.msra.mxu0 0.0
      %2390 = vmatprep.subr.mxu0 0.0
      %2391 = vmatpush1.msra.mxu0 0.0
      %2392 = vmatprep.subr.mxu0 0.0
      %2393 = vmatpush1.msra.mxu0 0.0
      %2394 = vmatprep.subr.mxu0 0.0
      %2395 = vmatpush1.msra.mxu0 0.0
      %2396 = vmatprep.subr.mxu0 0.0
      %2397 = vmatpush1.msra.mxu0 0.0
      %2398 = vmatprep.subr.mxu0 0.0
      %2399 = vmatpush1.msra.mxu0 0.0
      %2400 = vmatprep.subr.mxu0 0.0
      %2401 = vmatpush1.msra.mxu0 0.0
      %2402 = vmatprep.subr.mxu0 0.0
      %2403 = vmatpush1.msra.mxu0 0.0
      %2404 = vmatprep.subr.mxu0 0.0
      %2405 = vmatpush1.msra.mxu0 0.0
      %2406 = vmatprep.subr.mxu0 0.0
      %2407 = vmatpush1.msra.mxu0 0.0
      %2408 = vmatprep.subr.mxu0 0.0
      %2409 = vmatpush1.msra.mxu0 0.0
      %2410 = vmatprep.subr.mxu0 0.0
      %2411 = vmatpush1.msra.mxu0 0.0
      %2412 = vmatprep.subr.mxu0 0.0
      %2413 = vmatpush1.msra.mxu0 0.0
      %2414 = vmatprep.subr.mxu0 0.0
      %2415 = vmatpush1.msra.mxu0 0.0
      %2416 = vmatprep.subr.mxu0 0.0
      %2417 = vmatpush1.msra.mxu0 %v2292
      %2418 = vmatprep.subr.mxu0 0.0
      %2419 = vmatpush1.msra.mxu0 %v2287
      %2420 = vmatprep.subr.mxu0 0.0
      %2421 = vmatpush2.msra.mxu0 0.0
      %2422 = vmatprep.subr.mxu0 0.0
      %2423 = vmatpush2.msra.mxu0 0.0
      %2424 = vmatprep.subr.mxu0 0.0
      %2425 = vmatpush2.msra.mxu0 0.0
      %2426 = vmatprep.subr.mxu0 0.0
      %2427 = vmatpush2.msra.mxu0 0.0
      %2428 = vmatprep.subr.mxu0 0.0
      %2429 = vmatpush2.msra.mxu0 0.0
      %2430 = vmatprep.subr.mxu0 0.0
      %2431 = vmatpush2.msra.mxu0 0.0
      %2432 = vmatprep.subr.mxu0 0.0
      %2433 = vmatpush2.msra.mxu0 0.0
      %2434 = vmatprep.subr.mxu0 0.0
      %2435 = vmatpush2.msra.mxu0 0.0
      %2436 = vmatprep.subr.mxu0 0.0
      %2437 = vmatpush2.msra.mxu0 0.0
      %2438 = vmatprep.subr.mxu0 0.0
      %2439 = vmatpush2.msra.mxu0 0.0
      %2440 = vmatprep.subr.mxu0 0.0
      %2441 = vmatpush2.msra.mxu0 0.0
      %2442 = vmatprep.subr.mxu0 0.0
      %2443 = vmatpush2.msra.mxu0 0.0
      %2444 = vmatprep.subr.mxu0 0.0
      %2445 = vmatpush2.msra.mxu0 0.0
      %2446 = vmatprep.subr.mxu0 0.0
      %2447 = vmatpush2.msra.mxu0 0.0
      %2448 = vmatprep.subr.mxu0 0.0
      %2449 = vmatpush2.msra.mxu0 0.0
      %2450 = vmatprep.subr.mxu0 0.0
      %2451 = vmatpush2.msra.mxu0 0.0
      %2452 = vmatprep.mubr.f32.mxu0 0.0
      %2453 = vmatmul.mubr.f32.gmra.mxu0 %v2386
      %v2454 = vpop.f32.mrf.mxu0
      %v2455 = vadd.f32 0.0, %v2454
      %v2456 = vpop.f32.mrf.mxu0
      %2457 = vdwg.mxu0
      %s2458 = scalar_lea.vmem %s10, 24
      %v2459 = vld [vmem:[%s2458] sm:$0xff]
      %v2461 = vsel %vm799, %v2455, 0
      %2463 = vmatprep.subr.mxu0 0.0
      %2464 = vmatpush1.msra.mxu0 0.0
      %2465 = vmatprep.subr.mxu0 0.0
      %2466 = vmatpush1.msra.mxu0 0.0
      %2467 = vmatprep.subr.mxu0 0.0
      %2468 = vmatpush1.msra.mxu0 0.0
      %2469 = vmatprep.subr.mxu0 0.0
      %2470 = vmatpush1.msra.mxu0 0.0
      %2471 = vmatprep.subr.mxu0 0.0
      %2472 = vmatpush1.msra.mxu0 0.0
      %2473 = vmatprep.subr.mxu0 0.0
      %2474 = vmatpush1.msra.mxu0 0.0
      %2475 = vmatprep.subr.mxu0 0.0
      %2476 = vmatpush1.msra.mxu0 0.0
      %2477 = vmatprep.subr.mxu0 0.0
      %2478 = vmatpush1.msra.mxu0 0.0
      %2479 = vmatprep.subr.mxu0 0.0
      %2480 = vmatpush1.msra.mxu0 0.0
      %2481 = vmatprep.subr.mxu0 0.0
      %2482 = vmatpush1.msra.mxu0 0.0
      %2483 = vmatprep.subr.mxu0 0.0
      %2484 = vmatpush1.msra.mxu0 0.0
      %2485 = vmatprep.subr.mxu0 0.0
      %2486 = vmatpush1.msra.mxu0 0.0
      %2487 = vmatprep.subr.mxu0 0.0
      %2488 = vmatpush1.msra.mxu0 0.0
      %2489 = vmatprep.subr.mxu0 0.0
      %2490 = vmatpush1.msra.mxu0 0.0
      %2491 = vmatprep.subr.mxu0 0.0
      %2492 = vmatpush1.msra.mxu0 0.0
      %2493 = vmatprep.subr.mxu0 0.0
      %2494 = vmatpush1.msra.mxu0 %v2459
      %2495 = vmatprep.subr.mxu0 0.0
      %2496 = vmatpush2.msra.mxu0 0.0
      %2497 = vmatprep.subr.mxu0 0.0
      %2498 = vmatpush2.msra.mxu0 0.0
      %2499 = vmatprep.subr.mxu0 0.0
      %2500 = vmatpush2.msra.mxu0 0.0
      %2501 = vmatprep.subr.mxu0 0.0
      %2502 = vmatpush2.msra.mxu0 0.0
      %2503 = vmatprep.subr.mxu0 0.0
      %2504 = vmatpush2.msra.mxu0 0.0
      %2505 = vmatprep.subr.mxu0 0.0
      %2506 = vmatpush2.msra.mxu0 0.0
      %2507 = vmatprep.subr.mxu0 0.0
      %2508 = vmatpush2.msra.mxu0 0.0
      %2509 = vmatprep.subr.mxu0 0.0
      %2510 = vmatpush2.msra.mxu0 0.0
      %2511 = vmatprep.subr.mxu0 0.0
      %2512 = vmatpush2.msra.mxu0 0.0
      %2513 = vmatprep.subr.mxu0 0.0
      %2514 = vmatpush2.msra.mxu0 0.0
      %2515 = vmatprep.subr.mxu0 0.0
      %2516 = vmatpush2.msra.mxu0 0.0
      %2517 = vmatprep.subr.mxu0 0.0
      %2518 = vmatpush2.msra.mxu0 0.0
      %2519 = vmatprep.subr.mxu0 0.0
      %2520 = vmatpush2.msra.mxu0 0.0
      %2521 = vmatprep.subr.mxu0 0.0
      %2522 = vmatpush2.msra.mxu0 0.0
      %2523 = vmatprep.subr.mxu0 0.0
      %2524 = vmatpush2.msra.mxu0 0.0
      %2525 = vmatprep.subr.mxu0 0.0
      %2526 = vmatpush2.msra.mxu0 0.0
      %2527 = vmatprep.mubr.f32.mxu0 0.0
      %2528 = vmatmul.mubr.f32.gmra.mxu0 %v2461
      %v2529 = vpop.f32.mrf.mxu0
      %v2530 = vadd.f32 0.0, %v2529
      %v2531 = vpop.f32.mrf.mxu0
      %2532 = vdwg.mxu0
      %v2533 = vadd.f32 %v2034, %v2530
      %v2534 = vld [vmem:[%s11] sm:$0x1]
      %v2536 = vlaneseq
      %v2537 = vshrl.u32 %v2536, 7
      %v2538 = vsub.s32 0, %v2537
      %v2539 = vrot.slane %v2534, %v2538
      %v2541 = vadd.f32 %v2533, %v2539
      %v2542 = vld [vmem:[%s12] sm:$0x1]
      %v2543 = vld [vmem:[%s13] sm:$0x1]
      %v2544 = vadd.f32 %v2541, %v520
      %v2545 = vsel %vm540, %v2544, 0.0
      %2546 = vadd.xlane.f32.xlu0 %v2545
      %v2547 = vpop.xlane.xlu0 %2546
      %v2548 = vrcp.pop 32.0
      %v2549 = vmul.f32 %v2547, %v2548
      %v2550 = vsub.f32 %v2544, %v2549
      %v2551 = vmul.f32 %v2550, %v2550
      %v2552 = vsel %vm540, %v2551, 0.0
      %2553 = vadd.xlane.f32.xlu0 %v2552
      %v2554 = vpop.xlane.xlu0 %2553
      %v2555 = vmul.f32 %v2554, %v2548
      %v2556 = vadd.f32 %v2555, 1e-05
      %v2557 = vrsqrt.pop %v2556
      %v2558 = vmul.f32 %v2550, %v2557
      %v2560 = vlaneseq
      %v2561 = vshrl.u32 %v2560, 7
      %v2562 = vsub.s32 0, %v2561
      %v2563 = vrot.slane %v2542, %v2562
      %v2565 = vmul.f32 %v2558, %v2563
      %v2567 = vlaneseq
      %v2568 = vshrl.u32 %v2567, 7
      %v2569 = vsub.s32 0, %v2568
      %v2570 = vrot.slane %v2543, %v2569
      %v2572 = vadd.f32 %v2565, %v2570
      %2573 = vst.msk [vmem:[%s519] sm:$0xff] %vm540, %v2572
      %p2574 = scmp.lt.s32.totalorder %s25, 1
      %s2575 = scalar_select %p2574, %s25, 1
      %s2576 = smul.addr %s2575, 8
      %s2577 = scalar_lea.vmem %s14, %s2576
      // Predicated region
      $region77: #{transformer_decoder_layer_mma.4} parent=75 // pred_check
        %p2578 = pneg %p357
      $region78: #{transformer_decoder_layer_mma.4} parent=75 // pred_check_branch
        %2580 = sbr.rel (%p2578) target = $region80
      $region79: #{transformer_decoder_layer_mma.4} parent=75 // pred_region
        _
      $region80: #{transformer_decoder_layer_mma.4} parent=75 // pred_fallthru
        _
    $region76: #{transformer_decoder_layer_mma.4} parent=5 // pred_fallthru
      _
    %p2581 = scmp.le.s32.totalorder 2, %s20
    // Predicated region
    $region81: #{transformer_decoder_layer_mma.4} parent=5 // pred_check
      %p2582 = pneg %p2581
    $region82: #{transformer_decoder_layer_mma.4} parent=5 // pred_check_branch
      %2584 = sbr.rel (%p2582) target = $region84
    $region83: #{transformer_decoder_layer_mma.4} parent=5 // pred_region
      %s2585 = ssub.s32 %s20, 2
      // Predicated region
      $region85: #{transformer_decoder_layer_mma.4} parent=83 // pred_check
        %p2586 = pneg %p363
      $region86: #{transformer_decoder_layer_mma.4} parent=83 // pred_check_branch
        %2588 = sbr.rel (%p2586) target = $region88
      $region87: #{transformer_decoder_layer_mma.4} parent=83 // pred_region
        %p2589 = scmp.lt.s32.totalorder %s26, 1
        %s2590 = scalar_select %p2589, %s26, 1
        %s2591 = smul.addr %s2590, 8
        %s2592 = scalar_lea.vmem %s14, %s2591
      $region88: #{transformer_decoder_layer_mma.4} parent=83 // pred_fallthru
        _
    $region84: #{transformer_decoder_layer_mma.4} parent=5 // pred_fallthru
      _
  $region6: #{transformer_decoder_layer_mma.4} parent=0 // loop_footer
    %s24 = sadd.s32 1, %s20
  $region7: #{transformer_decoder_layer_mma.4} parent=0 // loop_footer_branch
    %19 = sbr.rel target = $region3
  $region8: #{transformer_decoder_layer_mma.4} parent=0 // loop_exit
    _

</llo_original>
